<compile_context>
chip_gen: v7x
topology: tpu7x:2x2x1
jax: 0.10.0
libtpu: 0.0.40
codegen_flags: <defaults>
</compile_context>

<pallas_src>
import functools
import math

import numpy as np
import jax
import jax.numpy as jnp
from jax import lax
from jax.experimental import pallas as pl
from jax.experimental.pallas import tpu as pltpu

_VMEM_LIMIT = 48 * 1024 * 1024  # < physical VMEM on v5e/v6e/v7x


# ---------------------------------------------------------------------------
# Kernel 1: fused BasicBlock with in-kernel im2col
#   y = leaky(W2 @ leaky(conv3x3(x)))   (reflect pad 1, no bias, then 1x1)
# ---------------------------------------------------------------------------
def _basicblock_kernel(w1_ref, w2_ref, xf_ref, o_ref, *, Wp, slope):
    # w1_ref: (9, M1, C) bf16 -- 3x3 taps, tap-major, w1_ref[dy*3+dx][m, c]
    # w2_ref: (M2, M1)   bf16 -- 1x1 conv
    # xf_ref: (C, FLAT)  bf16 -- reflect-padded image rows flattened, row stride Wp
    # o_ref : (M2, N)    f32  -- N = H*Wp columns; cols j >= W are junk (cropped later)
    n = o_ref.shape[1]
    acc = None
    for t in range(9):                         # statically unrolled
        dy, dx = divmod(t, 3)
        off = dy * Wp + dx
        slab = xf_ref[:, off:off + n]          # (C, N) shifted view built in VMEM
        part = jnp.dot(w1_ref[t], slab, preferred_element_type=jnp.float32)
        acc = part if acc is None else acc + part
    h = jnp.maximum(acc, slope * acc).astype(jnp.bfloat16)   # LeakyReLU(0.2)
    y = jnp.dot(w2_ref[...], h, preferred_element_type=jnp.float32)
    o_ref[...] = jnp.maximum(y, slope * y)


def basic_block(x, w1, w2, slope=0.2):
    """ReflectionPad(1)+Conv3x3(no bias) -> LeakyReLU(0.2) -> Conv1x1 -> LeakyReLU(0.2)."""
    B, C, H, W = x.shape
    M1, M2 = w1.shape[0], w2.shape[0]
    Wp = W + 2
    Hpp = H + 3                       # reflect(1,1) rows + 1 junk row (keeps slices in-bounds)
    FLAT = Hpp * Wp
    N = H * Wp

    xp = jnp.pad(x, ((0, 0), (0, 0), (1, 1), (1, 1)), mode="reflect")
    xp = jnp.pad(xp, ((0, 0), (0, 0), (0, 1), (0, 0)))        # junk row (never read for valid cols)
    xf = xp.reshape(B, C, FLAT).astype(jnp.bfloat16)          # free row-major collapse

    # weights: tap-major (dy, dx, m, c) so the kernel indexes w1_ref[t]; pre-cast bf16
    w1p = jnp.transpose(w1, (2, 3, 0, 1)).reshape(9, M1, C).astype(jnp.bfloat16)
    w2p = w2.reshape(M2, M1).astype(jnp.bfloat16)

    # TODO(synk): for large H*W add a row-tile grid axis so the per-step block
    # stays under v7x's 64 MiB VMEM; at these sizes per-B blocks are tiny.
    y = pl.pallas_call(
        functools.partial(_basicblock_kernel, Wp=Wp, slope=slope),
        out_shape=jax.ShapeDtypeStruct((B, M2, N), jnp.float32),
        grid=(B,),
        in_specs=[
            pl.BlockSpec((9, M1, C), lambda b: (0, 0, 0)),
            pl.BlockSpec((M2, M1), lambda b: (0, 0)),
            pl.BlockSpec((None, C, FLAT), lambda b: (b, 0, 0)),
        ],
        out_specs=pl.BlockSpec((None, M2, N), lambda b: (b, 0, 0)),
        compiler_params=pltpu.CompilerParams(
            dimension_semantics=("parallel",),
            vmem_limit_bytes=_VMEM_LIMIT),
    )(w1p, w2p, xf)

    # crop the junk columns (j >= W) -- already in (B, C, H, W) layout, no transpose
    return y.reshape(B, M2, H, Wp)[:, :, :, :W]


# ---------------------------------------------------------------------------
# Kernel 2: fused SPA attention (spatial hwC branch + per-patch channel branch)
# ---------------------------------------------------------------------------
def _spa_attention_kernel(p_ref, x4_ref, yh_ref, yc_ref, *, scale):
    # p_ref : (L, D)      bf16 patch slab for one batch element, D = C*k*k (C, kh, kw)
    # x4_ref: (L, C, KK)  bf16 free-reshape view of the same HBM bytes
    p = p_ref[...]

    # ---- spatial (hwC) attention: softmax(P P^T * s) P ----
    s = lax.dot_general(p, p, (((1,), (1,)), ((), ())),
                        preferred_element_type=jnp.float32) * scale        # (L, L)
    s = s - jnp.max(s, axis=-1, keepdims=True)
    e = jnp.exp(s)
    sm = e * pl.reciprocal(jnp.sum(e, axis=-1, keepdims=True), approx=True)
    yh = jnp.dot(sm.astype(jnp.bfloat16), p, preferred_element_type=jnp.float32)
    yh_ref[...] = yh                                                       # (L, D)

    # ---- per-patch channel attention: softmax(X^T X * s) X^T ----
    x = x4_ref[...]                                                        # (L, C, KK)
    sc = lax.dot_general(x, x, (((1,), (1,)), ((0,), (0,))),
                         preferred_element_type=jnp.float32) * scale       # (L, KK, KK)
    sc = sc - jnp.max(sc, axis=-1, keepdims=True)
    ec = jnp.exp(sc)
    smc = ec * pl.reciprocal(jnp.sum(ec, axis=-1, keepdims=True), approx=True)
    yc = lax.dot_general(smc.astype(jnp.bfloat16), x, (((2,), (2,)), ((0,), (0,))),
                         preferred_element_type=jnp.float32)               # (L, KK, C)
    yc_ref[...] = yc


def spa_attention(patches, C, KK, scale):
    """patches: (B, L, C*KK) bf16 -> (y_hwc (B,L,C*KK) f32, y_c (B,L,KK,C) f32)."""
    B, L, D = patches.shape
    x4 = patches.reshape(B, L, C, KK)        # free XLA view of the same buffer
    # TODO(synk): for large L, tile the query axis with an online-softmax
    # accumulator (flash P3) to bound the (L, L) score block under v7x VMEM.
    y_hwc, y_c = pl.pallas_call(
        functools.partial(_spa_attention_kernel, scale=scale),
        out_shape=(jax.ShapeDtypeStruct((B, L, D), jnp.float32),
                   jax.ShapeDtypeStruct((B, L, KK, C), jnp.float32)),
        grid=(B,),
        in_specs=[
            pl.BlockSpec((None, L, D), lambda b: (b, 0, 0)),
            pl.BlockSpec((None, L, C, KK), lambda b: (b, 0, 0, 0)),
        ],
        out_specs=(
            pl.BlockSpec((None, L, D), lambda b: (b, 0, 0)),
            pl.BlockSpec((None, L, KK, C), lambda b: (b, 0, 0, 0)),
        ),
        compiler_params=pltpu.CompilerParams(
            dimension_semantics=("parallel",),
            vmem_limit_bytes=_VMEM_LIMIT),
    )(patches, x4)
    return y_hwc, y_c


# ---------------------------------------------------------------------------
# Glue: unfold / fold / mask / SPA / Branch_SPA
# ---------------------------------------------------------------------------
def _unfold_to_patches(xp, k, stride):
    """xp: (B, C, Hp, Wp) zero-padded -> (B, nH*nW, C*k*k), last dim ordered (C, kh, kw)."""
    B, C, Hp, Wp = xp.shape
    nH = (Hp - k) // stride + 1
    nW = (Wp - k) // stride + 1
    cols = jnp.stack(
        [xp[:, :, dy:dy + stride * (nH - 1) + 1:stride,
             dx:dx + stride * (nW - 1) + 1:stride]
         for dy in range(k) for dx in range(k)],
        axis=2)                                          # (B, C, k*k, nH, nW)
    pat = jnp.transpose(cols, (0, 3, 4, 1, 2))           # (B, nH, nW, C, k*k)
    return pat.reshape(B, nH * nW, C * k * k)


def _fold_patches(y, C, k, stride, H, W, pad):
    """torch F.fold equivalent on (B, L, C*k*k) patches (last dim read as (C,kh,kw)),
    summing overlaps; output (B, C, H, W).  Requires k % stride == 0 (k=8, s=4)."""
    B, L, D = y.shape
    nH = (H + 2 * pad - k) // stride + 1
    nW = (W + 2 * pad - k) // stride + 1
    assert nH * nW == L and k % stride == 0
    r = k // stride
    Hp, Wp = H + 2 * pad, W + 2 * pad
    p8 = y.reshape(B, nH, nW, C, r, stride, r, stride)
    out = jnp.zeros((B, C, Hp, Wp), y.dtype)
    for m in range(r):
        for n in range(r):
            t = p8[:, :, :, :, m, :, n, :]               # (B, nH, nW, C, s, s)
            t = jnp.transpose(t, (0, 3, 1, 4, 2, 5))     # (B, C, nH, s, nW, s)
            t = t.reshape(B, C, nH * stride, nW * stride)
            out = out + jnp.pad(
                t, ((0, 0), (0, 0),
                    (m * stride, Hp - m * stride - nH * stride),
                    (n * stride, Wp - n * stride - nW * stride)))
    return out[:, :, pad:pad + H, pad:pad + W]


def _fold_inv_mask(H, W, k, stride, pad):
    """1 / fold(unfold(ones)): static overlap-count mask, computed in numpy."""
    def cnt(size):
        n = (size + 2 * pad - k) // stride + 1
        c = np.zeros(size + 2 * pad, np.float64)
        for i in range(n):
            c[i * stride:i * stride + k] += 1.0
        return c[pad:pad + size]
    m = np.outer(cnt(H), cnt(W))
    return (1.0 / m)[None, None].astype(np.float32)      # (1, 1, H, W)


def spa_forward(x, params, ksize=8, stride1=4, stride2=4, softmax_scale=10.0):
    x = basic_block(x, params["w1"], params["w2"])
    residual = x
    B, C, H, W = x.shape

    # torch same_padding semantics
    out_rows = (H + stride1 - 1) // stride1
    out_cols = (W + stride1 - 1) // stride1
    pad_rows = max(0, (out_rows - 1) * stride1 + ksize - H)
    pad_cols = max(0, (out_cols - 1) * stride1 + ksize - W)
    pad_top = pad_rows // 2
    pad_left = pad_cols // 2
    pad_bottom = pad_rows - pad_top
    pad_right = pad_cols - pad_left

    xp = jnp.pad(x, ((0, 0), (0, 0), (pad_top, pad_bottom), (pad_left, pad_right)))
    patches = _unfold_to_patches(xp, ksize, stride1).astype(jnp.bfloat16)  # (B, L, C*k*k)
    L = patches.shape[1]
    KK = ksize * ksize
    assert L == math.ceil(W / stride2) * math.ceil(H / stride2)

    y_hwc, y_c = spa_attention(patches, C, KK, softmax_scale)

    # Fold linearity: fold(y_hwc) + fold(y_c) == fold(y_hwc + y_c_flat) -> one fold.
    # y_c stays (KK, C)-ordered in its flat form, faithfully reproducing torch's
    # reinterpretation of that data as (C, kh, kw) inside fold.
    y_sum = y_hwc + y_c.reshape(B, L, KK * C)            # free XLA reshape + cheap add

    # Faithful to torch: fold and the overlap mask use padding = paddings[0] (pad_left)
    # for both spatial dims.
    pad_fold = pad_left
    folded = _fold_patches(y_sum, C, ksize, stride1, H, W, pad_fold)
    inv_mask = jnp.asarray(_fold_inv_mask(H, W, ksize, stride1, pad_fold),
                           dtype=x.dtype)
    return residual + folded * inv_mask


def branch_spa(x, params):
    out1 = spa_forward(x, params["spa1"])
    out2 = spa_forward(out1, params["spa2"])
    # TODO(synk): SPA.out BasicBlock is declared in __init__ but never used in the
    # PyTorch forward, so it is intentionally not instantiated here.
    return basic_block(out2, params["conv"]["w1"], params["conv"]["w2"])


# ---------------------------------------------------------------------------
if __name__ == "__main__":
    embed_dim = 32
    mid = embed_dim // 2

    key = jax.random.PRNGKey(0)
    keys = jax.random.split(key, 7)
    x = jax.random.normal(keys[0], (2, embed_dim, 16, 16), jnp.float32)

    def make_block(k_a, k_b):
        return {
            "w1": 0.05 * jax.random.normal(k_a, (mid, embed_dim, 3, 3), jnp.float32),
            "w2": 0.05 * jax.random.normal(k_b, (embed_dim, mid, 1, 1), jnp.float32),
        }

    params = {
        "spa1": make_block(keys[1], keys[2]),
        "spa2": make_block(keys[3], keys[4]),
        "conv": make_block(keys[5], keys[6]),
    }

    out = jax.jit(branch_spa)(x, params)
    jax.block_until_ready(out)
    assert out.shape == (2, embed_dim, 16, 16)
    assert bool(jnp.all(jnp.isfinite(out)))
    print("KERNEL_OK")
</pallas_src>

<mosaic_0001>
module attributes {stable_mosaic.version = 11 : i64} {
  func.func @_basicblock_kernel(%arg0: i32, %arg1: memref<9x16x32xbf16, #tpu.memory_space<vmem>>, %arg2: memref<32x16xbf16, #tpu.memory_space<vmem>>, %arg3: memref<1x32x342xbf16, #tpu.memory_space<vmem>>, %arg4: memref<1x32x288xf32, #tpu.memory_space<vmem>>) attributes {dimension_semantics = [#tpu.dimension_semantics<parallel>], iteration_bounds = array<i64: 2>, scalar_prefetch = 0 : i64, scratch_operands = 0 : i64, tpu.core_type = #tpu.core_type<tc>, window_params = [{pipeline_mode = #tpu.pipeline_mode<synchronous>, transform_indices = @transform_0, window_bounds = array<i64: 9, 16, 32>}, {pipeline_mode = #tpu.pipeline_mode<synchronous>, transform_indices = @transform_1, window_bounds = array<i64: 32, 16>}, {transform_indices = @transform_2, window_bounds = array<i64: 1, 32, 342>}, {transform_indices = @transform_3, window_bounds = array<i64: 1, 32, 288>}]} {
    %c0 = arith.constant 0 : index
    %c0_0 = arith.constant 0 : index
    %c0_1 = arith.constant 0 : index
    %0 = vector.load %arg3[%c0, %c0_0, %c0_1] : memref<1x32x342xbf16, #tpu.memory_space<vmem>>, vector<1x32x288xbf16>
    %1 = vector.shape_cast %0 : vector<1x32x288xbf16> to vector<32x288xbf16>
    %c0_2 = arith.constant 0 : index
    %c0_3 = arith.constant 0 : index
    %c0_4 = arith.constant 0 : index
    %2 = vector.load %arg1[%c0_2, %c0_3, %c0_4] : memref<9x16x32xbf16, #tpu.memory_space<vmem>>, vector<1x16x32xbf16>
    %3 = vector.shape_cast %2 : vector<1x16x32xbf16> to vector<16x32xbf16>
    %cst = arith.constant dense<0.000000e+00> : vector<16x288xf32>
    %4 = tpu.matmul %3, %1, %cst {dimension_numbers = #tpu.dot_dimension_numbers<[1], [0], [0], [1], [0, 0, 1, 1], [], []>} : vector<16x32xbf16>, vector<32x288xbf16>, vector<16x288xf32> -> vector<16x288xf32>
    %c0_5 = arith.constant 0 : index
    %c0_6 = arith.constant 0 : index
    %c1 = arith.constant 1 : index
    %5 = vector.load %arg3[%c0_5, %c0_6, %c1] : memref<1x32x342xbf16, #tpu.memory_space<vmem>>, vector<1x32x288xbf16>
    %6 = vector.shape_cast %5 : vector<1x32x288xbf16> to vector<32x288xbf16>
    %c1_7 = arith.constant 1 : index
    %c0_8 = arith.constant 0 : index
    %c0_9 = arith.constant 0 : index
    %7 = vector.load %arg1[%c1_7, %c0_8, %c0_9] : memref<9x16x32xbf16, #tpu.memory_space<vmem>>, vector<1x16x32xbf16>
    %8 = vector.shape_cast %7 : vector<1x16x32xbf16> to vector<16x32xbf16>
    %cst_10 = arith.constant dense<0.000000e+00> : vector<16x288xf32>
    %9 = tpu.matmul %8, %6, %cst_10 {dimension_numbers = #tpu.dot_dimension_numbers<[1], [0], [0], [1], [0, 0, 1, 1], [], []>} : vector<16x32xbf16>, vector<32x288xbf16>, vector<16x288xf32> -> vector<16x288xf32>
    %10 = arith.addf %4, %9 : vector<16x288xf32>
    %c0_11 = arith.constant 0 : index
    %c0_12 = arith.constant 0 : index
    %c2 = arith.constant 2 : index
    %11 = vector.load %arg3[%c0_11, %c0_12, %c2] : memref<1x32x342xbf16, #tpu.memory_space<vmem>>, vector<1x32x288xbf16>
    %12 = vector.shape_cast %11 : vector<1x32x288xbf16> to vector<32x288xbf16>
    %c2_13 = arith.constant 2 : index
    %c0_14 = arith.constant 0 : index
    %c0_15 = arith.constant 0 : index
    %13 = vector.load %arg1[%c2_13, %c0_14, %c0_15] : memref<9x16x32xbf16, #tpu.memory_space<vmem>>, vector<1x16x32xbf16>
    %14 = vector.shape_cast %13 : vector<1x16x32xbf16> to vector<16x32xbf16>
    %cst_16 = arith.constant dense<0.000000e+00> : vector<16x288xf32>
    %15 = tpu.matmul %14, %12, %cst_16 {dimension_numbers = #tpu.dot_dimension_numbers<[1], [0], [0], [1], [0, 0, 1, 1], [], []>} : vector<16x32xbf16>, vector<32x288xbf16>, vector<16x288xf32> -> vector<16x288xf32>
    %16 = arith.addf %10, %15 : vector<16x288xf32>
    %c0_17 = arith.constant 0 : index
    %c0_18 = arith.constant 0 : index
    %c18 = arith.constant 18 : index
    %17 = vector.load %arg3[%c0_17, %c0_18, %c18] : memref<1x32x342xbf16, #tpu.memory_space<vmem>>, vector<1x32x288xbf16>
    %18 = vector.shape_cast %17 : vector<1x32x288xbf16> to vector<32x288xbf16>
    %c3 = arith.constant 3 : index
    %c0_19 = arith.constant 0 : index
    %c0_20 = arith.constant 0 : index
    %19 = vector.load %arg1[%c3, %c0_19, %c0_20] : memref<9x16x32xbf16, #tpu.memory_space<vmem>>, vector<1x16x32xbf16>
    %20 = vector.shape_cast %19 : vector<1x16x32xbf16> to vector<16x32xbf16>
    %cst_21 = arith.constant dense<0.000000e+00> : vector<16x288xf32>
    %21 = tpu.matmul %20, %18, %cst_21 {dimension_numbers = #tpu.dot_dimension_numbers<[1], [0], [0], [1], [0, 0, 1, 1], [], []>} : vector<16x32xbf16>, vector<32x288xbf16>, vector<16x288xf32> -> vector<16x288xf32>
    %22 = arith.addf %16, %21 : vector<16x288xf32>
    %c0_22 = arith.constant 0 : index
    %c0_23 = arith.constant 0 : index
    %c19 = arith.constant 19 : index
    %23 = vector.load %arg3[%c0_22, %c0_23, %c19] : memref<1x32x342xbf16, #tpu.memory_space<vmem>>, vector<1x32x288xbf16>
    %24 = vector.shape_cast %23 : vector<1x32x288xbf16> to vector<32x288xbf16>
    %c4 = arith.constant 4 : index
    %c0_24 = arith.constant 0 : index
    %c0_25 = arith.constant 0 : index
    %25 = vector.load %arg1[%c4, %c0_24, %c0_25] : memref<9x16x32xbf16, #tpu.memory_space<vmem>>, vector<1x16x32xbf16>
    %26 = vector.shape_cast %25 : vector<1x16x32xbf16> to vector<16x32xbf16>
    %cst_26 = arith.constant dense<0.000000e+00> : vector<16x288xf32>
    %27 = tpu.matmul %26, %24, %cst_26 {dimension_numbers = #tpu.dot_dimension_numbers<[1], [0], [0], [1], [0, 0, 1, 1], [], []>} : vector<16x32xbf16>, vector<32x288xbf16>, vector<16x288xf32> -> vector<16x288xf32>
    %28 = arith.addf %22, %27 : vector<16x288xf32>
    %c0_27 = arith.constant 0 : index
    %c0_28 = arith.constant 0 : index
    %c20 = arith.constant 20 : index
    %29 = vector.load %arg3[%c0_27, %c0_28, %c20] : memref<1x32x342xbf16, #tpu.memory_space<vmem>>, vector<1x32x288xbf16>
    %30 = vector.shape_cast %29 : vector<1x32x288xbf16> to vector<32x288xbf16>
    %c5 = arith.constant 5 : index
    %c0_29 = arith.constant 0 : index
    %c0_30 = arith.constant 0 : index
    %31 = vector.load %arg1[%c5, %c0_29, %c0_30] : memref<9x16x32xbf16, #tpu.memory_space<vmem>>, vector<1x16x32xbf16>
    %32 = vector.shape_cast %31 : vector<1x16x32xbf16> to vector<16x32xbf16>
    %cst_31 = arith.constant dense<0.000000e+00> : vector<16x288xf32>
    %33 = tpu.matmul %32, %30, %cst_31 {dimension_numbers = #tpu.dot_dimension_numbers<[1], [0], [0], [1], [0, 0, 1, 1], [], []>} : vector<16x32xbf16>, vector<32x288xbf16>, vector<16x288xf32> -> vector<16x288xf32>
    %34 = arith.addf %28, %33 : vector<16x288xf32>
    %c0_32 = arith.constant 0 : index
    %c0_33 = arith.constant 0 : index
    %c36 = arith.constant 36 : index
    %35 = vector.load %arg3[%c0_32, %c0_33, %c36] : memref<1x32x342xbf16, #tpu.memory_space<vmem>>, vector<1x32x288xbf16>
    %36 = vector.shape_cast %35 : vector<1x32x288xbf16> to vector<32x288xbf16>
    %c6 = arith.constant 6 : index
    %c0_34 = arith.constant 0 : index
    %c0_35 = arith.constant 0 : index
    %37 = vector.load %arg1[%c6, %c0_34, %c0_35] : memref<9x16x32xbf16, #tpu.memory_space<vmem>>, vector<1x16x32xbf16>
    %38 = vector.shape_cast %37 : vector<1x16x32xbf16> to vector<16x32xbf16>
    %cst_36 = arith.constant dense<0.000000e+00> : vector<16x288xf32>
    %39 = tpu.matmul %38, %36, %cst_36 {dimension_numbers = #tpu.dot_dimension_numbers<[1], [0], [0], [1], [0, 0, 1, 1], [], []>} : vector<16x32xbf16>, vector<32x288xbf16>, vector<16x288xf32> -> vector<16x288xf32>
    %40 = arith.addf %34, %39 : vector<16x288xf32>
    %c0_37 = arith.constant 0 : index
    %c0_38 = arith.constant 0 : index
    %c37 = arith.constant 37 : index
    %41 = vector.load %arg3[%c0_37, %c0_38, %c37] : memref<1x32x342xbf16, #tpu.memory_space<vmem>>, vector<1x32x288xbf16>
    %42 = vector.shape_cast %41 : vector<1x32x288xbf16> to vector<32x288xbf16>
    %c7 = arith.constant 7 : index
    %c0_39 = arith.constant 0 : index
    %c0_40 = arith.constant 0 : index
    %43 = vector.load %arg1[%c7, %c0_39, %c0_40] : memref<9x16x32xbf16, #tpu.memory_space<vmem>>, vector<1x16x32xbf16>
    %44 = vector.shape_cast %43 : vector<1x16x32xbf16> to vector<16x32xbf16>
    %cst_41 = arith.constant dense<0.000000e+00> : vector<16x288xf32>
    %45 = tpu.matmul %44, %42, %cst_41 {dimension_numbers = #tpu.dot_dimension_numbers<[1], [0], [0], [1], [0, 0, 1, 1], [], []>} : vector<16x32xbf16>, vector<32x288xbf16>, vector<16x288xf32> -> vector<16x288xf32>
    %46 = arith.addf %40, %45 : vector<16x288xf32>
    %c0_42 = arith.constant 0 : index
    %c0_43 = arith.constant 0 : index
    %c38 = arith.constant 38 : index
    %47 = vector.load %arg3[%c0_42, %c0_43, %c38] : memref<1x32x342xbf16, #tpu.memory_space<vmem>>, vector<1x32x288xbf16>
    %48 = vector.shape_cast %47 : vector<1x32x288xbf16> to vector<32x288xbf16>
    %c8 = arith.constant 8 : index
    %c0_44 = arith.constant 0 : index
    %c0_45 = arith.constant 0 : index
    %49 = vector.load %arg1[%c8, %c0_44, %c0_45] : memref<9x16x32xbf16, #tpu.memory_space<vmem>>, vector<1x16x32xbf16>
    %50 = vector.shape_cast %49 : vector<1x16x32xbf16> to vector<16x32xbf16>
    %cst_46 = arith.constant dense<0.000000e+00> : vector<16x288xf32>
    %51 = tpu.matmul %50, %48, %cst_46 {dimension_numbers = #tpu.dot_dimension_numbers<[1], [0], [0], [1], [0, 0, 1, 1], [], []>} : vector<16x32xbf16>, vector<32x288xbf16>, vector<16x288xf32> -> vector<16x288xf32>
    %52 = arith.addf %46, %51 : vector<16x288xf32>
    %cst_47 = arith.constant 2.000000e-01 : f32
    %53 = vector.broadcast %cst_47 : f32 to vector<16x288xf32>
    %54 = arith.mulf %53, %52 : vector<16x288xf32>
    %55 = arith.maximumf %52, %54 : vector<16x288xf32>
    %56 = arith.truncf %55 : vector<16x288xf32> to vector<16x288xbf16>
    %c0_48 = arith.constant 0 : index
    %c0_49 = arith.constant 0 : index
    %57 = vector.load %arg2[%c0_48, %c0_49] : memref<32x16xbf16, #tpu.memory_space<vmem>>, vector<32x16xbf16>
    %cst_50 = arith.constant dense<0.000000e+00> : vector<32x288xf32>
    %58 = tpu.matmul %57, %56, %cst_50 {dimension_numbers = #tpu.dot_dimension_numbers<[1], [0], [0], [1], [0, 0, 1, 1], [], []>} : vector<32x16xbf16>, vector<16x288xbf16>, vector<32x288xf32> -> vector<32x288xf32>
    %cst_51 = arith.constant 2.000000e-01 : f32
    %59 = vector.broadcast %cst_51 : f32 to vector<32x288xf32>
    %60 = arith.mulf %59, %58 : vector<32x288xf32>
    %61 = arith.maximumf %58, %60 : vector<32x288xf32>
    %c0_52 = arith.constant 0 : index
    %c0_53 = arith.constant 0 : index
    %c0_54 = arith.constant 0 : index
    %62 = vector.load %arg4[%c0_52, %c0_53, %c0_54] : memref<1x32x288xf32, #tpu.memory_space<vmem>>, vector<1x32x288xf32>
    %63 = vector.shape_cast %62 : vector<1x32x288xf32> to vector<32x288xf32>
    %64 = vector.shape_cast %61 : vector<32x288xf32> to vector<1x32x288xf32>
    tpu.vector_store %arg4[%c0_52, %c0_53, %c0_54], %64 {strides = array<i32>} : memref<1x32x288xf32, #tpu.memory_space<vmem>>, vector<1x32x288xf32>,
    return
  }
  func.func @transform_0(%arg0: i32) -> (i32, i32, i32) {
    %c0_i32 = arith.constant 0 : i32
    %c0_i32_0 = arith.constant 0 : i32
    %c0_i32_1 = arith.constant 0 : i32
    %c0_i32_2 = arith.constant 0 : i32
    return %c0_i32, %c0_i32_0, %c0_i32_1 : i32, i32, i32
  }
  func.func @transform_1(%arg0: i32) -> (i32, i32) {
    %c0_i32 = arith.constant 0 : i32
    %c0_i32_0 = arith.constant 0 : i32
    %c0_i32_1 = arith.constant 0 : i32
    return %c0_i32, %c0_i32_0 : i32, i32
  }
  func.func @transform_2(%arg0: i32) -> (i32, i32, i32) {
    %c0_i32 = arith.constant 0 : i32
    %c0_i32_0 = arith.constant 0 : i32
    %c0_i32_1 = arith.constant 0 : i32
    return %arg0, %c0_i32, %c0_i32_0 : i32, i32, i32
  }
  func.func @transform_3(%arg0: i32) -> (i32, i32, i32) {
    %c0_i32 = arith.constant 0 : i32
    %c0_i32_0 = arith.constant 0 : i32
    %c0_i32_1 = arith.constant 0 : i32
    return %arg0, %c0_i32, %c0_i32_0 : i32, i32, i32
  }
}

module attributes {stable_mosaic.version = 11 : i64} {
  func.func @_spa_attention_kernel(%arg0: i32, %arg1: memref<1x16x2048xbf16, #tpu.memory_space<vmem>>, %arg2: memref<1x16x32x64xbf16, #tpu.memory_space<vmem>>, %arg3: memref<1x16x2048xf32, #tpu.memory_space<vmem>>, %arg4: memref<1x16x64x32xf32, #tpu.memory_space<vmem>>) attributes {dimension_semantics = [#tpu.dimension_semantics<parallel>], iteration_bounds = array<i64: 2>, scalar_prefetch = 0 : i64, scratch_operands = 0 : i64, tpu.core_type = #tpu.core_type<tc>, window_params = [{transform_indices = @transform_0, window_bounds = array<i64: 1, 16, 2048>}, {transform_indices = @transform_1, window_bounds = array<i64: 1, 16, 32, 64>}, {transform_indices = @transform_2, window_bounds = array<i64: 1, 16, 2048>}, {transform_indices = @transform_3, window_bounds = array<i64: 1, 16, 64, 32>}]} {
    %c0 = arith.constant 0 : index
    %c0_0 = arith.constant 0 : index
    %c0_1 = arith.constant 0 : index
    %0 = vector.load %arg1[%c0, %c0_0, %c0_1] : memref<1x16x2048xbf16, #tpu.memory_space<vmem>>, vector<1x16x2048xbf16>
    %1 = vector.shape_cast %0 : vector<1x16x2048xbf16> to vector<16x2048xbf16>
    %cst = arith.constant dense<0.000000e+00> : vector<16x16xf32>
    %2 = tpu.matmul %1, %1, %cst {dimension_numbers = #tpu.dot_dimension_numbers<[1], [1], [0], [0], [0, 0, 1, 0], [], []>} : vector<16x2048xbf16>, vector<16x2048xbf16>, vector<16x16xf32> -> vector<16x16xf32>
    %cst_2 = arith.constant 1.000000e+01 : f32
    %3 = vector.broadcast %cst_2 : f32 to vector<16x16xf32>
    %4 = arith.mulf %2, %3 : vector<16x16xf32>
    %cst_3 = arith.constant dense<0xFF800000> : vector<16xf32>
    %5 = vector.multi_reduction <maximumf>, %4, %cst_3 [1] : vector<16x16xf32> to vector<16xf32>
    %6 = vector.shape_cast %5 : vector<16xf32> to vector<16x1xf32>
    %7 = vector.broadcast %6 : vector<16x1xf32> to vector<16x16xf32>
    %8 = arith.subf %4, %7 : vector<16x16xf32>
    %9 = math.exp %8 : vector<16x16xf32>
    %cst_4 = arith.constant dense<0.000000e+00> : vector<16xf32>
    %10 = vector.multi_reduction <add>, %9, %cst_4 [1] : vector<16x16xf32> to vector<16xf32>
    %11 = vector.shape_cast %10 : vector<16xf32> to vector<16x1xf32>
    %12 = tpu.reciprocal %11 {approx = true} : vector<16x1xf32> -> vector<16x1xf32>
    %13 = vector.broadcast %12 : vector<16x1xf32> to vector<16x16xf32>
    %14 = arith.mulf %9, %13 : vector<16x16xf32>
    %15 = arith.truncf %14 : vector<16x16xf32> to vector<16x16xbf16>
    %cst_5 = arith.constant dense<0.000000e+00> : vector<16x2048xf32>
    %16 = tpu.matmul %15, %1, %cst_5 {dimension_numbers = #tpu.dot_dimension_numbers<[1], [0], [0], [1], [0, 0, 1, 1], [], []>} : vector<16x16xbf16>, vector<16x2048xbf16>, vector<16x2048xf32> -> vector<16x2048xf32>
    %c0_6 = arith.constant 0 : index
    %c0_7 = arith.constant 0 : index
    %c0_8 = arith.constant 0 : index
    %17 = vector.load %arg3[%c0_6, %c0_7, %c0_8] : memref<1x16x2048xf32, #tpu.memory_space<vmem>>, vector<1x16x2048xf32>
    %18 = vector.shape_cast %17 : vector<1x16x2048xf32> to vector<16x2048xf32>
    %19 = vector.shape_cast %16 : vector<16x2048xf32> to vector<1x16x2048xf32>
    tpu.vector_store %arg3[%c0_6, %c0_7, %c0_8], %19 {strides = array<i32>} : memref<1x16x2048xf32, #tpu.memory_space<vmem>>, vector<1x16x2048xf32>,
    %c0_9 = arith.constant 0 : index
    %c0_10 = arith.constant 0 : index
    %c0_11 = arith.constant 0 : index
    %c0_12 = arith.constant 0 : index
    %20 = vector.load %arg2[%c0_9, %c0_10, %c0_11, %c0_12] : memref<1x16x32x64xbf16, #tpu.memory_space<vmem>>, vector<1x16x32x64xbf16>
    %21 = vector.shape_cast %20 : vector<1x16x32x64xbf16> to vector<16x32x64xbf16>
    %cst_13 = arith.constant dense<0.000000e+00> : vector<16x64x64xf32>
    %22 = tpu.matmul %21, %21, %cst_13 {dimension_numbers = #tpu.dot_dimension_numbers<[1], [1], [2], [2], [0, 0, 0, 2, 1, 2], [0], [0]>} : vector<16x32x64xbf16>, vector<16x32x64xbf16>, vector<16x64x64xf32> -> vector<16x64x64xf32>
    %cst_14 = arith.constant 1.000000e+01 : f32
    %23 = vector.broadcast %cst_14 : f32 to vector<16x64x64xf32>
    %24 = arith.mulf %22, %23 : vector<16x64x64xf32>
    %cst_15 = arith.constant dense<0xFF800000> : vector<16x64xf32>
    %25 = vector.multi_reduction <maximumf>, %24, %cst_15 [2] : vector<16x64x64xf32> to vector<16x64xf32>
    %26 = vector.shape_cast %25 : vector<16x64xf32> to vector<16x64x1xf32>
    %27 = vector.broadcast %26 : vector<16x64x1xf32> to vector<16x64x64xf32>
    %28 = arith.subf %24, %27 : vector<16x64x64xf32>
    %29 = math.exp %28 : vector<16x64x64xf32>
    %cst_16 = arith.constant dense<0.000000e+00> : vector<16x64xf32>
    %30 = vector.multi_reduction <add>, %29, %cst_16 [2] : vector<16x64x64xf32> to vector<16x64xf32>
    %31 = vector.shape_cast %30 : vector<16x64xf32> to vector<16x64x1xf32>
    %32 = tpu.reciprocal %31 {approx = true} : vector<16x64x1xf32> -> vector<16x64x1xf32>
    %33 = vector.broadcast %32 : vector<16x64x1xf32> to vector<16x64x64xf32>
    %34 = arith.mulf %29, %33 : vector<16x64x64xf32>
    %35 = arith.truncf %34 : vector<16x64x64xf32> to vector<16x64x64xbf16>
    %cst_17 = arith.constant dense<0.000000e+00> : vector<16x64x32xf32>
    %36 = tpu.matmul %35, %21, %cst_17 {dimension_numbers = #tpu.dot_dimension_numbers<[2], [2], [1], [1], [0, 0, 0, 1, 1, 1], [0], [0]>} : vector<16x64x64xbf16>, vector<16x32x64xbf16>, vector<16x64x32xf32> -> vector<16x64x32xf32>
    %c0_18 = arith.constant 0 : index
    %c0_19 = arith.constant 0 : index
    %c0_20 = arith.constant 0 : index
    %c0_21 = arith.constant 0 : index
    %37 = vector.load %arg4[%c0_18, %c0_19, %c0_20, %c0_21] : memref<1x16x64x32xf32, #tpu.memory_space<vmem>>, vector<1x16x64x32xf32>
    %38 = vector.shape_cast %37 : vector<1x16x64x32xf32> to vector<16x64x32xf32>
    %39 = vector.shape_cast %36 : vector<16x64x32xf32> to vector<1x16x64x32xf32>
    tpu.vector_store %arg4[%c0_18, %c0_19, %c0_20, %c0_21], %39 {strides = array<i32>} : memref<1x16x64x32xf32, #tpu.memory_space<vmem>>, vector<1x16x64x32xf32>,
    return
  }
  func.func @transform_0(%arg0: i32) -> (i32, i32, i32) {
    %c0_i32 = arith.constant 0 : i32
    %c0_i32_0 = arith.constant 0 : i32
    %c0_i32_1 = arith.constant 0 : i32
    return %arg0, %c0_i32, %c0_i32_0 : i32, i32, i32
  }
  func.func @transform_1(%arg0: i32) -> (i32, i32, i32, i32) {
    %c0_i32 = arith.constant 0 : i32
    %c0_i32_0 = arith.constant 0 : i32
    %c0_i32_1 = arith.constant 0 : i32
    %c0_i32_2 = arith.constant 0 : i32
    return %arg0, %c0_i32, %c0_i32_0, %c0_i32_1 : i32, i32, i32, i32
  }
  func.func @transform_2(%arg0: i32) -> (i32, i32, i32) {
    %c0_i32 = arith.constant 0 : i32
    %c0_i32_0 = arith.constant 0 : i32
    %c0_i32_1 = arith.constant 0 : i32
    return %arg0, %c0_i32, %c0_i32_0 : i32, i32, i32
  }
  func.func @transform_3(%arg0: i32) -> (i32, i32, i32, i32) {
    %c0_i32 = arith.constant 0 : i32
    %c0_i32_0 = arith.constant 0 : i32
    %c0_i32_1 = arith.constant 0 : i32
    %c0_i32_2 = arith.constant 0 : i32
    return %arg0, %c0_i32, %c0_i32_0, %c0_i32_1 : i32, i32, i32, i32
  }
}

</mosaic_0001>

<llo_original>
// kernel: branch_spa.5
$region0: #{branch_spa.5}
  #allocation0 [shape = 'u32[]', space=smem, size = 0x4, offset = 0x4, fixed_abs, tag = 'smem constant byte address 0x4 - core index']
  #allocation1 [shape = 'u32[144,128]{1,0:T(1,128)}', space=vmem, size = 0x12000, scoped, tag = 'internal scratch']
  %s0 = inlined_call_operand.vmem [shape: bf16[9,16,32], index: 0, kind: input, shape index: {}]
  %s1 = inlined_call_operand.vmem [shape: bf16[32,16], index: 1, kind: input, shape index: {}]
  %s2 = inlined_call_operand.vmem [shape: bf16[2,32,342], index: 2, kind: input, shape index: {}]
  %s3 = inlined_call_operand.vmem [shape: f32[2,32,288], index: 3, kind: output, shape index: {}]
  %s4 = sld [smem:[#allocation0]]
  $region45: #{branch_spa.5} parent=0
    _
  %s6 = ssub.s32 1, %s4
  %s7 = scalar_select 0, %s6, %s4
  loop: start=0, step=1, limit=4
  $region2: #{branch_spa.5} parent=0 // loop_pre_header
    _
  $region3: #{branch_spa.5} parent=0 // loop_header
    %s9 = sphi 0, %s13
    %p10 = scmp.ge.s32.totalorder %s9, 4
    %s17 = sphi 0, %s17
    %s19 = sphi 0, %s17
    %s20 = sphi 0, %s19
    %s34 = sphi 0, %s20
    %s38 = sphi 0, %s38
    %s40 = sphi 0, %s38
    %s41 = sphi 0, %s40
    %s55 = sphi 0, %s41
    %s61 = sphi 0, %s63
    %s64 = sphi 0, %s61
    %s65 = sphi 0, %s64
    %s81 = sphi 0, %s65
    %s87 = sphi 0, %s89
    %s90 = sphi 0, %s87
    %s91 = sphi 0, %s90
    %s107 = sphi 0, %s91
  $region4: #{branch_spa.5} parent=0 // loop_header_branch
    %12 = sbr.rel (%p10) target = $region8
  $region5: #{branch_spa.5} parent=0 // loop_body
    %s14 = ssub.s32 %s9, 1
    %s15 = ssub.s32 %s9, 2
    %s16 = sadd.s32 %s9, 1
    %s18 = sadd.s32 %s17, 1
    %p21 = scmp.eq.s32.totalorder %s9, 1
    %p22 = scmp.ne.s32.totalorder %s17, %s19
    %p23 = scmp.eq.s32.totalorder %s9, 0
    %p24 = por %p22, %p23
    %p25 = scmp.ne.s32.totalorder %s17, %s19
    %p26 = scmp.eq.s32.totalorder %s14, 1
    %p27 = por %p25, %p26
    %p28 = scmp.ne.s32.totalorder %s19, %s20
    %p29 = scmp.eq.s32.totalorder %s14, 0
    %p30 = por %p28, %p29
    %p31 = scmp.ne.s32.totalorder %s19, %s20
    %p32 = scmp.eq.s32.totalorder %s15, 1
    %p33 = por %p31, %p32
    %p35 = scmp.ne.s32.totalorder %s20, %s34
    %p36 = scmp.eq.s32.totalorder %s15, 0
    %p37 = por %p35, %p36
    %s39 = sadd.s32 %s38, 1
    %p42 = scmp.eq.s32.totalorder %s9, 1
    %p43 = scmp.ne.s32.totalorder %s38, %s40
    %p44 = scmp.eq.s32.totalorder %s9, 0
    %p45 = por %p43, %p44
    %p46 = scmp.ne.s32.totalorder %s38, %s40
    %p47 = scmp.eq.s32.totalorder %s14, 1
    %p48 = por %p46, %p47
    %p49 = scmp.ne.s32.totalorder %s40, %s41
    %p50 = scmp.eq.s32.totalorder %s14, 0
    %p51 = por %p49, %p50
    %p52 = scmp.ne.s32.totalorder %s40, %s41
    %p53 = scmp.eq.s32.totalorder %s15, 1
    %p54 = por %p52, %p53
    %p56 = scmp.ne.s32.totalorder %s41, %s55
    %p57 = scmp.eq.s32.totalorder %s15, 0
    %p58 = por %p56, %p57
    %s59 = ssub.s32 %s9, %s16
    %p60 = scmp.eq.s32.totalorder %s59, 0
    %s62 = sadd.s32 %s61, 1
    %s63 = scalar_select %p60, %s61, %s62
    %p66 = pneg %p60
    %p67 = scmp.eq.s32.totalorder %s9, 1
    %p68 = por %p66, %p67
    %p69 = scmp.ne.s32.totalorder %s61, %s64
    %p70 = scmp.eq.s32.totalorder %s9, 0
    %p71 = por %p69, %p70
    %p72 = scmp.ne.s32.totalorder %s61, %s64
    %p73 = scmp.eq.s32.totalorder %s14, 1
    %p74 = por %p72, %p73
    %p75 = scmp.ne.s32.totalorder %s64, %s65
    %p76 = scmp.eq.s32.totalorder %s14, 0
    %p77 = por %p75, %p76
    %p78 = scmp.ne.s32.totalorder %s64, %s65
    %p79 = scmp.eq.s32.totalorder %s15, 1
    %p80 = por %p78, %p79
    %p82 = scmp.ne.s32.totalorder %s65, %s81
    %p83 = scmp.eq.s32.totalorder %s15, 0
    %p84 = por %p82, %p83
    %s85 = ssub.s32 %s9, %s16
    %p86 = scmp.eq.s32.totalorder %s85, 0
    %s88 = sadd.s32 %s87, 1
    %s89 = scalar_select %p86, %s87, %s88
    %p92 = pneg %p86
    %p93 = scmp.eq.s32.totalorder %s9, 1
    %p94 = por %p92, %p93
    %p95 = scmp.ne.s32.totalorder %s87, %s90
    %p96 = scmp.eq.s32.totalorder %s9, 0
    %p97 = por %p95, %p96
    %p98 = scmp.ne.s32.totalorder %s87, %s90
    %p99 = scmp.eq.s32.totalorder %s14, 1
    %p100 = por %p98, %p99
    %p101 = scmp.ne.s32.totalorder %s90, %s91
    %p102 = scmp.eq.s32.totalorder %s14, 0
    %p103 = por %p101, %p102
    %p104 = scmp.ne.s32.totalorder %s90, %s91
    %p105 = scmp.eq.s32.totalorder %s15, 1
    %p106 = por %p104, %p105
    %p108 = scmp.ne.s32.totalorder %s91, %s107
    %p109 = scmp.eq.s32.totalorder %s15, 0
    %p110 = por %p108, %p109
    %p111 = scmp.le.s32.totalorder 1, %s9
    %p112 = scmp.lt.s32.totalorder %s9, 3
    %p113 = pnand %p111, %p112
    %p114 = pneg %p113
    // Predicated region
    $region9: #{branch_spa.5} parent=5 // pred_check
      _
    $region10: #{branch_spa.5} parent=5 // pred_check_branch
      %116 = sbr.rel (%p113) target = $region12
    $region11: #{branch_spa.5} parent=5 // pred_region
      %s117 = ssub.s32 %s9, 1
      // Predicated region
      $region13: #{branch_spa.5} parent=11 // pred_check
        %p118 = pneg %p30
      $region14: #{branch_spa.5} parent=11 // pred_check_branch
        %120 = sbr.rel (%p118) target = $region16
      $region15: #{branch_spa.5} parent=11 // pred_region
        _
      $region16: #{branch_spa.5} parent=11 // pred_fallthru
        _
      // Predicated region
      $region17: #{branch_spa.5} parent=11 // pred_check
        %p121 = pneg %p51
      $region18: #{branch_spa.5} parent=11 // pred_check_branch
        %123 = sbr.rel (%p121) target = $region20
      $region19: #{branch_spa.5} parent=11 // pred_region
        _
      $region20: #{branch_spa.5} parent=11 // pred_fallthru
        _
    $region12: #{branch_spa.5} parent=5 // pred_fallthru
      _
    %p124 = scmp.lt.s32.totalorder %s9, 2
    // Predicated region
    $region21: #{branch_spa.5} parent=5 // pred_check
      %p125 = pneg %p124
    $region22: #{branch_spa.5} parent=5 // pred_check_branch
      %127 = sbr.rel (%p125) target = $region24
    $region23: #{branch_spa.5} parent=5 // pred_region
      // Predicated region
      $region25: #{branch_spa.5} parent=23 // pred_check
        %p128 = pneg %p71
      $region26: #{branch_spa.5} parent=23 // pred_check_branch
        %130 = sbr.rel (%p128) target = $region28
      $region27: #{branch_spa.5} parent=23 // pred_region
        %p131 = scmp.lt.s32.totalorder %s9, 1
        %s132 = scalar_select %p131, %s9, 1
        %s133 = smul.addr %s132, 12
        %s134 = smul.addr %s133, 4
        %s135 = scalar_lea.vmem %s2, %s134
      $region28: #{branch_spa.5} parent=23 // pred_fallthru
        _
    $region24: #{branch_spa.5} parent=5 // pred_fallthru
      _
    %p136 = scmp.le.s32.totalorder 1, %s9
    %p137 = scmp.lt.s32.totalorder %s9, 3
    %p138 = pnand %p136, %p137
    %p139 = pneg %p138
    // Predicated region
    $region29: #{branch_spa.5} parent=5 // pred_check
      _
    $region30: #{branch_spa.5} parent=5 // pred_check_branch
      %141 = sbr.rel (%p138) target = $region32
    $region31: #{branch_spa.5} parent=5 // pred_region
      %s142 = ssub.s32 %s9, 1
      %p143 = pneg %p30
      %p144 = pneg %p27
      %p145 = pneg %p51
      %p146 = pneg %p48
      %p147 = scmp.lt.s32.totalorder %s14, 1
      %s148 = scalar_select %p147, %s14, 1
      %s149 = smul.addr %s148, 12
      %s150 = smul.addr %s149, 4
      %s151 = scalar_lea.vmem %s2, %s150
      %p152 = pneg %p77
      %p153 = pneg %p74
      %p154 = pneg %p103
      %p155 = pneg %p100
      %p156 = scmp.lt.s32.totalorder %s14, 1
      %s157 = scalar_select %p156, %s14, 1
      %s158 = smul.addr %s157, 12
      %s159 = smul.addr %s158, 8
      %s160 = scalar_lea.vmem %s3, %s159
      %p161 = scmp.lt.s32.totalorder %s14, 1
      %s162 = scalar_select %p161, %s14, 1
      %s163 = smul.addr %s162, 12
      %s164 = smul.addr %s163, 4
      %s165 = scalar_lea.vmem %s2, %s164
      %p166 = scmp.lt.s32.totalorder %s14, 1
      %s167 = scalar_select %p166, %s14, 1
      %s168 = smul.addr %s167, 12
      %s169 = smul.addr %s168, 8
      %s170 = scalar_lea.vmem %s3, %s169
      %v172 = vld [vmem:[%s165] sm:$0xff]
      %v173 = vld [vmem:[%s165 + $0x8] sm:$0xf]
      %v174 = vld [vmem:[%s165 + $0xc] sm:$0xff]
      %v175 = vld [vmem:[%s165 + $0x14] sm:$0xf]
      %v176 = vld [vmem:[%s165 + $0x18] sm:$0xff]
      %v177 = vld [vmem:[%s165 + $0x20] sm:$0xf]
      %v178 = vld [vmem:[%s165 + $0x24] sm:$0xff]
      %v179 = vld [vmem:[%s165 + $0x2c] sm:$0xf]
      %v180 = vld [vmem:[%s0] sm:$0xf]
      %v181 = vld [vmem:[%s0 + $0x4] sm:$0xf]
      %s182 = scalar_lea.vmem %s0, 8
      %v183 = vld [vmem:[%s182] sm:$0xf]
      %v184 = vld [vmem:[%s182 + $0x4] sm:$0xf]
      %v187 = vunpack.c.l.b16 %v183
      %v188 = vunpack.c.l.b16 %v184
      %v189 = vpack.c.b16 %v188, %v187
      %v198 = vunpack.c.l.b16 %v172
      %v199 = vunpack.c.h.b16 %v172
      %v200 = vunpack.c.l.b16 %v173
      %v201 = vunpack.c.l.b16 %v174
      %v202 = vunpack.c.h.b16 %v174
      %v203 = vunpack.c.l.b16 %v175
      %v204 = vunpack.c.l.b16 %v176
      %v205 = vunpack.c.h.b16 %v176
      %v206 = vunpack.c.l.b16 %v177
      %v207 = vunpack.c.l.b16 %v178
      %v208 = vunpack.c.h.b16 %v178
      %v209 = vunpack.c.l.b16 %v179
      %v210 = vpack.c.b16 %v201, %v198
      %v211 = vpack.c.b16 %v202, %v199
      %v212 = vpack.c.b16 %v203, %v200
      %v213 = vpack.c.b16 %v207, %v204
      %v214 = vpack.c.b16 %v208, %v205
      %v215 = vpack.c.b16 %v209, %v206
      %216 = vrot.lane.b32.xlu0 %v210, 127
      %v217 = vpop.permute.xlu0 %216
      %218 = vrot.lane.b32.xlu0 %v211, 127
      %v219 = vpop.permute.xlu0 %218
      %220 = vrot.lane.b32.xlu0 %v212, 127
      %v221 = vpop.permute.xlu0 %220
      %222 = vrot.lane.b32.xlu0 %v213, 127
      %v223 = vpop.permute.xlu0 %222
      %224 = vrot.lane.b32.xlu0 %v214, 127
      %v225 = vpop.permute.xlu0 %224
      %226 = vrot.lane.b32.xlu0 %v215, 127
      %v227 = vpop.permute.xlu0 %226
      %vm228 = vcmask 1039360
      %v229 = vsel %vm228, %v217, %v219
      %v230 = vsel %vm228, %v219, %v221
      %v231 = vsel %vm228, %v223, %v225
      %v232 = vsel %vm228, %v225, %v227
      %vm239 = vcmask 261120
      %v241 = vsel %vm239, %v189, 0
      %243 = vmatprep.subr.bf16.mxu0 %v230
      %244 = vmatpush1.bf16.msra.mxu0 %v229
      %245 = vmatprep.subr.bf16.mxu0 %v232
      %246 = vmatpush1.bf16.msra.mxu0 %v231
      %247 = vmatprep.subr.bf16.mxu0 0
      %248 = vmatpush1.bf16.msra.mxu0 0
      %249 = vmatprep.subr.bf16.mxu0 0
      %250 = vmatpush1.bf16.msra.mxu0 0
      %251 = vmatprep.subr.bf16.mxu0 0
      %252 = vmatpush1.bf16.msra.mxu0 0
      %253 = vmatprep.subr.bf16.mxu0 0
      %254 = vmatpush1.bf16.msra.mxu0 0
      %255 = vmatprep.subr.bf16.mxu0 0
      %256 = vmatpush1.bf16.msra.mxu0 0
      %257 = vmatprep.subr.bf16.mxu0 0
      %258 = vmatpush1.bf16.msra.mxu0 0
      %259 = vmatprep.subr.bf16.mxu0 0
      %260 = vmatpush1.bf16.msra.mxu0 0
      %261 = vmatprep.subr.bf16.mxu0 0
      %262 = vmatpush1.bf16.msra.mxu0 0
      %263 = vmatprep.subr.bf16.mxu0 0
      %264 = vmatpush1.bf16.msra.mxu0 0
      %265 = vmatprep.subr.bf16.mxu0 0
      %266 = vmatpush1.bf16.msra.mxu0 0
      %267 = vmatprep.subr.bf16.mxu0 0
      %268 = vmatpush1.bf16.msra.mxu0 0
      %269 = vmatprep.subr.bf16.mxu0 0
      %270 = vmatpush1.bf16.msra.mxu0 0
      %271 = vmatprep.subr.bf16.mxu0 0
      %272 = vmatpush1.bf16.msra.mxu0 0
      %273 = vmatprep.subr.bf16.mxu0 0
      %274 = vmatpush1.bf16.msra.mxu0 0
      %275 = vmatprep.mubr.bf16.mxu0 0
      %276 = vmatmul.mubr.bf16.gmra.mrb[0].mxu0 %v241
      %v277 = vpop.f32.mrb[0].mxu0
      %v278 = vadd.f32 0.0, %v277
      %v279 = vpop.f32.mrb[0].mxu0
      %v280 = vadd.f32 0.0, %v279
      %v281 = vpop.f32.mrb[0].mxu0
      %v282 = vadd.f32 0.0, %v281
      %v283 = vpop.f32.mrb[0].mxu0
      %v284 = vadd.f32 0.0, %v283
      %285 = vdwg.mxu0
      %286 = vmatprep.subr.bf16.mxu0 0
      %287 = vmatpush1.bf16.msra.mxu0 %v221
      %288 = vmatprep.subr.bf16.mxu0 0
      %289 = vmatpush1.bf16.msra.mxu0 %v227
      %290 = vmatprep.subr.bf16.mxu0 0
      %291 = vmatpush1.bf16.msra.mxu0 0
      %292 = vmatprep.subr.bf16.mxu0 0
      %293 = vmatpush1.bf16.msra.mxu0 0
      %294 = vmatprep.subr.bf16.mxu0 0
      %295 = vmatpush1.bf16.msra.mxu0 0
      %296 = vmatprep.subr.bf16.mxu0 0
      %297 = vmatpush1.bf16.msra.mxu0 0
      %298 = vmatprep.subr.bf16.mxu0 0
      %299 = vmatpush1.bf16.msra.mxu0 0
      %300 = vmatprep.subr.bf16.mxu0 0
      %301 = vmatpush1.bf16.msra.mxu0 0
      %302 = vmatprep.subr.bf16.mxu0 0
      %303 = vmatpush1.bf16.msra.mxu0 0
      %304 = vmatprep.subr.bf16.mxu0 0
      %305 = vmatpush1.bf16.msra.mxu0 0
      %306 = vmatprep.subr.bf16.mxu0 0
      %307 = vmatpush1.bf16.msra.mxu0 0
      %308 = vmatprep.subr.bf16.mxu0 0
      %309 = vmatpush1.bf16.msra.mxu0 0
      %310 = vmatprep.subr.bf16.mxu0 0
      %311 = vmatpush1.bf16.msra.mxu0 0
      %312 = vmatprep.subr.bf16.mxu0 0
      %313 = vmatpush1.bf16.msra.mxu0 0
      %314 = vmatprep.subr.bf16.mxu0 0
      %315 = vmatpush1.bf16.msra.mxu0 0
      %316 = vmatprep.subr.bf16.mxu0 0
      %317 = vmatpush1.bf16.msra.mxu0 0
      %318 = vmatprep.mubr.bf16.mxu0 0
      %319 = vmatmul.mubr.bf16.gmra.mrb[0].mxu0 %v241
      %v320 = vpop.f32.mrb[0].mxu0
      %v321 = vadd.f32 0.0, %v320
      %v322 = vpop.f32.mrb[0].mxu0
      %v323 = vpop.f32.mrb[0].mxu0
      %v324 = vadd.f32 0.0, %v323
      %v325 = vpop.f32.mrb[0].mxu0
      %326 = vdwg.mxu0
      %v329 = vunpack.c.l.b16 %v180
      %v330 = vunpack.c.l.b16 %v181
      %v331 = vpack.c.b16 %v330, %v329
      %v339 = vsel %vm239, %v331, 0
      %341 = vmatprep.subr.bf16.mxu0 %v211
      %342 = vmatpush1.bf16.msra.mxu0 %v210
      %343 = vmatprep.subr.bf16.mxu0 %v214
      %344 = vmatpush1.bf16.msra.mxu0 %v213
      %345 = vmatprep.subr.bf16.mxu0 0
      %346 = vmatpush1.bf16.msra.mxu0 0
      %347 = vmatprep.subr.bf16.mxu0 0
      %348 = vmatpush1.bf16.msra.mxu0 0
      %349 = vmatprep.subr.bf16.mxu0 0
      %350 = vmatpush1.bf16.msra.mxu0 0
      %351 = vmatprep.subr.bf16.mxu0 0
      %352 = vmatpush1.bf16.msra.mxu0 0
      %353 = vmatprep.subr.bf16.mxu0 0
      %354 = vmatpush1.bf16.msra.mxu0 0
      %355 = vmatprep.subr.bf16.mxu0 0
      %356 = vmatpush1.bf16.msra.mxu0 0
      %357 = vmatprep.subr.bf16.mxu0 0
      %358 = vmatpush1.bf16.msra.mxu0 0
      %359 = vmatprep.subr.bf16.mxu0 0
      %360 = vmatpush1.bf16.msra.mxu0 0
      %361 = vmatprep.subr.bf16.mxu0 0
      %362 = vmatpush1.bf16.msra.mxu0 0
      %363 = vmatprep.subr.bf16.mxu0 0
      %364 = vmatpush1.bf16.msra.mxu0 0
      %365 = vmatprep.subr.bf16.mxu0 0
      %366 = vmatpush1.bf16.msra.mxu0 0
      %367 = vmatprep.subr.bf16.mxu0 0
      %368 = vmatpush1.bf16.msra.mxu0 0
      %369 = vmatprep.subr.bf16.mxu0 0
      %370 = vmatpush1.bf16.msra.mxu0 0
      %371 = vmatprep.subr.bf16.mxu0 0
      %372 = vmatpush1.bf16.msra.mxu0 0
      %373 = vmatprep.mubr.bf16.mxu0 0
      %374 = vmatmul.mubr.bf16.gmra.mrb[0].mxu0 %v339
      %v375 = vpop.f32.mrb[0].mxu0
      %v376 = vadd.f32 %v278, %v375
      %v377 = vpop.f32.mrb[0].mxu0
      %v378 = vadd.f32 %v280, %v377
      %v379 = vpop.f32.mrb[0].mxu0
      %v380 = vadd.f32 %v282, %v379
      %v381 = vpop.f32.mrb[0].mxu0
      %v382 = vadd.f32 %v284, %v381
      %383 = vdwg.mxu0
      %384 = vmatprep.subr.bf16.mxu0 0
      %385 = vmatpush1.bf16.msra.mxu0 %v212
      %386 = vmatprep.subr.bf16.mxu0 0
      %387 = vmatpush1.bf16.msra.mxu0 %v215
      %388 = vmatprep.subr.bf16.mxu0 0
      %389 = vmatpush1.bf16.msra.mxu0 0
      %390 = vmatprep.subr.bf16.mxu0 0
      %391 = vmatpush1.bf16.msra.mxu0 0
      %392 = vmatprep.subr.bf16.mxu0 0
      %393 = vmatpush1.bf16.msra.mxu0 0
      %394 = vmatprep.subr.bf16.mxu0 0
      %395 = vmatpush1.bf16.msra.mxu0 0
      %396 = vmatprep.subr.bf16.mxu0 0
      %397 = vmatpush1.bf16.msra.mxu0 0
      %398 = vmatprep.subr.bf16.mxu0 0
      %399 = vmatpush1.bf16.msra.mxu0 0
      %400 = vmatprep.subr.bf16.mxu0 0
      %401 = vmatpush1.bf16.msra.mxu0 0
      %402 = vmatprep.subr.bf16.mxu0 0
      %403 = vmatpush1.bf16.msra.mxu0 0
      %404 = vmatprep.subr.bf16.mxu0 0
      %405 = vmatpush1.bf16.msra.mxu0 0
      %406 = vmatprep.subr.bf16.mxu0 0
      %407 = vmatpush1.bf16.msra.mxu0 0
      %408 = vmatprep.subr.bf16.mxu0 0
      %409 = vmatpush1.bf16.msra.mxu0 0
      %410 = vmatprep.subr.bf16.mxu0 0
      %411 = vmatpush1.bf16.msra.mxu0 0
      %412 = vmatprep.subr.bf16.mxu0 0
      %413 = vmatpush1.bf16.msra.mxu0 0
      %414 = vmatprep.subr.bf16.mxu0 0
      %415 = vmatpush1.bf16.msra.mxu0 0
      %416 = vmatprep.mubr.bf16.mxu0 0
      %417 = vmatmul.mubr.bf16.gmra.mrb[0].mxu0 %v339
      %v418 = vpop.f32.mrb[0].mxu0
      %v419 = vadd.f32 %v321, %v418
      %v420 = vpop.f32.mrb[0].mxu0
      %v421 = vpop.f32.mrb[0].mxu0
      %v422 = vadd.f32 %v324, %v421
      %v423 = vpop.f32.mrb[0].mxu0
      %424 = vdwg.mxu0
      %s425 = scalar_lea.vmem %s0, 16
      %v426 = vld [vmem:[%s425] sm:$0xf]
      %v427 = vld [vmem:[%s425 + $0x4] sm:$0xf]
      %v430 = vunpack.c.l.b16 %v426
      %v431 = vunpack.c.l.b16 %v427
      %v432 = vpack.c.b16 %v431, %v430
      %433 = vrot.lane.b32.xlu0 %v210, 126
      %v434 = vpop.permute.xlu0 %433
      %435 = vrot.lane.b32.xlu0 %v211, 126
      %v436 = vpop.permute.xlu0 %435
      %437 = vrot.lane.b32.xlu0 %v212, 126
      %v438 = vpop.permute.xlu0 %437
      %439 = vrot.lane.b32.xlu0 %v213, 126
      %v440 = vpop.permute.xlu0 %439
      %441 = vrot.lane.b32.xlu0 %v214, 126
      %v442 = vpop.permute.xlu0 %441
      %443 = vrot.lane.b32.xlu0 %v215, 126
      %v444 = vpop.permute.xlu0 %443
      %vm445 = vcmask 1031168
      %v446 = vsel %vm445, %v434, %v436
      %v447 = vsel %vm445, %v436, %v438
      %v448 = vsel %vm445, %v440, %v442
      %v449 = vsel %vm445, %v442, %v444
      %v457 = vsel %vm239, %v432, 0
      %459 = vmatprep.subr.bf16.mxu0 %v447
      %460 = vmatpush1.bf16.msra.mxu0 %v446
      %461 = vmatprep.subr.bf16.mxu0 %v449
      %462 = vmatpush1.bf16.msra.mxu0 %v448
      %463 = vmatprep.subr.bf16.mxu0 0
      %464 = vmatpush1.bf16.msra.mxu0 0
      %465 = vmatprep.subr.bf16.mxu0 0
      %466 = vmatpush1.bf16.msra.mxu0 0
      %467 = vmatprep.subr.bf16.mxu0 0
      %468 = vmatpush1.bf16.msra.mxu0 0
      %469 = vmatprep.subr.bf16.mxu0 0
      %470 = vmatpush1.bf16.msra.mxu0 0
      %471 = vmatprep.subr.bf16.mxu0 0
      %472 = vmatpush1.bf16.msra.mxu0 0
      %473 = vmatprep.subr.bf16.mxu0 0
      %474 = vmatpush1.bf16.msra.mxu0 0
      %475 = vmatprep.subr.bf16.mxu0 0
      %476 = vmatpush1.bf16.msra.mxu0 0
      %477 = vmatprep.subr.bf16.mxu0 0
      %478 = vmatpush1.bf16.msra.mxu0 0
      %479 = vmatprep.subr.bf16.mxu0 0
      %480 = vmatpush1.bf16.msra.mxu0 0
      %481 = vmatprep.subr.bf16.mxu0 0
      %482 = vmatpush1.bf16.msra.mxu0 0
      %483 = vmatprep.subr.bf16.mxu0 0
      %484 = vmatpush1.bf16.msra.mxu0 0
      %485 = vmatprep.subr.bf16.mxu0 0
      %486 = vmatpush1.bf16.msra.mxu0 0
      %487 = vmatprep.subr.bf16.mxu0 0
      %488 = vmatpush1.bf16.msra.mxu0 0
      %489 = vmatprep.subr.bf16.mxu0 0
      %490 = vmatpush1.bf16.msra.mxu0 0
      %491 = vmatprep.mubr.bf16.mxu0 0
      %492 = vmatmul.mubr.bf16.gmra.mrb[0].mxu0 %v457
      %v493 = vpop.f32.mrb[0].mxu0
      %v494 = vadd.f32 0.0, %v493
      %v495 = vpop.f32.mrb[0].mxu0
      %v496 = vadd.f32 0.0, %v495
      %v497 = vpop.f32.mrb[0].mxu0
      %v498 = vadd.f32 0.0, %v497
      %v499 = vpop.f32.mrb[0].mxu0
      %v500 = vadd.f32 0.0, %v499
      %501 = vdwg.mxu0
      %502 = vmatprep.subr.bf16.mxu0 0
      %503 = vmatpush1.bf16.msra.mxu0 %v438
      %504 = vmatprep.subr.bf16.mxu0 0
      %505 = vmatpush1.bf16.msra.mxu0 %v444
      %506 = vmatprep.subr.bf16.mxu0 0
      %507 = vmatpush1.bf16.msra.mxu0 0
      %508 = vmatprep.subr.bf16.mxu0 0
      %509 = vmatpush1.bf16.msra.mxu0 0
      %510 = vmatprep.subr.bf16.mxu0 0
      %511 = vmatpush1.bf16.msra.mxu0 0
      %512 = vmatprep.subr.bf16.mxu0 0
      %513 = vmatpush1.bf16.msra.mxu0 0
      %514 = vmatprep.subr.bf16.mxu0 0
      %515 = vmatpush1.bf16.msra.mxu0 0
      %516 = vmatprep.subr.bf16.mxu0 0
      %517 = vmatpush1.bf16.msra.mxu0 0
      %518 = vmatprep.subr.bf16.mxu0 0
      %519 = vmatpush1.bf16.msra.mxu0 0
      %520 = vmatprep.subr.bf16.mxu0 0
      %521 = vmatpush1.bf16.msra.mxu0 0
      %522 = vmatprep.subr.bf16.mxu0 0
      %523 = vmatpush1.bf16.msra.mxu0 0
      %524 = vmatprep.subr.bf16.mxu0 0
      %525 = vmatpush1.bf16.msra.mxu0 0
      %526 = vmatprep.subr.bf16.mxu0 0
      %527 = vmatpush1.bf16.msra.mxu0 0
      %528 = vmatprep.subr.bf16.mxu0 0
      %529 = vmatpush1.bf16.msra.mxu0 0
      %530 = vmatprep.subr.bf16.mxu0 0
      %531 = vmatpush1.bf16.msra.mxu0 0
      %532 = vmatprep.subr.bf16.mxu0 0
      %533 = vmatpush1.bf16.msra.mxu0 0
      %534 = vmatprep.mubr.bf16.mxu0 0
      %535 = vmatmul.mubr.bf16.gmra.mrb[0].mxu0 %v457
      %v536 = vpop.f32.mrb[0].mxu0
      %v537 = vadd.f32 0.0, %v536
      %v538 = vpop.f32.mrb[0].mxu0
      %v539 = vpop.f32.mrb[0].mxu0
      %v540 = vadd.f32 0.0, %v539
      %v541 = vpop.f32.mrb[0].mxu0
      %542 = vdwg.mxu0
      %v543 = vadd.f32 %v376, %v494
      %v544 = vadd.f32 %v378, %v496
      %v545 = vadd.f32 %v419, %v537
      %v546 = vadd.f32 %v380, %v498
      %v547 = vadd.f32 %v382, %v500
      %v548 = vadd.f32 %v422, %v540
      %s549 = scalar_lea.vmem %s0, 24
      %v550 = vld [vmem:[%s549] sm:$0xf]
      %v551 = vld [vmem:[%s549 + $0x4] sm:$0xf]
      %v554 = vunpack.c.l.b16 %v550
      %v555 = vunpack.c.l.b16 %v551
      %v556 = vpack.c.b16 %v555, %v554
      %557 = vrot.lane.b32.xlu0 %v210, 110
      %v558 = vpop.permute.xlu0 %557
      %559 = vrot.lane.b32.xlu0 %v211, 110
      %v560 = vpop.permute.xlu0 %559
      %561 = vrot.lane.b32.xlu0 %v212, 110
      %v562 = vpop.permute.xlu0 %561
      %563 = vrot.lane.b32.xlu0 %v213, 110
      %v564 = vpop.permute.xlu0 %563
      %565 = vrot.lane.b32.xlu0 %v214, 110
      %v566 = vpop.permute.xlu0 %565
      %567 = vrot.lane.b32.xlu0 %v215, 110
      %v568 = vpop.permute.xlu0 %567
      %vm569 = vcmask 900096
      %v570 = vsel %vm569, %v558, %v560
      %v571 = vsel %vm569, %v560, %v562
      %v572 = vsel %vm569, %v564, %v566
      %v573 = vsel %vm569, %v566, %v568
      %v581 = vsel %vm239, %v556, 0
      %583 = vmatprep.subr.bf16.mxu0 %v571
      %584 = vmatpush1.bf16.msra.mxu0 %v570
      %585 = vmatprep.subr.bf16.mxu0 %v573
      %586 = vmatpush1.bf16.msra.mxu0 %v572
      %587 = vmatprep.subr.bf16.mxu0 0
      %588 = vmatpush1.bf16.msra.mxu0 0
      %589 = vmatprep.subr.bf16.mxu0 0
      %590 = vmatpush1.bf16.msra.mxu0 0
      %591 = vmatprep.subr.bf16.mxu0 0
      %592 = vmatpush1.bf16.msra.mxu0 0
      %593 = vmatprep.subr.bf16.mxu0 0
      %594 = vmatpush1.bf16.msra.mxu0 0
      %595 = vmatprep.subr.bf16.mxu0 0
      %596 = vmatpush1.bf16.msra.mxu0 0
      %597 = vmatprep.subr.bf16.mxu0 0
      %598 = vmatpush1.bf16.msra.mxu0 0
      %599 = vmatprep.subr.bf16.mxu0 0
      %600 = vmatpush1.bf16.msra.mxu0 0
      %601 = vmatprep.subr.bf16.mxu0 0
      %602 = vmatpush1.bf16.msra.mxu0 0
      %603 = vmatprep.subr.bf16.mxu0 0
      %604 = vmatpush1.bf16.msra.mxu0 0
      %605 = vmatprep.subr.bf16.mxu0 0
      %606 = vmatpush1.bf16.msra.mxu0 0
      %607 = vmatprep.subr.bf16.mxu0 0
      %608 = vmatpush1.bf16.msra.mxu0 0
      %609 = vmatprep.subr.bf16.mxu0 0
      %610 = vmatpush1.bf16.msra.mxu0 0
      %611 = vmatprep.subr.bf16.mxu0 0
      %612 = vmatpush1.bf16.msra.mxu0 0
      %613 = vmatprep.subr.bf16.mxu0 0
      %614 = vmatpush1.bf16.msra.mxu0 0
      %615 = vmatprep.mubr.bf16.mxu0 0
      %616 = vmatmul.mubr.bf16.gmra.mrb[0].mxu0 %v581
      %v617 = vpop.f32.mrb[0].mxu0
      %v618 = vadd.f32 0.0, %v617
      %v619 = vpop.f32.mrb[0].mxu0
      %v620 = vadd.f32 0.0, %v619
      %v621 = vpop.f32.mrb[0].mxu0
      %v622 = vadd.f32 0.0, %v621
      %v623 = vpop.f32.mrb[0].mxu0
      %v624 = vadd.f32 0.0, %v623
      %625 = vdwg.mxu0
      %626 = vmatprep.subr.bf16.mxu0 0
      %627 = vmatpush1.bf16.msra.mxu0 %v562
      %628 = vmatprep.subr.bf16.mxu0 0
      %629 = vmatpush1.bf16.msra.mxu0 %v568
      %630 = vmatprep.subr.bf16.mxu0 0
      %631 = vmatpush1.bf16.msra.mxu0 0
      %632 = vmatprep.subr.bf16.mxu0 0
      %633 = vmatpush1.bf16.msra.mxu0 0
      %634 = vmatprep.subr.bf16.mxu0 0
      %635 = vmatpush1.bf16.msra.mxu0 0
      %636 = vmatprep.subr.bf16.mxu0 0
      %637 = vmatpush1.bf16.msra.mxu0 0
      %638 = vmatprep.subr.bf16.mxu0 0
      %639 = vmatpush1.bf16.msra.mxu0 0
      %640 = vmatprep.subr.bf16.mxu0 0
      %641 = vmatpush1.bf16.msra.mxu0 0
      %642 = vmatprep.subr.bf16.mxu0 0
      %643 = vmatpush1.bf16.msra.mxu0 0
      %644 = vmatprep.subr.bf16.mxu0 0
      %645 = vmatpush1.bf16.msra.mxu0 0
      %646 = vmatprep.subr.bf16.mxu0 0
      %647 = vmatpush1.bf16.msra.mxu0 0
      %648 = vmatprep.subr.bf16.mxu0 0
      %649 = vmatpush1.bf16.msra.mxu0 0
      %650 = vmatprep.subr.bf16.mxu0 0
      %651 = vmatpush1.bf16.msra.mxu0 0
      %652 = vmatprep.subr.bf16.mxu0 0
      %653 = vmatpush1.bf16.msra.mxu0 0
      %654 = vmatprep.subr.bf16.mxu0 0
      %655 = vmatpush1.bf16.msra.mxu0 0
      %656 = vmatprep.subr.bf16.mxu0 0
      %657 = vmatpush1.bf16.msra.mxu0 0
      %658 = vmatprep.mubr.bf16.mxu0 0
      %659 = vmatmul.mubr.bf16.gmra.mrb[0].mxu0 %v581
      %v660 = vpop.f32.mrb[0].mxu0
      %v661 = vadd.f32 0.0, %v660
      %v662 = vpop.f32.mrb[0].mxu0
      %v663 = vpop.f32.mrb[0].mxu0
      %v664 = vadd.f32 0.0, %v663
      %v665 = vpop.f32.mrb[0].mxu0
      %666 = vdwg.mxu0
      %v667 = vadd.f32 %v543, %v618
      %v668 = vadd.f32 %v544, %v620
      %v669 = vadd.f32 %v545, %v661
      %v670 = vadd.f32 %v546, %v622
      %v671 = vadd.f32 %v547, %v624
      %v672 = vadd.f32 %v548, %v664
      %s673 = scalar_lea.vmem %s0, 32
      %v674 = vld [vmem:[%s673] sm:$0xf]
      %v675 = vld [vmem:[%s673 + $0x4] sm:$0xf]
      %v678 = vunpack.c.l.b16 %v674
      %v679 = vunpack.c.l.b16 %v675
      %v680 = vpack.c.b16 %v679, %v678
      %681 = vrot.lane.b32.xlu0 %v210, 109
      %v682 = vpop.permute.xlu0 %681
      %683 = vrot.lane.b32.xlu0 %v211, 109
      %v684 = vpop.permute.xlu0 %683
      %685 = vrot.lane.b32.xlu0 %v212, 109
      %v686 = vpop.permute.xlu0 %685
      %687 = vrot.lane.b32.xlu0 %v213, 109
      %v688 = vpop.permute.xlu0 %687
      %689 = vrot.lane.b32.xlu0 %v214, 109
      %v690 = vpop.permute.xlu0 %689
      %691 = vrot.lane.b32.xlu0 %v215, 109
      %v692 = vpop.permute.xlu0 %691
      %vm693 = vcmask 891904
      %v694 = vsel %vm693, %v682, %v684
      %v695 = vsel %vm693, %v684, %v686
      %v696 = vsel %vm693, %v688, %v690
      %v697 = vsel %vm693, %v690, %v692
      %v705 = vsel %vm239, %v680, 0
      %707 = vmatprep.subr.bf16.mxu0 %v695
      %708 = vmatpush1.bf16.msra.mxu0 %v694
      %709 = vmatprep.subr.bf16.mxu0 %v697
      %710 = vmatpush1.bf16.msra.mxu0 %v696
      %711 = vmatprep.subr.bf16.mxu0 0
      %712 = vmatpush1.bf16.msra.mxu0 0
      %713 = vmatprep.subr.bf16.mxu0 0
      %714 = vmatpush1.bf16.msra.mxu0 0
      %715 = vmatprep.subr.bf16.mxu0 0
      %716 = vmatpush1.bf16.msra.mxu0 0
      %717 = vmatprep.subr.bf16.mxu0 0
      %718 = vmatpush1.bf16.msra.mxu0 0
      %719 = vmatprep.subr.bf16.mxu0 0
      %720 = vmatpush1.bf16.msra.mxu0 0
      %721 = vmatprep.subr.bf16.mxu0 0
      %722 = vmatpush1.bf16.msra.mxu0 0
      %723 = vmatprep.subr.bf16.mxu0 0
      %724 = vmatpush1.bf16.msra.mxu0 0
      %725 = vmatprep.subr.bf16.mxu0 0
      %726 = vmatpush1.bf16.msra.mxu0 0
      %727 = vmatprep.subr.bf16.mxu0 0
      %728 = vmatpush1.bf16.msra.mxu0 0
      %729 = vmatprep.subr.bf16.mxu0 0
      %730 = vmatpush1.bf16.msra.mxu0 0
      %731 = vmatprep.subr.bf16.mxu0 0
      %732 = vmatpush1.bf16.msra.mxu0 0
      %733 = vmatprep.subr.bf16.mxu0 0
      %734 = vmatpush1.bf16.msra.mxu0 0
      %735 = vmatprep.subr.bf16.mxu0 0
      %736 = vmatpush1.bf16.msra.mxu0 0
      %737 = vmatprep.subr.bf16.mxu0 0
      %738 = vmatpush1.bf16.msra.mxu0 0
      %739 = vmatprep.mubr.bf16.mxu0 0
      %740 = vmatmul.mubr.bf16.gmra.mrb[0].mxu0 %v705
      %v741 = vpop.f32.mrb[0].mxu0
      %v742 = vadd.f32 0.0, %v741
      %v743 = vpop.f32.mrb[0].mxu0
      %v744 = vadd.f32 0.0, %v743
      %v745 = vpop.f32.mrb[0].mxu0
      %v746 = vadd.f32 0.0, %v745
      %v747 = vpop.f32.mrb[0].mxu0
      %v748 = vadd.f32 0.0, %v747
      %749 = vdwg.mxu0
      %750 = vmatprep.subr.bf16.mxu0 0
      %751 = vmatpush1.bf16.msra.mxu0 %v686
      %752 = vmatprep.subr.bf16.mxu0 0
      %753 = vmatpush1.bf16.msra.mxu0 %v692
      %754 = vmatprep.subr.bf16.mxu0 0
      %755 = vmatpush1.bf16.msra.mxu0 0
      %756 = vmatprep.subr.bf16.mxu0 0
      %757 = vmatpush1.bf16.msra.mxu0 0
      %758 = vmatprep.subr.bf16.mxu0 0
      %759 = vmatpush1.bf16.msra.mxu0 0
      %760 = vmatprep.subr.bf16.mxu0 0
      %761 = vmatpush1.bf16.msra.mxu0 0
      %762 = vmatprep.subr.bf16.mxu0 0
      %763 = vmatpush1.bf16.msra.mxu0 0
      %764 = vmatprep.subr.bf16.mxu0 0
      %765 = vmatpush1.bf16.msra.mxu0 0
      %766 = vmatprep.subr.bf16.mxu0 0
      %767 = vmatpush1.bf16.msra.mxu0 0
      %768 = vmatprep.subr.bf16.mxu0 0
      %769 = vmatpush1.bf16.msra.mxu0 0
      %770 = vmatprep.subr.bf16.mxu0 0
      %771 = vmatpush1.bf16.msra.mxu0 0
      %772 = vmatprep.subr.bf16.mxu0 0
      %773 = vmatpush1.bf16.msra.mxu0 0
      %774 = vmatprep.subr.bf16.mxu0 0
      %775 = vmatpush1.bf16.msra.mxu0 0
      %776 = vmatprep.subr.bf16.mxu0 0
      %777 = vmatpush1.bf16.msra.mxu0 0
      %778 = vmatprep.subr.bf16.mxu0 0
      %779 = vmatpush1.bf16.msra.mxu0 0
      %780 = vmatprep.subr.bf16.mxu0 0
      %781 = vmatpush1.bf16.msra.mxu0 0
      %782 = vmatprep.mubr.bf16.mxu0 0
      %783 = vmatmul.mubr.bf16.gmra.mrb[0].mxu0 %v705
      %v784 = vpop.f32.mrb[0].mxu0
      %v785 = vadd.f32 0.0, %v784
      %v786 = vpop.f32.mrb[0].mxu0
      %v787 = vpop.f32.mrb[0].mxu0
      %v788 = vadd.f32 0.0, %v787
      %v789 = vpop.f32.mrb[0].mxu0
      %790 = vdwg.mxu0
      %v791 = vadd.f32 %v667, %v742
      %v792 = vadd.f32 %v668, %v744
      %v793 = vadd.f32 %v669, %v785
      %v794 = vadd.f32 %v670, %v746
      %v795 = vadd.f32 %v671, %v748
      %v796 = vadd.f32 %v672, %v788
      %s797 = scalar_lea.vmem %s0, 40
      %v798 = vld [vmem:[%s797] sm:$0xf]
      %v799 = vld [vmem:[%s797 + $0x4] sm:$0xf]
      %v802 = vunpack.c.l.b16 %v798
      %v803 = vunpack.c.l.b16 %v799
      %v804 = vpack.c.b16 %v803, %v802
      %805 = vrot.lane.b32.xlu0 %v210, 108
      %v806 = vpop.permute.xlu0 %805
      %807 = vrot.lane.b32.xlu0 %v211, 108
      %v808 = vpop.permute.xlu0 %807
      %809 = vrot.lane.b32.xlu0 %v212, 108
      %v810 = vpop.permute.xlu0 %809
      %811 = vrot.lane.b32.xlu0 %v213, 108
      %v812 = vpop.permute.xlu0 %811
      %813 = vrot.lane.b32.xlu0 %v214, 108
      %v814 = vpop.permute.xlu0 %813
      %815 = vrot.lane.b32.xlu0 %v215, 108
      %v816 = vpop.permute.xlu0 %815
      %vm817 = vcmask 883712
      %v818 = vsel %vm817, %v806, %v808
      %v819 = vsel %vm817, %v808, %v810
      %v820 = vsel %vm817, %v812, %v814
      %v821 = vsel %vm817, %v814, %v816
      %v829 = vsel %vm239, %v804, 0
      %831 = vmatprep.subr.bf16.mxu0 %v819
      %832 = vmatpush1.bf16.msra.mxu0 %v818
      %833 = vmatprep.subr.bf16.mxu0 %v821
      %834 = vmatpush1.bf16.msra.mxu0 %v820
      %835 = vmatprep.subr.bf16.mxu0 0
      %836 = vmatpush1.bf16.msra.mxu0 0
      %837 = vmatprep.subr.bf16.mxu0 0
      %838 = vmatpush1.bf16.msra.mxu0 0
      %839 = vmatprep.subr.bf16.mxu0 0
      %840 = vmatpush1.bf16.msra.mxu0 0
      %841 = vmatprep.subr.bf16.mxu0 0
      %842 = vmatpush1.bf16.msra.mxu0 0
      %843 = vmatprep.subr.bf16.mxu0 0
      %844 = vmatpush1.bf16.msra.mxu0 0
      %845 = vmatprep.subr.bf16.mxu0 0
      %846 = vmatpush1.bf16.msra.mxu0 0
      %847 = vmatprep.subr.bf16.mxu0 0
      %848 = vmatpush1.bf16.msra.mxu0 0
      %849 = vmatprep.subr.bf16.mxu0 0
      %850 = vmatpush1.bf16.msra.mxu0 0
      %851 = vmatprep.subr.bf16.mxu0 0
      %852 = vmatpush1.bf16.msra.mxu0 0
      %853 = vmatprep.subr.bf16.mxu0 0
      %854 = vmatpush1.bf16.msra.mxu0 0
      %855 = vmatprep.subr.bf16.mxu0 0
      %856 = vmatpush1.bf16.msra.mxu0 0
      %857 = vmatprep.subr.bf16.mxu0 0
      %858 = vmatpush1.bf16.msra.mxu0 0
      %859 = vmatprep.subr.bf16.mxu0 0
      %860 = vmatpush1.bf16.msra.mxu0 0
      %861 = vmatprep.subr.bf16.mxu0 0
      %862 = vmatpush1.bf16.msra.mxu0 0
      %863 = vmatprep.mubr.bf16.mxu0 0
      %864 = vmatmul.mubr.bf16.gmra.mrb[0].mxu0 %v829
      %v865 = vpop.f32.mrb[0].mxu0
      %v866 = vadd.f32 0.0, %v865
      %v867 = vpop.f32.mrb[0].mxu0
      %v868 = vadd.f32 0.0, %v867
      %v869 = vpop.f32.mrb[0].mxu0
      %v870 = vadd.f32 0.0, %v869
      %v871 = vpop.f32.mrb[0].mxu0
      %v872 = vadd.f32 0.0, %v871
      %873 = vdwg.mxu0
      %874 = vmatprep.subr.bf16.mxu0 0
      %875 = vmatpush1.bf16.msra.mxu0 %v810
      %876 = vmatprep.subr.bf16.mxu0 0
      %877 = vmatpush1.bf16.msra.mxu0 %v816
      %878 = vmatprep.subr.bf16.mxu0 0
      %879 = vmatpush1.bf16.msra.mxu0 0
      %880 = vmatprep.subr.bf16.mxu0 0
      %881 = vmatpush1.bf16.msra.mxu0 0
      %882 = vmatprep.subr.bf16.mxu0 0
      %883 = vmatpush1.bf16.msra.mxu0 0
      %884 = vmatprep.subr.bf16.mxu0 0
      %885 = vmatpush1.bf16.msra.mxu0 0
      %886 = vmatprep.subr.bf16.mxu0 0
      %887 = vmatpush1.bf16.msra.mxu0 0
      %888 = vmatprep.subr.bf16.mxu0 0
      %889 = vmatpush1.bf16.msra.mxu0 0
      %890 = vmatprep.subr.bf16.mxu0 0
      %891 = vmatpush1.bf16.msra.mxu0 0
      %892 = vmatprep.subr.bf16.mxu0 0
      %893 = vmatpush1.bf16.msra.mxu0 0
      %894 = vmatprep.subr.bf16.mxu0 0
      %895 = vmatpush1.bf16.msra.mxu0 0
      %896 = vmatprep.subr.bf16.mxu0 0
      %897 = vmatpush1.bf16.msra.mxu0 0
      %898 = vmatprep.subr.bf16.mxu0 0
      %899 = vmatpush1.bf16.msra.mxu0 0
      %900 = vmatprep.subr.bf16.mxu0 0
      %901 = vmatpush1.bf16.msra.mxu0 0
      %902 = vmatprep.subr.bf16.mxu0 0
      %903 = vmatpush1.bf16.msra.mxu0 0
      %904 = vmatprep.subr.bf16.mxu0 0
      %905 = vmatpush1.bf16.msra.mxu0 0
      %906 = vmatprep.mubr.bf16.mxu0 0
      %907 = vmatmul.mubr.bf16.gmra.mrb[0].mxu0 %v829
      %v908 = vpop.f32.mrb[0].mxu0
      %v909 = vadd.f32 0.0, %v908
      %v910 = vpop.f32.mrb[0].mxu0
      %v911 = vpop.f32.mrb[0].mxu0
      %v912 = vadd.f32 0.0, %v911
      %v913 = vpop.f32.mrb[0].mxu0
      %914 = vdwg.mxu0
      %v915 = vadd.f32 %v791, %v866
      %v916 = vadd.f32 %v792, %v868
      %v917 = vadd.f32 %v793, %v909
      %v918 = vadd.f32 %v794, %v870
      %v919 = vadd.f32 %v795, %v872
      %v920 = vadd.f32 %v796, %v912
      %s921 = scalar_lea.vmem %s0, 48
      %v922 = vld [vmem:[%s921] sm:$0xf]
      %v923 = vld [vmem:[%s921 + $0x4] sm:$0xf]
      %v926 = vunpack.c.l.b16 %v922
      %v927 = vunpack.c.l.b16 %v923
      %v928 = vpack.c.b16 %v927, %v926
      %929 = vrot.lane.b32.xlu0 %v210, 92
      %v930 = vpop.permute.xlu0 %929
      %931 = vrot.lane.b32.xlu0 %v211, 92
      %v932 = vpop.permute.xlu0 %931
      %933 = vrot.lane.b32.xlu0 %v212, 92
      %v934 = vpop.permute.xlu0 %933
      %935 = vrot.lane.b32.xlu0 %v213, 92
      %v936 = vpop.permute.xlu0 %935
      %937 = vrot.lane.b32.xlu0 %v214, 92
      %v938 = vpop.permute.xlu0 %937
      %939 = vrot.lane.b32.xlu0 %v215, 92
      %v940 = vpop.permute.xlu0 %939
      %vm941 = vcmask 752640
      %v942 = vsel %vm941, %v930, %v932
      %v943 = vsel %vm941, %v932, %v934
      %v944 = vsel %vm941, %v936, %v938
      %v945 = vsel %vm941, %v938, %v940
      %v953 = vsel %vm239, %v928, 0
      %955 = vmatprep.subr.bf16.mxu0 %v943
      %956 = vmatpush1.bf16.msra.mxu0 %v942
      %957 = vmatprep.subr.bf16.mxu0 %v945
      %958 = vmatpush1.bf16.msra.mxu0 %v944
      %959 = vmatprep.subr.bf16.mxu0 0
      %960 = vmatpush1.bf16.msra.mxu0 0
      %961 = vmatprep.subr.bf16.mxu0 0
      %962 = vmatpush1.bf16.msra.mxu0 0
      %963 = vmatprep.subr.bf16.mxu0 0
      %964 = vmatpush1.bf16.msra.mxu0 0
      %965 = vmatprep.subr.bf16.mxu0 0
      %966 = vmatpush1.bf16.msra.mxu0 0
      %967 = vmatprep.subr.bf16.mxu0 0
      %968 = vmatpush1.bf16.msra.mxu0 0
      %969 = vmatprep.subr.bf16.mxu0 0
      %970 = vmatpush1.bf16.msra.mxu0 0
      %971 = vmatprep.subr.bf16.mxu0 0
      %972 = vmatpush1.bf16.msra.mxu0 0
      %973 = vmatprep.subr.bf16.mxu0 0
      %974 = vmatpush1.bf16.msra.mxu0 0
      %975 = vmatprep.subr.bf16.mxu0 0
      %976 = vmatpush1.bf16.msra.mxu0 0
      %977 = vmatprep.subr.bf16.mxu0 0
      %978 = vmatpush1.bf16.msra.mxu0 0
      %979 = vmatprep.subr.bf16.mxu0 0
      %980 = vmatpush1.bf16.msra.mxu0 0
      %981 = vmatprep.subr.bf16.mxu0 0
      %982 = vmatpush1.bf16.msra.mxu0 0
      %983 = vmatprep.subr.bf16.mxu0 0
      %984 = vmatpush1.bf16.msra.mxu0 0
      %985 = vmatprep.subr.bf16.mxu0 0
      %986 = vmatpush1.bf16.msra.mxu0 0
      %987 = vmatprep.mubr.bf16.mxu0 0
      %988 = vmatmul.mubr.bf16.gmra.mrb[0].mxu0 %v953
      %v989 = vpop.f32.mrb[0].mxu0
      %v990 = vadd.f32 0.0, %v989
      %v991 = vpop.f32.mrb[0].mxu0
      %v992 = vadd.f32 0.0, %v991
      %v993 = vpop.f32.mrb[0].mxu0
      %v994 = vadd.f32 0.0, %v993
      %v995 = vpop.f32.mrb[0].mxu0
      %v996 = vadd.f32 0.0, %v995
      %997 = vdwg.mxu0
      %998 = vmatprep.subr.bf16.mxu0 0
      %999 = vmatpush1.bf16.msra.mxu0 %v934
      %1000 = vmatprep.subr.bf16.mxu0 0
      %1001 = vmatpush1.bf16.msra.mxu0 %v940
      %1002 = vmatprep.subr.bf16.mxu0 0
      %1003 = vmatpush1.bf16.msra.mxu0 0
      %1004 = vmatprep.subr.bf16.mxu0 0
      %1005 = vmatpush1.bf16.msra.mxu0 0
      %1006 = vmatprep.subr.bf16.mxu0 0
      %1007 = vmatpush1.bf16.msra.mxu0 0
      %1008 = vmatprep.subr.bf16.mxu0 0
      %1009 = vmatpush1.bf16.msra.mxu0 0
      %1010 = vmatprep.subr.bf16.mxu0 0
      %1011 = vmatpush1.bf16.msra.mxu0 0
      %1012 = vmatprep.subr.bf16.mxu0 0
      %1013 = vmatpush1.bf16.msra.mxu0 0
      %1014 = vmatprep.subr.bf16.mxu0 0
      %1015 = vmatpush1.bf16.msra.mxu0 0
      %1016 = vmatprep.subr.bf16.mxu0 0
      %1017 = vmatpush1.bf16.msra.mxu0 0
      %1018 = vmatprep.subr.bf16.mxu0 0
      %1019 = vmatpush1.bf16.msra.mxu0 0
      %1020 = vmatprep.subr.bf16.mxu0 0
      %1021 = vmatpush1.bf16.msra.mxu0 0
      %1022 = vmatprep.subr.bf16.mxu0 0
      %1023 = vmatpush1.bf16.msra.mxu0 0
      %1024 = vmatprep.subr.bf16.mxu0 0
      %1025 = vmatpush1.bf16.msra.mxu0 0
      %1026 = vmatprep.subr.bf16.mxu0 0
      %1027 = vmatpush1.bf16.msra.mxu0 0
      %1028 = vmatprep.subr.bf16.mxu0 0
      %1029 = vmatpush1.bf16.msra.mxu0 0
      %1030 = vmatprep.mubr.bf16.mxu0 0
      %1031 = vmatmul.mubr.bf16.gmra.mrb[0].mxu0 %v953
      %v1032 = vpop.f32.mrb[0].mxu0
      %v1033 = vadd.f32 0.0, %v1032
      %v1034 = vpop.f32.mrb[0].mxu0
      %v1035 = vpop.f32.mrb[0].mxu0
      %v1036 = vadd.f32 0.0, %v1035
      %v1037 = vpop.f32.mrb[0].mxu0
      %1038 = vdwg.mxu0
      %v1039 = vadd.f32 %v915, %v990
      %v1040 = vadd.f32 %v916, %v992
      %v1041 = vadd.f32 %v917, %v1033
      %v1042 = vadd.f32 %v918, %v994
      %v1043 = vadd.f32 %v919, %v996
      %v1044 = vadd.f32 %v920, %v1036
      %s1045 = scalar_lea.vmem %s0, 56
      %v1046 = vld [vmem:[%s1045] sm:$0xf]
      %v1047 = vld [vmem:[%s1045 + $0x4] sm:$0xf]
      %v1050 = vunpack.c.l.b16 %v1046
      %v1051 = vunpack.c.l.b16 %v1047
      %v1052 = vpack.c.b16 %v1051, %v1050
      %1053 = vrot.lane.b32.xlu0 %v210, 91
      %v1054 = vpop.permute.xlu0 %1053
      %1055 = vrot.lane.b32.xlu0 %v211, 91
      %v1056 = vpop.permute.xlu0 %1055
      %1057 = vrot.lane.b32.xlu0 %v212, 91
      %v1058 = vpop.permute.xlu0 %1057
      %1059 = vrot.lane.b32.xlu0 %v213, 91
      %v1060 = vpop.permute.xlu0 %1059
      %1061 = vrot.lane.b32.xlu0 %v214, 91
      %v1062 = vpop.permute.xlu0 %1061
      %1063 = vrot.lane.b32.xlu0 %v215, 91
      %v1064 = vpop.permute.xlu0 %1063
      %vm1065 = vcmask 744448
      %v1066 = vsel %vm1065, %v1054, %v1056
      %v1067 = vsel %vm1065, %v1056, %v1058
      %v1068 = vsel %vm1065, %v1060, %v1062
      %v1069 = vsel %vm1065, %v1062, %v1064
      %v1077 = vsel %vm239, %v1052, 0
      %1079 = vmatprep.subr.bf16.mxu0 %v1067
      %1080 = vmatpush1.bf16.msra.mxu0 %v1066
      %1081 = vmatprep.subr.bf16.mxu0 %v1069
      %1082 = vmatpush1.bf16.msra.mxu0 %v1068
      %1083 = vmatprep.subr.bf16.mxu0 0
      %1084 = vmatpush1.bf16.msra.mxu0 0
      %1085 = vmatprep.subr.bf16.mxu0 0
      %1086 = vmatpush1.bf16.msra.mxu0 0
      %1087 = vmatprep.subr.bf16.mxu0 0
      %1088 = vmatpush1.bf16.msra.mxu0 0
      %1089 = vmatprep.subr.bf16.mxu0 0
      %1090 = vmatpush1.bf16.msra.mxu0 0
      %1091 = vmatprep.subr.bf16.mxu0 0
      %1092 = vmatpush1.bf16.msra.mxu0 0
      %1093 = vmatprep.subr.bf16.mxu0 0
      %1094 = vmatpush1.bf16.msra.mxu0 0
      %1095 = vmatprep.subr.bf16.mxu0 0
      %1096 = vmatpush1.bf16.msra.mxu0 0
      %1097 = vmatprep.subr.bf16.mxu0 0
      %1098 = vmatpush1.bf16.msra.mxu0 0
      %1099 = vmatprep.subr.bf16.mxu0 0
      %1100 = vmatpush1.bf16.msra.mxu0 0
      %1101 = vmatprep.subr.bf16.mxu0 0
      %1102 = vmatpush1.bf16.msra.mxu0 0
      %1103 = vmatprep.subr.bf16.mxu0 0
      %1104 = vmatpush1.bf16.msra.mxu0 0
      %1105 = vmatprep.subr.bf16.mxu0 0
      %1106 = vmatpush1.bf16.msra.mxu0 0
      %1107 = vmatprep.subr.bf16.mxu0 0
      %1108 = vmatpush1.bf16.msra.mxu0 0
      %1109 = vmatprep.subr.bf16.mxu0 0
      %1110 = vmatpush1.bf16.msra.mxu0 0
      %1111 = vmatprep.mubr.bf16.mxu0 0
      %1112 = vmatmul.mubr.bf16.gmra.mrb[0].mxu0 %v1077
      %v1113 = vpop.f32.mrb[0].mxu0
      %v1114 = vadd.f32 0.0, %v1113
      %v1115 = vpop.f32.mrb[0].mxu0
      %v1116 = vadd.f32 0.0, %v1115
      %v1117 = vpop.f32.mrb[0].mxu0
      %v1118 = vadd.f32 0.0, %v1117
      %v1119 = vpop.f32.mrb[0].mxu0
      %v1120 = vadd.f32 0.0, %v1119
      %1121 = vdwg.mxu0
      %1122 = vmatprep.subr.bf16.mxu0 0
      %1123 = vmatpush1.bf16.msra.mxu0 %v1058
      %1124 = vmatprep.subr.bf16.mxu0 0
      %1125 = vmatpush1.bf16.msra.mxu0 %v1064
      %1126 = vmatprep.subr.bf16.mxu0 0
      %1127 = vmatpush1.bf16.msra.mxu0 0
      %1128 = vmatprep.subr.bf16.mxu0 0
      %1129 = vmatpush1.bf16.msra.mxu0 0
      %1130 = vmatprep.subr.bf16.mxu0 0
      %1131 = vmatpush1.bf16.msra.mxu0 0
      %1132 = vmatprep.subr.bf16.mxu0 0
      %1133 = vmatpush1.bf16.msra.mxu0 0
      %1134 = vmatprep.subr.bf16.mxu0 0
      %1135 = vmatpush1.bf16.msra.mxu0 0
      %1136 = vmatprep.subr.bf16.mxu0 0
      %1137 = vmatpush1.bf16.msra.mxu0 0
      %1138 = vmatprep.subr.bf16.mxu0 0
      %1139 = vmatpush1.bf16.msra.mxu0 0
      %1140 = vmatprep.subr.bf16.mxu0 0
      %1141 = vmatpush1.bf16.msra.mxu0 0
      %1142 = vmatprep.subr.bf16.mxu0 0
      %1143 = vmatpush1.bf16.msra.mxu0 0
      %1144 = vmatprep.subr.bf16.mxu0 0
      %1145 = vmatpush1.bf16.msra.mxu0 0
      %1146 = vmatprep.subr.bf16.mxu0 0
      %1147 = vmatpush1.bf16.msra.mxu0 0
      %1148 = vmatprep.subr.bf16.mxu0 0
      %1149 = vmatpush1.bf16.msra.mxu0 0
      %1150 = vmatprep.subr.bf16.mxu0 0
      %1151 = vmatpush1.bf16.msra.mxu0 0
      %1152 = vmatprep.subr.bf16.mxu0 0
      %1153 = vmatpush1.bf16.msra.mxu0 0
      %1154 = vmatprep.mubr.bf16.mxu0 0
      %1155 = vmatmul.mubr.bf16.gmra.mrb[0].mxu0 %v1077
      %v1156 = vpop.f32.mrb[0].mxu0
      %v1157 = vadd.f32 0.0, %v1156
      %v1158 = vpop.f32.mrb[0].mxu0
      %v1159 = vpop.f32.mrb[0].mxu0
      %v1160 = vadd.f32 0.0, %v1159
      %v1161 = vpop.f32.mrb[0].mxu0
      %1162 = vdwg.mxu0
      %v1163 = vadd.f32 %v1039, %v1114
      %v1164 = vadd.f32 %v1040, %v1116
      %v1165 = vadd.f32 %v1041, %v1157
      %v1166 = vadd.f32 %v1042, %v1118
      %v1167 = vadd.f32 %v1043, %v1120
      %v1168 = vadd.f32 %v1044, %v1160
      %s1169 = scalar_lea.vmem %s0, 64
      %v1170 = vld [vmem:[%s1169] sm:$0xf]
      %v1171 = vld [vmem:[%s1169 + $0x4] sm:$0xf]
      %v1174 = vunpack.c.l.b16 %v1170
      %v1175 = vunpack.c.l.b16 %v1171
      %v1176 = vpack.c.b16 %v1175, %v1174
      %1177 = vrot.lane.b32.xlu0 %v210, 90
      %v1178 = vpop.permute.xlu0 %1177
      %1179 = vrot.lane.b32.xlu0 %v211, 90
      %v1180 = vpop.permute.xlu0 %1179
      %1181 = vrot.lane.b32.xlu0 %v212, 90
      %v1182 = vpop.permute.xlu0 %1181
      %1183 = vrot.lane.b32.xlu0 %v213, 90
      %v1184 = vpop.permute.xlu0 %1183
      %1185 = vrot.lane.b32.xlu0 %v214, 90
      %v1186 = vpop.permute.xlu0 %1185
      %1187 = vrot.lane.b32.xlu0 %v215, 90
      %v1188 = vpop.permute.xlu0 %1187
      %vm1189 = vcmask 736256
      %v1190 = vsel %vm1189, %v1178, %v1180
      %v1191 = vsel %vm1189, %v1180, %v1182
      %v1192 = vsel %vm1189, %v1184, %v1186
      %v1193 = vsel %vm1189, %v1186, %v1188
      %v1201 = vsel %vm239, %v1176, 0
      %1203 = vmatprep.subr.bf16.mxu0 %v1191
      %1204 = vmatpush1.bf16.msra.mxu0 %v1190
      %1205 = vmatprep.subr.bf16.mxu0 %v1193
      %1206 = vmatpush1.bf16.msra.mxu0 %v1192
      %1207 = vmatprep.subr.bf16.mxu0 0
      %1208 = vmatpush1.bf16.msra.mxu0 0
      %1209 = vmatprep.subr.bf16.mxu0 0
      %1210 = vmatpush1.bf16.msra.mxu0 0
      %1211 = vmatprep.subr.bf16.mxu0 0
      %1212 = vmatpush1.bf16.msra.mxu0 0
      %1213 = vmatprep.subr.bf16.mxu0 0
      %1214 = vmatpush1.bf16.msra.mxu0 0
      %1215 = vmatprep.subr.bf16.mxu0 0
      %1216 = vmatpush1.bf16.msra.mxu0 0
      %1217 = vmatprep.subr.bf16.mxu0 0
      %1218 = vmatpush1.bf16.msra.mxu0 0
      %1219 = vmatprep.subr.bf16.mxu0 0
      %1220 = vmatpush1.bf16.msra.mxu0 0
      %1221 = vmatprep.subr.bf16.mxu0 0
      %1222 = vmatpush1.bf16.msra.mxu0 0
      %1223 = vmatprep.subr.bf16.mxu0 0
      %1224 = vmatpush1.bf16.msra.mxu0 0
      %1225 = vmatprep.subr.bf16.mxu0 0
      %1226 = vmatpush1.bf16.msra.mxu0 0
      %1227 = vmatprep.subr.bf16.mxu0 0
      %1228 = vmatpush1.bf16.msra.mxu0 0
      %1229 = vmatprep.subr.bf16.mxu0 0
      %1230 = vmatpush1.bf16.msra.mxu0 0
      %1231 = vmatprep.subr.bf16.mxu0 0
      %1232 = vmatpush1.bf16.msra.mxu0 0
      %1233 = vmatprep.subr.bf16.mxu0 0
      %1234 = vmatpush1.bf16.msra.mxu0 0
      %1235 = vmatprep.mubr.bf16.mxu0 0
      %1236 = vmatmul.mubr.bf16.gmra.mrb[0].mxu0 %v1201
      %v1237 = vpop.f32.mrb[0].mxu0
      %v1238 = vadd.f32 0.0, %v1237
      %v1239 = vpop.f32.mrb[0].mxu0
      %v1240 = vadd.f32 0.0, %v1239
      %v1241 = vpop.f32.mrb[0].mxu0
      %v1242 = vadd.f32 0.0, %v1241
      %v1243 = vpop.f32.mrb[0].mxu0
      %v1244 = vadd.f32 0.0, %v1243
      %1245 = vdwg.mxu0
      %1246 = vmatprep.subr.bf16.mxu0 0
      %1247 = vmatpush1.bf16.msra.mxu0 %v1182
      %1248 = vmatprep.subr.bf16.mxu0 0
      %1249 = vmatpush1.bf16.msra.mxu0 %v1188
      %1250 = vmatprep.subr.bf16.mxu0 0
      %1251 = vmatpush1.bf16.msra.mxu0 0
      %1252 = vmatprep.subr.bf16.mxu0 0
      %1253 = vmatpush1.bf16.msra.mxu0 0
      %1254 = vmatprep.subr.bf16.mxu0 0
      %1255 = vmatpush1.bf16.msra.mxu0 0
      %1256 = vmatprep.subr.bf16.mxu0 0
      %1257 = vmatpush1.bf16.msra.mxu0 0
      %1258 = vmatprep.subr.bf16.mxu0 0
      %1259 = vmatpush1.bf16.msra.mxu0 0
      %1260 = vmatprep.subr.bf16.mxu0 0
      %1261 = vmatpush1.bf16.msra.mxu0 0
      %1262 = vmatprep.subr.bf16.mxu0 0
      %1263 = vmatpush1.bf16.msra.mxu0 0
      %1264 = vmatprep.subr.bf16.mxu0 0
      %1265 = vmatpush1.bf16.msra.mxu0 0
      %1266 = vmatprep.subr.bf16.mxu0 0
      %1267 = vmatpush1.bf16.msra.mxu0 0
      %1268 = vmatprep.subr.bf16.mxu0 0
      %1269 = vmatpush1.bf16.msra.mxu0 0
      %1270 = vmatprep.subr.bf16.mxu0 0
      %1271 = vmatpush1.bf16.msra.mxu0 0
      %1272 = vmatprep.subr.bf16.mxu0 0
      %1273 = vmatpush1.bf16.msra.mxu0 0
      %1274 = vmatprep.subr.bf16.mxu0 0
      %1275 = vmatpush1.bf16.msra.mxu0 0
      %1276 = vmatprep.subr.bf16.mxu0 0
      %1277 = vmatpush1.bf16.msra.mxu0 0
      %1278 = vmatprep.mubr.bf16.mxu0 0
      %1279 = vmatmul.mubr.bf16.gmra.mrb[0].mxu0 %v1201
      %v1280 = vpop.f32.mrb[0].mxu0
      %v1281 = vadd.f32 0.0, %v1280
      %v1282 = vpop.f32.mrb[0].mxu0
      %v1283 = vpop.f32.mrb[0].mxu0
      %v1284 = vadd.f32 0.0, %v1283
      %v1285 = vpop.f32.mrb[0].mxu0
      %1286 = vdwg.mxu0
      %v1287 = vadd.f32 %v1163, %v1238
      %v1288 = vadd.f32 %v1164, %v1240
      %v1289 = vadd.f32 %v1165, %v1281
      %v1290 = vadd.f32 %v1166, %v1242
      %v1291 = vadd.f32 %v1167, %v1244
      %v1292 = vadd.f32 %v1168, %v1284
      %v1293 = vmul.f32 %v1287, 0.2
      %v1294 = vmul.f32 %v1288, 0.2
      %v1295 = vmul.f32 %v1289, 0.2
      %v1296 = vmul.f32 %v1290, 0.2
      %v1297 = vmul.f32 %v1291, 0.2
      %v1298 = vmul.f32 %v1292, 0.2
      %v1299 = vmax.f32 %v1287, %v1293
      %v1300 = vmax.f32 %v1288, %v1294
      %v1301 = vmax.f32 %v1289, %v1295
      %v1302 = vmax.f32 %v1290, %v1296
      %v1303 = vmax.f32 %v1291, %v1297
      %v1304 = vmax.f32 %v1292, %v1298
      %v1305 = vpack.c.bf16 %v1302, %v1299
      %v1306 = vpack.c.bf16 %v1303, %v1300
      %v1307 = vpack.c.bf16 %v1304, %v1301
      %v1308 = vld [vmem:[%s1] sm:$0xf]
      %v1309 = vld [vmem:[%s1 + $0x4] sm:$0xf]
      %v1310 = vld [vmem:[%s1 + $0x8] sm:$0xf]
      %v1311 = vld [vmem:[%s1 + $0xc] sm:$0xf]
      %v1316 = vunpack.c.l.b16 %v1308
      %v1317 = vunpack.c.l.b16 %v1309
      %v1318 = vunpack.c.l.b16 %v1310
      %v1319 = vunpack.c.l.b16 %v1311
      %v1320 = vpack.c.b16 %v1317, %v1316
      %v1321 = vpack.c.b16 %v1319, %v1318
      %vm1322 = vcmask 130048
      %v1324 = vsel %vm1322, %v1320, 0
      %v1327 = vsel %vm1322, %v1321, 0
      %1329 = vmatprep.subr.bf16.mxu0 %v1306
      %1330 = vmatpush1.bf16.msra.mxu0 %v1305
      %1331 = vmatprep.subr.bf16.mxu0 0
      %1332 = vmatpush1.bf16.msra.mxu0 0
      %1333 = vmatprep.subr.bf16.mxu0 0
      %1334 = vmatpush1.bf16.msra.mxu0 0
      %1335 = vmatprep.subr.bf16.mxu0 0
      %1336 = vmatpush1.bf16.msra.mxu0 0
      %1337 = vmatprep.subr.bf16.mxu0 0
      %1338 = vmatpush1.bf16.msra.mxu0 0
      %1339 = vmatprep.subr.bf16.mxu0 0
      %1340 = vmatpush1.bf16.msra.mxu0 0
      %1341 = vmatprep.subr.bf16.mxu0 0
      %1342 = vmatpush1.bf16.msra.mxu0 0
      %1343 = vmatprep.subr.bf16.mxu0 0
      %1344 = vmatpush1.bf16.msra.mxu0 0
      %1345 = vmatprep.subr.bf16.mxu0 0
      %1346 = vmatpush1.bf16.msra.mxu0 0
      %1347 = vmatprep.subr.bf16.mxu0 0
      %1348 = vmatpush1.bf16.msra.mxu0 0
      %1349 = vmatprep.subr.bf16.mxu0 0
      %1350 = vmatpush1.bf16.msra.mxu0 0
      %1351 = vmatprep.subr.bf16.mxu0 0
      %1352 = vmatpush1.bf16.msra.mxu0 0
      %1353 = vmatprep.subr.bf16.mxu0 0
      %1354 = vmatpush1.bf16.msra.mxu0 0
      %1355 = vmatprep.subr.bf16.mxu0 0
      %1356 = vmatpush1.bf16.msra.mxu0 0
      %1357 = vmatprep.subr.bf16.mxu0 0
      %1358 = vmatpush1.bf16.msra.mxu0 0
      %1359 = vmatprep.subr.bf16.mxu0 0
      %1360 = vmatpush1.bf16.msra.mxu0 0
      %1361 = vmatprep.mubr.bf16.mxu0 0
      %1362 = vmatmul.mubr.bf16.gmra.mrb[0].mxu0 %v1324
      %v1363 = vpop.f32.mrb[0].mxu0
      %v1364 = vadd.f32 0.0, %v1363
      %v1365 = vpop.f32.mrb[0].mxu0
      %v1366 = vadd.f32 0.0, %v1365
      %v1367 = vpop.f32.mrb[0].mxu0
      %v1368 = vadd.f32 0.0, %v1367
      %v1369 = vpop.f32.mrb[0].mxu0
      %v1370 = vadd.f32 0.0, %v1369
      %1371 = vmatprep.mubr.bf16.mxu0 0
      %1372 = vmatmul.mubr.bf16.gmra.mrb[0].mxu0 %v1327
      %v1373 = vpop.f32.mrb[0].mxu0
      %v1374 = vadd.f32 0.0, %v1373
      %v1375 = vpop.f32.mrb[0].mxu0
      %v1376 = vadd.f32 0.0, %v1375
      %v1377 = vpop.f32.mrb[0].mxu0
      %v1378 = vadd.f32 0.0, %v1377
      %v1379 = vpop.f32.mrb[0].mxu0
      %v1380 = vadd.f32 0.0, %v1379
      %1381 = vdwg.mxu0
      %1382 = vmatprep.subr.bf16.mxu0 0
      %1383 = vmatpush1.bf16.msra.mxu0 %v1307
      %1384 = vmatprep.subr.bf16.mxu0 0
      %1385 = vmatpush1.bf16.msra.mxu0 0
      %1386 = vmatprep.subr.bf16.mxu0 0
      %1387 = vmatpush1.bf16.msra.mxu0 0
      %1388 = vmatprep.subr.bf16.mxu0 0
      %1389 = vmatpush1.bf16.msra.mxu0 0
      %1390 = vmatprep.subr.bf16.mxu0 0
      %1391 = vmatpush1.bf16.msra.mxu0 0
      %1392 = vmatprep.subr.bf16.mxu0 0
      %1393 = vmatpush1.bf16.msra.mxu0 0
      %1394 = vmatprep.subr.bf16.mxu0 0
      %1395 = vmatpush1.bf16.msra.mxu0 0
      %1396 = vmatprep.subr.bf16.mxu0 0
      %1397 = vmatpush1.bf16.msra.mxu0 0
      %1398 = vmatprep.subr.bf16.mxu0 0
      %1399 = vmatpush1.bf16.msra.mxu0 0
      %1400 = vmatprep.subr.bf16.mxu0 0
      %1401 = vmatpush1.bf16.msra.mxu0 0
      %1402 = vmatprep.subr.bf16.mxu0 0
      %1403 = vmatpush1.bf16.msra.mxu0 0
      %1404 = vmatprep.subr.bf16.mxu0 0
      %1405 = vmatpush1.bf16.msra.mxu0 0
      %1406 = vmatprep.subr.bf16.mxu0 0
      %1407 = vmatpush1.bf16.msra.mxu0 0
      %1408 = vmatprep.subr.bf16.mxu0 0
      %1409 = vmatpush1.bf16.msra.mxu0 0
      %1410 = vmatprep.subr.bf16.mxu0 0
      %1411 = vmatpush1.bf16.msra.mxu0 0
      %1412 = vmatprep.subr.bf16.mxu0 0
      %1413 = vmatpush1.bf16.msra.mxu0 0
      %1414 = vmatprep.mubr.bf16.mxu0 0
      %1415 = vmatmul.mubr.bf16.gmra.mrb[0].mxu0 %v1324
      %v1416 = vpop.f32.mrb[0].mxu0
      %v1417 = vadd.f32 0.0, %v1416
      %v1418 = vpop.f32.mrb[0].mxu0
      %v1419 = vpop.f32.mrb[0].mxu0
      %v1420 = vadd.f32 0.0, %v1419
      %v1421 = vpop.f32.mrb[0].mxu0
      %1422 = vmatprep.mubr.bf16.mxu0 0
      %1423 = vmatmul.mubr.bf16.gmra.mrb[0].mxu0 %v1327
      %v1424 = vpop.f32.mrb[0].mxu0
      %v1425 = vadd.f32 0.0, %v1424
      %v1426 = vpop.f32.mrb[0].mxu0
      %v1427 = vpop.f32.mrb[0].mxu0
      %v1428 = vadd.f32 0.0, %v1427
      %v1429 = vpop.f32.mrb[0].mxu0
      %1430 = vdwg.mxu0
      %v1431 = vmul.f32 %v1364, 0.2
      %v1432 = vmul.f32 %v1366, 0.2
      %v1433 = vmul.f32 %v1417, 0.2
      %v1434 = vmul.f32 %v1368, 0.2
      %v1435 = vmul.f32 %v1370, 0.2
      %v1436 = vmul.f32 %v1420, 0.2
      %v1437 = vmul.f32 %v1374, 0.2
      %v1438 = vmul.f32 %v1376, 0.2
      %v1439 = vmul.f32 %v1425, 0.2
      %v1440 = vmul.f32 %v1378, 0.2
      %v1441 = vmul.f32 %v1380, 0.2
      %v1442 = vmul.f32 %v1428, 0.2
      %v1443 = vmax.f32 %v1364, %v1431
      %v1444 = vmax.f32 %v1366, %v1432
      %v1445 = vmax.f32 %v1417, %v1433
      %v1446 = vmax.f32 %v1368, %v1434
      %v1447 = vmax.f32 %v1370, %v1435
      %v1448 = vmax.f32 %v1420, %v1436
      %v1449 = vmax.f32 %v1374, %v1437
      %v1450 = vmax.f32 %v1376, %v1438
      %v1451 = vmax.f32 %v1425, %v1439
      %v1452 = vmax.f32 %v1378, %v1440
      %v1453 = vmax.f32 %v1380, %v1441
      %v1454 = vmax.f32 %v1428, %v1442
      %1455 = vst [vmem:[%s170] sm:$0xff] %v1443
      %1456 = vst [vmem:[%s170 + $0x8] sm:$0xff] %v1444
      %1457 = vst.msk [vmem:[%s170 + $0x10] sm:$0xff] %vm239, %v1445
      %1458 = vst [vmem:[%s170 + $0x18] sm:$0xff] %v1446
      %1459 = vst [vmem:[%s170 + $0x20] sm:$0xff] %v1447
      %1460 = vst.msk [vmem:[%s170 + $0x28] sm:$0xff] %vm239, %v1448
      %1461 = vst [vmem:[%s170 + $0x30] sm:$0xff] %v1449
      %1462 = vst [vmem:[%s170 + $0x38] sm:$0xff] %v1450
      %1463 = vst.msk [vmem:[%s170 + $0x40] sm:$0xff] %vm239, %v1451
      %1464 = vst [vmem:[%s170 + $0x48] sm:$0xff] %v1452
      %1465 = vst [vmem:[%s170 + $0x50] sm:$0xff] %v1453
      %1466 = vst.msk [vmem:[%s170 + $0x58] sm:$0xff] %vm239, %v1454
      %p1467 = scmp.lt.s32.totalorder %s14, 1
      %s1468 = scalar_select %p1467, %s14, 1
      %s1469 = smul.addr %s1468, 12
      %s1470 = smul.addr %s1469, 8
      %s1471 = scalar_lea.vmem %s3, %s1470
      // Predicated region
      $region33: #{branch_spa.5} parent=31 // pred_check
        %p1472 = pneg %p100
      $region34: #{branch_spa.5} parent=31 // pred_check_branch
        %1474 = sbr.rel (%p1472) target = $region36
      $region35: #{branch_spa.5} parent=31 // pred_region
        _
      $region36: #{branch_spa.5} parent=31 // pred_fallthru
        _
    $region32: #{branch_spa.5} parent=5 // pred_fallthru
      _
    %p1475 = scmp.le.s32.totalorder 2, %s9
    // Predicated region
    $region37: #{branch_spa.5} parent=5 // pred_check
      %p1476 = pneg %p1475
    $region38: #{branch_spa.5} parent=5 // pred_check_branch
      %1478 = sbr.rel (%p1476) target = $region40
    $region39: #{branch_spa.5} parent=5 // pred_region
      %s1479 = ssub.s32 %s9, 2
      // Predicated region
      $region41: #{branch_spa.5} parent=39 // pred_check
        %p1480 = pneg %p106
      $region42: #{branch_spa.5} parent=39 // pred_check_branch
        %1482 = sbr.rel (%p1480) target = $region44
      $region43: #{branch_spa.5} parent=39 // pred_region
        %p1483 = scmp.lt.s32.totalorder %s15, 1
        %s1484 = scalar_select %p1483, %s15, 1
        %s1485 = smul.addr %s1484, 12
        %s1486 = smul.addr %s1485, 8
        %s1487 = scalar_lea.vmem %s3, %s1486
      $region44: #{branch_spa.5} parent=39 // pred_fallthru
        _
    $region40: #{branch_spa.5} parent=5 // pred_fallthru
      _
  $region6: #{branch_spa.5} parent=0 // loop_footer
    %s13 = sadd.s32 1, %s9
  $region7: #{branch_spa.5} parent=0 // loop_footer_branch
    %8 = sbr.rel target = $region3
  $region8: #{branch_spa.5} parent=0 // loop_exit
    _

// kernel: branch_spa.6
$region0: #{branch_spa.6}
  #allocation0 [shape = 'u32[]', space=smem, size = 0x4, offset = 0x4, fixed_abs, tag = 'smem constant byte address 0x4 - core index']
  #allocation1 [shape = 'u32[144,128]{1,0:T(1,128)}', space=vmem, size = 0x12000, scoped, tag = 'internal scratch']
  %s0 = inlined_call_operand.vmem [shape: bf16[2,16,2048], index: 0, kind: input, shape index: {}]
  %s1 = inlined_call_operand.vmem [shape: bf16[2,16,32,64], index: 1, kind: input, shape index: {}]
  %s2 = inlined_call_operand.vmem [shape: f32[2,16,2048], index: 2, kind: output, shape index: {0}]
  %s3 = inlined_call_operand.vmem [shape: f32[2,16,64,32], index: 3, kind: output, shape index: {1}]
  %4 = xla_tuple %s2, %s3
  %s5 = sld [smem:[#allocation0]]
  $region49: #{branch_spa.6} parent=0
    _
  %s7 = ssub.s32 1, %s5
  %s8 = scalar_select 0, %s7, %s5
  loop: start=0, step=1, limit=4
  $region2: #{branch_spa.6} parent=0 // loop_pre_header
    _
  $region3: #{branch_spa.6} parent=0 // loop_header
    %s10 = sphi 0, %s14
    %p11 = scmp.ge.s32.totalorder %s10, 4
    %s20 = sphi 0, %s22
    %s23 = sphi 0, %s20
    %s24 = sphi 0, %s23
    %s40 = sphi 0, %s24
    %s46 = sphi 0, %s48
    %s49 = sphi 0, %s46
    %s50 = sphi 0, %s49
    %s66 = sphi 0, %s50
    %s72 = sphi 0, %s74
    %s75 = sphi 0, %s72
    %s76 = sphi 0, %s75
    %s92 = sphi 0, %s76
    %s98 = sphi 0, %s100
    %s101 = sphi 0, %s98
    %s102 = sphi 0, %s101
    %s118 = sphi 0, %s102
  $region4: #{branch_spa.6} parent=0 // loop_header_branch
    %13 = sbr.rel (%p11) target = $region8
  $region5: #{branch_spa.6} parent=0 // loop_body
    %s15 = ssub.s32 %s10, 1
    %s16 = ssub.s32 %s10, 2
    %s17 = sadd.s32 %s10, 1
    %s18 = ssub.s32 %s10, %s17
    %p19 = scmp.eq.s32.totalorder %s18, 0
    %s21 = sadd.s32 %s20, 1
    %s22 = scalar_select %p19, %s20, %s21
    %p25 = pneg %p19
    %p26 = scmp.eq.s32.totalorder %s10, 1
    %p27 = por %p25, %p26
    %p28 = scmp.ne.s32.totalorder %s20, %s23
    %p29 = scmp.eq.s32.totalorder %s10, 0
    %p30 = por %p28, %p29
    %p31 = scmp.ne.s32.totalorder %s20, %s23
    %p32 = scmp.eq.s32.totalorder %s15, 1
    %p33 = por %p31, %p32
    %p34 = scmp.ne.s32.totalorder %s23, %s24
    %p35 = scmp.eq.s32.totalorder %s15, 0
    %p36 = por %p34, %p35
    %p37 = scmp.ne.s32.totalorder %s23, %s24
    %p38 = scmp.eq.s32.totalorder %s16, 1
    %p39 = por %p37, %p38
    %p41 = scmp.ne.s32.totalorder %s24, %s40
    %p42 = scmp.eq.s32.totalorder %s16, 0
    %p43 = por %p41, %p42
    %s44 = ssub.s32 %s10, %s17
    %p45 = scmp.eq.s32.totalorder %s44, 0
    %s47 = sadd.s32 %s46, 1
    %s48 = scalar_select %p45, %s46, %s47
    %p51 = pneg %p45
    %p52 = scmp.eq.s32.totalorder %s10, 1
    %p53 = por %p51, %p52
    %p54 = scmp.ne.s32.totalorder %s46, %s49
    %p55 = scmp.eq.s32.totalorder %s10, 0
    %p56 = por %p54, %p55
    %p57 = scmp.ne.s32.totalorder %s46, %s49
    %p58 = scmp.eq.s32.totalorder %s15, 1
    %p59 = por %p57, %p58
    %p60 = scmp.ne.s32.totalorder %s49, %s50
    %p61 = scmp.eq.s32.totalorder %s15, 0
    %p62 = por %p60, %p61
    %p63 = scmp.ne.s32.totalorder %s49, %s50
    %p64 = scmp.eq.s32.totalorder %s16, 1
    %p65 = por %p63, %p64
    %p67 = scmp.ne.s32.totalorder %s50, %s66
    %p68 = scmp.eq.s32.totalorder %s16, 0
    %p69 = por %p67, %p68
    %s70 = ssub.s32 %s10, %s17
    %p71 = scmp.eq.s32.totalorder %s70, 0
    %s73 = sadd.s32 %s72, 1
    %s74 = scalar_select %p71, %s72, %s73
    %p77 = pneg %p71
    %p78 = scmp.eq.s32.totalorder %s10, 1
    %p79 = por %p77, %p78
    %p80 = scmp.ne.s32.totalorder %s72, %s75
    %p81 = scmp.eq.s32.totalorder %s10, 0
    %p82 = por %p80, %p81
    %p83 = scmp.ne.s32.totalorder %s72, %s75
    %p84 = scmp.eq.s32.totalorder %s15, 1
    %p85 = por %p83, %p84
    %p86 = scmp.ne.s32.totalorder %s75, %s76
    %p87 = scmp.eq.s32.totalorder %s15, 0
    %p88 = por %p86, %p87
    %p89 = scmp.ne.s32.totalorder %s75, %s76
    %p90 = scmp.eq.s32.totalorder %s16, 1
    %p91 = por %p89, %p90
    %p93 = scmp.ne.s32.totalorder %s76, %s92
    %p94 = scmp.eq.s32.totalorder %s16, 0
    %p95 = por %p93, %p94
    %s96 = ssub.s32 %s10, %s17
    %p97 = scmp.eq.s32.totalorder %s96, 0
    %s99 = sadd.s32 %s98, 1
    %s100 = scalar_select %p97, %s98, %s99
    %p103 = pneg %p97
    %p104 = scmp.eq.s32.totalorder %s10, 1
    %p105 = por %p103, %p104
    %p106 = scmp.ne.s32.totalorder %s98, %s101
    %p107 = scmp.eq.s32.totalorder %s10, 0
    %p108 = por %p106, %p107
    %p109 = scmp.ne.s32.totalorder %s98, %s101
    %p110 = scmp.eq.s32.totalorder %s15, 1
    %p111 = por %p109, %p110
    %p112 = scmp.ne.s32.totalorder %s101, %s102
    %p113 = scmp.eq.s32.totalorder %s15, 0
    %p114 = por %p112, %p113
    %p115 = scmp.ne.s32.totalorder %s101, %s102
    %p116 = scmp.eq.s32.totalorder %s16, 1
    %p117 = por %p115, %p116
    %p119 = scmp.ne.s32.totalorder %s102, %s118
    %p120 = scmp.eq.s32.totalorder %s16, 0
    %p121 = por %p119, %p120
    %p122 = scmp.le.s32.totalorder 1, %s10
    %p123 = scmp.lt.s32.totalorder %s10, 3
    %p124 = pnand %p122, %p123
    %p125 = pneg %p124
    // Predicated region
    $region9: #{branch_spa.6} parent=5 // pred_check
      _
    $region10: #{branch_spa.6} parent=5 // pred_check_branch
      %127 = sbr.rel (%p124) target = $region12
    $region11: #{branch_spa.6} parent=5 // pred_region
      %s128 = ssub.s32 %s10, 1
    $region12: #{branch_spa.6} parent=5 // pred_fallthru
      _
    %p129 = scmp.lt.s32.totalorder %s10, 2
    // Predicated region
    $region13: #{branch_spa.6} parent=5 // pred_check
      %p130 = pneg %p129
    $region14: #{branch_spa.6} parent=5 // pred_check_branch
      %132 = sbr.rel (%p130) target = $region16
    $region15: #{branch_spa.6} parent=5 // pred_region
      // Predicated region
      $region17: #{branch_spa.6} parent=15 // pred_check
        %p133 = pneg %p30
      $region18: #{branch_spa.6} parent=15 // pred_check_branch
        %135 = sbr.rel (%p133) target = $region20
      $region19: #{branch_spa.6} parent=15 // pred_region
        %p136 = scmp.lt.s32.totalorder %s10, 1
        %s137 = scalar_select %p136, %s10, 1
        %s138 = smul.addr %s137, 32
        %s139 = smul.addr %s138, 4
        %s140 = scalar_lea.vmem %s0, %s139
      $region20: #{branch_spa.6} parent=15 // pred_fallthru
        _
      // Predicated region
      $region21: #{branch_spa.6} parent=15 // pred_check
        %p141 = pneg %p56
      $region22: #{branch_spa.6} parent=15 // pred_check_branch
        %143 = sbr.rel (%p141) target = $region24
      $region23: #{branch_spa.6} parent=15 // pred_region
        %p144 = scmp.lt.s32.totalorder %s10, 1
        %s145 = scalar_select %p144, %s10, 1
        %s146 = smul.addr %s145, 64
        %s147 = smul.addr %s146, 4
        %s148 = scalar_lea.vmem %s1, %s147
      $region24: #{branch_spa.6} parent=15 // pred_fallthru
        _
    $region16: #{branch_spa.6} parent=5 // pred_fallthru
      _
    %p149 = scmp.le.s32.totalorder 1, %s10
    %p150 = scmp.lt.s32.totalorder %s10, 3
    %p151 = pnand %p149, %p150
    %p152 = pneg %p151
    // Predicated region
    $region25: #{branch_spa.6} parent=5 // pred_check
      _
    $region26: #{branch_spa.6} parent=5 // pred_check_branch
      %154 = sbr.rel (%p151) target = $region28
    $region27: #{branch_spa.6} parent=5 // pred_region
      %s155 = ssub.s32 %s10, 1
      %p156 = scmp.lt.s32.totalorder %s15, 1
      %s157 = scalar_select %p156, %s15, 1
      %s158 = smul.addr %s157, 32
      %s159 = smul.addr %s158, 4
      %s160 = scalar_lea.vmem %s0, %s159
      %p161 = pneg %p36
      %p162 = pneg %p33
      %p163 = scmp.lt.s32.totalorder %s15, 1
      %s164 = scalar_select %p163, %s15, 1
      %s165 = smul.addr %s164, 64
      %s166 = smul.addr %s165, 4
      %s167 = scalar_lea.vmem %s1, %s166
      %p168 = pneg %p62
      %p169 = pneg %p59
      %p170 = pneg %p88
      %p171 = pneg %p85
      %p172 = scmp.lt.s32.totalorder %s15, 1
      %s173 = scalar_select %p172, %s15, 1
      %s174 = smul.addr %s173, 32
      %s175 = smul.addr %s174, 8
      %s176 = scalar_lea.vmem %s2, %s175
      %p177 = pneg %p114
      %p178 = pneg %p111
      %p179 = scmp.lt.s32.totalorder %s15, 1
      %s180 = scalar_select %p179, %s15, 1
      %s181 = smul.addr %s180, 128
      %s182 = smul.addr %s181, 8
      %s183 = scalar_lea.vmem %s3, %s182
      %p184 = scmp.lt.s32.totalorder %s15, 1
      %s185 = scalar_select %p184, %s15, 1
      %s186 = smul.addr %s185, 32
      %s187 = smul.addr %s186, 4
      %s188 = scalar_lea.vmem %s0, %s187
      %p189 = scmp.lt.s32.totalorder %s15, 1
      %s190 = scalar_select %p189, %s15, 1
      %s191 = smul.addr %s190, 64
      %s192 = smul.addr %s191, 4
      %s193 = scalar_lea.vmem %s1, %s192
      %p194 = scmp.lt.s32.totalorder %s15, 1
      %s195 = scalar_select %p194, %s15, 1
      %s196 = smul.addr %s195, 32
      %s197 = smul.addr %s196, 8
      %s198 = scalar_lea.vmem %s2, %s197
      %p199 = scmp.lt.s32.totalorder %s15, 1
      %s200 = scalar_select %p199, %s15, 1
      %s201 = smul.addr %s200, 128
      %s202 = smul.addr %s201, 8
      %s203 = scalar_lea.vmem %s3, %s202
      %v205 = vld [vmem:[%s188] sm:$0xff]
      %v206 = vld [vmem:[%s188 + $0x8] sm:$0xff]
      %v207 = vld [vmem:[%s188 + $0x10] sm:$0xff]
      %v208 = vld [vmem:[%s188 + $0x18] sm:$0xff]
      %v209 = vld [vmem:[%s188 + $0x20] sm:$0xff]
      %v210 = vld [vmem:[%s188 + $0x28] sm:$0xff]
      %v211 = vld [vmem:[%s188 + $0x30] sm:$0xff]
      %v212 = vld [vmem:[%s188 + $0x38] sm:$0xff]
      %v213 = vld [vmem:[%s188 + $0x40] sm:$0xff]
      %v214 = vld [vmem:[%s188 + $0x48] sm:$0xff]
      %v215 = vld [vmem:[%s188 + $0x50] sm:$0xff]
      %v216 = vld [vmem:[%s188 + $0x58] sm:$0xff]
      %v217 = vld [vmem:[%s188 + $0x60] sm:$0xff]
      %v218 = vld [vmem:[%s188 + $0x68] sm:$0xff]
      %v219 = vld [vmem:[%s188 + $0x70] sm:$0xff]
      %v220 = vld [vmem:[%s188 + $0x78] sm:$0xff]
      %v237 = vunpack.c.l.b16 %v205
      %v238 = vunpack.c.h.b16 %v205
      %v239 = vunpack.c.l.b16 %v206
      %v240 = vunpack.c.h.b16 %v206
      %v241 = vunpack.c.l.b16 %v207
      %v242 = vunpack.c.h.b16 %v207
      %v243 = vunpack.c.l.b16 %v208
      %v244 = vunpack.c.h.b16 %v208
      %v245 = vunpack.c.l.b16 %v209
      %v246 = vunpack.c.h.b16 %v209
      %v247 = vunpack.c.l.b16 %v210
      %v248 = vunpack.c.h.b16 %v210
      %v249 = vunpack.c.l.b16 %v211
      %v250 = vunpack.c.h.b16 %v211
      %v251 = vunpack.c.l.b16 %v212
      %v252 = vunpack.c.h.b16 %v212
      %v253 = vunpack.c.l.b16 %v213
      %v254 = vunpack.c.h.b16 %v213
      %v255 = vunpack.c.l.b16 %v214
      %v256 = vunpack.c.h.b16 %v214
      %v257 = vunpack.c.l.b16 %v215
      %v258 = vunpack.c.h.b16 %v215
      %v259 = vunpack.c.l.b16 %v216
      %v260 = vunpack.c.h.b16 %v216
      %v261 = vunpack.c.l.b16 %v217
      %v262 = vunpack.c.h.b16 %v217
      %v263 = vunpack.c.l.b16 %v218
      %v264 = vunpack.c.h.b16 %v218
      %v265 = vunpack.c.l.b16 %v219
      %v266 = vunpack.c.h.b16 %v219
      %v267 = vunpack.c.l.b16 %v220
      %v268 = vunpack.c.h.b16 %v220
      %v269 = vpack.c.b16 %v253, %v237
      %v270 = vpack.c.b16 %v254, %v238
      %v271 = vpack.c.b16 %v255, %v239
      %v272 = vpack.c.b16 %v256, %v240
      %v273 = vpack.c.b16 %v257, %v241
      %v274 = vpack.c.b16 %v258, %v242
      %v275 = vpack.c.b16 %v259, %v243
      %v276 = vpack.c.b16 %v260, %v244
      %v277 = vpack.c.b16 %v261, %v245
      %v278 = vpack.c.b16 %v262, %v246
      %v279 = vpack.c.b16 %v263, %v247
      %v280 = vpack.c.b16 %v264, %v248
      %v281 = vpack.c.b16 %v265, %v249
      %v282 = vpack.c.b16 %v266, %v250
      %v283 = vpack.c.b16 %v267, %v251
      %v284 = vpack.c.b16 %v268, %v252
      %301 = vmatprep.subr.bf16.mxu0 %v270
      %302 = vmatpush1.bf16.xpose.msra.mxu0 %v269
      %303 = vmatprep.subr.bf16.mxu0 0
      %304 = vmatpush1.bf16.xpose.msra.mxu0 0
      %305 = vmatprep.subr.bf16.mxu0 0
      %306 = vmatpush1.bf16.xpose.msra.mxu0 0
      %307 = vmatprep.subr.bf16.mxu0 0
      %308 = vmatpush1.bf16.xpose.msra.mxu0 0
      %309 = vmatprep.subr.bf16.mxu0 0
      %310 = vmatpush1.bf16.xpose.msra.mxu0 0
      %311 = vmatprep.subr.bf16.mxu0 0
      %312 = vmatpush1.bf16.xpose.msra.mxu0 0
      %313 = vmatprep.subr.bf16.mxu0 0
      %314 = vmatpush1.bf16.xpose.msra.mxu0 0
      %315 = vmatprep.subr.bf16.mxu0 0
      %316 = vmatpush1.bf16.xpose.msra.mxu0 0
      %317 = vmatprep.subr.bf16.mxu0 0
      %318 = vmatpush1.bf16.xpose.msra.mxu0 0
      %319 = vmatprep.subr.bf16.mxu0 0
      %320 = vmatpush1.bf16.xpose.msra.mxu0 0
      %321 = vmatprep.subr.bf16.mxu0 0
      %322 = vmatpush1.bf16.xpose.msra.mxu0 0
      %323 = vmatprep.subr.bf16.mxu0 0
      %324 = vmatpush1.bf16.xpose.msra.mxu0 0
      %325 = vmatprep.subr.bf16.mxu0 0
      %326 = vmatpush1.bf16.xpose.msra.mxu0 0
      %327 = vmatprep.subr.bf16.mxu0 0
      %328 = vmatpush1.bf16.xpose.msra.mxu0 0
      %329 = vmatprep.subr.bf16.mxu0 0
      %330 = vmatpush1.bf16.xpose.msra.mxu0 0
      %331 = vmatprep.subr.bf16.mxu0 0
      %332 = vmatpush1.bf16.xpose.msra.mxu0 0
      %333 = vmatprep.mubr.bf16.mxu0 %v270
      %334 = vmatmul.mubr.bf16.gmra.mrb[0].mxu0 %v269
      %v335 = vpop.f32.mrb[0].mxu0
      %v336 = vadd.f32 0.0, %v335
      %v337 = vpop.f32.mrb[0].mxu0
      %v338 = vpop.f32.mrb[0].mxu0
      %v339 = vadd.f32 0.0, %v338
      %v340 = vpop.f32.mrb[0].mxu0
      %341 = vdwg.mxu0
      %342 = vmatprep.subr.bf16.mxu0 %v272
      %343 = vmatpush1.bf16.xpose.msra.mxu0 %v271
      %344 = vmatprep.subr.bf16.mxu0 0
      %345 = vmatpush1.bf16.xpose.msra.mxu0 0
      %346 = vmatprep.subr.bf16.mxu0 0
      %347 = vmatpush1.bf16.xpose.msra.mxu0 0
      %348 = vmatprep.subr.bf16.mxu0 0
      %349 = vmatpush1.bf16.xpose.msra.mxu0 0
      %350 = vmatprep.subr.bf16.mxu0 0
      %351 = vmatpush1.bf16.xpose.msra.mxu0 0
      %352 = vmatprep.subr.bf16.mxu0 0
      %353 = vmatpush1.bf16.xpose.msra.mxu0 0
      %354 = vmatprep.subr.bf16.mxu0 0
      %355 = vmatpush1.bf16.xpose.msra.mxu0 0
      %356 = vmatprep.subr.bf16.mxu0 0
      %357 = vmatpush1.bf16.xpose.msra.mxu0 0
      %358 = vmatprep.subr.bf16.mxu0 0
      %359 = vmatpush1.bf16.xpose.msra.mxu0 0
      %360 = vmatprep.subr.bf16.mxu0 0
      %361 = vmatpush1.bf16.xpose.msra.mxu0 0
      %362 = vmatprep.subr.bf16.mxu0 0
      %363 = vmatpush1.bf16.xpose.msra.mxu0 0
      %364 = vmatprep.subr.bf16.mxu0 0
      %365 = vmatpush1.bf16.xpose.msra.mxu0 0
      %366 = vmatprep.subr.bf16.mxu0 0
      %367 = vmatpush1.bf16.xpose.msra.mxu0 0
      %368 = vmatprep.subr.bf16.mxu0 0
      %369 = vmatpush1.bf16.xpose.msra.mxu0 0
      %370 = vmatprep.subr.bf16.mxu0 0
      %371 = vmatpush1.bf16.xpose.msra.mxu0 0
      %372 = vmatprep.subr.bf16.mxu0 0
      %373 = vmatpush1.bf16.xpose.msra.mxu0 0
      %374 = vmatprep.mubr.bf16.mxu0 %v272
      %375 = vmatmul.mubr.bf16.gmra.mrb[0].mxu0 %v271
      %v376 = vpop.f32.mrb[0].mxu0
      %v377 = vadd.f32 %v336, %v376
      %v378 = vpop.f32.mrb[0].mxu0
      %v379 = vpop.f32.mrb[0].mxu0
      %v380 = vadd.f32 %v339, %v379
      %v381 = vpop.f32.mrb[0].mxu0
      %382 = vdwg.mxu0
      %383 = vmatprep.subr.bf16.mxu0 %v274
      %384 = vmatpush1.bf16.xpose.msra.mxu0 %v273
      %385 = vmatprep.subr.bf16.mxu0 0
      %386 = vmatpush1.bf16.xpose.msra.mxu0 0
      %387 = vmatprep.subr.bf16.mxu0 0
      %388 = vmatpush1.bf16.xpose.msra.mxu0 0
      %389 = vmatprep.subr.bf16.mxu0 0
      %390 = vmatpush1.bf16.xpose.msra.mxu0 0
      %391 = vmatprep.subr.bf16.mxu0 0
      %392 = vmatpush1.bf16.xpose.msra.mxu0 0
      %393 = vmatprep.subr.bf16.mxu0 0
      %394 = vmatpush1.bf16.xpose.msra.mxu0 0
      %395 = vmatprep.subr.bf16.mxu0 0
      %396 = vmatpush1.bf16.xpose.msra.mxu0 0
      %397 = vmatprep.subr.bf16.mxu0 0
      %398 = vmatpush1.bf16.xpose.msra.mxu0 0
      %399 = vmatprep.subr.bf16.mxu0 0
      %400 = vmatpush1.bf16.xpose.msra.mxu0 0
      %401 = vmatprep.subr.bf16.mxu0 0
      %402 = vmatpush1.bf16.xpose.msra.mxu0 0
      %403 = vmatprep.subr.bf16.mxu0 0
      %404 = vmatpush1.bf16.xpose.msra.mxu0 0
      %405 = vmatprep.subr.bf16.mxu0 0
      %406 = vmatpush1.bf16.xpose.msra.mxu0 0
      %407 = vmatprep.subr.bf16.mxu0 0
      %408 = vmatpush1.bf16.xpose.msra.mxu0 0
      %409 = vmatprep.subr.bf16.mxu0 0
      %410 = vmatpush1.bf16.xpose.msra.mxu0 0
      %411 = vmatprep.subr.bf16.mxu0 0
      %412 = vmatpush1.bf16.xpose.msra.mxu0 0
      %413 = vmatprep.subr.bf16.mxu0 0
      %414 = vmatpush1.bf16.xpose.msra.mxu0 0
      %415 = vmatprep.mubr.bf16.mxu0 %v274
      %416 = vmatmul.mubr.bf16.gmra.mrb[0].mxu0 %v273
      %v417 = vpop.f32.mrb[0].mxu0
      %v418 = vadd.f32 %v377, %v417
      %v419 = vpop.f32.mrb[0].mxu0
      %v420 = vpop.f32.mrb[0].mxu0
      %v421 = vadd.f32 %v380, %v420
      %v422 = vpop.f32.mrb[0].mxu0
      %423 = vdwg.mxu0
      %424 = vmatprep.subr.bf16.mxu0 %v276
      %425 = vmatpush1.bf16.xpose.msra.mxu0 %v275
      %426 = vmatprep.subr.bf16.mxu0 0
      %427 = vmatpush1.bf16.xpose.msra.mxu0 0
      %428 = vmatprep.subr.bf16.mxu0 0
      %429 = vmatpush1.bf16.xpose.msra.mxu0 0
      %430 = vmatprep.subr.bf16.mxu0 0
      %431 = vmatpush1.bf16.xpose.msra.mxu0 0
      %432 = vmatprep.subr.bf16.mxu0 0
      %433 = vmatpush1.bf16.xpose.msra.mxu0 0
      %434 = vmatprep.subr.bf16.mxu0 0
      %435 = vmatpush1.bf16.xpose.msra.mxu0 0
      %436 = vmatprep.subr.bf16.mxu0 0
      %437 = vmatpush1.bf16.xpose.msra.mxu0 0
      %438 = vmatprep.subr.bf16.mxu0 0
      %439 = vmatpush1.bf16.xpose.msra.mxu0 0
      %440 = vmatprep.subr.bf16.mxu0 0
      %441 = vmatpush1.bf16.xpose.msra.mxu0 0
      %442 = vmatprep.subr.bf16.mxu0 0
      %443 = vmatpush1.bf16.xpose.msra.mxu0 0
      %444 = vmatprep.subr.bf16.mxu0 0
      %445 = vmatpush1.bf16.xpose.msra.mxu0 0
      %446 = vmatprep.subr.bf16.mxu0 0
      %447 = vmatpush1.bf16.xpose.msra.mxu0 0
      %448 = vmatprep.subr.bf16.mxu0 0
      %449 = vmatpush1.bf16.xpose.msra.mxu0 0
      %450 = vmatprep.subr.bf16.mxu0 0
      %451 = vmatpush1.bf16.xpose.msra.mxu0 0
      %452 = vmatprep.subr.bf16.mxu0 0
      %453 = vmatpush1.bf16.xpose.msra.mxu0 0
      %454 = vmatprep.subr.bf16.mxu0 0
      %455 = vmatpush1.bf16.xpose.msra.mxu0 0
      %456 = vmatprep.mubr.bf16.mxu0 %v276
      %457 = vmatmul.mubr.bf16.gmra.mrb[0].mxu0 %v275
      %v458 = vpop.f32.mrb[0].mxu0
      %v459 = vadd.f32 %v418, %v458
      %v460 = vpop.f32.mrb[0].mxu0
      %v461 = vpop.f32.mrb[0].mxu0
      %v462 = vadd.f32 %v421, %v461
      %v463 = vpop.f32.mrb[0].mxu0
      %464 = vdwg.mxu0
      %465 = vmatprep.subr.bf16.mxu0 %v278
      %466 = vmatpush1.bf16.xpose.msra.mxu0 %v277
      %467 = vmatprep.subr.bf16.mxu0 0
      %468 = vmatpush1.bf16.xpose.msra.mxu0 0
      %469 = vmatprep.subr.bf16.mxu0 0
      %470 = vmatpush1.bf16.xpose.msra.mxu0 0
      %471 = vmatprep.subr.bf16.mxu0 0
      %472 = vmatpush1.bf16.xpose.msra.mxu0 0
      %473 = vmatprep.subr.bf16.mxu0 0
      %474 = vmatpush1.bf16.xpose.msra.mxu0 0
      %475 = vmatprep.subr.bf16.mxu0 0
      %476 = vmatpush1.bf16.xpose.msra.mxu0 0
      %477 = vmatprep.subr.bf16.mxu0 0
      %478 = vmatpush1.bf16.xpose.msra.mxu0 0
      %479 = vmatprep.subr.bf16.mxu0 0
      %480 = vmatpush1.bf16.xpose.msra.mxu0 0
      %481 = vmatprep.subr.bf16.mxu0 0
      %482 = vmatpush1.bf16.xpose.msra.mxu0 0
      %483 = vmatprep.subr.bf16.mxu0 0
      %484 = vmatpush1.bf16.xpose.msra.mxu0 0
      %485 = vmatprep.subr.bf16.mxu0 0
      %486 = vmatpush1.bf16.xpose.msra.mxu0 0
      %487 = vmatprep.subr.bf16.mxu0 0
      %488 = vmatpush1.bf16.xpose.msra.mxu0 0
      %489 = vmatprep.subr.bf16.mxu0 0
      %490 = vmatpush1.bf16.xpose.msra.mxu0 0
      %491 = vmatprep.subr.bf16.mxu0 0
      %492 = vmatpush1.bf16.xpose.msra.mxu0 0
      %493 = vmatprep.subr.bf16.mxu0 0
      %494 = vmatpush1.bf16.xpose.msra.mxu0 0
      %495 = vmatprep.subr.bf16.mxu0 0
      %496 = vmatpush1.bf16.xpose.msra.mxu0 0
      %497 = vmatprep.mubr.bf16.mxu0 %v278
      %498 = vmatmul.mubr.bf16.gmra.mrb[0].mxu0 %v277
      %v499 = vpop.f32.mrb[0].mxu0
      %v500 = vadd.f32 %v459, %v499
      %v501 = vpop.f32.mrb[0].mxu0
      %v502 = vpop.f32.mrb[0].mxu0
      %v503 = vadd.f32 %v462, %v502
      %v504 = vpop.f32.mrb[0].mxu0
      %505 = vdwg.mxu0
      %506 = vmatprep.subr.bf16.mxu0 %v280
      %507 = vmatpush1.bf16.xpose.msra.mxu0 %v279
      %508 = vmatprep.subr.bf16.mxu0 0
      %509 = vmatpush1.bf16.xpose.msra.mxu0 0
      %510 = vmatprep.subr.bf16.mxu0 0
      %511 = vmatpush1.bf16.xpose.msra.mxu0 0
      %512 = vmatprep.subr.bf16.mxu0 0
      %513 = vmatpush1.bf16.xpose.msra.mxu0 0
      %514 = vmatprep.subr.bf16.mxu0 0
      %515 = vmatpush1.bf16.xpose.msra.mxu0 0
      %516 = vmatprep.subr.bf16.mxu0 0
      %517 = vmatpush1.bf16.xpose.msra.mxu0 0
      %518 = vmatprep.subr.bf16.mxu0 0
      %519 = vmatpush1.bf16.xpose.msra.mxu0 0
      %520 = vmatprep.subr.bf16.mxu0 0
      %521 = vmatpush1.bf16.xpose.msra.mxu0 0
      %522 = vmatprep.subr.bf16.mxu0 0
      %523 = vmatpush1.bf16.xpose.msra.mxu0 0
      %524 = vmatprep.subr.bf16.mxu0 0
      %525 = vmatpush1.bf16.xpose.msra.mxu0 0
      %526 = vmatprep.subr.bf16.mxu0 0
      %527 = vmatpush1.bf16.xpose.msra.mxu0 0
      %528 = vmatprep.subr.bf16.mxu0 0
      %529 = vmatpush1.bf16.xpose.msra.mxu0 0
      %530 = vmatprep.subr.bf16.mxu0 0
      %531 = vmatpush1.bf16.xpose.msra.mxu0 0
      %532 = vmatprep.subr.bf16.mxu0 0
      %533 = vmatpush1.bf16.xpose.msra.mxu0 0
      %534 = vmatprep.subr.bf16.mxu0 0
      %535 = vmatpush1.bf16.xpose.msra.mxu0 0
      %536 = vmatprep.subr.bf16.mxu0 0
      %537 = vmatpush1.bf16.xpose.msra.mxu0 0
      %538 = vmatprep.mubr.bf16.mxu0 %v280
      %539 = vmatmul.mubr.bf16.gmra.mrb[0].mxu0 %v279
      %v540 = vpop.f32.mrb[0].mxu0
      %v541 = vadd.f32 %v500, %v540
      %v542 = vpop.f32.mrb[0].mxu0
      %v543 = vpop.f32.mrb[0].mxu0
      %v544 = vadd.f32 %v503, %v543
      %v545 = vpop.f32.mrb[0].mxu0
      %546 = vdwg.mxu0
      %547 = vmatprep.subr.bf16.mxu0 %v282
      %548 = vmatpush1.bf16.xpose.msra.mxu0 %v281
      %549 = vmatprep.subr.bf16.mxu0 0
      %550 = vmatpush1.bf16.xpose.msra.mxu0 0
      %551 = vmatprep.subr.bf16.mxu0 0
      %552 = vmatpush1.bf16.xpose.msra.mxu0 0
      %553 = vmatprep.subr.bf16.mxu0 0
      %554 = vmatpush1.bf16.xpose.msra.mxu0 0
      %555 = vmatprep.subr.bf16.mxu0 0
      %556 = vmatpush1.bf16.xpose.msra.mxu0 0
      %557 = vmatprep.subr.bf16.mxu0 0
      %558 = vmatpush1.bf16.xpose.msra.mxu0 0
      %559 = vmatprep.subr.bf16.mxu0 0
      %560 = vmatpush1.bf16.xpose.msra.mxu0 0
      %561 = vmatprep.subr.bf16.mxu0 0
      %562 = vmatpush1.bf16.xpose.msra.mxu0 0
      %563 = vmatprep.subr.bf16.mxu0 0
      %564 = vmatpush1.bf16.xpose.msra.mxu0 0
      %565 = vmatprep.subr.bf16.mxu0 0
      %566 = vmatpush1.bf16.xpose.msra.mxu0 0
      %567 = vmatprep.subr.bf16.mxu0 0
      %568 = vmatpush1.bf16.xpose.msra.mxu0 0
      %569 = vmatprep.subr.bf16.mxu0 0
      %570 = vmatpush1.bf16.xpose.msra.mxu0 0
      %571 = vmatprep.subr.bf16.mxu0 0
      %572 = vmatpush1.bf16.xpose.msra.mxu0 0
      %573 = vmatprep.subr.bf16.mxu0 0
      %574 = vmatpush1.bf16.xpose.msra.mxu0 0
      %575 = vmatprep.subr.bf16.mxu0 0
      %576 = vmatpush1.bf16.xpose.msra.mxu0 0
      %577 = vmatprep.subr.bf16.mxu0 0
      %578 = vmatpush1.bf16.xpose.msra.mxu0 0
      %579 = vmatprep.mubr.bf16.mxu0 %v282
      %580 = vmatmul.mubr.bf16.gmra.mrb[0].mxu0 %v281
      %v581 = vpop.f32.mrb[0].mxu0
      %v582 = vadd.f32 %v541, %v581
      %v583 = vpop.f32.mrb[0].mxu0
      %v584 = vpop.f32.mrb[0].mxu0
      %v585 = vadd.f32 %v544, %v584
      %v586 = vpop.f32.mrb[0].mxu0
      %587 = vdwg.mxu0
      %588 = vmatprep.subr.bf16.mxu0 %v284
      %589 = vmatpush1.bf16.xpose.msra.mxu0 %v283
      %590 = vmatprep.subr.bf16.mxu0 0
      %591 = vmatpush1.bf16.xpose.msra.mxu0 0
      %592 = vmatprep.subr.bf16.mxu0 0
      %593 = vmatpush1.bf16.xpose.msra.mxu0 0
      %594 = vmatprep.subr.bf16.mxu0 0
      %595 = vmatpush1.bf16.xpose.msra.mxu0 0
      %596 = vmatprep.subr.bf16.mxu0 0
      %597 = vmatpush1.bf16.xpose.msra.mxu0 0
      %598 = vmatprep.subr.bf16.mxu0 0
      %599 = vmatpush1.bf16.xpose.msra.mxu0 0
      %600 = vmatprep.subr.bf16.mxu0 0
      %601 = vmatpush1.bf16.xpose.msra.mxu0 0
      %602 = vmatprep.subr.bf16.mxu0 0
      %603 = vmatpush1.bf16.xpose.msra.mxu0 0
      %604 = vmatprep.subr.bf16.mxu0 0
      %605 = vmatpush1.bf16.xpose.msra.mxu0 0
      %606 = vmatprep.subr.bf16.mxu0 0
      %607 = vmatpush1.bf16.xpose.msra.mxu0 0
      %608 = vmatprep.subr.bf16.mxu0 0
      %609 = vmatpush1.bf16.xpose.msra.mxu0 0
      %610 = vmatprep.subr.bf16.mxu0 0
      %611 = vmatpush1.bf16.xpose.msra.mxu0 0
      %612 = vmatprep.subr.bf16.mxu0 0
      %613 = vmatpush1.bf16.xpose.msra.mxu0 0
      %614 = vmatprep.subr.bf16.mxu0 0
      %615 = vmatpush1.bf16.xpose.msra.mxu0 0
      %616 = vmatprep.subr.bf16.mxu0 0
      %617 = vmatpush1.bf16.xpose.msra.mxu0 0
      %618 = vmatprep.subr.bf16.mxu0 0
      %619 = vmatpush1.bf16.xpose.msra.mxu0 0
      %620 = vmatprep.mubr.bf16.mxu0 %v284
      %621 = vmatmul.mubr.bf16.gmra.mrb[0].mxu0 %v283
      %v622 = vpop.f32.mrb[0].mxu0
      %v623 = vadd.f32 %v582, %v622
      %v624 = vpop.f32.mrb[0].mxu0
      %v625 = vpop.f32.mrb[0].mxu0
      %v626 = vadd.f32 %v585, %v625
      %v627 = vpop.f32.mrb[0].mxu0
      %628 = vdwg.mxu0
      %v629 = vmul.f32 %v623, 10.0
      %v630 = vmul.f32 %v626, 10.0
      %vm631 = vcmask 130048
      %v632 = vsel %vm631, %v629, -inf
      %633 = vmax.xlane.f32.xlu0 %v632
      %v634 = vpop.xlane.xlu0 %633
      %v635 = vsel %vm631, %v630, -inf
      %636 = vmax.xlane.f32.xlu0 %v635
      %v637 = vpop.xlane.xlu0 %636
      %v638 = vsub.f32 %v629, %v634
      %v639 = vsub.f32 %v630, %v637
      %v640 = vmul.f32 %v638, 1.442695
      %v641 = vpow.pop %v640
      %v642 = vmul.f32 %v639, 1.442695
      %v643 = vpow.pop %v642
      %v644 = vsel %vm631, %v641, 0.0
      %645 = vadd.xlane.f32.xlu0 %v644
      %v646 = vpop.xlane.xlu0 %645
      %v647 = vsel %vm631, %v643, 0.0
      %648 = vadd.xlane.f32.xlu0 %v647
      %v649 = vpop.xlane.xlu0 %648
      %v650 = vrcp.pop %v646
      %v651 = vrcp.pop %v649
      %v652 = vmul.f32 %v641, %v650
      %v653 = vmul.f32 %v643, %v651
      %v654 = vpack.c.bf16 %v653, %v652
      %v656 = vsel %vm631, %v654, 0
      %658 = vmatprep.subr.bf16.mxu0 %v270
      %659 = vmatpush1.bf16.msra.mxu0 %v269
      %660 = vmatprep.subr.bf16.mxu0 0
      %661 = vmatpush1.bf16.msra.mxu0 0
      %662 = vmatprep.subr.bf16.mxu0 0
      %663 = vmatpush1.bf16.msra.mxu0 0
      %664 = vmatprep.subr.bf16.mxu0 0
      %665 = vmatpush1.bf16.msra.mxu0 0
      %666 = vmatprep.subr.bf16.mxu0 0
      %667 = vmatpush1.bf16.msra.mxu0 0
      %668 = vmatprep.subr.bf16.mxu0 0
      %669 = vmatpush1.bf16.msra.mxu0 0
      %670 = vmatprep.subr.bf16.mxu0 0
      %671 = vmatpush1.bf16.msra.mxu0 0
      %672 = vmatprep.subr.bf16.mxu0 0
      %673 = vmatpush1.bf16.msra.mxu0 0
      %674 = vmatprep.subr.bf16.mxu0 0
      %675 = vmatpush1.bf16.msra.mxu0 0
      %676 = vmatprep.subr.bf16.mxu0 0
      %677 = vmatpush1.bf16.msra.mxu0 0
      %678 = vmatprep.subr.bf16.mxu0 0
      %679 = vmatpush1.bf16.msra.mxu0 0
      %680 = vmatprep.subr.bf16.mxu0 0
      %681 = vmatpush1.bf16.msra.mxu0 0
      %682 = vmatprep.subr.bf16.mxu0 0
      %683 = vmatpush1.bf16.msra.mxu0 0
      %684 = vmatprep.subr.bf16.mxu0 0
      %685 = vmatpush1.bf16.msra.mxu0 0
      %686 = vmatprep.subr.bf16.mxu0 0
      %687 = vmatpush1.bf16.msra.mxu0 0
      %688 = vmatprep.subr.bf16.mxu0 0
      %689 = vmatpush1.bf16.msra.mxu0 0
      %690 = vmatprep.mubr.bf16.mxu0 0
      %691 = vmatmul.mubr.bf16.gmra.mrb[0].mxu0 %v656
      %v692 = vpop.f32.mrb[0].mxu0
      %v693 = vadd.f32 0.0, %v692
      %v694 = vpop.f32.mrb[0].mxu0
      %v695 = vadd.f32 0.0, %v694
      %v696 = vpop.f32.mrb[0].mxu0
      %v697 = vadd.f32 0.0, %v696
      %v698 = vpop.f32.mrb[0].mxu0
      %v699 = vadd.f32 0.0, %v698
      %700 = vdwg.mxu0
      %701 = vmatprep.subr.bf16.mxu0 %v272
      %702 = vmatpush1.bf16.msra.mxu0 %v271
      %703 = vmatprep.subr.bf16.mxu0 0
      %704 = vmatpush1.bf16.msra.mxu0 0
      %705 = vmatprep.subr.bf16.mxu0 0
      %706 = vmatpush1.bf16.msra.mxu0 0
      %707 = vmatprep.subr.bf16.mxu0 0
      %708 = vmatpush1.bf16.msra.mxu0 0
      %709 = vmatprep.subr.bf16.mxu0 0
      %710 = vmatpush1.bf16.msra.mxu0 0
      %711 = vmatprep.subr.bf16.mxu0 0
      %712 = vmatpush1.bf16.msra.mxu0 0
      %713 = vmatprep.subr.bf16.mxu0 0
      %714 = vmatpush1.bf16.msra.mxu0 0
      %715 = vmatprep.subr.bf16.mxu0 0
      %716 = vmatpush1.bf16.msra.mxu0 0
      %717 = vmatprep.subr.bf16.mxu0 0
      %718 = vmatpush1.bf16.msra.mxu0 0
      %719 = vmatprep.subr.bf16.mxu0 0
      %720 = vmatpush1.bf16.msra.mxu0 0
      %721 = vmatprep.subr.bf16.mxu0 0
      %722 = vmatpush1.bf16.msra.mxu0 0
      %723 = vmatprep.subr.bf16.mxu0 0
      %724 = vmatpush1.bf16.msra.mxu0 0
      %725 = vmatprep.subr.bf16.mxu0 0
      %726 = vmatpush1.bf16.msra.mxu0 0
      %727 = vmatprep.subr.bf16.mxu0 0
      %728 = vmatpush1.bf16.msra.mxu0 0
      %729 = vmatprep.subr.bf16.mxu0 0
      %730 = vmatpush1.bf16.msra.mxu0 0
      %731 = vmatprep.subr.bf16.mxu0 0
      %732 = vmatpush1.bf16.msra.mxu0 0
      %733 = vmatprep.mubr.bf16.mxu0 0
      %734 = vmatmul.mubr.bf16.gmra.mrb[0].mxu0 %v656
      %v735 = vpop.f32.mrb[0].mxu0
      %v736 = vadd.f32 0.0, %v735
      %v737 = vpop.f32.mrb[0].mxu0
      %v738 = vadd.f32 0.0, %v737
      %v739 = vpop.f32.mrb[0].mxu0
      %v740 = vadd.f32 0.0, %v739
      %v741 = vpop.f32.mrb[0].mxu0
      %v742 = vadd.f32 0.0, %v741
      %743 = vdwg.mxu0
      %744 = vmatprep.subr.bf16.mxu0 %v274
      %745 = vmatpush1.bf16.msra.mxu0 %v273
      %746 = vmatprep.subr.bf16.mxu0 0
      %747 = vmatpush1.bf16.msra.mxu0 0
      %748 = vmatprep.subr.bf16.mxu0 0
      %749 = vmatpush1.bf16.msra.mxu0 0
      %750 = vmatprep.subr.bf16.mxu0 0
      %751 = vmatpush1.bf16.msra.mxu0 0
      %752 = vmatprep.subr.bf16.mxu0 0
      %753 = vmatpush1.bf16.msra.mxu0 0
      %754 = vmatprep.subr.bf16.mxu0 0
      %755 = vmatpush1.bf16.msra.mxu0 0
      %756 = vmatprep.subr.bf16.mxu0 0
      %757 = vmatpush1.bf16.msra.mxu0 0
      %758 = vmatprep.subr.bf16.mxu0 0
      %759 = vmatpush1.bf16.msra.mxu0 0
      %760 = vmatprep.subr.bf16.mxu0 0
      %761 = vmatpush1.bf16.msra.mxu0 0
      %762 = vmatprep.subr.bf16.mxu0 0
      %763 = vmatpush1.bf16.msra.mxu0 0
      %764 = vmatprep.subr.bf16.mxu0 0
      %765 = vmatpush1.bf16.msra.mxu0 0
      %766 = vmatprep.subr.bf16.mxu0 0
      %767 = vmatpush1.bf16.msra.mxu0 0
      %768 = vmatprep.subr.bf16.mxu0 0
      %769 = vmatpush1.bf16.msra.mxu0 0
      %770 = vmatprep.subr.bf16.mxu0 0
      %771 = vmatpush1.bf16.msra.mxu0 0
      %772 = vmatprep.subr.bf16.mxu0 0
      %773 = vmatpush1.bf16.msra.mxu0 0
      %774 = vmatprep.subr.bf16.mxu0 0
      %775 = vmatpush1.bf16.msra.mxu0 0
      %776 = vmatprep.mubr.bf16.mxu0 0
      %777 = vmatmul.mubr.bf16.gmra.mrb[0].mxu0 %v656
      %v778 = vpop.f32.mrb[0].mxu0
      %v779 = vadd.f32 0.0, %v778
      %v780 = vpop.f32.mrb[0].mxu0
      %v781 = vadd.f32 0.0, %v780
      %v782 = vpop.f32.mrb[0].mxu0
      %v783 = vadd.f32 0.0, %v782
      %v784 = vpop.f32.mrb[0].mxu0
      %v785 = vadd.f32 0.0, %v784
      %786 = vdwg.mxu0
      %787 = vmatprep.subr.bf16.mxu0 %v276
      %788 = vmatpush1.bf16.msra.mxu0 %v275
      %789 = vmatprep.subr.bf16.mxu0 0
      %790 = vmatpush1.bf16.msra.mxu0 0
      %791 = vmatprep.subr.bf16.mxu0 0
      %792 = vmatpush1.bf16.msra.mxu0 0
      %793 = vmatprep.subr.bf16.mxu0 0
      %794 = vmatpush1.bf16.msra.mxu0 0
      %795 = vmatprep.subr.bf16.mxu0 0
      %796 = vmatpush1.bf16.msra.mxu0 0
      %797 = vmatprep.subr.bf16.mxu0 0
      %798 = vmatpush1.bf16.msra.mxu0 0
      %799 = vmatprep.subr.bf16.mxu0 0
      %800 = vmatpush1.bf16.msra.mxu0 0
      %801 = vmatprep.subr.bf16.mxu0 0
      %802 = vmatpush1.bf16.msra.mxu0 0
      %803 = vmatprep.subr.bf16.mxu0 0
      %804 = vmatpush1.bf16.msra.mxu0 0
      %805 = vmatprep.subr.bf16.mxu0 0
      %806 = vmatpush1.bf16.msra.mxu0 0
      %807 = vmatprep.subr.bf16.mxu0 0
      %808 = vmatpush1.bf16.msra.mxu0 0
      %809 = vmatprep.subr.bf16.mxu0 0
      %810 = vmatpush1.bf16.msra.mxu0 0
      %811 = vmatprep.subr.bf16.mxu0 0
      %812 = vmatpush1.bf16.msra.mxu0 0
      %813 = vmatprep.subr.bf16.mxu0 0
      %814 = vmatpush1.bf16.msra.mxu0 0
      %815 = vmatprep.subr.bf16.mxu0 0
      %816 = vmatpush1.bf16.msra.mxu0 0
      %817 = vmatprep.subr.bf16.mxu0 0
      %818 = vmatpush1.bf16.msra.mxu0 0
      %819 = vmatprep.mubr.bf16.mxu0 0
      %820 = vmatmul.mubr.bf16.gmra.mrb[0].mxu0 %v656
      %v821 = vpop.f32.mrb[0].mxu0
      %v822 = vadd.f32 0.0, %v821
      %v823 = vpop.f32.mrb[0].mxu0
      %v824 = vadd.f32 0.0, %v823
      %v825 = vpop.f32.mrb[0].mxu0
      %v826 = vadd.f32 0.0, %v825
      %v827 = vpop.f32.mrb[0].mxu0
      %v828 = vadd.f32 0.0, %v827
      %829 = vdwg.mxu0
      %830 = vmatprep.subr.bf16.mxu0 %v278
      %831 = vmatpush1.bf16.msra.mxu0 %v277
      %832 = vmatprep.subr.bf16.mxu0 0
      %833 = vmatpush1.bf16.msra.mxu0 0
      %834 = vmatprep.subr.bf16.mxu0 0
      %835 = vmatpush1.bf16.msra.mxu0 0
      %836 = vmatprep.subr.bf16.mxu0 0
      %837 = vmatpush1.bf16.msra.mxu0 0
      %838 = vmatprep.subr.bf16.mxu0 0
      %839 = vmatpush1.bf16.msra.mxu0 0
      %840 = vmatprep.subr.bf16.mxu0 0
      %841 = vmatpush1.bf16.msra.mxu0 0
      %842 = vmatprep.subr.bf16.mxu0 0
      %843 = vmatpush1.bf16.msra.mxu0 0
      %844 = vmatprep.subr.bf16.mxu0 0
      %845 = vmatpush1.bf16.msra.mxu0 0
      %846 = vmatprep.subr.bf16.mxu0 0
      %847 = vmatpush1.bf16.msra.mxu0 0
      %848 = vmatprep.subr.bf16.mxu0 0
      %849 = vmatpush1.bf16.msra.mxu0 0
      %850 = vmatprep.subr.bf16.mxu0 0
      %851 = vmatpush1.bf16.msra.mxu0 0
      %852 = vmatprep.subr.bf16.mxu0 0
      %853 = vmatpush1.bf16.msra.mxu0 0
      %854 = vmatprep.subr.bf16.mxu0 0
      %855 = vmatpush1.bf16.msra.mxu0 0
      %856 = vmatprep.subr.bf16.mxu0 0
      %857 = vmatpush1.bf16.msra.mxu0 0
      %858 = vmatprep.subr.bf16.mxu0 0
      %859 = vmatpush1.bf16.msra.mxu0 0
      %860 = vmatprep.subr.bf16.mxu0 0
      %861 = vmatpush1.bf16.msra.mxu0 0
      %862 = vmatprep.mubr.bf16.mxu0 0
      %863 = vmatmul.mubr.bf16.gmra.mrb[0].mxu0 %v656
      %v864 = vpop.f32.mrb[0].mxu0
      %v865 = vadd.f32 0.0, %v864
      %v866 = vpop.f32.mrb[0].mxu0
      %v867 = vadd.f32 0.0, %v866
      %v868 = vpop.f32.mrb[0].mxu0
      %v869 = vadd.f32 0.0, %v868
      %v870 = vpop.f32.mrb[0].mxu0
      %v871 = vadd.f32 0.0, %v870
      %872 = vdwg.mxu0
      %873 = vmatprep.subr.bf16.mxu0 %v280
      %874 = vmatpush1.bf16.msra.mxu0 %v279
      %875 = vmatprep.subr.bf16.mxu0 0
      %876 = vmatpush1.bf16.msra.mxu0 0
      %877 = vmatprep.subr.bf16.mxu0 0
      %878 = vmatpush1.bf16.msra.mxu0 0
      %879 = vmatprep.subr.bf16.mxu0 0
      %880 = vmatpush1.bf16.msra.mxu0 0
      %881 = vmatprep.subr.bf16.mxu0 0
      %882 = vmatpush1.bf16.msra.mxu0 0
      %883 = vmatprep.subr.bf16.mxu0 0
      %884 = vmatpush1.bf16.msra.mxu0 0
      %885 = vmatprep.subr.bf16.mxu0 0
      %886 = vmatpush1.bf16.msra.mxu0 0
      %887 = vmatprep.subr.bf16.mxu0 0
      %888 = vmatpush1.bf16.msra.mxu0 0
      %889 = vmatprep.subr.bf16.mxu0 0
      %890 = vmatpush1.bf16.msra.mxu0 0
      %891 = vmatprep.subr.bf16.mxu0 0
      %892 = vmatpush1.bf16.msra.mxu0 0
      %893 = vmatprep.subr.bf16.mxu0 0
      %894 = vmatpush1.bf16.msra.mxu0 0
      %895 = vmatprep.subr.bf16.mxu0 0
      %896 = vmatpush1.bf16.msra.mxu0 0
      %897 = vmatprep.subr.bf16.mxu0 0
      %898 = vmatpush1.bf16.msra.mxu0 0
      %899 = vmatprep.subr.bf16.mxu0 0
      %900 = vmatpush1.bf16.msra.mxu0 0
      %901 = vmatprep.subr.bf16.mxu0 0
      %902 = vmatpush1.bf16.msra.mxu0 0
      %903 = vmatprep.subr.bf16.mxu0 0
      %904 = vmatpush1.bf16.msra.mxu0 0
      %905 = vmatprep.mubr.bf16.mxu0 0
      %906 = vmatmul.mubr.bf16.gmra.mrb[0].mxu0 %v656
      %v907 = vpop.f32.mrb[0].mxu0
      %v908 = vadd.f32 0.0, %v907
      %v909 = vpop.f32.mrb[0].mxu0
      %v910 = vadd.f32 0.0, %v909
      %v911 = vpop.f32.mrb[0].mxu0
      %v912 = vadd.f32 0.0, %v911
      %v913 = vpop.f32.mrb[0].mxu0
      %v914 = vadd.f32 0.0, %v913
      %915 = vdwg.mxu0
      %916 = vmatprep.subr.bf16.mxu0 %v282
      %917 = vmatpush1.bf16.msra.mxu0 %v281
      %918 = vmatprep.subr.bf16.mxu0 0
      %919 = vmatpush1.bf16.msra.mxu0 0
      %920 = vmatprep.subr.bf16.mxu0 0
      %921 = vmatpush1.bf16.msra.mxu0 0
      %922 = vmatprep.subr.bf16.mxu0 0
      %923 = vmatpush1.bf16.msra.mxu0 0
      %924 = vmatprep.subr.bf16.mxu0 0
      %925 = vmatpush1.bf16.msra.mxu0 0
      %926 = vmatprep.subr.bf16.mxu0 0
      %927 = vmatpush1.bf16.msra.mxu0 0
      %928 = vmatprep.subr.bf16.mxu0 0
      %929 = vmatpush1.bf16.msra.mxu0 0
      %930 = vmatprep.subr.bf16.mxu0 0
      %931 = vmatpush1.bf16.msra.mxu0 0
      %932 = vmatprep.subr.bf16.mxu0 0
      %933 = vmatpush1.bf16.msra.mxu0 0
      %934 = vmatprep.subr.bf16.mxu0 0
      %935 = vmatpush1.bf16.msra.mxu0 0
      %936 = vmatprep.subr.bf16.mxu0 0
      %937 = vmatpush1.bf16.msra.mxu0 0
      %938 = vmatprep.subr.bf16.mxu0 0
      %939 = vmatpush1.bf16.msra.mxu0 0
      %940 = vmatprep.subr.bf16.mxu0 0
      %941 = vmatpush1.bf16.msra.mxu0 0
      %942 = vmatprep.subr.bf16.mxu0 0
      %943 = vmatpush1.bf16.msra.mxu0 0
      %944 = vmatprep.subr.bf16.mxu0 0
      %945 = vmatpush1.bf16.msra.mxu0 0
      %946 = vmatprep.subr.bf16.mxu0 0
      %947 = vmatpush1.bf16.msra.mxu0 0
      %948 = vmatprep.mubr.bf16.mxu0 0
      %949 = vmatmul.mubr.bf16.gmra.mrb[0].mxu0 %v656
      %v950 = vpop.f32.mrb[0].mxu0
      %v951 = vadd.f32 0.0, %v950
      %v952 = vpop.f32.mrb[0].mxu0
      %v953 = vadd.f32 0.0, %v952
      %v954 = vpop.f32.mrb[0].mxu0
      %v955 = vadd.f32 0.0, %v954
      %v956 = vpop.f32.mrb[0].mxu0
      %v957 = vadd.f32 0.0, %v956
      %958 = vdwg.mxu0
      %959 = vmatprep.subr.bf16.mxu0 %v284
      %960 = vmatpush1.bf16.msra.mxu0 %v283
      %961 = vmatprep.subr.bf16.mxu0 0
      %962 = vmatpush1.bf16.msra.mxu0 0
      %963 = vmatprep.subr.bf16.mxu0 0
      %964 = vmatpush1.bf16.msra.mxu0 0
      %965 = vmatprep.subr.bf16.mxu0 0
      %966 = vmatpush1.bf16.msra.mxu0 0
      %967 = vmatprep.subr.bf16.mxu0 0
      %968 = vmatpush1.bf16.msra.mxu0 0
      %969 = vmatprep.subr.bf16.mxu0 0
      %970 = vmatpush1.bf16.msra.mxu0 0
      %971 = vmatprep.subr.bf16.mxu0 0
      %972 = vmatpush1.bf16.msra.mxu0 0
      %973 = vmatprep.subr.bf16.mxu0 0
      %974 = vmatpush1.bf16.msra.mxu0 0
      %975 = vmatprep.subr.bf16.mxu0 0
      %976 = vmatpush1.bf16.msra.mxu0 0
      %977 = vmatprep.subr.bf16.mxu0 0
      %978 = vmatpush1.bf16.msra.mxu0 0
      %979 = vmatprep.subr.bf16.mxu0 0
      %980 = vmatpush1.bf16.msra.mxu0 0
      %981 = vmatprep.subr.bf16.mxu0 0
      %982 = vmatpush1.bf16.msra.mxu0 0
      %983 = vmatprep.subr.bf16.mxu0 0
      %984 = vmatpush1.bf16.msra.mxu0 0
      %985 = vmatprep.subr.bf16.mxu0 0
      %986 = vmatpush1.bf16.msra.mxu0 0
      %987 = vmatprep.subr.bf16.mxu0 0
      %988 = vmatpush1.bf16.msra.mxu0 0
      %989 = vmatprep.subr.bf16.mxu0 0
      %990 = vmatpush1.bf16.msra.mxu0 0
      %991 = vmatprep.mubr.bf16.mxu0 0
      %992 = vmatmul.mubr.bf16.gmra.mrb[0].mxu0 %v656
      %v993 = vpop.f32.mrb[0].mxu0
      %v994 = vadd.f32 0.0, %v993
      %v995 = vpop.f32.mrb[0].mxu0
      %v996 = vadd.f32 0.0, %v995
      %v997 = vpop.f32.mrb[0].mxu0
      %v998 = vadd.f32 0.0, %v997
      %v999 = vpop.f32.mrb[0].mxu0
      %v1000 = vadd.f32 0.0, %v999
      %1001 = vdwg.mxu0
      %1002 = vst [vmem:[%s198] sm:$0xff] %v693
      %1003 = vst [vmem:[%s198 + $0x8] sm:$0xff] %v695
      %1004 = vst [vmem:[%s198 + $0x10] sm:$0xff] %v736
      %1005 = vst [vmem:[%s198 + $0x18] sm:$0xff] %v738
      %1006 = vst [vmem:[%s198 + $0x20] sm:$0xff] %v779
      %1007 = vst [vmem:[%s198 + $0x28] sm:$0xff] %v781
      %1008 = vst [vmem:[%s198 + $0x30] sm:$0xff] %v822
      %1009 = vst [vmem:[%s198 + $0x38] sm:$0xff] %v824
      %1010 = vst [vmem:[%s198 + $0x40] sm:$0xff] %v865
      %1011 = vst [vmem:[%s198 + $0x48] sm:$0xff] %v867
      %1012 = vst [vmem:[%s198 + $0x50] sm:$0xff] %v908
      %1013 = vst [vmem:[%s198 + $0x58] sm:$0xff] %v910
      %1014 = vst [vmem:[%s198 + $0x60] sm:$0xff] %v951
      %1015 = vst [vmem:[%s198 + $0x68] sm:$0xff] %v953
      %1016 = vst [vmem:[%s198 + $0x70] sm:$0xff] %v994
      %1017 = vst [vmem:[%s198 + $0x78] sm:$0xff] %v996
      %1018 = vst [vmem:[%s198 + $0x80] sm:$0xff] %v697
      %1019 = vst [vmem:[%s198 + $0x88] sm:$0xff] %v699
      %1020 = vst [vmem:[%s198 + $0x90] sm:$0xff] %v740
      %1021 = vst [vmem:[%s198 + $0x98] sm:$0xff] %v742
      %1022 = vst [vmem:[%s198 + $0xa0] sm:$0xff] %v783
      %1023 = vst [vmem:[%s198 + $0xa8] sm:$0xff] %v785
      %1024 = vst [vmem:[%s198 + $0xb0] sm:$0xff] %v826
      %1025 = vst [vmem:[%s198 + $0xb8] sm:$0xff] %v828
      %1026 = vst [vmem:[%s198 + $0xc0] sm:$0xff] %v869
      %1027 = vst [vmem:[%s198 + $0xc8] sm:$0xff] %v871
      %1028 = vst [vmem:[%s198 + $0xd0] sm:$0xff] %v912
      %1029 = vst [vmem:[%s198 + $0xd8] sm:$0xff] %v914
      %1030 = vst [vmem:[%s198 + $0xe0] sm:$0xff] %v955
      %1031 = vst [vmem:[%s198 + $0xe8] sm:$0xff] %v957
      %1032 = vst [vmem:[%s198 + $0xf0] sm:$0xff] %v998
      %1033 = vst [vmem:[%s198 + $0xf8] sm:$0xff] %v1000
      %v1034 = vld [vmem:[%s193] sm:$0xf]
      %v1035 = vld [vmem:[%s193 + $0x4] sm:$0xf]
      %v1036 = vld [vmem:[%s193 + $0x8] sm:$0xf]
      %v1037 = vld [vmem:[%s193 + $0xc] sm:$0xf]
      %v1038 = vld [vmem:[%s193 + $0x10] sm:$0xf]
      %v1039 = vld [vmem:[%s193 + $0x14] sm:$0xf]
      %v1040 = vld [vmem:[%s193 + $0x18] sm:$0xf]
      %v1041 = vld [vmem:[%s193 + $0x1c] sm:$0xf]
      %v1042 = vld [vmem:[%s193 + $0x20] sm:$0xf]
      %v1043 = vld [vmem:[%s193 + $0x24] sm:$0xf]
      %v1044 = vld [vmem:[%s193 + $0x28] sm:$0xf]
      %v1045 = vld [vmem:[%s193 + $0x2c] sm:$0xf]
      %v1046 = vld [vmem:[%s193 + $0x30] sm:$0xf]
      %v1047 = vld [vmem:[%s193 + $0x34] sm:$0xf]
      %v1048 = vld [vmem:[%s193 + $0x38] sm:$0xf]
      %v1049 = vld [vmem:[%s193 + $0x3c] sm:$0xf]
      %v1050 = vld [vmem:[%s193 + $0x40] sm:$0xf]
      %v1051 = vld [vmem:[%s193 + $0x44] sm:$0xf]
      %v1052 = vld [vmem:[%s193 + $0x48] sm:$0xf]
      %v1053 = vld [vmem:[%s193 + $0x4c] sm:$0xf]
      %v1054 = vld [vmem:[%s193 + $0x50] sm:$0xf]
      %v1055 = vld [vmem:[%s193 + $0x54] sm:$0xf]
      %v1056 = vld [vmem:[%s193 + $0x58] sm:$0xf]
      %v1057 = vld [vmem:[%s193 + $0x5c] sm:$0xf]
      %v1058 = vld [vmem:[%s193 + $0x60] sm:$0xf]
      %v1059 = vld [vmem:[%s193 + $0x64] sm:$0xf]
      %v1060 = vld [vmem:[%s193 + $0x68] sm:$0xf]
      %v1061 = vld [vmem:[%s193 + $0x6c] sm:$0xf]
      %v1062 = vld [vmem:[%s193 + $0x70] sm:$0xf]
      %v1063 = vld [vmem:[%s193 + $0x74] sm:$0xf]
      %v1064 = vld [vmem:[%s193 + $0x78] sm:$0xf]
      %v1065 = vld [vmem:[%s193 + $0x7c] sm:$0xf]
      %v1066 = vld [vmem:[%s193 + $0x80] sm:$0xf]
      %v1067 = vld [vmem:[%s193 + $0x84] sm:$0xf]
      %v1068 = vld [vmem:[%s193 + $0x88] sm:$0xf]
      %v1069 = vld [vmem:[%s193 + $0x8c] sm:$0xf]
      %v1070 = vld [vmem:[%s193 + $0x90] sm:$0xf]
      %v1071 = vld [vmem:[%s193 + $0x94] sm:$0xf]
      %v1072 = vld [vmem:[%s193 + $0x98] sm:$0xf]
      %v1073 = vld [vmem:[%s193 + $0x9c] sm:$0xf]
      %v1074 = vld [vmem:[%s193 + $0xa0] sm:$0xf]
      %v1075 = vld [vmem:[%s193 + $0xa4] sm:$0xf]
      %v1076 = vld [vmem:[%s193 + $0xa8] sm:$0xf]
      %v1077 = vld [vmem:[%s193 + $0xac] sm:$0xf]
      %v1078 = vld [vmem:[%s193 + $0xb0] sm:$0xf]
      %v1079 = vld [vmem:[%s193 + $0xb4] sm:$0xf]
      %v1080 = vld [vmem:[%s193 + $0xb8] sm:$0xf]
      %v1081 = vld [vmem:[%s193 + $0xbc] sm:$0xf]
      %v1082 = vld [vmem:[%s193 + $0xc0] sm:$0xf]
      %v1083 = vld [vmem:[%s193 + $0xc4] sm:$0xf]
      %v1084 = vld [vmem:[%s193 + $0xc8] sm:$0xf]
      %v1085 = vld [vmem:[%s193 + $0xcc] sm:$0xf]
      %v1086 = vld [vmem:[%s193 + $0xd0] sm:$0xf]
      %v1087 = vld [vmem:[%s193 + $0xd4] sm:$0xf]
      %v1088 = vld [vmem:[%s193 + $0xd8] sm:$0xf]
      %v1089 = vld [vmem:[%s193 + $0xdc] sm:$0xf]
      %v1090 = vld [vmem:[%s193 + $0xe0] sm:$0xf]
      %v1091 = vld [vmem:[%s193 + $0xe4] sm:$0xf]
      %v1092 = vld [vmem:[%s193 + $0xe8] sm:$0xf]
      %v1093 = vld [vmem:[%s193 + $0xec] sm:$0xf]
      %v1094 = vld [vmem:[%s193 + $0xf0] sm:$0xf]
      %v1095 = vld [vmem:[%s193 + $0xf4] sm:$0xf]
      %v1096 = vld [vmem:[%s193 + $0xf8] sm:$0xf]
      %v1097 = vld [vmem:[%s193 + $0xfc] sm:$0xf]
      %v1102 = vunpack.c.l.b16 %v1034
      %v1103 = vunpack.c.l.b16 %v1035
      %v1104 = vunpack.c.l.b16 %v1036
      %v1105 = vunpack.c.l.b16 %v1037
      %v1106 = vpack.c.b16 %v1103, %v1102
      %v1107 = vpack.c.b16 %v1105, %v1104
      %1110 = vxpose.xlu0.c.b16.start [1/8] %v1106, 128
      %1111 = vxpose.xlu0.c.b16.cont [2/8] %v1107, 128
      %1112 = vxpose.xlu0.c.b16.cont [3/8] 0, 128
      %1113 = vxpose.xlu0.c.b16.cont [4/8] 0, 128
      %1114 = vxpose.xlu0.c.b16.cont [5/8] 0, 128
      %1115 = vxpose.xlu0.c.b16.cont [6/8] 0, 128
      %1116 = vxpose.xlu0.c.b16.cont [7/8] 0, 128
      %1117 = vxpose.xlu0.c.b16.end [8/8] 0, 128
      %v1118 = vpop.trf.xlu0
      %v1119 = vpop.trf.xlu0
      %v1120 = vpop.trf.xlu0
      %v1121 = vpop.trf.xlu0
      %v1122 = vpop.trf.xlu0
      %v1123 = vpop.trf.xlu0
      %v1124 = vpop.trf.xlu0
      %v1125 = vpop.trf.xlu0
      %vm1126 = vcmask 261120
      %v1128 = vsel %vm1126, %v1118, 0
      %v1131 = vsel %vm1126, %v1119, 0
      %v1134 = vsel %vm1126, %v1120, 0
      %v1137 = vsel %vm1126, %v1121, 0
      %1139 = vmatprep.subr.bf16.mxu0 0
      %1140 = vmatpush1.bf16.msra.mxu0 %v1106
      %1141 = vmatprep.subr.bf16.mxu0 0
      %1142 = vmatpush1.bf16.msra.mxu0 %v1107
      %1143 = vmatprep.subr.bf16.mxu0 0
      %1144 = vmatpush1.bf16.msra.mxu0 0
      %1145 = vmatprep.subr.bf16.mxu0 0
      %1146 = vmatpush1.bf16.msra.mxu0 0
      %1147 = vmatprep.subr.bf16.mxu0 0
      %1148 = vmatpush1.bf16.msra.mxu0 0
      %1149 = vmatprep.subr.bf16.mxu0 0
      %1150 = vmatpush1.bf16.msra.mxu0 0
      %1151 = vmatprep.subr.bf16.mxu0 0
      %1152 = vmatpush1.bf16.msra.mxu0 0
      %1153 = vmatprep.subr.bf16.mxu0 0
      %1154 = vmatpush1.bf16.msra.mxu0 0
      %1155 = vmatprep.subr.bf16.mxu0 0
      %1156 = vmatpush1.bf16.msra.mxu0 0
      %1157 = vmatprep.subr.bf16.mxu0 0
      %1158 = vmatpush1.bf16.msra.mxu0 0
      %1159 = vmatprep.subr.bf16.mxu0 0
      %1160 = vmatpush1.bf16.msra.mxu0 0
      %1161 = vmatprep.subr.bf16.mxu0 0
      %1162 = vmatpush1.bf16.msra.mxu0 0
      %1163 = vmatprep.subr.bf16.mxu0 0
      %1164 = vmatpush1.bf16.msra.mxu0 0
      %1165 = vmatprep.subr.bf16.mxu0 0
      %1166 = vmatpush1.bf16.msra.mxu0 0
      %1167 = vmatprep.subr.bf16.mxu0 0
      %1168 = vmatpush1.bf16.msra.mxu0 0
      %1169 = vmatprep.subr.bf16.mxu0 0
      %1170 = vmatpush1.bf16.msra.mxu0 0
      %1171 = vmatprep.mubr.bf16.mxu0 0
      %1172 = vmatmul.mubr.bf16.gmra.mrb[0].mxu0 %v1128
      %v1173 = vpop.f32.mrb[0].mxu0
      %v1174 = vadd.f32 0.0, %v1173
      %v1175 = vpop.f32.mrb[0].mxu0
      %v1176 = vpop.f32.mrb[0].mxu0
      %v1177 = vadd.f32 0.0, %v1176
      %v1178 = vpop.f32.mrb[0].mxu0
      %1179 = vmatprep.mubr.bf16.mxu0 0
      %1180 = vmatmul.mubr.bf16.gmra.mrb[0].mxu0 %v1131
      %v1181 = vpop.f32.mrb[0].mxu0
      %v1182 = vadd.f32 0.0, %v1181
      %v1183 = vpop.f32.mrb[0].mxu0
      %v1184 = vpop.f32.mrb[0].mxu0
      %v1185 = vadd.f32 0.0, %v1184
      %v1186 = vpop.f32.mrb[0].mxu0
      %1187 = vmatprep.mubr.bf16.mxu0 0
      %1188 = vmatmul.mubr.bf16.gmra.mrb[0].mxu0 %v1134
      %v1189 = vpop.f32.mrb[0].mxu0
      %v1190 = vadd.f32 0.0, %v1189
      %v1191 = vpop.f32.mrb[0].mxu0
      %v1192 = vpop.f32.mrb[0].mxu0
      %v1193 = vadd.f32 0.0, %v1192
      %v1194 = vpop.f32.mrb[0].mxu0
      %1195 = vmatprep.mubr.bf16.mxu0 0
      %1196 = vmatmul.mubr.bf16.gmra.mrb[0].mxu0 %v1137
      %v1197 = vpop.f32.mrb[0].mxu0
      %v1198 = vadd.f32 0.0, %v1197
      %v1199 = vpop.f32.mrb[0].mxu0
      %v1200 = vpop.f32.mrb[0].mxu0
      %v1201 = vadd.f32 0.0, %v1200
      %v1202 = vpop.f32.mrb[0].mxu0
      %1203 = vdwg.mxu0
      %v1208 = vunpack.c.l.b16 %v1038
      %v1209 = vunpack.c.l.b16 %v1039
      %v1210 = vunpack.c.l.b16 %v1040
      %v1211 = vunpack.c.l.b16 %v1041
      %v1212 = vpack.c.b16 %v1209, %v1208
      %v1213 = vpack.c.b16 %v1211, %v1210
      %1216 = vxpose.xlu0.c.b16.start [1/8] %v1212, 128
      %1217 = vxpose.xlu0.c.b16.cont [2/8] %v1213, 128
      %1218 = vxpose.xlu0.c.b16.cont [3/8] 0, 128
      %1219 = vxpose.xlu0.c.b16.cont [4/8] 0, 128
      %1220 = vxpose.xlu0.c.b16.cont [5/8] 0, 128
      %1221 = vxpose.xlu0.c.b16.cont [6/8] 0, 128
      %1222 = vxpose.xlu0.c.b16.cont [7/8] 0, 128
      %1223 = vxpose.xlu0.c.b16.end [8/8] 0, 128
      %v1224 = vpop.trf.xlu0
      %v1225 = vpop.trf.xlu0
      %v1226 = vpop.trf.xlu0
      %v1227 = vpop.trf.xlu0
      %v1228 = vpop.trf.xlu0
      %v1229 = vpop.trf.xlu0
      %v1230 = vpop.trf.xlu0
      %v1231 = vpop.trf.xlu0
      %v1233 = vsel %vm1126, %v1224, 0
      %v1236 = vsel %vm1126, %v1225, 0
      %v1239 = vsel %vm1126, %v1226, 0
      %v1242 = vsel %vm1126, %v1227, 0
      %1244 = vmatprep.subr.bf16.mxu0 0
      %1245 = vmatpush1.bf16.msra.mxu0 %v1212
      %1246 = vmatprep.subr.bf16.mxu0 0
      %1247 = vmatpush1.bf16.msra.mxu0 %v1213
      %1248 = vmatprep.subr.bf16.mxu0 0
      %1249 = vmatpush1.bf16.msra.mxu0 0
      %1250 = vmatprep.subr.bf16.mxu0 0
      %1251 = vmatpush1.bf16.msra.mxu0 0
      %1252 = vmatprep.subr.bf16.mxu0 0
      %1253 = vmatpush1.bf16.msra.mxu0 0
      %1254 = vmatprep.subr.bf16.mxu0 0
      %1255 = vmatpush1.bf16.msra.mxu0 0
      %1256 = vmatprep.subr.bf16.mxu0 0
      %1257 = vmatpush1.bf16.msra.mxu0 0
      %1258 = vmatprep.subr.bf16.mxu0 0
      %1259 = vmatpush1.bf16.msra.mxu0 0
      %1260 = vmatprep.subr.bf16.mxu0 0
      %1261 = vmatpush1.bf16.msra.mxu0 0
      %1262 = vmatprep.subr.bf16.mxu0 0
      %1263 = vmatpush1.bf16.msra.mxu0 0
      %1264 = vmatprep.subr.bf16.mxu0 0
      %1265 = vmatpush1.bf16.msra.mxu0 0
      %1266 = vmatprep.subr.bf16.mxu0 0
      %1267 = vmatpush1.bf16.msra.mxu0 0
      %1268 = vmatprep.subr.bf16.mxu0 0
      %1269 = vmatpush1.bf16.msra.mxu0 0
      %1270 = vmatprep.subr.bf16.mxu0 0
      %1271 = vmatpush1.bf16.msra.mxu0 0
      %1272 = vmatprep.subr.bf16.mxu0 0
      %1273 = vmatpush1.bf16.msra.mxu0 0
      %1274 = vmatprep.subr.bf16.mxu0 0
      %1275 = vmatpush1.bf16.msra.mxu0 0
      %1276 = vmatprep.mubr.bf16.mxu0 0
      %1277 = vmatmul.mubr.bf16.gmra.mrb[0].mxu0 %v1233
      %v1278 = vpop.f32.mrb[0].mxu0
      %v1279 = vadd.f32 0.0, %v1278
      %v1280 = vpop.f32.mrb[0].mxu0
      %v1281 = vpop.f32.mrb[0].mxu0
      %v1282 = vadd.f32 0.0, %v1281
      %v1283 = vpop.f32.mrb[0].mxu0
      %1284 = vmatprep.mubr.bf16.mxu0 0
      %1285 = vmatmul.mubr.bf16.gmra.mrb[0].mxu0 %v1236
      %v1286 = vpop.f32.mrb[0].mxu0
      %v1287 = vadd.f32 0.0, %v1286
      %v1288 = vpop.f32.mrb[0].mxu0
      %v1289 = vpop.f32.mrb[0].mxu0
      %v1290 = vadd.f32 0.0, %v1289
      %v1291 = vpop.f32.mrb[0].mxu0
      %1292 = vmatprep.mubr.bf16.mxu0 0
      %1293 = vmatmul.mubr.bf16.gmra.mrb[0].mxu0 %v1239
      %v1294 = vpop.f32.mrb[0].mxu0
      %v1295 = vadd.f32 0.0, %v1294
      %v1296 = vpop.f32.mrb[0].mxu0
      %v1297 = vpop.f32.mrb[0].mxu0
      %v1298 = vadd.f32 0.0, %v1297
      %v1299 = vpop.f32.mrb[0].mxu0
      %1300 = vmatprep.mubr.bf16.mxu0 0
      %1301 = vmatmul.mubr.bf16.gmra.mrb[0].mxu0 %v1242
      %v1302 = vpop.f32.mrb[0].mxu0
      %v1303 = vadd.f32 0.0, %v1302
      %v1304 = vpop.f32.mrb[0].mxu0
      %v1305 = vpop.f32.mrb[0].mxu0
      %v1306 = vadd.f32 0.0, %v1305
      %v1307 = vpop.f32.mrb[0].mxu0
      %1308 = vdwg.mxu0
      %v1313 = vunpack.c.l.b16 %v1042
      %v1314 = vunpack.c.l.b16 %v1043
      %v1315 = vunpack.c.l.b16 %v1044
      %v1316 = vunpack.c.l.b16 %v1045
      %v1317 = vpack.c.b16 %v1314, %v1313
      %v1318 = vpack.c.b16 %v1316, %v1315
      %1321 = vxpose.xlu0.c.b16.start [1/8] %v1317, 128
      %1322 = vxpose.xlu0.c.b16.cont [2/8] %v1318, 128
      %1323 = vxpose.xlu0.c.b16.cont [3/8] 0, 128
      %1324 = vxpose.xlu0.c.b16.cont [4/8] 0, 128
      %1325 = vxpose.xlu0.c.b16.cont [5/8] 0, 128
      %1326 = vxpose.xlu0.c.b16.cont [6/8] 0, 128
      %1327 = vxpose.xlu0.c.b16.cont [7/8] 0, 128
      %1328 = vxpose.xlu0.c.b16.end [8/8] 0, 128
      %v1329 = vpop.trf.xlu0
      %v1330 = vpop.trf.xlu0
      %v1331 = vpop.trf.xlu0
      %v1332 = vpop.trf.xlu0
      %v1333 = vpop.trf.xlu0
      %v1334 = vpop.trf.xlu0
      %v1335 = vpop.trf.xlu0
      %v1336 = vpop.trf.xlu0
      %v1338 = vsel %vm1126, %v1329, 0
      %v1341 = vsel %vm1126, %v1330, 0
      %v1344 = vsel %vm1126, %v1331, 0
      %v1347 = vsel %vm1126, %v1332, 0
      %1349 = vmatprep.subr.bf16.mxu0 0
      %1350 = vmatpush1.bf16.msra.mxu0 %v1317
      %1351 = vmatprep.subr.bf16.mxu0 0
      %1352 = vmatpush1.bf16.msra.mxu0 %v1318
      %1353 = vmatprep.subr.bf16.mxu0 0
      %1354 = vmatpush1.bf16.msra.mxu0 0
      %1355 = vmatprep.subr.bf16.mxu0 0
      %1356 = vmatpush1.bf16.msra.mxu0 0
      %1357 = vmatprep.subr.bf16.mxu0 0
      %1358 = vmatpush1.bf16.msra.mxu0 0
      %1359 = vmatprep.subr.bf16.mxu0 0
      %1360 = vmatpush1.bf16.msra.mxu0 0
      %1361 = vmatprep.subr.bf16.mxu0 0
      %1362 = vmatpush1.bf16.msra.mxu0 0
      %1363 = vmatprep.subr.bf16.mxu0 0
      %1364 = vmatpush1.bf16.msra.mxu0 0
      %1365 = vmatprep.subr.bf16.mxu0 0
      %1366 = vmatpush1.bf16.msra.mxu0 0
      %1367 = vmatprep.subr.bf16.mxu0 0
      %1368 = vmatpush1.bf16.msra.mxu0 0
      %1369 = vmatprep.subr.bf16.mxu0 0
      %1370 = vmatpush1.bf16.msra.mxu0 0
      %1371 = vmatprep.subr.bf16.mxu0 0
      %1372 = vmatpush1.bf16.msra.mxu0 0
      %1373 = vmatprep.subr.bf16.mxu0 0
      %1374 = vmatpush1.bf16.msra.mxu0 0
      %1375 = vmatprep.subr.bf16.mxu0 0
      %1376 = vmatpush1.bf16.msra.mxu0 0
      %1377 = vmatprep.subr.bf16.mxu0 0
      %1378 = vmatpush1.bf16.msra.mxu0 0
      %1379 = vmatprep.subr.bf16.mxu0 0
      %1380 = vmatpush1.bf16.msra.mxu0 0
      %1381 = vmatprep.mubr.bf16.mxu0 0
      %1382 = vmatmul.mubr.bf16.gmra.mrb[0].mxu0 %v1338
      %v1383 = vpop.f32.mrb[0].mxu0
      %v1384 = vadd.f32 0.0, %v1383
      %v1385 = vpop.f32.mrb[0].mxu0
      %v1386 = vpop.f32.mrb[0].mxu0
      %v1387 = vadd.f32 0.0, %v1386
      %v1388 = vpop.f32.mrb[0].mxu0
      %1389 = vmatprep.mubr.bf16.mxu0 0
      %1390 = vmatmul.mubr.bf16.gmra.mrb[0].mxu0 %v1341
      %v1391 = vpop.f32.mrb[0].mxu0
      %v1392 = vadd.f32 0.0, %v1391
      %v1393 = vpop.f32.mrb[0].mxu0
      %v1394 = vpop.f32.mrb[0].mxu0
      %v1395 = vadd.f32 0.0, %v1394
      %v1396 = vpop.f32.mrb[0].mxu0
      %1397 = vmatprep.mubr.bf16.mxu0 0
      %1398 = vmatmul.mubr.bf16.gmra.mrb[0].mxu0 %v1344
      %v1399 = vpop.f32.mrb[0].mxu0
      %v1400 = vadd.f32 0.0, %v1399
      %v1401 = vpop.f32.mrb[0].mxu0
      %v1402 = vpop.f32.mrb[0].mxu0
      %v1403 = vadd.f32 0.0, %v1402
      %v1404 = vpop.f32.mrb[0].mxu0
      %1405 = vmatprep.mubr.bf16.mxu0 0
      %1406 = vmatmul.mubr.bf16.gmra.mrb[0].mxu0 %v1347
      %v1407 = vpop.f32.mrb[0].mxu0
      %v1408 = vadd.f32 0.0, %v1407
      %v1409 = vpop.f32.mrb[0].mxu0
      %v1410 = vpop.f32.mrb[0].mxu0
      %v1411 = vadd.f32 0.0, %v1410
      %v1412 = vpop.f32.mrb[0].mxu0
      %1413 = vdwg.mxu0
      %v1418 = vunpack.c.l.b16 %v1046
      %v1419 = vunpack.c.l.b16 %v1047
      %v1420 = vunpack.c.l.b16 %v1048
      %v1421 = vunpack.c.l.b16 %v1049
      %v1422 = vpack.c.b16 %v1419, %v1418
      %v1423 = vpack.c.b16 %v1421, %v1420
      %1426 = vxpose.xlu0.c.b16.start [1/8] %v1422, 128
      %1427 = vxpose.xlu0.c.b16.cont [2/8] %v1423, 128
      %1428 = vxpose.xlu0.c.b16.cont [3/8] 0, 128
      %1429 = vxpose.xlu0.c.b16.cont [4/8] 0, 128
      %1430 = vxpose.xlu0.c.b16.cont [5/8] 0, 128
      %1431 = vxpose.xlu0.c.b16.cont [6/8] 0, 128
      %1432 = vxpose.xlu0.c.b16.cont [7/8] 0, 128
      %1433 = vxpose.xlu0.c.b16.end [8/8] 0, 128
      %v1434 = vpop.trf.xlu0
      %v1435 = vpop.trf.xlu0
      %v1436 = vpop.trf.xlu0
      %v1437 = vpop.trf.xlu0
      %v1438 = vpop.trf.xlu0
      %v1439 = vpop.trf.xlu0
      %v1440 = vpop.trf.xlu0
      %v1441 = vpop.trf.xlu0
      %v1443 = vsel %vm1126, %v1434, 0
      %v1446 = vsel %vm1126, %v1435, 0
      %v1449 = vsel %vm1126, %v1436, 0
      %v1452 = vsel %vm1126, %v1437, 0
      %1454 = vmatprep.subr.bf16.mxu0 0
      %1455 = vmatpush1.bf16.msra.mxu0 %v1422
      %1456 = vmatprep.subr.bf16.mxu0 0
      %1457 = vmatpush1.bf16.msra.mxu0 %v1423
      %1458 = vmatprep.subr.bf16.mxu0 0
      %1459 = vmatpush1.bf16.msra.mxu0 0
      %1460 = vmatprep.subr.bf16.mxu0 0
      %1461 = vmatpush1.bf16.msra.mxu0 0
      %1462 = vmatprep.subr.bf16.mxu0 0
      %1463 = vmatpush1.bf16.msra.mxu0 0
      %1464 = vmatprep.subr.bf16.mxu0 0
      %1465 = vmatpush1.bf16.msra.mxu0 0
      %1466 = vmatprep.subr.bf16.mxu0 0
      %1467 = vmatpush1.bf16.msra.mxu0 0
      %1468 = vmatprep.subr.bf16.mxu0 0
      %1469 = vmatpush1.bf16.msra.mxu0 0
      %1470 = vmatprep.subr.bf16.mxu0 0
      %1471 = vmatpush1.bf16.msra.mxu0 0
      %1472 = vmatprep.subr.bf16.mxu0 0
      %1473 = vmatpush1.bf16.msra.mxu0 0
      %1474 = vmatprep.subr.bf16.mxu0 0
      %1475 = vmatpush1.bf16.msra.mxu0 0
      %1476 = vmatprep.subr.bf16.mxu0 0
      %1477 = vmatpush1.bf16.msra.mxu0 0
      %1478 = vmatprep.subr.bf16.mxu0 0
      %1479 = vmatpush1.bf16.msra.mxu0 0
      %1480 = vmatprep.subr.bf16.mxu0 0
      %1481 = vmatpush1.bf16.msra.mxu0 0
      %1482 = vmatprep.subr.bf16.mxu0 0
      %1483 = vmatpush1.bf16.msra.mxu0 0
      %1484 = vmatprep.subr.bf16.mxu0 0
      %1485 = vmatpush1.bf16.msra.mxu0 0
      %1486 = vmatprep.mubr.bf16.mxu0 0
      %1487 = vmatmul.mubr.bf16.gmra.mrb[0].mxu0 %v1443
      %v1488 = vpop.f32.mrb[0].mxu0
      %v1489 = vadd.f32 0.0, %v1488
      %v1490 = vpop.f32.mrb[0].mxu0
      %v1491 = vpop.f32.mrb[0].mxu0
      %v1492 = vadd.f32 0.0, %v1491
      %v1493 = vpop.f32.mrb[0].mxu0
      %1494 = vmatprep.mubr.bf16.mxu0 0
      %1495 = vmatmul.mubr.bf16.gmra.mrb[0].mxu0 %v1446
      %v1496 = vpop.f32.mrb[0].mxu0
      %v1497 = vadd.f32 0.0, %v1496
      %v1498 = vpop.f32.mrb[0].mxu0
      %v1499 = vpop.f32.mrb[0].mxu0
      %v1500 = vadd.f32 0.0, %v1499
      %v1501 = vpop.f32.mrb[0].mxu0
      %1502 = vmatprep.mubr.bf16.mxu0 0
      %1503 = vmatmul.mubr.bf16.gmra.mrb[0].mxu0 %v1449
      %v1504 = vpop.f32.mrb[0].mxu0
      %v1505 = vadd.f32 0.0, %v1504
      %v1506 = vpop.f32.mrb[0].mxu0
      %v1507 = vpop.f32.mrb[0].mxu0
      %v1508 = vadd.f32 0.0, %v1507
      %v1509 = vpop.f32.mrb[0].mxu0
      %1510 = vmatprep.mubr.bf16.mxu0 0
      %1511 = vmatmul.mubr.bf16.gmra.mrb[0].mxu0 %v1452
      %v1512 = vpop.f32.mrb[0].mxu0
      %v1513 = vadd.f32 0.0, %v1512
      %v1514 = vpop.f32.mrb[0].mxu0
      %v1515 = vpop.f32.mrb[0].mxu0
      %v1516 = vadd.f32 0.0, %v1515
      %v1517 = vpop.f32.mrb[0].mxu0
      %1518 = vdwg.mxu0
      %v1523 = vunpack.c.l.b16 %v1050
      %v1524 = vunpack.c.l.b16 %v1051
      %v1525 = vunpack.c.l.b16 %v1052
      %v1526 = vunpack.c.l.b16 %v1053
      %v1527 = vpack.c.b16 %v1524, %v1523
      %v1528 = vpack.c.b16 %v1526, %v1525
      %1531 = vxpose.xlu0.c.b16.start [1/8] %v1527, 128
      %1532 = vxpose.xlu0.c.b16.cont [2/8] %v1528, 128
      %1533 = vxpose.xlu0.c.b16.cont [3/8] 0, 128
      %1534 = vxpose.xlu0.c.b16.cont [4/8] 0, 128
      %1535 = vxpose.xlu0.c.b16.cont [5/8] 0, 128
      %1536 = vxpose.xlu0.c.b16.cont [6/8] 0, 128
      %1537 = vxpose.xlu0.c.b16.cont [7/8] 0, 128
      %1538 = vxpose.xlu0.c.b16.end [8/8] 0, 128
      %v1539 = vpop.trf.xlu0
      %v1540 = vpop.trf.xlu0
      %v1541 = vpop.trf.xlu0
      %v1542 = vpop.trf.xlu0
      %v1543 = vpop.trf.xlu0
      %v1544 = vpop.trf.xlu0
      %v1545 = vpop.trf.xlu0
      %v1546 = vpop.trf.xlu0
      %v1548 = vsel %vm1126, %v1539, 0
      %v1551 = vsel %vm1126, %v1540, 0
      %v1554 = vsel %vm1126, %v1541, 0
      %v1557 = vsel %vm1126, %v1542, 0
      %1559 = vmatprep.subr.bf16.mxu0 0
      %1560 = vmatpush1.bf16.msra.mxu0 %v1527
      %1561 = vmatprep.subr.bf16.mxu0 0
      %1562 = vmatpush1.bf16.msra.mxu0 %v1528
      %1563 = vmatprep.subr.bf16.mxu0 0
      %1564 = vmatpush1.bf16.msra.mxu0 0
      %1565 = vmatprep.subr.bf16.mxu0 0
      %1566 = vmatpush1.bf16.msra.mxu0 0
      %1567 = vmatprep.subr.bf16.mxu0 0
      %1568 = vmatpush1.bf16.msra.mxu0 0
      %1569 = vmatprep.subr.bf16.mxu0 0
      %1570 = vmatpush1.bf16.msra.mxu0 0
      %1571 = vmatprep.subr.bf16.mxu0 0
      %1572 = vmatpush1.bf16.msra.mxu0 0
      %1573 = vmatprep.subr.bf16.mxu0 0
      %1574 = vmatpush1.bf16.msra.mxu0 0
      %1575 = vmatprep.subr.bf16.mxu0 0
      %1576 = vmatpush1.bf16.msra.mxu0 0
      %1577 = vmatprep.subr.bf16.mxu0 0
      %1578 = vmatpush1.bf16.msra.mxu0 0
      %1579 = vmatprep.subr.bf16.mxu0 0
      %1580 = vmatpush1.bf16.msra.mxu0 0
      %1581 = vmatprep.subr.bf16.mxu0 0
      %1582 = vmatpush1.bf16.msra.mxu0 0
      %1583 = vmatprep.subr.bf16.mxu0 0
      %1584 = vmatpush1.bf16.msra.mxu0 0
      %1585 = vmatprep.subr.bf16.mxu0 0
      %1586 = vmatpush1.bf16.msra.mxu0 0
      %1587 = vmatprep.subr.bf16.mxu0 0
      %1588 = vmatpush1.bf16.msra.mxu0 0
      %1589 = vmatprep.subr.bf16.mxu0 0
      %1590 = vmatpush1.bf16.msra.mxu0 0
      %1591 = vmatprep.mubr.bf16.mxu0 0
      %1592 = vmatmul.mubr.bf16.gmra.mrb[0].mxu0 %v1548
      %v1593 = vpop.f32.mrb[0].mxu0
      %v1594 = vadd.f32 0.0, %v1593
      %v1595 = vpop.f32.mrb[0].mxu0
      %v1596 = vpop.f32.mrb[0].mxu0
      %v1597 = vadd.f32 0.0, %v1596
      %v1598 = vpop.f32.mrb[0].mxu0
      %1599 = vmatprep.mubr.bf16.mxu0 0
      %1600 = vmatmul.mubr.bf16.gmra.mrb[0].mxu0 %v1551
      %v1601 = vpop.f32.mrb[0].mxu0
      %v1602 = vadd.f32 0.0, %v1601
      %v1603 = vpop.f32.mrb[0].mxu0
      %v1604 = vpop.f32.mrb[0].mxu0
      %v1605 = vadd.f32 0.0, %v1604
      %v1606 = vpop.f32.mrb[0].mxu0
      %1607 = vmatprep.mubr.bf16.mxu0 0
      %1608 = vmatmul.mubr.bf16.gmra.mrb[0].mxu0 %v1554
      %v1609 = vpop.f32.mrb[0].mxu0
      %v1610 = vadd.f32 0.0, %v1609
      %v1611 = vpop.f32.mrb[0].mxu0
      %v1612 = vpop.f32.mrb[0].mxu0
      %v1613 = vadd.f32 0.0, %v1612
      %v1614 = vpop.f32.mrb[0].mxu0
      %1615 = vmatprep.mubr.bf16.mxu0 0
      %1616 = vmatmul.mubr.bf16.gmra.mrb[0].mxu0 %v1557
      %v1617 = vpop.f32.mrb[0].mxu0
      %v1618 = vadd.f32 0.0, %v1617
      %v1619 = vpop.f32.mrb[0].mxu0
      %v1620 = vpop.f32.mrb[0].mxu0
      %v1621 = vadd.f32 0.0, %v1620
      %v1622 = vpop.f32.mrb[0].mxu0
      %1623 = vdwg.mxu0
      %v1628 = vunpack.c.l.b16 %v1054
      %v1629 = vunpack.c.l.b16 %v1055
      %v1630 = vunpack.c.l.b16 %v1056
      %v1631 = vunpack.c.l.b16 %v1057
      %v1632 = vpack.c.b16 %v1629, %v1628
      %v1633 = vpack.c.b16 %v1631, %v1630
      %1636 = vxpose.xlu0.c.b16.start [1/8] %v1632, 128
      %1637 = vxpose.xlu0.c.b16.cont [2/8] %v1633, 128
      %1638 = vxpose.xlu0.c.b16.cont [3/8] 0, 128
      %1639 = vxpose.xlu0.c.b16.cont [4/8] 0, 128
      %1640 = vxpose.xlu0.c.b16.cont [5/8] 0, 128
      %1641 = vxpose.xlu0.c.b16.cont [6/8] 0, 128
      %1642 = vxpose.xlu0.c.b16.cont [7/8] 0, 128
      %1643 = vxpose.xlu0.c.b16.end [8/8] 0, 128
      %v1644 = vpop.trf.xlu0
      %v1645 = vpop.trf.xlu0
      %v1646 = vpop.trf.xlu0
      %v1647 = vpop.trf.xlu0
      %v1648 = vpop.trf.xlu0
      %v1649 = vpop.trf.xlu0
      %v1650 = vpop.trf.xlu0
      %v1651 = vpop.trf.xlu0
      %v1653 = vsel %vm1126, %v1644, 0
      %v1656 = vsel %vm1126, %v1645, 0
      %v1659 = vsel %vm1126, %v1646, 0
      %v1662 = vsel %vm1126, %v1647, 0
      %1664 = vmatprep.subr.bf16.mxu0 0
      %1665 = vmatpush1.bf16.msra.mxu0 %v1632
      %1666 = vmatprep.subr.bf16.mxu0 0
      %1667 = vmatpush1.bf16.msra.mxu0 %v1633
      %1668 = vmatprep.subr.bf16.mxu0 0
      %1669 = vmatpush1.bf16.msra.mxu0 0
      %1670 = vmatprep.subr.bf16.mxu0 0
      %1671 = vmatpush1.bf16.msra.mxu0 0
      %1672 = vmatprep.subr.bf16.mxu0 0
      %1673 = vmatpush1.bf16.msra.mxu0 0
      %1674 = vmatprep.subr.bf16.mxu0 0
      %1675 = vmatpush1.bf16.msra.mxu0 0
      %1676 = vmatprep.subr.bf16.mxu0 0
      %1677 = vmatpush1.bf16.msra.mxu0 0
      %1678 = vmatprep.subr.bf16.mxu0 0
      %1679 = vmatpush1.bf16.msra.mxu0 0
      %1680 = vmatprep.subr.bf16.mxu0 0
      %1681 = vmatpush1.bf16.msra.mxu0 0
      %1682 = vmatprep.subr.bf16.mxu0 0
      %1683 = vmatpush1.bf16.msra.mxu0 0
      %1684 = vmatprep.subr.bf16.mxu0 0
      %1685 = vmatpush1.bf16.msra.mxu0 0
      %1686 = vmatprep.subr.bf16.mxu0 0
      %1687 = vmatpush1.bf16.msra.mxu0 0
      %1688 = vmatprep.subr.bf16.mxu0 0
      %1689 = vmatpush1.bf16.msra.mxu0 0
      %1690 = vmatprep.subr.bf16.mxu0 0
      %1691 = vmatpush1.bf16.msra.mxu0 0
      %1692 = vmatprep.subr.bf16.mxu0 0
      %1693 = vmatpush1.bf16.msra.mxu0 0
      %1694 = vmatprep.subr.bf16.mxu0 0
      %1695 = vmatpush1.bf16.msra.mxu0 0
      %1696 = vmatprep.mubr.bf16.mxu0 0
      %1697 = vmatmul.mubr.bf16.gmra.mrb[0].mxu0 %v1653
      %v1698 = vpop.f32.mrb[0].mxu0
      %v1699 = vadd.f32 0.0, %v1698
      %v1700 = vpop.f32.mrb[0].mxu0
      %v1701 = vpop.f32.mrb[0].mxu0
      %v1702 = vadd.f32 0.0, %v1701
      %v1703 = vpop.f32.mrb[0].mxu0
      %1704 = vmatprep.mubr.bf16.mxu0 0
      %1705 = vmatmul.mubr.bf16.gmra.mrb[0].mxu0 %v1656
      %v1706 = vpop.f32.mrb[0].mxu0
      %v1707 = vadd.f32 0.0, %v1706
      %v1708 = vpop.f32.mrb[0].mxu0
      %v1709 = vpop.f32.mrb[0].mxu0
      %v1710 = vadd.f32 0.0, %v1709
      %v1711 = vpop.f32.mrb[0].mxu0
      %1712 = vmatprep.mubr.bf16.mxu0 0
      %1713 = vmatmul.mubr.bf16.gmra.mrb[0].mxu0 %v1659
      %v1714 = vpop.f32.mrb[0].mxu0
      %v1715 = vadd.f32 0.0, %v1714
      %v1716 = vpop.f32.mrb[0].mxu0
      %v1717 = vpop.f32.mrb[0].mxu0
      %v1718 = vadd.f32 0.0, %v1717
      %v1719 = vpop.f32.mrb[0].mxu0
      %1720 = vmatprep.mubr.bf16.mxu0 0
      %1721 = vmatmul.mubr.bf16.gmra.mrb[0].mxu0 %v1662
      %v1722 = vpop.f32.mrb[0].mxu0
      %v1723 = vadd.f32 0.0, %v1722
      %v1724 = vpop.f32.mrb[0].mxu0
      %v1725 = vpop.f32.mrb[0].mxu0
      %v1726 = vadd.f32 0.0, %v1725
      %v1727 = vpop.f32.mrb[0].mxu0
      %1728 = vdwg.mxu0
      %v1733 = vunpack.c.l.b16 %v1058
      %v1734 = vunpack.c.l.b16 %v1059
      %v1735 = vunpack.c.l.b16 %v1060
      %v1736 = vunpack.c.l.b16 %v1061
      %v1737 = vpack.c.b16 %v1734, %v1733
      %v1738 = vpack.c.b16 %v1736, %v1735
      %1741 = vxpose.xlu0.c.b16.start [1/8] %v1737, 128
      %1742 = vxpose.xlu0.c.b16.cont [2/8] %v1738, 128
      %1743 = vxpose.xlu0.c.b16.cont [3/8] 0, 128
      %1744 = vxpose.xlu0.c.b16.cont [4/8] 0, 128
      %1745 = vxpose.xlu0.c.b16.cont [5/8] 0, 128
      %1746 = vxpose.xlu0.c.b16.cont [6/8] 0, 128
      %1747 = vxpose.xlu0.c.b16.cont [7/8] 0, 128
      %1748 = vxpose.xlu0.c.b16.end [8/8] 0, 128
      %v1749 = vpop.trf.xlu0
      %v1750 = vpop.trf.xlu0
      %v1751 = vpop.trf.xlu0
      %v1752 = vpop.trf.xlu0
      %v1753 = vpop.trf.xlu0
      %v1754 = vpop.trf.xlu0
      %v1755 = vpop.trf.xlu0
      %v1756 = vpop.trf.xlu0
      %v1758 = vsel %vm1126, %v1749, 0
      %v1761 = vsel %vm1126, %v1750, 0
      %v1764 = vsel %vm1126, %v1751, 0
      %v1767 = vsel %vm1126, %v1752, 0
      %1769 = vmatprep.subr.bf16.mxu0 0
      %1770 = vmatpush1.bf16.msra.mxu0 %v1737
      %1771 = vmatprep.subr.bf16.mxu0 0
      %1772 = vmatpush1.bf16.msra.mxu0 %v1738
      %1773 = vmatprep.subr.bf16.mxu0 0
      %1774 = vmatpush1.bf16.msra.mxu0 0
      %1775 = vmatprep.subr.bf16.mxu0 0
      %1776 = vmatpush1.bf16.msra.mxu0 0
      %1777 = vmatprep.subr.bf16.mxu0 0
      %1778 = vmatpush1.bf16.msra.mxu0 0
      %1779 = vmatprep.subr.bf16.mxu0 0
      %1780 = vmatpush1.bf16.msra.mxu0 0
      %1781 = vmatprep.subr.bf16.mxu0 0
      %1782 = vmatpush1.bf16.msra.mxu0 0
      %1783 = vmatprep.subr.bf16.mxu0 0
      %1784 = vmatpush1.bf16.msra.mxu0 0
      %1785 = vmatprep.subr.bf16.mxu0 0
      %1786 = vmatpush1.bf16.msra.mxu0 0
      %1787 = vmatprep.subr.bf16.mxu0 0
      %1788 = vmatpush1.bf16.msra.mxu0 0
      %1789 = vmatprep.subr.bf16.mxu0 0
      %1790 = vmatpush1.bf16.msra.mxu0 0
      %1791 = vmatprep.subr.bf16.mxu0 0
      %1792 = vmatpush1.bf16.msra.mxu0 0
      %1793 = vmatprep.subr.bf16.mxu0 0
      %1794 = vmatpush1.bf16.msra.mxu0 0
      %1795 = vmatprep.subr.bf16.mxu0 0
      %1796 = vmatpush1.bf16.msra.mxu0 0
      %1797 = vmatprep.subr.bf16.mxu0 0
      %1798 = vmatpush1.bf16.msra.mxu0 0
      %1799 = vmatprep.subr.bf16.mxu0 0
      %1800 = vmatpush1.bf16.msra.mxu0 0
      %1801 = vmatprep.mubr.bf16.mxu0 0
      %1802 = vmatmul.mubr.bf16.gmra.mrb[0].mxu0 %v1758
      %v1803 = vpop.f32.mrb[0].mxu0
      %v1804 = vadd.f32 0.0, %v1803
      %v1805 = vpop.f32.mrb[0].mxu0
      %v1806 = vpop.f32.mrb[0].mxu0
      %v1807 = vadd.f32 0.0, %v1806
      %v1808 = vpop.f32.mrb[0].mxu0
      %1809 = vmatprep.mubr.bf16.mxu0 0
      %1810 = vmatmul.mubr.bf16.gmra.mrb[0].mxu0 %v1761
      %v1811 = vpop.f32.mrb[0].mxu0
      %v1812 = vadd.f32 0.0, %v1811
      %v1813 = vpop.f32.mrb[0].mxu0
      %v1814 = vpop.f32.mrb[0].mxu0
      %v1815 = vadd.f32 0.0, %v1814
      %v1816 = vpop.f32.mrb[0].mxu0
      %1817 = vmatprep.mubr.bf16.mxu0 0
      %1818 = vmatmul.mubr.bf16.gmra.mrb[0].mxu0 %v1764
      %v1819 = vpop.f32.mrb[0].mxu0
      %v1820 = vadd.f32 0.0, %v1819
      %v1821 = vpop.f32.mrb[0].mxu0
      %v1822 = vpop.f32.mrb[0].mxu0
      %v1823 = vadd.f32 0.0, %v1822
      %v1824 = vpop.f32.mrb[0].mxu0
      %1825 = vmatprep.mubr.bf16.mxu0 0
      %1826 = vmatmul.mubr.bf16.gmra.mrb[0].mxu0 %v1767
      %v1827 = vpop.f32.mrb[0].mxu0
      %v1828 = vadd.f32 0.0, %v1827
      %v1829 = vpop.f32.mrb[0].mxu0
      %v1830 = vpop.f32.mrb[0].mxu0
      %v1831 = vadd.f32 0.0, %v1830
      %v1832 = vpop.f32.mrb[0].mxu0
      %1833 = vdwg.mxu0
      %v1838 = vunpack.c.l.b16 %v1062
      %v1839 = vunpack.c.l.b16 %v1063
      %v1840 = vunpack.c.l.b16 %v1064
      %v1841 = vunpack.c.l.b16 %v1065
      %v1842 = vpack.c.b16 %v1839, %v1838
      %v1843 = vpack.c.b16 %v1841, %v1840
      %1846 = vxpose.xlu0.c.b16.start [1/8] %v1842, 128
      %1847 = vxpose.xlu0.c.b16.cont [2/8] %v1843, 128
      %1848 = vxpose.xlu0.c.b16.cont [3/8] 0, 128
      %1849 = vxpose.xlu0.c.b16.cont [4/8] 0, 128
      %1850 = vxpose.xlu0.c.b16.cont [5/8] 0, 128
      %1851 = vxpose.xlu0.c.b16.cont [6/8] 0, 128
      %1852 = vxpose.xlu0.c.b16.cont [7/8] 0, 128
      %1853 = vxpose.xlu0.c.b16.end [8/8] 0, 128
      %v1854 = vpop.trf.xlu0
      %v1855 = vpop.trf.xlu0
      %v1856 = vpop.trf.xlu0
      %v1857 = vpop.trf.xlu0
      %v1858 = vpop.trf.xlu0
      %v1859 = vpop.trf.xlu0
      %v1860 = vpop.trf.xlu0
      %v1861 = vpop.trf.xlu0
      %v1863 = vsel %vm1126, %v1854, 0
      %v1866 = vsel %vm1126, %v1855, 0
      %v1869 = vsel %vm1126, %v1856, 0
      %v1872 = vsel %vm1126, %v1857, 0
      %1874 = vmatprep.subr.bf16.mxu0 0
      %1875 = vmatpush1.bf16.msra.mxu0 %v1842
      %1876 = vmatprep.subr.bf16.mxu0 0
      %1877 = vmatpush1.bf16.msra.mxu0 %v1843
      %1878 = vmatprep.subr.bf16.mxu0 0
      %1879 = vmatpush1.bf16.msra.mxu0 0
      %1880 = vmatprep.subr.bf16.mxu0 0
      %1881 = vmatpush1.bf16.msra.mxu0 0
      %1882 = vmatprep.subr.bf16.mxu0 0
      %1883 = vmatpush1.bf16.msra.mxu0 0
      %1884 = vmatprep.subr.bf16.mxu0 0
      %1885 = vmatpush1.bf16.msra.mxu0 0
      %1886 = vmatprep.subr.bf16.mxu0 0
      %1887 = vmatpush1.bf16.msra.mxu0 0
      %1888 = vmatprep.subr.bf16.mxu0 0
      %1889 = vmatpush1.bf16.msra.mxu0 0
      %1890 = vmatprep.subr.bf16.mxu0 0
      %1891 = vmatpush1.bf16.msra.mxu0 0
      %1892 = vmatprep.subr.bf16.mxu0 0
      %1893 = vmatpush1.bf16.msra.mxu0 0
      %1894 = vmatprep.subr.bf16.mxu0 0
      %1895 = vmatpush1.bf16.msra.mxu0 0
      %1896 = vmatprep.subr.bf16.mxu0 0
      %1897 = vmatpush1.bf16.msra.mxu0 0
      %1898 = vmatprep.subr.bf16.mxu0 0
      %1899 = vmatpush1.bf16.msra.mxu0 0
      %1900 = vmatprep.subr.bf16.mxu0 0
      %1901 = vmatpush1.bf16.msra.mxu0 0
      %1902 = vmatprep.subr.bf16.mxu0 0
      %1903 = vmatpush1.bf16.msra.mxu0 0
      %1904 = vmatprep.subr.bf16.mxu0 0
      %1905 = vmatpush1.bf16.msra.mxu0 0
      %1906 = vmatprep.mubr.bf16.mxu0 0
      %1907 = vmatmul.mubr.bf16.gmra.mrb[0].mxu0 %v1863
      %v1908 = vpop.f32.mrb[0].mxu0
      %v1909 = vadd.f32 0.0, %v1908
      %v1910 = vpop.f32.mrb[0].mxu0
      %v1911 = vpop.f32.mrb[0].mxu0
      %v1912 = vadd.f32 0.0, %v1911
      %v1913 = vpop.f32.mrb[0].mxu0
      %1914 = vmatprep.mubr.bf16.mxu0 0
      %1915 = vmatmul.mubr.bf16.gmra.mrb[0].mxu0 %v1866
      %v1916 = vpop.f32.mrb[0].mxu0
      %v1917 = vadd.f32 0.0, %v1916
      %v1918 = vpop.f32.mrb[0].mxu0
      %v1919 = vpop.f32.mrb[0].mxu0
      %v1920 = vadd.f32 0.0, %v1919
      %v1921 = vpop.f32.mrb[0].mxu0
      %1922 = vmatprep.mubr.bf16.mxu0 0
      %1923 = vmatmul.mubr.bf16.gmra.mrb[0].mxu0 %v1869
      %v1924 = vpop.f32.mrb[0].mxu0
      %v1925 = vadd.f32 0.0, %v1924
      %v1926 = vpop.f32.mrb[0].mxu0
      %v1927 = vpop.f32.mrb[0].mxu0
      %v1928 = vadd.f32 0.0, %v1927
      %v1929 = vpop.f32.mrb[0].mxu0
      %1930 = vmatprep.mubr.bf16.mxu0 0
      %1931 = vmatmul.mubr.bf16.gmra.mrb[0].mxu0 %v1872
      %v1932 = vpop.f32.mrb[0].mxu0
      %v1933 = vadd.f32 0.0, %v1932
      %v1934 = vpop.f32.mrb[0].mxu0
      %v1935 = vpop.f32.mrb[0].mxu0
      %v1936 = vadd.f32 0.0, %v1935
      %v1937 = vpop.f32.mrb[0].mxu0
      %1938 = vdwg.mxu0
      %v1943 = vunpack.c.l.b16 %v1066
      %v1944 = vunpack.c.l.b16 %v1067
      %v1945 = vunpack.c.l.b16 %v1068
      %v1946 = vunpack.c.l.b16 %v1069
      %v1947 = vpack.c.b16 %v1944, %v1943
      %v1948 = vpack.c.b16 %v1946, %v1945
      %1951 = vxpose.xlu0.c.b16.start [1/8] %v1947, 128
      %1952 = vxpose.xlu0.c.b16.cont [2/8] %v1948, 128
      %1953 = vxpose.xlu0.c.b16.cont [3/8] 0, 128
      %1954 = vxpose.xlu0.c.b16.cont [4/8] 0, 128
      %1955 = vxpose.xlu0.c.b16.cont [5/8] 0, 128
      %1956 = vxpose.xlu0.c.b16.cont [6/8] 0, 128
      %1957 = vxpose.xlu0.c.b16.cont [7/8] 0, 128
      %1958 = vxpose.xlu0.c.b16.end [8/8] 0, 128
      %v1959 = vpop.trf.xlu0
      %v1960 = vpop.trf.xlu0
      %v1961 = vpop.trf.xlu0
      %v1962 = vpop.trf.xlu0
      %v1963 = vpop.trf.xlu0
      %v1964 = vpop.trf.xlu0
      %v1965 = vpop.trf.xlu0
      %v1966 = vpop.trf.xlu0
      %v1968 = vsel %vm1126, %v1959, 0
      %v1971 = vsel %vm1126, %v1960, 0
      %v1974 = vsel %vm1126, %v1961, 0
      %v1977 = vsel %vm1126, %v1962, 0
      %1979 = vmatprep.subr.bf16.mxu0 0
      %1980 = vmatpush1.bf16.msra.mxu0 %v1947
      %1981 = vmatprep.subr.bf16.mxu0 0
      %1982 = vmatpush1.bf16.msra.mxu0 %v1948
      %1983 = vmatprep.subr.bf16.mxu0 0
      %1984 = vmatpush1.bf16.msra.mxu0 0
      %1985 = vmatprep.subr.bf16.mxu0 0
      %1986 = vmatpush1.bf16.msra.mxu0 0
      %1987 = vmatprep.subr.bf16.mxu0 0
      %1988 = vmatpush1.bf16.msra.mxu0 0
      %1989 = vmatprep.subr.bf16.mxu0 0
      %1990 = vmatpush1.bf16.msra.mxu0 0
      %1991 = vmatprep.subr.bf16.mxu0 0
      %1992 = vmatpush1.bf16.msra.mxu0 0
      %1993 = vmatprep.subr.bf16.mxu0 0
      %1994 = vmatpush1.bf16.msra.mxu0 0
      %1995 = vmatprep.subr.bf16.mxu0 0
      %1996 = vmatpush1.bf16.msra.mxu0 0
      %1997 = vmatprep.subr.bf16.mxu0 0
      %1998 = vmatpush1.bf16.msra.mxu0 0
      %1999 = vmatprep.subr.bf16.mxu0 0
      %2000 = vmatpush1.bf16.msra.mxu0 0
      %2001 = vmatprep.subr.bf16.mxu0 0
      %2002 = vmatpush1.bf16.msra.mxu0 0
      %2003 = vmatprep.subr.bf16.mxu0 0
      %2004 = vmatpush1.bf16.msra.mxu0 0
      %2005 = vmatprep.subr.bf16.mxu0 0
      %2006 = vmatpush1.bf16.msra.mxu0 0
      %2007 = vmatprep.subr.bf16.mxu0 0
      %2008 = vmatpush1.bf16.msra.mxu0 0
      %2009 = vmatprep.subr.bf16.mxu0 0
      %2010 = vmatpush1.bf16.msra.mxu0 0
      %2011 = vmatprep.mubr.bf16.mxu0 0
      %2012 = vmatmul.mubr.bf16.gmra.mrb[0].mxu0 %v1968
      %v2013 = vpop.f32.mrb[0].mxu0
      %v2014 = vadd.f32 0.0, %v2013
      %v2015 = vpop.f32.mrb[0].mxu0
      %v2016 = vpop.f32.mrb[0].mxu0
      %v2017 = vadd.f32 0.0, %v2016
      %v2018 = vpop.f32.mrb[0].mxu0
      %2019 = vmatprep.mubr.bf16.mxu0 0
      %2020 = vmatmul.mubr.bf16.gmra.mrb[0].mxu0 %v1971
      %v2021 = vpop.f32.mrb[0].mxu0
      %v2022 = vadd.f32 0.0, %v2021
      %v2023 = vpop.f32.mrb[0].mxu0
      %v2024 = vpop.f32.mrb[0].mxu0
      %v2025 = vadd.f32 0.0, %v2024
      %v2026 = vpop.f32.mrb[0].mxu0
      %2027 = vmatprep.mubr.bf16.mxu0 0
      %2028 = vmatmul.mubr.bf16.gmra.mrb[0].mxu0 %v1974
      %v2029 = vpop.f32.mrb[0].mxu0
      %v2030 = vadd.f32 0.0, %v2029
      %v2031 = vpop.f32.mrb[0].mxu0
      %v2032 = vpop.f32.mrb[0].mxu0
      %v2033 = vadd.f32 0.0, %v2032
      %v2034 = vpop.f32.mrb[0].mxu0
      %2035 = vmatprep.mubr.bf16.mxu0 0
      %2036 = vmatmul.mubr.bf16.gmra.mrb[0].mxu0 %v1977
      %v2037 = vpop.f32.mrb[0].mxu0
      %v2038 = vadd.f32 0.0, %v2037
      %v2039 = vpop.f32.mrb[0].mxu0
      %v2040 = vpop.f32.mrb[0].mxu0
      %v2041 = vadd.f32 0.0, %v2040
      %v2042 = vpop.f32.mrb[0].mxu0
      %2043 = vdwg.mxu0
      %v2048 = vunpack.c.l.b16 %v1070
      %v2049 = vunpack.c.l.b16 %v1071
      %v2050 = vunpack.c.l.b16 %v1072
      %v2051 = vunpack.c.l.b16 %v1073
      %v2052 = vpack.c.b16 %v2049, %v2048
      %v2053 = vpack.c.b16 %v2051, %v2050
      %2056 = vxpose.xlu0.c.b16.start [1/8] %v2052, 128
      %2057 = vxpose.xlu0.c.b16.cont [2/8] %v2053, 128
      %2058 = vxpose.xlu0.c.b16.cont [3/8] 0, 128
      %2059 = vxpose.xlu0.c.b16.cont [4/8] 0, 128
      %2060 = vxpose.xlu0.c.b16.cont [5/8] 0, 128
      %2061 = vxpose.xlu0.c.b16.cont [6/8] 0, 128
      %2062 = vxpose.xlu0.c.b16.cont [7/8] 0, 128
      %2063 = vxpose.xlu0.c.b16.end [8/8] 0, 128
      %v2064 = vpop.trf.xlu0
      %v2065 = vpop.trf.xlu0
      %v2066 = vpop.trf.xlu0
      %v2067 = vpop.trf.xlu0
      %v2068 = vpop.trf.xlu0
      %v2069 = vpop.trf.xlu0
      %v2070 = vpop.trf.xlu0
      %v2071 = vpop.trf.xlu0
      %v2073 = vsel %vm1126, %v2064, 0
      %v2076 = vsel %vm1126, %v2065, 0
      %v2079 = vsel %vm1126, %v2066, 0
      %v2082 = vsel %vm1126, %v2067, 0
      %2084 = vmatprep.subr.bf16.mxu0 0
      %2085 = vmatpush1.bf16.msra.mxu0 %v2052
      %2086 = vmatprep.subr.bf16.mxu0 0
      %2087 = vmatpush1.bf16.msra.mxu0 %v2053
      %2088 = vmatprep.subr.bf16.mxu0 0
      %2089 = vmatpush1.bf16.msra.mxu0 0
      %2090 = vmatprep.subr.bf16.mxu0 0
      %2091 = vmatpush1.bf16.msra.mxu0 0
      %2092 = vmatprep.subr.bf16.mxu0 0
      %2093 = vmatpush1.bf16.msra.mxu0 0
      %2094 = vmatprep.subr.bf16.mxu0 0
      %2095 = vmatpush1.bf16.msra.mxu0 0
      %2096 = vmatprep.subr.bf16.mxu0 0
      %2097 = vmatpush1.bf16.msra.mxu0 0
      %2098 = vmatprep.subr.bf16.mxu0 0
      %2099 = vmatpush1.bf16.msra.mxu0 0
      %2100 = vmatprep.subr.bf16.mxu0 0
      %2101 = vmatpush1.bf16.msra.mxu0 0
      %2102 = vmatprep.subr.bf16.mxu0 0
      %2103 = vmatpush1.bf16.msra.mxu0 0
      %2104 = vmatprep.subr.bf16.mxu0 0
      %2105 = vmatpush1.bf16.msra.mxu0 0
      %2106 = vmatprep.subr.bf16.mxu0 0
      %2107 = vmatpush1.bf16.msra.mxu0 0
      %2108 = vmatprep.subr.bf16.mxu0 0
      %2109 = vmatpush1.bf16.msra.mxu0 0
      %2110 = vmatprep.subr.bf16.mxu0 0
      %2111 = vmatpush1.bf16.msra.mxu0 0
      %2112 = vmatprep.subr.bf16.mxu0 0
      %2113 = vmatpush1.bf16.msra.mxu0 0
      %2114 = vmatprep.subr.bf16.mxu0 0
      %2115 = vmatpush1.bf16.msra.mxu0 0
      %2116 = vmatprep.mubr.bf16.mxu0 0
      %2117 = vmatmul.mubr.bf16.gmra.mrb[0].mxu0 %v2073
      %v2118 = vpop.f32.mrb[0].mxu0
      %v2119 = vadd.f32 0.0, %v2118
      %v2120 = vpop.f32.mrb[0].mxu0
      %v2121 = vpop.f32.mrb[0].mxu0
      %v2122 = vadd.f32 0.0, %v2121
      %v2123 = vpop.f32.mrb[0].mxu0
      %2124 = vmatprep.mubr.bf16.mxu0 0
      %2125 = vmatmul.mubr.bf16.gmra.mrb[0].mxu0 %v2076
      %v2126 = vpop.f32.mrb[0].mxu0
      %v2127 = vadd.f32 0.0, %v2126
      %v2128 = vpop.f32.mrb[0].mxu0
      %v2129 = vpop.f32.mrb[0].mxu0
      %v2130 = vadd.f32 0.0, %v2129
      %v2131 = vpop.f32.mrb[0].mxu0
      %2132 = vmatprep.mubr.bf16.mxu0 0
      %2133 = vmatmul.mubr.bf16.gmra.mrb[0].mxu0 %v2079
      %v2134 = vpop.f32.mrb[0].mxu0
      %v2135 = vadd.f32 0.0, %v2134
      %v2136 = vpop.f32.mrb[0].mxu0
      %v2137 = vpop.f32.mrb[0].mxu0
      %v2138 = vadd.f32 0.0, %v2137
      %v2139 = vpop.f32.mrb[0].mxu0
      %2140 = vmatprep.mubr.bf16.mxu0 0
      %2141 = vmatmul.mubr.bf16.gmra.mrb[0].mxu0 %v2082
      %v2142 = vpop.f32.mrb[0].mxu0
      %v2143 = vadd.f32 0.0, %v2142
      %v2144 = vpop.f32.mrb[0].mxu0
      %v2145 = vpop.f32.mrb[0].mxu0
      %v2146 = vadd.f32 0.0, %v2145
      %v2147 = vpop.f32.mrb[0].mxu0
      %2148 = vdwg.mxu0
      %v2153 = vunpack.c.l.b16 %v1074
      %v2154 = vunpack.c.l.b16 %v1075
      %v2155 = vunpack.c.l.b16 %v1076
      %v2156 = vunpack.c.l.b16 %v1077
      %v2157 = vpack.c.b16 %v2154, %v2153
      %v2158 = vpack.c.b16 %v2156, %v2155
      %2161 = vxpose.xlu0.c.b16.start [1/8] %v2157, 128
      %2162 = vxpose.xlu0.c.b16.cont [2/8] %v2158, 128
      %2163 = vxpose.xlu0.c.b16.cont [3/8] 0, 128
      %2164 = vxpose.xlu0.c.b16.cont [4/8] 0, 128
      %2165 = vxpose.xlu0.c.b16.cont [5/8] 0, 128
      %2166 = vxpose.xlu0.c.b16.cont [6/8] 0, 128
      %2167 = vxpose.xlu0.c.b16.cont [7/8] 0, 128
      %2168 = vxpose.xlu0.c.b16.end [8/8] 0, 128
      %v2169 = vpop.trf.xlu0
      %v2170 = vpop.trf.xlu0
      %v2171 = vpop.trf.xlu0
      %v2172 = vpop.trf.xlu0
      %v2173 = vpop.trf.xlu0
      %v2174 = vpop.trf.xlu0
      %v2175 = vpop.trf.xlu0
      %v2176 = vpop.trf.xlu0
      %v2178 = vsel %vm1126, %v2169, 0
      %v2181 = vsel %vm1126, %v2170, 0
      %v2184 = vsel %vm1126, %v2171, 0
      %v2187 = vsel %vm1126, %v2172, 0
      %2189 = vmatprep.subr.bf16.mxu0 0
      %2190 = vmatpush1.bf16.msra.mxu0 %v2157
      %2191 = vmatprep.subr.bf16.mxu0 0
      %2192 = vmatpush1.bf16.msra.mxu0 %v2158
      %2193 = vmatprep.subr.bf16.mxu0 0
      %2194 = vmatpush1.bf16.msra.mxu0 0
      %2195 = vmatprep.subr.bf16.mxu0 0
      %2196 = vmatpush1.bf16.msra.mxu0 0
      %2197 = vmatprep.subr.bf16.mxu0 0
      %2198 = vmatpush1.bf16.msra.mxu0 0
      %2199 = vmatprep.subr.bf16.mxu0 0
      %2200 = vmatpush1.bf16.msra.mxu0 0
      %2201 = vmatprep.subr.bf16.mxu0 0
      %2202 = vmatpush1.bf16.msra.mxu0 0
      %2203 = vmatprep.subr.bf16.mxu0 0
      %2204 = vmatpush1.bf16.msra.mxu0 0
      %2205 = vmatprep.subr.bf16.mxu0 0
      %2206 = vmatpush1.bf16.msra.mxu0 0
      %2207 = vmatprep.subr.bf16.mxu0 0
      %2208 = vmatpush1.bf16.msra.mxu0 0
      %2209 = vmatprep.subr.bf16.mxu0 0
      %2210 = vmatpush1.bf16.msra.mxu0 0
      %2211 = vmatprep.subr.bf16.mxu0 0
      %2212 = vmatpush1.bf16.msra.mxu0 0
      %2213 = vmatprep.subr.bf16.mxu0 0
      %2214 = vmatpush1.bf16.msra.mxu0 0
      %2215 = vmatprep.subr.bf16.mxu0 0
      %2216 = vmatpush1.bf16.msra.mxu0 0
      %2217 = vmatprep.subr.bf16.mxu0 0
      %2218 = vmatpush1.bf16.msra.mxu0 0
      %2219 = vmatprep.subr.bf16.mxu0 0
      %2220 = vmatpush1.bf16.msra.mxu0 0
      %2221 = vmatprep.mubr.bf16.mxu0 0
      %2222 = vmatmul.mubr.bf16.gmra.mrb[0].mxu0 %v2178
      %v2223 = vpop.f32.mrb[0].mxu0
      %v2224 = vadd.f32 0.0, %v2223
      %v2225 = vpop.f32.mrb[0].mxu0
      %v2226 = vpop.f32.mrb[0].mxu0
      %v2227 = vadd.f32 0.0, %v2226
      %v2228 = vpop.f32.mrb[0].mxu0
      %2229 = vmatprep.mubr.bf16.mxu0 0
      %2230 = vmatmul.mubr.bf16.gmra.mrb[0].mxu0 %v2181
      %v2231 = vpop.f32.mrb[0].mxu0
      %v2232 = vadd.f32 0.0, %v2231
      %v2233 = vpop.f32.mrb[0].mxu0
      %v2234 = vpop.f32.mrb[0].mxu0
      %v2235 = vadd.f32 0.0, %v2234
      %v2236 = vpop.f32.mrb[0].mxu0
      %2237 = vmatprep.mubr.bf16.mxu0 0
      %2238 = vmatmul.mubr.bf16.gmra.mrb[0].mxu0 %v2184
      %v2239 = vpop.f32.mrb[0].mxu0
      %v2240 = vadd.f32 0.0, %v2239
      %v2241 = vpop.f32.mrb[0].mxu0
      %v2242 = vpop.f32.mrb[0].mxu0
      %v2243 = vadd.f32 0.0, %v2242
      %v2244 = vpop.f32.mrb[0].mxu0
      %2245 = vmatprep.mubr.bf16.mxu0 0
      %2246 = vmatmul.mubr.bf16.gmra.mrb[0].mxu0 %v2187
      %v2247 = vpop.f32.mrb[0].mxu0
      %v2248 = vadd.f32 0.0, %v2247
      %v2249 = vpop.f32.mrb[0].mxu0
      %v2250 = vpop.f32.mrb[0].mxu0
      %v2251 = vadd.f32 0.0, %v2250
      %v2252 = vpop.f32.mrb[0].mxu0
      %2253 = vdwg.mxu0
      %v2258 = vunpack.c.l.b16 %v1078
      %v2259 = vunpack.c.l.b16 %v1079
      %v2260 = vunpack.c.l.b16 %v1080
      %v2261 = vunpack.c.l.b16 %v1081
      %v2262 = vpack.c.b16 %v2259, %v2258
      %v2263 = vpack.c.b16 %v2261, %v2260
      %2266 = vxpose.xlu0.c.b16.start [1/8] %v2262, 128
      %2267 = vxpose.xlu0.c.b16.cont [2/8] %v2263, 128
      %2268 = vxpose.xlu0.c.b16.cont [3/8] 0, 128
      %2269 = vxpose.xlu0.c.b16.cont [4/8] 0, 128
      %2270 = vxpose.xlu0.c.b16.cont [5/8] 0, 128
      %2271 = vxpose.xlu0.c.b16.cont [6/8] 0, 128
      %2272 = vxpose.xlu0.c.b16.cont [7/8] 0, 128
      %2273 = vxpose.xlu0.c.b16.end [8/8] 0, 128
      %v2274 = vpop.trf.xlu0
      %v2275 = vpop.trf.xlu0
      %v2276 = vpop.trf.xlu0
      %v2277 = vpop.trf.xlu0
      %v2278 = vpop.trf.xlu0
      %v2279 = vpop.trf.xlu0
      %v2280 = vpop.trf.xlu0
      %v2281 = vpop.trf.xlu0
      %v2283 = vsel %vm1126, %v2274, 0
      %v2286 = vsel %vm1126, %v2275, 0
      %v2289 = vsel %vm1126, %v2276, 0
      %v2292 = vsel %vm1126, %v2277, 0
      %2294 = vmatprep.subr.bf16.mxu0 0
      %2295 = vmatpush1.bf16.msra.mxu0 %v2262
      %2296 = vmatprep.subr.bf16.mxu0 0
      %2297 = vmatpush1.bf16.msra.mxu0 %v2263
      %2298 = vmatprep.subr.bf16.mxu0 0
      %2299 = vmatpush1.bf16.msra.mxu0 0
      %2300 = vmatprep.subr.bf16.mxu0 0
      %2301 = vmatpush1.bf16.msra.mxu0 0
      %2302 = vmatprep.subr.bf16.mxu0 0
      %2303 = vmatpush1.bf16.msra.mxu0 0
      %2304 = vmatprep.subr.bf16.mxu0 0
      %2305 = vmatpush1.bf16.msra.mxu0 0
      %2306 = vmatprep.subr.bf16.mxu0 0
      %2307 = vmatpush1.bf16.msra.mxu0 0
      %2308 = vmatprep.subr.bf16.mxu0 0
      %2309 = vmatpush1.bf16.msra.mxu0 0
      %2310 = vmatprep.subr.bf16.mxu0 0
      %2311 = vmatpush1.bf16.msra.mxu0 0
      %2312 = vmatprep.subr.bf16.mxu0 0
      %2313 = vmatpush1.bf16.msra.mxu0 0
      %2314 = vmatprep.subr.bf16.mxu0 0
      %2315 = vmatpush1.bf16.msra.mxu0 0
      %2316 = vmatprep.subr.bf16.mxu0 0
      %2317 = vmatpush1.bf16.msra.mxu0 0
      %2318 = vmatprep.subr.bf16.mxu0 0
      %2319 = vmatpush1.bf16.msra.mxu0 0
      %2320 = vmatprep.subr.bf16.mxu0 0
      %2321 = vmatpush1.bf16.msra.mxu0 0
      %2322 = vmatprep.subr.bf16.mxu0 0
      %2323 = vmatpush1.bf16.msra.mxu0 0
      %2324 = vmatprep.subr.bf16.mxu0 0
      %2325 = vmatpush1.bf16.msra.mxu0 0
      %2326 = vmatprep.mubr.bf16.mxu0 0
      %2327 = vmatmul.mubr.bf16.gmra.mrb[0].mxu0 %v2283
      %v2328 = vpop.f32.mrb[0].mxu0
      %v2329 = vadd.f32 0.0, %v2328
      %v2330 = vpop.f32.mrb[0].mxu0
      %v2331 = vpop.f32.mrb[0].mxu0
      %v2332 = vadd.f32 0.0, %v2331
      %v2333 = vpop.f32.mrb[0].mxu0
      %2334 = vmatprep.mubr.bf16.mxu0 0
      %2335 = vmatmul.mubr.bf16.gmra.mrb[0].mxu0 %v2286
      %v2336 = vpop.f32.mrb[0].mxu0
      %v2337 = vadd.f32 0.0, %v2336
      %v2338 = vpop.f32.mrb[0].mxu0
      %v2339 = vpop.f32.mrb[0].mxu0
      %v2340 = vadd.f32 0.0, %v2339
      %v2341 = vpop.f32.mrb[0].mxu0
      %2342 = vmatprep.mubr.bf16.mxu0 0
      %2343 = vmatmul.mubr.bf16.gmra.mrb[0].mxu0 %v2289
      %v2344 = vpop.f32.mrb[0].mxu0
      %v2345 = vadd.f32 0.0, %v2344
      %v2346 = vpop.f32.mrb[0].mxu0
      %v2347 = vpop.f32.mrb[0].mxu0
      %v2348 = vadd.f32 0.0, %v2347
      %v2349 = vpop.f32.mrb[0].mxu0
      %2350 = vmatprep.mubr.bf16.mxu0 0
      %2351 = vmatmul.mubr.bf16.gmra.mrb[0].mxu0 %v2292
      %v2352 = vpop.f32.mrb[0].mxu0
      %v2353 = vadd.f32 0.0, %v2352
      %v2354 = vpop.f32.mrb[0].mxu0
      %v2355 = vpop.f32.mrb[0].mxu0
      %v2356 = vadd.f32 0.0, %v2355
      %v2357 = vpop.f32.mrb[0].mxu0
      %2358 = vdwg.mxu0
      %v2363 = vunpack.c.l.b16 %v1082
      %v2364 = vunpack.c.l.b16 %v1083
      %v2365 = vunpack.c.l.b16 %v1084
      %v2366 = vunpack.c.l.b16 %v1085
      %v2367 = vpack.c.b16 %v2364, %v2363
      %v2368 = vpack.c.b16 %v2366, %v2365
      %2371 = vxpose.xlu0.c.b16.start [1/8] %v2367, 128
      %2372 = vxpose.xlu0.c.b16.cont [2/8] %v2368, 128
      %2373 = vxpose.xlu0.c.b16.cont [3/8] 0, 128
      %2374 = vxpose.xlu0.c.b16.cont [4/8] 0, 128
      %2375 = vxpose.xlu0.c.b16.cont [5/8] 0, 128
      %2376 = vxpose.xlu0.c.b16.cont [6/8] 0, 128
      %2377 = vxpose.xlu0.c.b16.cont [7/8] 0, 128
      %2378 = vxpose.xlu0.c.b16.end [8/8] 0, 128
      %v2379 = vpop.trf.xlu0
      %v2380 = vpop.trf.xlu0
      %v2381 = vpop.trf.xlu0
      %v2382 = vpop.trf.xlu0
      %v2383 = vpop.trf.xlu0
      %v2384 = vpop.trf.xlu0
      %v2385 = vpop.trf.xlu0
      %v2386 = vpop.trf.xlu0
      %v2388 = vsel %vm1126, %v2379, 0
      %v2391 = vsel %vm1126, %v2380, 0
      %v2394 = vsel %vm1126, %v2381, 0
      %v2397 = vsel %vm1126, %v2382, 0
      %2399 = vmatprep.subr.bf16.mxu0 0
      %2400 = vmatpush1.bf16.msra.mxu0 %v2367
      %2401 = vmatprep.subr.bf16.mxu0 0
      %2402 = vmatpush1.bf16.msra.mxu0 %v2368
      %2403 = vmatprep.subr.bf16.mxu0 0
      %2404 = vmatpush1.bf16.msra.mxu0 0
      %2405 = vmatprep.subr.bf16.mxu0 0
      %2406 = vmatpush1.bf16.msra.mxu0 0
      %2407 = vmatprep.subr.bf16.mxu0 0
      %2408 = vmatpush1.bf16.msra.mxu0 0
      %2409 = vmatprep.subr.bf16.mxu0 0
      %2410 = vmatpush1.bf16.msra.mxu0 0
      %2411 = vmatprep.subr.bf16.mxu0 0
      %2412 = vmatpush1.bf16.msra.mxu0 0
      %2413 = vmatprep.subr.bf16.mxu0 0
      %2414 = vmatpush1.bf16.msra.mxu0 0
      %2415 = vmatprep.subr.bf16.mxu0 0
      %2416 = vmatpush1.bf16.msra.mxu0 0
      %2417 = vmatprep.subr.bf16.mxu0 0
      %2418 = vmatpush1.bf16.msra.mxu0 0
      %2419 = vmatprep.subr.bf16.mxu0 0
      %2420 = vmatpush1.bf16.msra.mxu0 0
      %2421 = vmatprep.subr.bf16.mxu0 0
      %2422 = vmatpush1.bf16.msra.mxu0 0
      %2423 = vmatprep.subr.bf16.mxu0 0
      %2424 = vmatpush1.bf16.msra.mxu0 0
      %2425 = vmatprep.subr.bf16.mxu0 0
      %2426 = vmatpush1.bf16.msra.mxu0 0
      %2427 = vmatprep.subr.bf16.mxu0 0
      %2428 = vmatpush1.bf16.msra.mxu0 0
      %2429 = vmatprep.subr.bf16.mxu0 0
      %2430 = vmatpush1.bf16.msra.mxu0 0
      %2431 = vmatprep.mubr.bf16.mxu0 0
      %2432 = vmatmul.mubr.bf16.gmra.mrb[0].mxu0 %v2388
      %v2433 = vpop.f32.mrb[0].mxu0
      %v2434 = vadd.f32 0.0, %v2433
      %v2435 = vpop.f32.mrb[0].mxu0
      %v2436 = vpop.f32.mrb[0].mxu0
      %v2437 = vadd.f32 0.0, %v2436
      %v2438 = vpop.f32.mrb[0].mxu0
      %2439 = vmatprep.mubr.bf16.mxu0 0
      %2440 = vmatmul.mubr.bf16.gmra.mrb[0].mxu0 %v2391
      %v2441 = vpop.f32.mrb[0].mxu0
      %v2442 = vadd.f32 0.0, %v2441
      %v2443 = vpop.f32.mrb[0].mxu0
      %v2444 = vpop.f32.mrb[0].mxu0
      %v2445 = vadd.f32 0.0, %v2444
      %v2446 = vpop.f32.mrb[0].mxu0
      %2447 = vmatprep.mubr.bf16.mxu0 0
      %2448 = vmatmul.mubr.bf16.gmra.mrb[0].mxu0 %v2394
      %v2449 = vpop.f32.mrb[0].mxu0
      %v2450 = vadd.f32 0.0, %v2449
      %v2451 = vpop.f32.mrb[0].mxu0
      %v2452 = vpop.f32.mrb[0].mxu0
      %v2453 = vadd.f32 0.0, %v2452
      %v2454 = vpop.f32.mrb[0].mxu0
      %2455 = vmatprep.mubr.bf16.mxu0 0
      %2456 = vmatmul.mubr.bf16.gmra.mrb[0].mxu0 %v2397
      %v2457 = vpop.f32.mrb[0].mxu0
      %v2458 = vadd.f32 0.0, %v2457
      %v2459 = vpop.f32.mrb[0].mxu0
      %v2460 = vpop.f32.mrb[0].mxu0
      %v2461 = vadd.f32 0.0, %v2460
      %v2462 = vpop.f32.mrb[0].mxu0
      %2463 = vdwg.mxu0
      %v2468 = vunpack.c.l.b16 %v1086
      %v2469 = vunpack.c.l.b16 %v1087
      %v2470 = vunpack.c.l.b16 %v1088
      %v2471 = vunpack.c.l.b16 %v1089
      %v2472 = vpack.c.b16 %v2469, %v2468
      %v2473 = vpack.c.b16 %v2471, %v2470
      %2476 = vxpose.xlu0.c.b16.start [1/8] %v2472, 128
      %2477 = vxpose.xlu0.c.b16.cont [2/8] %v2473, 128
      %2478 = vxpose.xlu0.c.b16.cont [3/8] 0, 128
      %2479 = vxpose.xlu0.c.b16.cont [4/8] 0, 128
      %2480 = vxpose.xlu0.c.b16.cont [5/8] 0, 128
      %2481 = vxpose.xlu0.c.b16.cont [6/8] 0, 128
      %2482 = vxpose.xlu0.c.b16.cont [7/8] 0, 128
      %2483 = vxpose.xlu0.c.b16.end [8/8] 0, 128
      %v2484 = vpop.trf.xlu0
      %v2485 = vpop.trf.xlu0
      %v2486 = vpop.trf.xlu0
      %v2487 = vpop.trf.xlu0
      %v2488 = vpop.trf.xlu0
      %v2489 = vpop.trf.xlu0
      %v2490 = vpop.trf.xlu0
      %v2491 = vpop.trf.xlu0
      %v2493 = vsel %vm1126, %v2484, 0
      %v2496 = vsel %vm1126, %v2485, 0
      %v2499 = vsel %vm1126, %v2486, 0
      %v2502 = vsel %vm1126, %v2487, 0
      %2504 = vmatprep.subr.bf16.mxu0 0
      %2505 = vmatpush1.bf16.msra.mxu0 %v2472
      %2506 = vmatprep.subr.bf16.mxu0 0
      %2507 = vmatpush1.bf16.msra.mxu0 %v2473
      %2508 = vmatprep.subr.bf16.mxu0 0
      %2509 = vmatpush1.bf16.msra.mxu0 0
      %2510 = vmatprep.subr.bf16.mxu0 0
      %2511 = vmatpush1.bf16.msra.mxu0 0
      %2512 = vmatprep.subr.bf16.mxu0 0
      %2513 = vmatpush1.bf16.msra.mxu0 0
      %2514 = vmatprep.subr.bf16.mxu0 0
      %2515 = vmatpush1.bf16.msra.mxu0 0
      %2516 = vmatprep.subr.bf16.mxu0 0
      %2517 = vmatpush1.bf16.msra.mxu0 0
      %2518 = vmatprep.subr.bf16.mxu0 0
      %2519 = vmatpush1.bf16.msra.mxu0 0
      %2520 = vmatprep.subr.bf16.mxu0 0
      %2521 = vmatpush1.bf16.msra.mxu0 0
      %2522 = vmatprep.subr.bf16.mxu0 0
      %2523 = vmatpush1.bf16.msra.mxu0 0
      %2524 = vmatprep.subr.bf16.mxu0 0
      %2525 = vmatpush1.bf16.msra.mxu0 0
      %2526 = vmatprep.subr.bf16.mxu0 0
      %2527 = vmatpush1.bf16.msra.mxu0 0
      %2528 = vmatprep.subr.bf16.mxu0 0
      %2529 = vmatpush1.bf16.msra.mxu0 0
      %2530 = vmatprep.subr.bf16.mxu0 0
      %2531 = vmatpush1.bf16.msra.mxu0 0
      %2532 = vmatprep.subr.bf16.mxu0 0
      %2533 = vmatpush1.bf16.msra.mxu0 0
      %2534 = vmatprep.subr.bf16.mxu0 0
      %2535 = vmatpush1.bf16.msra.mxu0 0
      %2536 = vmatprep.mubr.bf16.mxu0 0
      %2537 = vmatmul.mubr.bf16.gmra.mrb[0].mxu0 %v2493
      %v2538 = vpop.f32.mrb[0].mxu0
      %v2539 = vadd.f32 0.0, %v2538
      %v2540 = vpop.f32.mrb[0].mxu0
      %v2541 = vpop.f32.mrb[0].mxu0
      %v2542 = vadd.f32 0.0, %v2541
      %v2543 = vpop.f32.mrb[0].mxu0
      %2544 = vmatprep.mubr.bf16.mxu0 0
      %2545 = vmatmul.mubr.bf16.gmra.mrb[0].mxu0 %v2496
      %v2546 = vpop.f32.mrb[0].mxu0
      %v2547 = vadd.f32 0.0, %v2546
      %v2548 = vpop.f32.mrb[0].mxu0
      %v2549 = vpop.f32.mrb[0].mxu0
      %v2550 = vadd.f32 0.0, %v2549
      %v2551 = vpop.f32.mrb[0].mxu0
      %2552 = vmatprep.mubr.bf16.mxu0 0
      %2553 = vmatmul.mubr.bf16.gmra.mrb[0].mxu0 %v2499
      %v2554 = vpop.f32.mrb[0].mxu0
      %v2555 = vadd.f32 0.0, %v2554
      %v2556 = vpop.f32.mrb[0].mxu0
      %v2557 = vpop.f32.mrb[0].mxu0
      %v2558 = vadd.f32 0.0, %v2557
      %v2559 = vpop.f32.mrb[0].mxu0
      %2560 = vmatprep.mubr.bf16.mxu0 0
      %2561 = vmatmul.mubr.bf16.gmra.mrb[0].mxu0 %v2502
      %v2562 = vpop.f32.mrb[0].mxu0
      %v2563 = vadd.f32 0.0, %v2562
      %v2564 = vpop.f32.mrb[0].mxu0
      %v2565 = vpop.f32.mrb[0].mxu0
      %v2566 = vadd.f32 0.0, %v2565
      %v2567 = vpop.f32.mrb[0].mxu0
      %2568 = vdwg.mxu0
      %v2573 = vunpack.c.l.b16 %v1090
      %v2574 = vunpack.c.l.b16 %v1091
      %v2575 = vunpack.c.l.b16 %v1092
      %v2576 = vunpack.c.l.b16 %v1093
      %v2577 = vpack.c.b16 %v2574, %v2573
      %v2578 = vpack.c.b16 %v2576, %v2575
      %2581 = vxpose.xlu0.c.b16.start [1/8] %v2577, 128
      %2582 = vxpose.xlu0.c.b16.cont [2/8] %v2578, 128
      %2583 = vxpose.xlu0.c.b16.cont [3/8] 0, 128
      %2584 = vxpose.xlu0.c.b16.cont [4/8] 0, 128
      %2585 = vxpose.xlu0.c.b16.cont [5/8] 0, 128
      %2586 = vxpose.xlu0.c.b16.cont [6/8] 0, 128
      %2587 = vxpose.xlu0.c.b16.cont [7/8] 0, 128
      %2588 = vxpose.xlu0.c.b16.end [8/8] 0, 128
      %v2589 = vpop.trf.xlu0
      %v2590 = vpop.trf.xlu0
      %v2591 = vpop.trf.xlu0
      %v2592 = vpop.trf.xlu0
      %v2593 = vpop.trf.xlu0
      %v2594 = vpop.trf.xlu0
      %v2595 = vpop.trf.xlu0
      %v2596 = vpop.trf.xlu0
      %v2598 = vsel %vm1126, %v2589, 0
      %v2601 = vsel %vm1126, %v2590, 0
      %v2604 = vsel %vm1126, %v2591, 0
      %v2607 = vsel %vm1126, %v2592, 0
      %2609 = vmatprep.subr.bf16.mxu0 0
      %2610 = vmatpush1.bf16.msra.mxu0 %v2577
      %2611 = vmatprep.subr.bf16.mxu0 0
      %2612 = vmatpush1.bf16.msra.mxu0 %v2578
      %2613 = vmatprep.subr.bf16.mxu0 0
      %2614 = vmatpush1.bf16.msra.mxu0 0
      %2615 = vmatprep.subr.bf16.mxu0 0
      %2616 = vmatpush1.bf16.msra.mxu0 0
      %2617 = vmatprep.subr.bf16.mxu0 0
      %2618 = vmatpush1.bf16.msra.mxu0 0
      %2619 = vmatprep.subr.bf16.mxu0 0
      %2620 = vmatpush1.bf16.msra.mxu0 0
      %2621 = vmatprep.subr.bf16.mxu0 0
      %2622 = vmatpush1.bf16.msra.mxu0 0
      %2623 = vmatprep.subr.bf16.mxu0 0
      %2624 = vmatpush1.bf16.msra.mxu0 0
      %2625 = vmatprep.subr.bf16.mxu0 0
      %2626 = vmatpush1.bf16.msra.mxu0 0
      %2627 = vmatprep.subr.bf16.mxu0 0
      %2628 = vmatpush1.bf16.msra.mxu0 0
      %2629 = vmatprep.subr.bf16.mxu0 0
      %2630 = vmatpush1.bf16.msra.mxu0 0
      %2631 = vmatprep.subr.bf16.mxu0 0
      %2632 = vmatpush1.bf16.msra.mxu0 0
      %2633 = vmatprep.subr.bf16.mxu0 0
      %2634 = vmatpush1.bf16.msra.mxu0 0
      %2635 = vmatprep.subr.bf16.mxu0 0
      %2636 = vmatpush1.bf16.msra.mxu0 0
      %2637 = vmatprep.subr.bf16.mxu0 0
      %2638 = vmatpush1.bf16.msra.mxu0 0
      %2639 = vmatprep.subr.bf16.mxu0 0
      %2640 = vmatpush1.bf16.msra.mxu0 0
      %2641 = vmatprep.mubr.bf16.mxu0 0
      %2642 = vmatmul.mubr.bf16.gmra.mrb[0].mxu0 %v2598
      %v2643 = vpop.f32.mrb[0].mxu0
      %v2644 = vadd.f32 0.0, %v2643
      %v2645 = vpop.f32.mrb[0].mxu0
      %v2646 = vpop.f32.mrb[0].mxu0
      %v2647 = vadd.f32 0.0, %v2646
      %v2648 = vpop.f32.mrb[0].mxu0
      %2649 = vmatprep.mubr.bf16.mxu0 0
      %2650 = vmatmul.mubr.bf16.gmra.mrb[0].mxu0 %v2601
      %v2651 = vpop.f32.mrb[0].mxu0
      %v2652 = vadd.f32 0.0, %v2651
      %v2653 = vpop.f32.mrb[0].mxu0
      %v2654 = vpop.f32.mrb[0].mxu0
      %v2655 = vadd.f32 0.0, %v2654
      %v2656 = vpop.f32.mrb[0].mxu0
      %2657 = vmatprep.mubr.bf16.mxu0 0
      %2658 = vmatmul.mubr.bf16.gmra.mrb[0].mxu0 %v2604
      %v2659 = vpop.f32.mrb[0].mxu0
      %v2660 = vadd.f32 0.0, %v2659
      %v2661 = vpop.f32.mrb[0].mxu0
      %v2662 = vpop.f32.mrb[0].mxu0
      %v2663 = vadd.f32 0.0, %v2662
      %v2664 = vpop.f32.mrb[0].mxu0
      %2665 = vmatprep.mubr.bf16.mxu0 0
      %2666 = vmatmul.mubr.bf16.gmra.mrb[0].mxu0 %v2607
      %v2667 = vpop.f32.mrb[0].mxu0
      %v2668 = vadd.f32 0.0, %v2667
      %v2669 = vpop.f32.mrb[0].mxu0
      %v2670 = vpop.f32.mrb[0].mxu0
      %v2671 = vadd.f32 0.0, %v2670
      %v2672 = vpop.f32.mrb[0].mxu0
      %2673 = vdwg.mxu0
      %v2678 = vunpack.c.l.b16 %v1094
      %v2679 = vunpack.c.l.b16 %v1095
      %v2680 = vunpack.c.l.b16 %v1096
      %v2681 = vunpack.c.l.b16 %v1097
      %v2682 = vpack.c.b16 %v2679, %v2678
      %v2683 = vpack.c.b16 %v2681, %v2680
      %2686 = vxpose.xlu0.c.b16.start [1/8] %v2682, 128
      %2687 = vxpose.xlu0.c.b16.cont [2/8] %v2683, 128
      %2688 = vxpose.xlu0.c.b16.cont [3/8] 0, 128
      %2689 = vxpose.xlu0.c.b16.cont [4/8] 0, 128
      %2690 = vxpose.xlu0.c.b16.cont [5/8] 0, 128
      %2691 = vxpose.xlu0.c.b16.cont [6/8] 0, 128
      %2692 = vxpose.xlu0.c.b16.cont [7/8] 0, 128
      %2693 = vxpose.xlu0.c.b16.end [8/8] 0, 128
      %v2694 = vpop.trf.xlu0
      %v2695 = vpop.trf.xlu0
      %v2696 = vpop.trf.xlu0
      %v2697 = vpop.trf.xlu0
      %v2698 = vpop.trf.xlu0
      %v2699 = vpop.trf.xlu0
      %v2700 = vpop.trf.xlu0
      %v2701 = vpop.trf.xlu0
      %v2703 = vsel %vm1126, %v2694, 0
      %v2706 = vsel %vm1126, %v2695, 0
      %v2709 = vsel %vm1126, %v2696, 0
      %v2712 = vsel %vm1126, %v2697, 0
      %2714 = vmatprep.subr.bf16.mxu0 0
      %2715 = vmatpush1.bf16.msra.mxu0 %v2682
      %2716 = vmatprep.subr.bf16.mxu0 0
      %2717 = vmatpush1.bf16.msra.mxu0 %v2683
      %2718 = vmatprep.subr.bf16.mxu0 0
      %2719 = vmatpush1.bf16.msra.mxu0 0
      %2720 = vmatprep.subr.bf16.mxu0 0
      %2721 = vmatpush1.bf16.msra.mxu0 0
      %2722 = vmatprep.subr.bf16.mxu0 0
      %2723 = vmatpush1.bf16.msra.mxu0 0
      %2724 = vmatprep.subr.bf16.mxu0 0
      %2725 = vmatpush1.bf16.msra.mxu0 0
      %2726 = vmatprep.subr.bf16.mxu0 0
      %2727 = vmatpush1.bf16.msra.mxu0 0
      %2728 = vmatprep.subr.bf16.mxu0 0
      %2729 = vmatpush1.bf16.msra.mxu0 0
      %2730 = vmatprep.subr.bf16.mxu0 0
      %2731 = vmatpush1.bf16.msra.mxu0 0
      %2732 = vmatprep.subr.bf16.mxu0 0
      %2733 = vmatpush1.bf16.msra.mxu0 0
      %2734 = vmatprep.subr.bf16.mxu0 0
      %2735 = vmatpush1.bf16.msra.mxu0 0
      %2736 = vmatprep.subr.bf16.mxu0 0
      %2737 = vmatpush1.bf16.msra.mxu0 0
      %2738 = vmatprep.subr.bf16.mxu0 0
      %2739 = vmatpush1.bf16.msra.mxu0 0
      %2740 = vmatprep.subr.bf16.mxu0 0
      %2741 = vmatpush1.bf16.msra.mxu0 0
      %2742 = vmatprep.subr.bf16.mxu0 0
      %2743 = vmatpush1.bf16.msra.mxu0 0
      %2744 = vmatprep.subr.bf16.mxu0 0
      %2745 = vmatpush1.bf16.msra.mxu0 0
      %2746 = vmatprep.mubr.bf16.mxu0 0
      %2747 = vmatmul.mubr.bf16.gmra.mrb[0].mxu0 %v2703
      %v2748 = vpop.f32.mrb[0].mxu0
      %v2749 = vadd.f32 0.0, %v2748
      %v2750 = vpop.f32.mrb[0].mxu0
      %v2751 = vpop.f32.mrb[0].mxu0
      %v2752 = vadd.f32 0.0, %v2751
      %v2753 = vpop.f32.mrb[0].mxu0
      %2754 = vmatprep.mubr.bf16.mxu0 0
      %2755 = vmatmul.mubr.bf16.gmra.mrb[0].mxu0 %v2706
      %v2756 = vpop.f32.mrb[0].mxu0
      %v2757 = vadd.f32 0.0, %v2756
      %v2758 = vpop.f32.mrb[0].mxu0
      %v2759 = vpop.f32.mrb[0].mxu0
      %v2760 = vadd.f32 0.0, %v2759
      %v2761 = vpop.f32.mrb[0].mxu0
      %2762 = vmatprep.mubr.bf16.mxu0 0
      %2763 = vmatmul.mubr.bf16.gmra.mrb[0].mxu0 %v2709
      %v2764 = vpop.f32.mrb[0].mxu0
      %v2765 = vadd.f32 0.0, %v2764
      %v2766 = vpop.f32.mrb[0].mxu0
      %v2767 = vpop.f32.mrb[0].mxu0
      %v2768 = vadd.f32 0.0, %v2767
      %v2769 = vpop.f32.mrb[0].mxu0
      %2770 = vmatprep.mubr.bf16.mxu0 0
      %2771 = vmatmul.mubr.bf16.gmra.mrb[0].mxu0 %v2712
      %v2772 = vpop.f32.mrb[0].mxu0
      %v2773 = vadd.f32 0.0, %v2772
      %v2774 = vpop.f32.mrb[0].mxu0
      %v2775 = vpop.f32.mrb[0].mxu0
      %v2776 = vadd.f32 0.0, %v2775
      %v2777 = vpop.f32.mrb[0].mxu0
      %2778 = vdwg.mxu0
      %v2779 = vmul.f32 %v1174, 10.0
      %v2780 = vmul.f32 %v1177, 10.0
      %v2781 = vmul.f32 %v1182, 10.0
      %v2782 = vmul.f32 %v1185, 10.0
      %v2783 = vmul.f32 %v1190, 10.0
      %v2784 = vmul.f32 %v1193, 10.0
      %v2785 = vmul.f32 %v1198, 10.0
      %v2786 = vmul.f32 %v1201, 10.0
      %v2787 = vmul.f32 %v1279, 10.0
      %v2788 = vmul.f32 %v1282, 10.0
      %v2789 = vmul.f32 %v1287, 10.0
      %v2790 = vmul.f32 %v1290, 10.0
      %v2791 = vmul.f32 %v1295, 10.0
      %v2792 = vmul.f32 %v1298, 10.0
      %v2793 = vmul.f32 %v1303, 10.0
      %v2794 = vmul.f32 %v1306, 10.0
      %v2795 = vmul.f32 %v1384, 10.0
      %v2796 = vmul.f32 %v1387, 10.0
      %v2797 = vmul.f32 %v1392, 10.0
      %v2798 = vmul.f32 %v1395, 10.0
      %v2799 = vmul.f32 %v1400, 10.0
      %v2800 = vmul.f32 %v1403, 10.0
      %v2801 = vmul.f32 %v1408, 10.0
      %v2802 = vmul.f32 %v1411, 10.0
      %v2803 = vmul.f32 %v1489, 10.0
      %v2804 = vmul.f32 %v1492, 10.0
      %v2805 = vmul.f32 %v1497, 10.0
      %v2806 = vmul.f32 %v1500, 10.0
      %v2807 = vmul.f32 %v1505, 10.0
      %v2808 = vmul.f32 %v1508, 10.0
      %v2809 = vmul.f32 %v1513, 10.0
      %v2810 = vmul.f32 %v1516, 10.0
      %v2811 = vmul.f32 %v1594, 10.0
      %v2812 = vmul.f32 %v1597, 10.0
      %v2813 = vmul.f32 %v1602, 10.0
      %v2814 = vmul.f32 %v1605, 10.0
      %v2815 = vmul.f32 %v1610, 10.0
      %v2816 = vmul.f32 %v1613, 10.0
      %v2817 = vmul.f32 %v1618, 10.0
      %v2818 = vmul.f32 %v1621, 10.0
      %v2819 = vmul.f32 %v1699, 10.0
      %v2820 = vmul.f32 %v1702, 10.0
      %v2821 = vmul.f32 %v1707, 10.0
      %v2822 = vmul.f32 %v1710, 10.0
      %v2823 = vmul.f32 %v1715, 10.0
      %v2824 = vmul.f32 %v1718, 10.0
      %v2825 = vmul.f32 %v1723, 10.0
      %v2826 = vmul.f32 %v1726, 10.0
      %v2827 = vmul.f32 %v1804, 10.0
      %v2828 = vmul.f32 %v1807, 10.0
      %v2829 = vmul.f32 %v1812, 10.0
      %v2830 = vmul.f32 %v1815, 10.0
      %v2831 = vmul.f32 %v1820, 10.0
      %v2832 = vmul.f32 %v1823, 10.0
      %v2833 = vmul.f32 %v1828, 10.0
      %v2834 = vmul.f32 %v1831, 10.0
      %v2835 = vmul.f32 %v1909, 10.0
      %v2836 = vmul.f32 %v1912, 10.0
      %v2837 = vmul.f32 %v1917, 10.0
      %v2838 = vmul.f32 %v1920, 10.0
      %v2839 = vmul.f32 %v1925, 10.0
      %v2840 = vmul.f32 %v1928, 10.0
      %v2841 = vmul.f32 %v1933, 10.0
      %v2842 = vmul.f32 %v1936, 10.0
      %v2843 = vmul.f32 %v2014, 10.0
      %v2844 = vmul.f32 %v2017, 10.0
      %v2845 = vmul.f32 %v2022, 10.0
      %v2846 = vmul.f32 %v2025, 10.0
      %v2847 = vmul.f32 %v2030, 10.0
      %v2848 = vmul.f32 %v2033, 10.0
      %v2849 = vmul.f32 %v2038, 10.0
      %v2850 = vmul.f32 %v2041, 10.0
      %v2851 = vmul.f32 %v2119, 10.0
      %v2852 = vmul.f32 %v2122, 10.0
      %v2853 = vmul.f32 %v2127, 10.0
      %v2854 = vmul.f32 %v2130, 10.0
      %v2855 = vmul.f32 %v2135, 10.0
      %v2856 = vmul.f32 %v2138, 10.0
      %v2857 = vmul.f32 %v2143, 10.0
      %v2858 = vmul.f32 %v2146, 10.0
      %v2859 = vmul.f32 %v2224, 10.0
      %v2860 = vmul.f32 %v2227, 10.0
      %v2861 = vmul.f32 %v2232, 10.0
      %v2862 = vmul.f32 %v2235, 10.0
      %v2863 = vmul.f32 %v2240, 10.0
      %v2864 = vmul.f32 %v2243, 10.0
      %v2865 = vmul.f32 %v2248, 10.0
      %v2866 = vmul.f32 %v2251, 10.0
      %v2867 = vmul.f32 %v2329, 10.0
      %v2868 = vmul.f32 %v2332, 10.0
      %v2869 = vmul.f32 %v2337, 10.0
      %v2870 = vmul.f32 %v2340, 10.0
      %v2871 = vmul.f32 %v2345, 10.0
      %v2872 = vmul.f32 %v2348, 10.0
      %v2873 = vmul.f32 %v2353, 10.0
      %v2874 = vmul.f32 %v2356, 10.0
      %v2875 = vmul.f32 %v2434, 10.0
      %v2876 = vmul.f32 %v2437, 10.0
      %v2877 = vmul.f32 %v2442, 10.0
      %v2878 = vmul.f32 %v2445, 10.0
      %v2879 = vmul.f32 %v2450, 10.0
      %v2880 = vmul.f32 %v2453, 10.0
      %v2881 = vmul.f32 %v2458, 10.0
      %v2882 = vmul.f32 %v2461, 10.0
      %v2883 = vmul.f32 %v2539, 10.0
      %v2884 = vmul.f32 %v2542, 10.0
      %v2885 = vmul.f32 %v2547, 10.0
      %v2886 = vmul.f32 %v2550, 10.0
      %v2887 = vmul.f32 %v2555, 10.0
      %v2888 = vmul.f32 %v2558, 10.0
      %v2889 = vmul.f32 %v2563, 10.0
      %v2890 = vmul.f32 %v2566, 10.0
      %v2891 = vmul.f32 %v2644, 10.0
      %v2892 = vmul.f32 %v2647, 10.0
      %v2893 = vmul.f32 %v2652, 10.0
      %v2894 = vmul.f32 %v2655, 10.0
      %v2895 = vmul.f32 %v2660, 10.0
      %v2896 = vmul.f32 %v2663, 10.0
      %v2897 = vmul.f32 %v2668, 10.0
      %v2898 = vmul.f32 %v2671, 10.0
      %v2899 = vmul.f32 %v2749, 10.0
      %v2900 = vmul.f32 %v2752, 10.0
      %v2901 = vmul.f32 %v2757, 10.0
      %v2902 = vmul.f32 %v2760, 10.0
      %v2903 = vmul.f32 %v2765, 10.0
      %v2904 = vmul.f32 %v2768, 10.0
      %v2905 = vmul.f32 %v2773, 10.0
      %v2906 = vmul.f32 %v2776, 10.0
      %vm2907 = vcmask 523264
      %v2908 = vsel %vm2907, %v2779, -inf
      %2909 = vmax.xlane.f32.xlu0 %v2908
      %v2910 = vpop.xlane.xlu0 %2909
      %v2911 = vsel %vm2907, %v2780, -inf
      %2912 = vmax.xlane.f32.xlu0 %v2911
      %v2913 = vpop.xlane.xlu0 %2912
      %v2914 = vsel %vm2907, %v2781, -inf
      %2915 = vmax.xlane.f32.xlu0 %v2914
      %v2916 = vpop.xlane.xlu0 %2915
      %v2917 = vsel %vm2907, %v2782, -inf
      %2918 = vmax.xlane.f32.xlu0 %v2917
      %v2919 = vpop.xlane.xlu0 %2918
      %v2920 = vsel %vm2907, %v2783, -inf
      %2921 = vmax.xlane.f32.xlu0 %v2920
      %v2922 = vpop.xlane.xlu0 %2921
      %v2923 = vsel %vm2907, %v2784, -inf
      %2924 = vmax.xlane.f32.xlu0 %v2923
      %v2925 = vpop.xlane.xlu0 %2924
      %v2926 = vsel %vm2907, %v2785, -inf
      %2927 = vmax.xlane.f32.xlu0 %v2926
      %v2928 = vpop.xlane.xlu0 %2927
      %v2929 = vsel %vm2907, %v2786, -inf
      %2930 = vmax.xlane.f32.xlu0 %v2929
      %v2931 = vpop.xlane.xlu0 %2930
      %v2932 = vsel %vm2907, %v2787, -inf
      %2933 = vmax.xlane.f32.xlu0 %v2932
      %v2934 = vpop.xlane.xlu0 %2933
      %v2935 = vsel %vm2907, %v2788, -inf
      %2936 = vmax.xlane.f32.xlu0 %v2935
      %v2937 = vpop.xlane.xlu0 %2936
      %v2938 = vsel %vm2907, %v2789, -inf
      %2939 = vmax.xlane.f32.xlu0 %v2938
      %v2940 = vpop.xlane.xlu0 %2939
      %v2941 = vsel %vm2907, %v2790, -inf
      %2942 = vmax.xlane.f32.xlu0 %v2941
      %v2943 = vpop.xlane.xlu0 %2942
      %v2944 = vsel %vm2907, %v2791, -inf
      %2945 = vmax.xlane.f32.xlu0 %v2944
      %v2946 = vpop.xlane.xlu0 %2945
      %v2947 = vsel %vm2907, %v2792, -inf
      %2948 = vmax.xlane.f32.xlu0 %v2947
      %v2949 = vpop.xlane.xlu0 %2948
      %v2950 = vsel %vm2907, %v2793, -inf
      %2951 = vmax.xlane.f32.xlu0 %v2950
      %v2952 = vpop.xlane.xlu0 %2951
      %v2953 = vsel %vm2907, %v2794, -inf
      %2954 = vmax.xlane.f32.xlu0 %v2953
      %v2955 = vpop.xlane.xlu0 %2954
      %v2956 = vsel %vm2907, %v2795, -inf
      %2957 = vmax.xlane.f32.xlu0 %v2956
      %v2958 = vpop.xlane.xlu0 %2957
      %v2959 = vsel %vm2907, %v2796, -inf
      %2960 = vmax.xlane.f32.xlu0 %v2959
      %v2961 = vpop.xlane.xlu0 %2960
      %v2962 = vsel %vm2907, %v2797, -inf
      %2963 = vmax.xlane.f32.xlu0 %v2962
      %v2964 = vpop.xlane.xlu0 %2963
      %v2965 = vsel %vm2907, %v2798, -inf
      %2966 = vmax.xlane.f32.xlu0 %v2965
      %v2967 = vpop.xlane.xlu0 %2966
      %v2968 = vsel %vm2907, %v2799, -inf
      %2969 = vmax.xlane.f32.xlu0 %v2968
      %v2970 = vpop.xlane.xlu0 %2969
      %v2971 = vsel %vm2907, %v2800, -inf
      %2972 = vmax.xlane.f32.xlu0 %v2971
      %v2973 = vpop.xlane.xlu0 %2972
      %v2974 = vsel %vm2907, %v2801, -inf
      %2975 = vmax.xlane.f32.xlu0 %v2974
      %v2976 = vpop.xlane.xlu0 %2975
      %v2977 = vsel %vm2907, %v2802, -inf
      %2978 = vmax.xlane.f32.xlu0 %v2977
      %v2979 = vpop.xlane.xlu0 %2978
      %v2980 = vsel %vm2907, %v2803, -inf
      %2981 = vmax.xlane.f32.xlu0 %v2980
      %v2982 = vpop.xlane.xlu0 %2981
      %v2983 = vsel %vm2907, %v2804, -inf
      %2984 = vmax.xlane.f32.xlu0 %v2983
      %v2985 = vpop.xlane.xlu0 %2984
      %v2986 = vsel %vm2907, %v2805, -inf
      %2987 = vmax.xlane.f32.xlu0 %v2986
      %v2988 = vpop.xlane.xlu0 %2987
      %v2989 = vsel %vm2907, %v2806, -inf
      %2990 = vmax.xlane.f32.xlu0 %v2989
      %v2991 = vpop.xlane.xlu0 %2990
      %v2992 = vsel %vm2907, %v2807, -inf
      %2993 = vmax.xlane.f32.xlu0 %v2992
      %v2994 = vpop.xlane.xlu0 %2993
      %v2995 = vsel %vm2907, %v2808, -inf
      %2996 = vmax.xlane.f32.xlu0 %v2995
      %v2997 = vpop.xlane.xlu0 %2996
      %v2998 = vsel %vm2907, %v2809, -inf
      %2999 = vmax.xlane.f32.xlu0 %v2998
      %v3000 = vpop.xlane.xlu0 %2999
      %v3001 = vsel %vm2907, %v2810, -inf
      %3002 = vmax.xlane.f32.xlu0 %v3001
      %v3003 = vpop.xlane.xlu0 %3002
      %v3004 = vsel %vm2907, %v2811, -inf
      %3005 = vmax.xlane.f32.xlu0 %v3004
      %v3006 = vpop.xlane.xlu0 %3005
      %v3007 = vsel %vm2907, %v2812, -inf
      %3008 = vmax.xlane.f32.xlu0 %v3007
      %v3009 = vpop.xlane.xlu0 %3008
      %v3010 = vsel %vm2907, %v2813, -inf
      %3011 = vmax.xlane.f32.xlu0 %v3010
      %v3012 = vpop.xlane.xlu0 %3011
      %v3013 = vsel %vm2907, %v2814, -inf
      %3014 = vmax.xlane.f32.xlu0 %v3013
      %v3015 = vpop.xlane.xlu0 %3014
      %v3016 = vsel %vm2907, %v2815, -inf
      %3017 = vmax.xlane.f32.xlu0 %v3016
      %v3018 = vpop.xlane.xlu0 %3017
      %v3019 = vsel %vm2907, %v2816, -inf
      %3020 = vmax.xlane.f32.xlu0 %v3019
      %v3021 = vpop.xlane.xlu0 %3020
      %v3022 = vsel %vm2907, %v2817, -inf
      %3023 = vmax.xlane.f32.xlu0 %v3022
      %v3024 = vpop.xlane.xlu0 %3023
      %v3025 = vsel %vm2907, %v2818, -inf
      %3026 = vmax.xlane.f32.xlu0 %v3025
      %v3027 = vpop.xlane.xlu0 %3026
      %v3028 = vsel %vm2907, %v2819, -inf
      %3029 = vmax.xlane.f32.xlu0 %v3028
      %v3030 = vpop.xlane.xlu0 %3029
      %v3031 = vsel %vm2907, %v2820, -inf
      %3032 = vmax.xlane.f32.xlu0 %v3031
      %v3033 = vpop.xlane.xlu0 %3032
      %v3034 = vsel %vm2907, %v2821, -inf
      %3035 = vmax.xlane.f32.xlu0 %v3034
      %v3036 = vpop.xlane.xlu0 %3035
      %v3037 = vsel %vm2907, %v2822, -inf
      %3038 = vmax.xlane.f32.xlu0 %v3037
      %v3039 = vpop.xlane.xlu0 %3038
      %v3040 = vsel %vm2907, %v2823, -inf
      %3041 = vmax.xlane.f32.xlu0 %v3040
      %v3042 = vpop.xlane.xlu0 %3041
      %v3043 = vsel %vm2907, %v2824, -inf
      %3044 = vmax.xlane.f32.xlu0 %v3043
      %v3045 = vpop.xlane.xlu0 %3044
      %v3046 = vsel %vm2907, %v2825, -inf
      %3047 = vmax.xlane.f32.xlu0 %v3046
      %v3048 = vpop.xlane.xlu0 %3047
      %v3049 = vsel %vm2907, %v2826, -inf
      %3050 = vmax.xlane.f32.xlu0 %v3049
      %v3051 = vpop.xlane.xlu0 %3050
      %v3052 = vsel %vm2907, %v2827, -inf
      %3053 = vmax.xlane.f32.xlu0 %v3052
      %v3054 = vpop.xlane.xlu0 %3053
      %v3055 = vsel %vm2907, %v2828, -inf
      %3056 = vmax.xlane.f32.xlu0 %v3055
      %v3057 = vpop.xlane.xlu0 %3056
      %v3058 = vsel %vm2907, %v2829, -inf
      %3059 = vmax.xlane.f32.xlu0 %v3058
      %v3060 = vpop.xlane.xlu0 %3059
      %v3061 = vsel %vm2907, %v2830, -inf
      %3062 = vmax.xlane.f32.xlu0 %v3061
      %v3063 = vpop.xlane.xlu0 %3062
      %v3064 = vsel %vm2907, %v2831, -inf
      %3065 = vmax.xlane.f32.xlu0 %v3064
      %v3066 = vpop.xlane.xlu0 %3065
      %v3067 = vsel %vm2907, %v2832, -inf
      %3068 = vmax.xlane.f32.xlu0 %v3067
      %v3069 = vpop.xlane.xlu0 %3068
      %v3070 = vsel %vm2907, %v2833, -inf
      %3071 = vmax.xlane.f32.xlu0 %v3070
      %v3072 = vpop.xlane.xlu0 %3071
      %v3073 = vsel %vm2907, %v2834, -inf
      %3074 = vmax.xlane.f32.xlu0 %v3073
      %v3075 = vpop.xlane.xlu0 %3074
      %v3076 = vsel %vm2907, %v2835, -inf
      %3077 = vmax.xlane.f32.xlu0 %v3076
      %v3078 = vpop.xlane.xlu0 %3077
      %v3079 = vsel %vm2907, %v2836, -inf
      %3080 = vmax.xlane.f32.xlu0 %v3079
      %v3081 = vpop.xlane.xlu0 %3080
      %v3082 = vsel %vm2907, %v2837, -inf
      %3083 = vmax.xlane.f32.xlu0 %v3082
      %v3084 = vpop.xlane.xlu0 %3083
      %v3085 = vsel %vm2907, %v2838, -inf
      %3086 = vmax.xlane.f32.xlu0 %v3085
      %v3087 = vpop.xlane.xlu0 %3086
      %v3088 = vsel %vm2907, %v2839, -inf
      %3089 = vmax.xlane.f32.xlu0 %v3088
      %v3090 = vpop.xlane.xlu0 %3089
      %v3091 = vsel %vm2907, %v2840, -inf
      %3092 = vmax.xlane.f32.xlu0 %v3091
      %v3093 = vpop.xlane.xlu0 %3092
      %v3094 = vsel %vm2907, %v2841, -inf
      %3095 = vmax.xlane.f32.xlu0 %v3094
      %v3096 = vpop.xlane.xlu0 %3095
      %v3097 = vsel %vm2907, %v2842, -inf
      %3098 = vmax.xlane.f32.xlu0 %v3097
      %v3099 = vpop.xlane.xlu0 %3098
      %v3100 = vsel %vm2907, %v2843, -inf
      %3101 = vmax.xlane.f32.xlu0 %v3100
      %v3102 = vpop.xlane.xlu0 %3101
      %v3103 = vsel %vm2907, %v2844, -inf
      %3104 = vmax.xlane.f32.xlu0 %v3103
      %v3105 = vpop.xlane.xlu0 %3104
      %v3106 = vsel %vm2907, %v2845, -inf
      %3107 = vmax.xlane.f32.xlu0 %v3106
      %v3108 = vpop.xlane.xlu0 %3107
      %v3109 = vsel %vm2907, %v2846, -inf
      %3110 = vmax.xlane.f32.xlu0 %v3109
      %v3111 = vpop.xlane.xlu0 %3110
      %v3112 = vsel %vm2907, %v2847, -inf
      %3113 = vmax.xlane.f32.xlu0 %v3112
      %v3114 = vpop.xlane.xlu0 %3113
      %v3115 = vsel %vm2907, %v2848, -inf
      %3116 = vmax.xlane.f32.xlu0 %v3115
      %v3117 = vpop.xlane.xlu0 %3116
      %v3118 = vsel %vm2907, %v2849, -inf
      %3119 = vmax.xlane.f32.xlu0 %v3118
      %v3120 = vpop.xlane.xlu0 %3119
      %v3121 = vsel %vm2907, %v2850, -inf
      %3122 = vmax.xlane.f32.xlu0 %v3121
      %v3123 = vpop.xlane.xlu0 %3122
      %v3124 = vsel %vm2907, %v2851, -inf
      %3125 = vmax.xlane.f32.xlu0 %v3124
      %v3126 = vpop.xlane.xlu0 %3125
      %v3127 = vsel %vm2907, %v2852, -inf
      %3128 = vmax.xlane.f32.xlu0 %v3127
      %v3129 = vpop.xlane.xlu0 %3128
      %v3130 = vsel %vm2907, %v2853, -inf
      %3131 = vmax.xlane.f32.xlu0 %v3130
      %v3132 = vpop.xlane.xlu0 %3131
      %v3133 = vsel %vm2907, %v2854, -inf
      %3134 = vmax.xlane.f32.xlu0 %v3133
      %v3135 = vpop.xlane.xlu0 %3134
      %v3136 = vsel %vm2907, %v2855, -inf
      %3137 = vmax.xlane.f32.xlu0 %v3136
      %v3138 = vpop.xlane.xlu0 %3137
      %v3139 = vsel %vm2907, %v2856, -inf
      %3140 = vmax.xlane.f32.xlu0 %v3139
      %v3141 = vpop.xlane.xlu0 %3140
      %v3142 = vsel %vm2907, %v2857, -inf
      %3143 = vmax.xlane.f32.xlu0 %v3142
      %v3144 = vpop.xlane.xlu0 %3143
      %v3145 = vsel %vm2907, %v2858, -inf
      %3146 = vmax.xlane.f32.xlu0 %v3145
      %v3147 = vpop.xlane.xlu0 %3146
      %v3148 = vsel %vm2907, %v2859, -inf
      %3149 = vmax.xlane.f32.xlu0 %v3148
      %v3150 = vpop.xlane.xlu0 %3149
      %v3151 = vsel %vm2907, %v2860, -inf
      %3152 = vmax.xlane.f32.xlu0 %v3151
      %v3153 = vpop.xlane.xlu0 %3152
      %v3154 = vsel %vm2907, %v2861, -inf
      %3155 = vmax.xlane.f32.xlu0 %v3154
      %v3156 = vpop.xlane.xlu0 %3155
      %v3157 = vsel %vm2907, %v2862, -inf
      %3158 = vmax.xlane.f32.xlu0 %v3157
      %v3159 = vpop.xlane.xlu0 %3158
      %v3160 = vsel %vm2907, %v2863, -inf
      %3161 = vmax.xlane.f32.xlu0 %v3160
      %v3162 = vpop.xlane.xlu0 %3161
      %v3163 = vsel %vm2907, %v2864, -inf
      %3164 = vmax.xlane.f32.xlu0 %v3163
      %v3165 = vpop.xlane.xlu0 %3164
      %v3166 = vsel %vm2907, %v2865, -inf
      %3167 = vmax.xlane.f32.xlu0 %v3166
      %v3168 = vpop.xlane.xlu0 %3167
      %v3169 = vsel %vm2907, %v2866, -inf
      %3170 = vmax.xlane.f32.xlu0 %v3169
      %v3171 = vpop.xlane.xlu0 %3170
      %v3172 = vsel %vm2907, %v2867, -inf
      %3173 = vmax.xlane.f32.xlu0 %v3172
      %v3174 = vpop.xlane.xlu0 %3173
      %v3175 = vsel %vm2907, %v2868, -inf
      %3176 = vmax.xlane.f32.xlu0 %v3175
      %v3177 = vpop.xlane.xlu0 %3176
      %v3178 = vsel %vm2907, %v2869, -inf
      %3179 = vmax.xlane.f32.xlu0 %v3178
      %v3180 = vpop.xlane.xlu0 %3179
      %v3181 = vsel %vm2907, %v2870, -inf
      %3182 = vmax.xlane.f32.xlu0 %v3181
      %v3183 = vpop.xlane.xlu0 %3182
      %v3184 = vsel %vm2907, %v2871, -inf
      %3185 = vmax.xlane.f32.xlu0 %v3184
      %v3186 = vpop.xlane.xlu0 %3185
      %v3187 = vsel %vm2907, %v2872, -inf
      %3188 = vmax.xlane.f32.xlu0 %v3187
      %v3189 = vpop.xlane.xlu0 %3188
      %v3190 = vsel %vm2907, %v2873, -inf
      %3191 = vmax.xlane.f32.xlu0 %v3190
      %v3192 = vpop.xlane.xlu0 %3191
      %v3193 = vsel %vm2907, %v2874, -inf
      %3194 = vmax.xlane.f32.xlu0 %v3193
      %v3195 = vpop.xlane.xlu0 %3194
      %v3196 = vsel %vm2907, %v2875, -inf
      %3197 = vmax.xlane.f32.xlu0 %v3196
      %v3198 = vpop.xlane.xlu0 %3197
      %v3199 = vsel %vm2907, %v2876, -inf
      %3200 = vmax.xlane.f32.xlu0 %v3199
      %v3201 = vpop.xlane.xlu0 %3200
      %v3202 = vsel %vm2907, %v2877, -inf
      %3203 = vmax.xlane.f32.xlu0 %v3202
      %v3204 = vpop.xlane.xlu0 %3203
      %v3205 = vsel %vm2907, %v2878, -inf
      %3206 = vmax.xlane.f32.xlu0 %v3205
      %v3207 = vpop.xlane.xlu0 %3206
      %v3208 = vsel %vm2907, %v2879, -inf
      %3209 = vmax.xlane.f32.xlu0 %v3208
      %v3210 = vpop.xlane.xlu0 %3209
      %v3211 = vsel %vm2907, %v2880, -inf
      %3212 = vmax.xlane.f32.xlu0 %v3211
      %v3213 = vpop.xlane.xlu0 %3212
      %v3214 = vsel %vm2907, %v2881, -inf
      %3215 = vmax.xlane.f32.xlu0 %v3214
      %v3216 = vpop.xlane.xlu0 %3215
      %v3217 = vsel %vm2907, %v2882, -inf
      %3218 = vmax.xlane.f32.xlu0 %v3217
      %v3219 = vpop.xlane.xlu0 %3218
      %v3220 = vsel %vm2907, %v2883, -inf
      %3221 = vmax.xlane.f32.xlu0 %v3220
      %v3222 = vpop.xlane.xlu0 %3221
      %v3223 = vsel %vm2907, %v2884, -inf
      %3224 = vmax.xlane.f32.xlu0 %v3223
      %v3225 = vpop.xlane.xlu0 %3224
      %v3226 = vsel %vm2907, %v2885, -inf
      %3227 = vmax.xlane.f32.xlu0 %v3226
      %v3228 = vpop.xlane.xlu0 %3227
      %v3229 = vsel %vm2907, %v2886, -inf
      %3230 = vmax.xlane.f32.xlu0 %v3229
      %v3231 = vpop.xlane.xlu0 %3230
      %v3232 = vsel %vm2907, %v2887, -inf
      %3233 = vmax.xlane.f32.xlu0 %v3232
      %v3234 = vpop.xlane.xlu0 %3233
      %v3235 = vsel %vm2907, %v2888, -inf
      %3236 = vmax.xlane.f32.xlu0 %v3235
      %v3237 = vpop.xlane.xlu0 %3236
      %v3238 = vsel %vm2907, %v2889, -inf
      %3239 = vmax.xlane.f32.xlu0 %v3238
      %v3240 = vpop.xlane.xlu0 %3239
      %v3241 = vsel %vm2907, %v2890, -inf
      %3242 = vmax.xlane.f32.xlu0 %v3241
      %v3243 = vpop.xlane.xlu0 %3242
      %v3244 = vsel %vm2907, %v2891, -inf
      %3245 = vmax.xlane.f32.xlu0 %v3244
      %v3246 = vpop.xlane.xlu0 %3245
      %v3247 = vsel %vm2907, %v2892, -inf
      %3248 = vmax.xlane.f32.xlu0 %v3247
      %v3249 = vpop.xlane.xlu0 %3248
      %v3250 = vsel %vm2907, %v2893, -inf
      %3251 = vmax.xlane.f32.xlu0 %v3250
      %v3252 = vpop.xlane.xlu0 %3251
      %v3253 = vsel %vm2907, %v2894, -inf
      %3254 = vmax.xlane.f32.xlu0 %v3253
      %v3255 = vpop.xlane.xlu0 %3254
      %v3256 = vsel %vm2907, %v2895, -inf
      %3257 = vmax.xlane.f32.xlu0 %v3256
      %v3258 = vpop.xlane.xlu0 %3257
      %v3259 = vsel %vm2907, %v2896, -inf
      %3260 = vmax.xlane.f32.xlu0 %v3259
      %v3261 = vpop.xlane.xlu0 %3260
      %v3262 = vsel %vm2907, %v2897, -inf
      %3263 = vmax.xlane.f32.xlu0 %v3262
      %v3264 = vpop.xlane.xlu0 %3263
      %v3265 = vsel %vm2907, %v2898, -inf
      %3266 = vmax.xlane.f32.xlu0 %v3265
      %v3267 = vpop.xlane.xlu0 %3266
      %v3268 = vsel %vm2907, %v2899, -inf
      %3269 = vmax.xlane.f32.xlu0 %v3268
      %v3270 = vpop.xlane.xlu0 %3269
      %v3271 = vsel %vm2907, %v2900, -inf
      %3272 = vmax.xlane.f32.xlu0 %v3271
      %v3273 = vpop.xlane.xlu0 %3272
      %v3274 = vsel %vm2907, %v2901, -inf
      %3275 = vmax.xlane.f32.xlu0 %v3274
      %v3276 = vpop.xlane.xlu0 %3275
      %v3277 = vsel %vm2907, %v2902, -inf
      %3278 = vmax.xlane.f32.xlu0 %v3277
      %v3279 = vpop.xlane.xlu0 %3278
      %v3280 = vsel %vm2907, %v2903, -inf
      %3281 = vmax.xlane.f32.xlu0 %v3280
      %v3282 = vpop.xlane.xlu0 %3281
      %v3283 = vsel %vm2907, %v2904, -inf
      %3284 = vmax.xlane.f32.xlu0 %v3283
      %v3285 = vpop.xlane.xlu0 %3284
      %v3286 = vsel %vm2907, %v2905, -inf
      %3287 = vmax.xlane.f32.xlu0 %v3286
      %v3288 = vpop.xlane.xlu0 %3287
      %v3289 = vsel %vm2907, %v2906, -inf
      %3290 = vmax.xlane.f32.xlu0 %v3289
      %v3291 = vpop.xlane.xlu0 %3290
      %v3292 = vsub.f32 %v2779, %v2910
      %v3293 = vsub.f32 %v2780, %v2913
      %v3294 = vsub.f32 %v2781, %v2916
      %v3295 = vsub.f32 %v2782, %v2919
      %v3296 = vsub.f32 %v2783, %v2922
      %v3297 = vsub.f32 %v2784, %v2925
      %v3298 = vsub.f32 %v2785, %v2928
      %v3299 = vsub.f32 %v2786, %v2931
      %v3300 = vsub.f32 %v2787, %v2934
      %v3301 = vsub.f32 %v2788, %v2937
      %v3302 = vsub.f32 %v2789, %v2940
      %v3303 = vsub.f32 %v2790, %v2943
      %v3304 = vsub.f32 %v2791, %v2946
      %v3305 = vsub.f32 %v2792, %v2949
      %v3306 = vsub.f32 %v2793, %v2952
      %v3307 = vsub.f32 %v2794, %v2955
      %v3308 = vsub.f32 %v2795, %v2958
      %v3309 = vsub.f32 %v2796, %v2961
      %v3310 = vsub.f32 %v2797, %v2964
      %v3311 = vsub.f32 %v2798, %v2967
      %v3312 = vsub.f32 %v2799, %v2970
      %v3313 = vsub.f32 %v2800, %v2973
      %v3314 = vsub.f32 %v2801, %v2976
      %v3315 = vsub.f32 %v2802, %v2979
      %v3316 = vsub.f32 %v2803, %v2982
      %v3317 = vsub.f32 %v2804, %v2985
      %v3318 = vsub.f32 %v2805, %v2988
      %v3319 = vsub.f32 %v2806, %v2991
      %v3320 = vsub.f32 %v2807, %v2994
      %v3321 = vsub.f32 %v2808, %v2997
      %v3322 = vsub.f32 %v2809, %v3000
      %v3323 = vsub.f32 %v2810, %v3003
      %v3324 = vsub.f32 %v2811, %v3006
      %v3325 = vsub.f32 %v2812, %v3009
      %v3326 = vsub.f32 %v2813, %v3012
      %v3327 = vsub.f32 %v2814, %v3015
      %v3328 = vsub.f32 %v2815, %v3018
      %v3329 = vsub.f32 %v2816, %v3021
      %v3330 = vsub.f32 %v2817, %v3024
      %v3331 = vsub.f32 %v2818, %v3027
      %v3332 = vsub.f32 %v2819, %v3030
      %v3333 = vsub.f32 %v2820, %v3033
      %v3334 = vsub.f32 %v2821, %v3036
      %v3335 = vsub.f32 %v2822, %v3039
      %v3336 = vsub.f32 %v2823, %v3042
      %v3337 = vsub.f32 %v2824, %v3045
      %v3338 = vsub.f32 %v2825, %v3048
      %v3339 = vsub.f32 %v2826, %v3051
      %v3340 = vsub.f32 %v2827, %v3054
      %v3341 = vsub.f32 %v2828, %v3057
      %v3342 = vsub.f32 %v2829, %v3060
      %v3343 = vsub.f32 %v2830, %v3063
      %v3344 = vsub.f32 %v2831, %v3066
      %v3345 = vsub.f32 %v2832, %v3069
      %v3346 = vsub.f32 %v2833, %v3072
      %v3347 = vsub.f32 %v2834, %v3075
      %v3348 = vsub.f32 %v2835, %v3078
      %v3349 = vsub.f32 %v2836, %v3081
      %v3350 = vsub.f32 %v2837, %v3084
      %v3351 = vsub.f32 %v2838, %v3087
      %v3352 = vsub.f32 %v2839, %v3090
      %v3353 = vsub.f32 %v2840, %v3093
      %v3354 = vsub.f32 %v2841, %v3096
      %v3355 = vsub.f32 %v2842, %v3099
      %v3356 = vsub.f32 %v2843, %v3102
      %v3357 = vsub.f32 %v2844, %v3105
      %v3358 = vsub.f32 %v2845, %v3108
      %v3359 = vsub.f32 %v2846, %v3111
      %v3360 = vsub.f32 %v2847, %v3114
      %v3361 = vsub.f32 %v2848, %v3117
      %v3362 = vsub.f32 %v2849, %v3120
      %v3363 = vsub.f32 %v2850, %v3123
      %v3364 = vsub.f32 %v2851, %v3126
      %v3365 = vsub.f32 %v2852, %v3129
      %v3366 = vsub.f32 %v2853, %v3132
      %v3367 = vsub.f32 %v2854, %v3135
      %v3368 = vsub.f32 %v2855, %v3138
      %v3369 = vsub.f32 %v2856, %v3141
      %v3370 = vsub.f32 %v2857, %v3144
      %v3371 = vsub.f32 %v2858, %v3147
      %v3372 = vsub.f32 %v2859, %v3150
      %v3373 = vsub.f32 %v2860, %v3153
      %v3374 = vsub.f32 %v2861, %v3156
      %v3375 = vsub.f32 %v2862, %v3159
      %v3376 = vsub.f32 %v2863, %v3162
      %v3377 = vsub.f32 %v2864, %v3165
      %v3378 = vsub.f32 %v2865, %v3168
      %v3379 = vsub.f32 %v2866, %v3171
      %v3380 = vsub.f32 %v2867, %v3174
      %v3381 = vsub.f32 %v2868, %v3177
      %v3382 = vsub.f32 %v2869, %v3180
      %v3383 = vsub.f32 %v2870, %v3183
      %v3384 = vsub.f32 %v2871, %v3186
      %v3385 = vsub.f32 %v2872, %v3189
      %v3386 = vsub.f32 %v2873, %v3192
      %v3387 = vsub.f32 %v2874, %v3195
      %v3388 = vsub.f32 %v2875, %v3198
      %v3389 = vsub.f32 %v2876, %v3201
      %v3390 = vsub.f32 %v2877, %v3204
      %v3391 = vsub.f32 %v2878, %v3207
      %v3392 = vsub.f32 %v2879, %v3210
      %v3393 = vsub.f32 %v2880, %v3213
      %v3394 = vsub.f32 %v2881, %v3216
      %v3395 = vsub.f32 %v2882, %v3219
      %v3396 = vsub.f32 %v2883, %v3222
      %v3397 = vsub.f32 %v2884, %v3225
      %v3398 = vsub.f32 %v2885, %v3228
      %v3399 = vsub.f32 %v2886, %v3231
      %v3400 = vsub.f32 %v2887, %v3234
      %v3401 = vsub.f32 %v2888, %v3237
      %v3402 = vsub.f32 %v2889, %v3240
      %v3403 = vsub.f32 %v2890, %v3243
      %v3404 = vsub.f32 %v2891, %v3246
      %v3405 = vsub.f32 %v2892, %v3249
      %v3406 = vsub.f32 %v2893, %v3252
      %v3407 = vsub.f32 %v2894, %v3255
      %v3408 = vsub.f32 %v2895, %v3258
      %v3409 = vsub.f32 %v2896, %v3261
      %v3410 = vsub.f32 %v2897, %v3264
      %v3411 = vsub.f32 %v2898, %v3267
      %v3412 = vsub.f32 %v2899, %v3270
      %v3413 = vsub.f32 %v2900, %v3273
      %v3414 = vsub.f32 %v2901, %v3276
      %v3415 = vsub.f32 %v2902, %v3279
      %v3416 = vsub.f32 %v2903, %v3282
      %v3417 = vsub.f32 %v2904, %v3285
      %v3418 = vsub.f32 %v2905, %v3288
      %v3419 = vsub.f32 %v2906, %v3291
      %v3420 = vmul.f32 %v3292, 1.442695
      %v3421 = vpow.pop %v3420
      %v3422 = vmul.f32 %v3293, 1.442695
      %v3423 = vpow.pop %v3422
      %v3424 = vmul.f32 %v3294, 1.442695
      %v3425 = vpow.pop %v3424
      %v3426 = vmul.f32 %v3295, 1.442695
      %v3427 = vpow.pop %v3426
      %v3428 = vmul.f32 %v3296, 1.442695
      %v3429 = vpow.pop %v3428
      %v3430 = vmul.f32 %v3297, 1.442695
      %v3431 = vpow.pop %v3430
      %v3432 = vmul.f32 %v3298, 1.442695
      %v3433 = vpow.pop %v3432
      %v3434 = vmul.f32 %v3299, 1.442695
      %v3435 = vpow.pop %v3434
      %v3436 = vmul.f32 %v3300, 1.442695
      %v3437 = vpow.pop %v3436
      %v3438 = vmul.f32 %v3301, 1.442695
      %v3439 = vpow.pop %v3438
      %v3440 = vmul.f32 %v3302, 1.442695
      %v3441 = vpow.pop %v3440
      %v3442 = vmul.f32 %v3303, 1.442695
      %v3443 = vpow.pop %v3442
      %v3444 = vmul.f32 %v3304, 1.442695
      %v3445 = vpow.pop %v3444
      %v3446 = vmul.f32 %v3305, 1.442695
      %v3447 = vpow.pop %v3446
      %v3448 = vmul.f32 %v3306, 1.442695
      %v3449 = vpow.pop %v3448
      %v3450 = vmul.f32 %v3307, 1.442695
      %v3451 = vpow.pop %v3450
      %v3452 = vmul.f32 %v3308, 1.442695
      %v3453 = vpow.pop %v3452
      %v3454 = vmul.f32 %v3309, 1.442695
      %v3455 = vpow.pop %v3454
      %v3456 = vmul.f32 %v3310, 1.442695
      %v3457 = vpow.pop %v3456
      %v3458 = vmul.f32 %v3311, 1.442695
      %v3459 = vpow.pop %v3458
      %v3460 = vmul.f32 %v3312, 1.442695
      %v3461 = vpow.pop %v3460
      %v3462 = vmul.f32 %v3313, 1.442695
      %v3463 = vpow.pop %v3462
      %v3464 = vmul.f32 %v3314, 1.442695
      %v3465 = vpow.pop %v3464
      %v3466 = vmul.f32 %v3315, 1.442695
      %v3467 = vpow.pop %v3466
      %v3468 = vmul.f32 %v3316, 1.442695
      %v3469 = vpow.pop %v3468
      %v3470 = vmul.f32 %v3317, 1.442695
      %v3471 = vpow.pop %v3470
      %v3472 = vmul.f32 %v3318, 1.442695
      %v3473 = vpow.pop %v3472
      %v3474 = vmul.f32 %v3319, 1.442695
      %v3475 = vpow.pop %v3474
      %v3476 = vmul.f32 %v3320, 1.442695
      %v3477 = vpow.pop %v3476
      %v3478 = vmul.f32 %v3321, 1.442695
      %v3479 = vpow.pop %v3478
      %v3480 = vmul.f32 %v3322, 1.442695
      %v3481 = vpow.pop %v3480
      %v3482 = vmul.f32 %v3323, 1.442695
      %v3483 = vpow.pop %v3482
      %v3484 = vmul.f32 %v3324, 1.442695
      %v3485 = vpow.pop %v3484
      %v3486 = vmul.f32 %v3325, 1.442695
      %v3487 = vpow.pop %v3486
      %v3488 = vmul.f32 %v3326, 1.442695
      %v3489 = vpow.pop %v3488
      %v3490 = vmul.f32 %v3327, 1.442695
      %v3491 = vpow.pop %v3490
      %v3492 = vmul.f32 %v3328, 1.442695
      %v3493 = vpow.pop %v3492
      %v3494 = vmul.f32 %v3329, 1.442695
      %v3495 = vpow.pop %v3494
      %v3496 = vmul.f32 %v3330, 1.442695
      %v3497 = vpow.pop %v3496
      %v3498 = vmul.f32 %v3331, 1.442695
      %v3499 = vpow.pop %v3498
      %v3500 = vmul.f32 %v3332, 1.442695
      %v3501 = vpow.pop %v3500
      %v3502 = vmul.f32 %v3333, 1.442695
      %v3503 = vpow.pop %v3502
      %v3504 = vmul.f32 %v3334, 1.442695
      %v3505 = vpow.pop %v3504
      %v3506 = vmul.f32 %v3335, 1.442695
      %v3507 = vpow.pop %v3506
      %v3508 = vmul.f32 %v3336, 1.442695
      %v3509 = vpow.pop %v3508
      %v3510 = vmul.f32 %v3337, 1.442695
      %v3511 = vpow.pop %v3510
      %v3512 = vmul.f32 %v3338, 1.442695
      %v3513 = vpow.pop %v3512
      %v3514 = vmul.f32 %v3339, 1.442695
      %v3515 = vpow.pop %v3514
      %v3516 = vmul.f32 %v3340, 1.442695
      %v3517 = vpow.pop %v3516
      %v3518 = vmul.f32 %v3341, 1.442695
      %v3519 = vpow.pop %v3518
      %v3520 = vmul.f32 %v3342, 1.442695
      %v3521 = vpow.pop %v3520
      %v3522 = vmul.f32 %v3343, 1.442695
      %v3523 = vpow.pop %v3522
      %v3524 = vmul.f32 %v3344, 1.442695
      %v3525 = vpow.pop %v3524
      %v3526 = vmul.f32 %v3345, 1.442695
      %v3527 = vpow.pop %v3526
      %v3528 = vmul.f32 %v3346, 1.442695
      %v3529 = vpow.pop %v3528
      %v3530 = vmul.f32 %v3347, 1.442695
      %v3531 = vpow.pop %v3530
      %v3532 = vmul.f32 %v3348, 1.442695
      %v3533 = vpow.pop %v3532
      %v3534 = vmul.f32 %v3349, 1.442695
      %v3535 = vpow.pop %v3534
      %v3536 = vmul.f32 %v3350, 1.442695
      %v3537 = vpow.pop %v3536
      %v3538 = vmul.f32 %v3351, 1.442695
      %v3539 = vpow.pop %v3538
      %v3540 = vmul.f32 %v3352, 1.442695
      %v3541 = vpow.pop %v3540
      %v3542 = vmul.f32 %v3353, 1.442695
      %v3543 = vpow.pop %v3542
      %v3544 = vmul.f32 %v3354, 1.442695
      %v3545 = vpow.pop %v3544
      %v3546 = vmul.f32 %v3355, 1.442695
      %v3547 = vpow.pop %v3546
      %v3548 = vmul.f32 %v3356, 1.442695
      %v3549 = vpow.pop %v3548
      %v3550 = vmul.f32 %v3357, 1.442695
      %v3551 = vpow.pop %v3550
      %v3552 = vmul.f32 %v3358, 1.442695
      %v3553 = vpow.pop %v3552
      %v3554 = vmul.f32 %v3359, 1.442695
      %v3555 = vpow.pop %v3554
      %v3556 = vmul.f32 %v3360, 1.442695
      %v3557 = vpow.pop %v3556
      %v3558 = vmul.f32 %v3361, 1.442695
      %v3559 = vpow.pop %v3558
      %v3560 = vmul.f32 %v3362, 1.442695
      %v3561 = vpow.pop %v3560
      %v3562 = vmul.f32 %v3363, 1.442695
      %v3563 = vpow.pop %v3562
      %v3564 = vmul.f32 %v3364, 1.442695
      %v3565 = vpow.pop %v3564
      %v3566 = vmul.f32 %v3365, 1.442695
      %v3567 = vpow.pop %v3566
      %v3568 = vmul.f32 %v3366, 1.442695
      %v3569 = vpow.pop %v3568
      %v3570 = vmul.f32 %v3367, 1.442695
      %v3571 = vpow.pop %v3570
      %v3572 = vmul.f32 %v3368, 1.442695
      %v3573 = vpow.pop %v3572
      %v3574 = vmul.f32 %v3369, 1.442695
      %v3575 = vpow.pop %v3574
      %v3576 = vmul.f32 %v3370, 1.442695
      %v3577 = vpow.pop %v3576
      %v3578 = vmul.f32 %v3371, 1.442695
      %v3579 = vpow.pop %v3578
      %v3580 = vmul.f32 %v3372, 1.442695
      %v3581 = vpow.pop %v3580
      %v3582 = vmul.f32 %v3373, 1.442695
      %v3583 = vpow.pop %v3582
      %v3584 = vmul.f32 %v3374, 1.442695
      %v3585 = vpow.pop %v3584
      %v3586 = vmul.f32 %v3375, 1.442695
      %v3587 = vpow.pop %v3586
      %v3588 = vmul.f32 %v3376, 1.442695
      %v3589 = vpow.pop %v3588
      %v3590 = vmul.f32 %v3377, 1.442695
      %v3591 = vpow.pop %v3590
      %v3592 = vmul.f32 %v3378, 1.442695
      %v3593 = vpow.pop %v3592
      %v3594 = vmul.f32 %v3379, 1.442695
      %v3595 = vpow.pop %v3594
      %v3596 = vmul.f32 %v3380, 1.442695
      %v3597 = vpow.pop %v3596
      %v3598 = vmul.f32 %v3381, 1.442695
      %v3599 = vpow.pop %v3598
      %v3600 = vmul.f32 %v3382, 1.442695
      %v3601 = vpow.pop %v3600
      %v3602 = vmul.f32 %v3383, 1.442695
      %v3603 = vpow.pop %v3602
      %v3604 = vmul.f32 %v3384, 1.442695
      %v3605 = vpow.pop %v3604
      %v3606 = vmul.f32 %v3385, 1.442695
      %v3607 = vpow.pop %v3606
      %v3608 = vmul.f32 %v3386, 1.442695
      %v3609 = vpow.pop %v3608
      %v3610 = vmul.f32 %v3387, 1.442695
      %v3611 = vpow.pop %v3610
      %v3612 = vmul.f32 %v3388, 1.442695
      %v3613 = vpow.pop %v3612
      %v3614 = vmul.f32 %v3389, 1.442695
      %v3615 = vpow.pop %v3614
      %v3616 = vmul.f32 %v3390, 1.442695
      %v3617 = vpow.pop %v3616
      %v3618 = vmul.f32 %v3391, 1.442695
      %v3619 = vpow.pop %v3618
      %v3620 = vmul.f32 %v3392, 1.442695
      %v3621 = vpow.pop %v3620
      %v3622 = vmul.f32 %v3393, 1.442695
      %v3623 = vpow.pop %v3622
      %v3624 = vmul.f32 %v3394, 1.442695
      %v3625 = vpow.pop %v3624
      %v3626 = vmul.f32 %v3395, 1.442695
      %v3627 = vpow.pop %v3626
      %v3628 = vmul.f32 %v3396, 1.442695
      %v3629 = vpow.pop %v3628
      %v3630 = vmul.f32 %v3397, 1.442695
      %v3631 = vpow.pop %v3630
      %v3632 = vmul.f32 %v3398, 1.442695
      %v3633 = vpow.pop %v3632
      %v3634 = vmul.f32 %v3399, 1.442695
      %v3635 = vpow.pop %v3634
      %v3636 = vmul.f32 %v3400, 1.442695
      %v3637 = vpow.pop %v3636
      %v3638 = vmul.f32 %v3401, 1.442695
      %v3639 = vpow.pop %v3638
      %v3640 = vmul.f32 %v3402, 1.442695
      %v3641 = vpow.pop %v3640
      %v3642 = vmul.f32 %v3403, 1.442695
      %v3643 = vpow.pop %v3642
      %v3644 = vmul.f32 %v3404, 1.442695
      %v3645 = vpow.pop %v3644
      %v3646 = vmul.f32 %v3405, 1.442695
      %v3647 = vpow.pop %v3646
      %v3648 = vmul.f32 %v3406, 1.442695
      %v3649 = vpow.pop %v3648
      %v3650 = vmul.f32 %v3407, 1.442695
      %v3651 = vpow.pop %v3650
      %v3652 = vmul.f32 %v3408, 1.442695
      %v3653 = vpow.pop %v3652
      %v3654 = vmul.f32 %v3409, 1.442695
      %v3655 = vpow.pop %v3654
      %v3656 = vmul.f32 %v3410, 1.442695
      %v3657 = vpow.pop %v3656
      %v3658 = vmul.f32 %v3411, 1.442695
      %v3659 = vpow.pop %v3658
      %v3660 = vmul.f32 %v3412, 1.442695
      %v3661 = vpow.pop %v3660
      %v3662 = vmul.f32 %v3413, 1.442695
      %v3663 = vpow.pop %v3662
      %v3664 = vmul.f32 %v3414, 1.442695
      %v3665 = vpow.pop %v3664
      %v3666 = vmul.f32 %v3415, 1.442695
      %v3667 = vpow.pop %v3666
      %v3668 = vmul.f32 %v3416, 1.442695
      %v3669 = vpow.pop %v3668
      %v3670 = vmul.f32 %v3417, 1.442695
      %v3671 = vpow.pop %v3670
      %v3672 = vmul.f32 %v3418, 1.442695
      %v3673 = vpow.pop %v3672
      %v3674 = vmul.f32 %v3419, 1.442695
      %v3675 = vpow.pop %v3674
      %v3676 = vsel %vm2907, %v3421, 0.0
      %3677 = vadd.xlane.f32.xlu0 %v3676
      %v3678 = vpop.xlane.xlu0 %3677
      %v3679 = vsel %vm2907, %v3423, 0.0
      %3680 = vadd.xlane.f32.xlu0 %v3679
      %v3681 = vpop.xlane.xlu0 %3680
      %v3682 = vsel %vm2907, %v3425, 0.0
      %3683 = vadd.xlane.f32.xlu0 %v3682
      %v3684 = vpop.xlane.xlu0 %3683
      %v3685 = vsel %vm2907, %v3427, 0.0
      %3686 = vadd.xlane.f32.xlu0 %v3685
      %v3687 = vpop.xlane.xlu0 %3686
      %v3688 = vsel %vm2907, %v3429, 0.0
      %3689 = vadd.xlane.f32.xlu0 %v3688
      %v3690 = vpop.xlane.xlu0 %3689
      %v3691 = vsel %vm2907, %v3431, 0.0
      %3692 = vadd.xlane.f32.xlu0 %v3691
      %v3693 = vpop.xlane.xlu0 %3692
      %v3694 = vsel %vm2907, %v3433, 0.0
      %3695 = vadd.xlane.f32.xlu0 %v3694
      %v3696 = vpop.xlane.xlu0 %3695
      %v3697 = vsel %vm2907, %v3435, 0.0
      %3698 = vadd.xlane.f32.xlu0 %v3697
      %v3699 = vpop.xlane.xlu0 %3698
      %v3700 = vsel %vm2907, %v3437, 0.0
      %3701 = vadd.xlane.f32.xlu0 %v3700
      %v3702 = vpop.xlane.xlu0 %3701
      %v3703 = vsel %vm2907, %v3439, 0.0
      %3704 = vadd.xlane.f32.xlu0 %v3703
      %v3705 = vpop.xlane.xlu0 %3704
      %v3706 = vsel %vm2907, %v3441, 0.0
      %3707 = vadd.xlane.f32.xlu0 %v3706
      %v3708 = vpop.xlane.xlu0 %3707
      %v3709 = vsel %vm2907, %v3443, 0.0
      %3710 = vadd.xlane.f32.xlu0 %v3709
      %v3711 = vpop.xlane.xlu0 %3710
      %v3712 = vsel %vm2907, %v3445, 0.0
      %3713 = vadd.xlane.f32.xlu0 %v3712
      %v3714 = vpop.xlane.xlu0 %3713
      %v3715 = vsel %vm2907, %v3447, 0.0
      %3716 = vadd.xlane.f32.xlu0 %v3715
      %v3717 = vpop.xlane.xlu0 %3716
      %v3718 = vsel %vm2907, %v3449, 0.0
      %3719 = vadd.xlane.f32.xlu0 %v3718
      %v3720 = vpop.xlane.xlu0 %3719
      %v3721 = vsel %vm2907, %v3451, 0.0
      %3722 = vadd.xlane.f32.xlu0 %v3721
      %v3723 = vpop.xlane.xlu0 %3722
      %v3724 = vsel %vm2907, %v3453, 0.0
      %3725 = vadd.xlane.f32.xlu0 %v3724
      %v3726 = vpop.xlane.xlu0 %3725
      %v3727 = vsel %vm2907, %v3455, 0.0
      %3728 = vadd.xlane.f32.xlu0 %v3727
      %v3729 = vpop.xlane.xlu0 %3728
      %v3730 = vsel %vm2907, %v3457, 0.0
      %3731 = vadd.xlane.f32.xlu0 %v3730
      %v3732 = vpop.xlane.xlu0 %3731
      %v3733 = vsel %vm2907, %v3459, 0.0
      %3734 = vadd.xlane.f32.xlu0 %v3733
      %v3735 = vpop.xlane.xlu0 %3734
      %v3736 = vsel %vm2907, %v3461, 0.0
      %3737 = vadd.xlane.f32.xlu0 %v3736
      %v3738 = vpop.xlane.xlu0 %3737
      %v3739 = vsel %vm2907, %v3463, 0.0
      %3740 = vadd.xlane.f32.xlu0 %v3739
      %v3741 = vpop.xlane.xlu0 %3740
      %v3742 = vsel %vm2907, %v3465, 0.0
      %3743 = vadd.xlane.f32.xlu0 %v3742
      %v3744 = vpop.xlane.xlu0 %3743
      %v3745 = vsel %vm2907, %v3467, 0.0
      %3746 = vadd.xlane.f32.xlu0 %v3745
      %v3747 = vpop.xlane.xlu0 %3746
      %v3748 = vsel %vm2907, %v3469, 0.0
      %3749 = vadd.xlane.f32.xlu0 %v3748
      %v3750 = vpop.xlane.xlu0 %3749
      %v3751 = vsel %vm2907, %v3471, 0.0
      %3752 = vadd.xlane.f32.xlu0 %v3751
      %v3753 = vpop.xlane.xlu0 %3752
      %v3754 = vsel %vm2907, %v3473, 0.0
      %3755 = vadd.xlane.f32.xlu0 %v3754
      %v3756 = vpop.xlane.xlu0 %3755
      %v3757 = vsel %vm2907, %v3475, 0.0
      %3758 = vadd.xlane.f32.xlu0 %v3757
      %v3759 = vpop.xlane.xlu0 %3758
      %v3760 = vsel %vm2907, %v3477, 0.0
      %3761 = vadd.xlane.f32.xlu0 %v3760
      %v3762 = vpop.xlane.xlu0 %3761
      %v3763 = vsel %vm2907, %v3479, 0.0
      %3764 = vadd.xlane.f32.xlu0 %v3763
      %v3765 = vpop.xlane.xlu0 %3764
      %v3766 = vsel %vm2907, %v3481, 0.0
      %3767 = vadd.xlane.f32.xlu0 %v3766
      %v3768 = vpop.xlane.xlu0 %3767
      %v3769 = vsel %vm2907, %v3483, 0.0
      %3770 = vadd.xlane.f32.xlu0 %v3769
      %v3771 = vpop.xlane.xlu0 %3770
      %v3772 = vsel %vm2907, %v3485, 0.0
      %3773 = vadd.xlane.f32.xlu0 %v3772
      %v3774 = vpop.xlane.xlu0 %3773
      %v3775 = vsel %vm2907, %v3487, 0.0
      %3776 = vadd.xlane.f32.xlu0 %v3775
      %v3777 = vpop.xlane.xlu0 %3776
      %v3778 = vsel %vm2907, %v3489, 0.0
      %3779 = vadd.xlane.f32.xlu0 %v3778
      %v3780 = vpop.xlane.xlu0 %3779
      %v3781 = vsel %vm2907, %v3491, 0.0
      %3782 = vadd.xlane.f32.xlu0 %v3781
      %v3783 = vpop.xlane.xlu0 %3782
      %v3784 = vsel %vm2907, %v3493, 0.0
      %3785 = vadd.xlane.f32.xlu0 %v3784
      %v3786 = vpop.xlane.xlu0 %3785
      %v3787 = vsel %vm2907, %v3495, 0.0
      %3788 = vadd.xlane.f32.xlu0 %v3787
      %v3789 = vpop.xlane.xlu0 %3788
      %v3790 = vsel %vm2907, %v3497, 0.0
      %3791 = vadd.xlane.f32.xlu0 %v3790
      %v3792 = vpop.xlane.xlu0 %3791
      %v3793 = vsel %vm2907, %v3499, 0.0
      %3794 = vadd.xlane.f32.xlu0 %v3793
      %v3795 = vpop.xlane.xlu0 %3794
      %v3796 = vsel %vm2907, %v3501, 0.0
      %3797 = vadd.xlane.f32.xlu0 %v3796
      %v3798 = vpop.xlane.xlu0 %3797
      %v3799 = vsel %vm2907, %v3503, 0.0
      %3800 = vadd.xlane.f32.xlu0 %v3799
      %v3801 = vpop.xlane.xlu0 %3800
      %v3802 = vsel %vm2907, %v3505, 0.0
      %3803 = vadd.xlane.f32.xlu0 %v3802
      %v3804 = vpop.xlane.xlu0 %3803
      %v3805 = vsel %vm2907, %v3507, 0.0
      %3806 = vadd.xlane.f32.xlu0 %v3805
      %v3807 = vpop.xlane.xlu0 %3806
      %v3808 = vsel %vm2907, %v3509, 0.0
      %3809 = vadd.xlane.f32.xlu0 %v3808
      %v3810 = vpop.xlane.xlu0 %3809
      %v3811 = vsel %vm2907, %v3511, 0.0
      %3812 = vadd.xlane.f32.xlu0 %v3811
      %v3813 = vpop.xlane.xlu0 %3812
      %v3814 = vsel %vm2907, %v3513, 0.0
      %3815 = vadd.xlane.f32.xlu0 %v3814
      %v3816 = vpop.xlane.xlu0 %3815
      %v3817 = vsel %vm2907, %v3515, 0.0
      %3818 = vadd.xlane.f32.xlu0 %v3817
      %v3819 = vpop.xlane.xlu0 %3818
      %v3820 = vsel %vm2907, %v3517, 0.0
      %3821 = vadd.xlane.f32.xlu0 %v3820
      %v3822 = vpop.xlane.xlu0 %3821
      %v3823 = vsel %vm2907, %v3519, 0.0
      %3824 = vadd.xlane.f32.xlu0 %v3823
      %v3825 = vpop.xlane.xlu0 %3824
      %v3826 = vsel %vm2907, %v3521, 0.0
      %3827 = vadd.xlane.f32.xlu0 %v3826
      %v3828 = vpop.xlane.xlu0 %3827
      %v3829 = vsel %vm2907, %v3523, 0.0
      %3830 = vadd.xlane.f32.xlu0 %v3829
      %v3831 = vpop.xlane.xlu0 %3830
      %v3832 = vsel %vm2907, %v3525, 0.0
      %3833 = vadd.xlane.f32.xlu0 %v3832
      %v3834 = vpop.xlane.xlu0 %3833
      %v3835 = vsel %vm2907, %v3527, 0.0
      %3836 = vadd.xlane.f32.xlu0 %v3835
      %v3837 = vpop.xlane.xlu0 %3836
      %v3838 = vsel %vm2907, %v3529, 0.0
      %3839 = vadd.xlane.f32.xlu0 %v3838
      %v3840 = vpop.xlane.xlu0 %3839
      %v3841 = vsel %vm2907, %v3531, 0.0
      %3842 = vadd.xlane.f32.xlu0 %v3841
      %v3843 = vpop.xlane.xlu0 %3842
      %v3844 = vsel %vm2907, %v3533, 0.0
      %3845 = vadd.xlane.f32.xlu0 %v3844
      %v3846 = vpop.xlane.xlu0 %3845
      %v3847 = vsel %vm2907, %v3535, 0.0
      %3848 = vadd.xlane.f32.xlu0 %v3847
      %v3849 = vpop.xlane.xlu0 %3848
      %v3850 = vsel %vm2907, %v3537, 0.0
      %3851 = vadd.xlane.f32.xlu0 %v3850
      %v3852 = vpop.xlane.xlu0 %3851
      %v3853 = vsel %vm2907, %v3539, 0.0
      %3854 = vadd.xlane.f32.xlu0 %v3853
      %v3855 = vpop.xlane.xlu0 %3854
      %v3856 = vsel %vm2907, %v3541, 0.0
      %3857 = vadd.xlane.f32.xlu0 %v3856
      %v3858 = vpop.xlane.xlu0 %3857
      %v3859 = vsel %vm2907, %v3543, 0.0
      %3860 = vadd.xlane.f32.xlu0 %v3859
      %v3861 = vpop.xlane.xlu0 %3860
      %v3862 = vsel %vm2907, %v3545, 0.0
      %3863 = vadd.xlane.f32.xlu0 %v3862
      %v3864 = vpop.xlane.xlu0 %3863
      %v3865 = vsel %vm2907, %v3547, 0.0
      %3866 = vadd.xlane.f32.xlu0 %v3865
      %v3867 = vpop.xlane.xlu0 %3866
      %v3868 = vsel %vm2907, %v3549, 0.0
      %3869 = vadd.xlane.f32.xlu0 %v3868
      %v3870 = vpop.xlane.xlu0 %3869
      %v3871 = vsel %vm2907, %v3551, 0.0
      %3872 = vadd.xlane.f32.xlu0 %v3871
      %v3873 = vpop.xlane.xlu0 %3872
      %v3874 = vsel %vm2907, %v3553, 0.0
      %3875 = vadd.xlane.f32.xlu0 %v3874
      %v3876 = vpop.xlane.xlu0 %3875
      %v3877 = vsel %vm2907, %v3555, 0.0
      %3878 = vadd.xlane.f32.xlu0 %v3877
      %v3879 = vpop.xlane.xlu0 %3878
      %v3880 = vsel %vm2907, %v3557, 0.0
      %3881 = vadd.xlane.f32.xlu0 %v3880
      %v3882 = vpop.xlane.xlu0 %3881
      %v3883 = vsel %vm2907, %v3559, 0.0
      %3884 = vadd.xlane.f32.xlu0 %v3883
      %v3885 = vpop.xlane.xlu0 %3884
      %v3886 = vsel %vm2907, %v3561, 0.0
      %3887 = vadd.xlane.f32.xlu0 %v3886
      %v3888 = vpop.xlane.xlu0 %3887
      %v3889 = vsel %vm2907, %v3563, 0.0
      %3890 = vadd.xlane.f32.xlu0 %v3889
      %v3891 = vpop.xlane.xlu0 %3890
      %v3892 = vsel %vm2907, %v3565, 0.0
      %3893 = vadd.xlane.f32.xlu0 %v3892
      %v3894 = vpop.xlane.xlu0 %3893
      %v3895 = vsel %vm2907, %v3567, 0.0
      %3896 = vadd.xlane.f32.xlu0 %v3895
      %v3897 = vpop.xlane.xlu0 %3896
      %v3898 = vsel %vm2907, %v3569, 0.0
      %3899 = vadd.xlane.f32.xlu0 %v3898
      %v3900 = vpop.xlane.xlu0 %3899
      %v3901 = vsel %vm2907, %v3571, 0.0
      %3902 = vadd.xlane.f32.xlu0 %v3901
      %v3903 = vpop.xlane.xlu0 %3902
      %v3904 = vsel %vm2907, %v3573, 0.0
      %3905 = vadd.xlane.f32.xlu0 %v3904
      %v3906 = vpop.xlane.xlu0 %3905
      %v3907 = vsel %vm2907, %v3575, 0.0
      %3908 = vadd.xlane.f32.xlu0 %v3907
      %v3909 = vpop.xlane.xlu0 %3908
      %v3910 = vsel %vm2907, %v3577, 0.0
      %3911 = vadd.xlane.f32.xlu0 %v3910
      %v3912 = vpop.xlane.xlu0 %3911
      %v3913 = vsel %vm2907, %v3579, 0.0
      %3914 = vadd.xlane.f32.xlu0 %v3913
      %v3915 = vpop.xlane.xlu0 %3914
      %v3916 = vsel %vm2907, %v3581, 0.0
      %3917 = vadd.xlane.f32.xlu0 %v3916
      %v3918 = vpop.xlane.xlu0 %3917
      %v3919 = vsel %vm2907, %v3583, 0.0
      %3920 = vadd.xlane.f32.xlu0 %v3919
      %v3921 = vpop.xlane.xlu0 %3920
      %v3922 = vsel %vm2907, %v3585, 0.0
      %3923 = vadd.xlane.f32.xlu0 %v3922
      %v3924 = vpop.xlane.xlu0 %3923
      %v3925 = vsel %vm2907, %v3587, 0.0
      %3926 = vadd.xlane.f32.xlu0 %v3925
      %v3927 = vpop.xlane.xlu0 %3926
      %v3928 = vsel %vm2907, %v3589, 0.0
      %3929 = vadd.xlane.f32.xlu0 %v3928
      %v3930 = vpop.xlane.xlu0 %3929
      %v3931 = vsel %vm2907, %v3591, 0.0
      %3932 = vadd.xlane.f32.xlu0 %v3931
      %v3933 = vpop.xlane.xlu0 %3932
      %v3934 = vsel %vm2907, %v3593, 0.0
      %3935 = vadd.xlane.f32.xlu0 %v3934
      %v3936 = vpop.xlane.xlu0 %3935
      %v3937 = vsel %vm2907, %v3595, 0.0
      %3938 = vadd.xlane.f32.xlu0 %v3937
      %v3939 = vpop.xlane.xlu0 %3938
      %v3940 = vsel %vm2907, %v3597, 0.0
      %3941 = vadd.xlane.f32.xlu0 %v3940
      %v3942 = vpop.xlane.xlu0 %3941
      %v3943 = vsel %vm2907, %v3599, 0.0
      %3944 = vadd.xlane.f32.xlu0 %v3943
      %v3945 = vpop.xlane.xlu0 %3944
      %v3946 = vsel %vm2907, %v3601, 0.0
      %3947 = vadd.xlane.f32.xlu0 %v3946
      %v3948 = vpop.xlane.xlu0 %3947
      %v3949 = vsel %vm2907, %v3603, 0.0
      %3950 = vadd.xlane.f32.xlu0 %v3949
      %v3951 = vpop.xlane.xlu0 %3950
      %v3952 = vsel %vm2907, %v3605, 0.0
      %3953 = vadd.xlane.f32.xlu0 %v3952
      %v3954 = vpop.xlane.xlu0 %3953
      %v3955 = vsel %vm2907, %v3607, 0.0
      %3956 = vadd.xlane.f32.xlu0 %v3955
      %v3957 = vpop.xlane.xlu0 %3956
      %v3958 = vsel %vm2907, %v3609, 0.0
      %3959 = vadd.xlane.f32.xlu0 %v3958
      %v3960 = vpop.xlane.xlu0 %3959
      %v3961 = vsel %vm2907, %v3611, 0.0
      %3962 = vadd.xlane.f32.xlu0 %v3961
      %v3963 = vpop.xlane.xlu0 %3962
      %v3964 = vsel %vm2907, %v3613, 0.0
      %3965 = vadd.xlane.f32.xlu0 %v3964
      %v3966 = vpop.xlane.xlu0 %3965
      %v3967 = vsel %vm2907, %v3615, 0.0
      %3968 = vadd.xlane.f32.xlu0 %v3967
      %v3969 = vpop.xlane.xlu0 %3968
      %v3970 = vsel %vm2907, %v3617, 0.0
      %3971 = vadd.xlane.f32.xlu0 %v3970
      %v3972 = vpop.xlane.xlu0 %3971
      %v3973 = vsel %vm2907, %v3619, 0.0
      %3974 = vadd.xlane.f32.xlu0 %v3973
      %v3975 = vpop.xlane.xlu0 %3974
      %v3976 = vsel %vm2907, %v3621, 0.0
      %3977 = vadd.xlane.f32.xlu0 %v3976
      %v3978 = vpop.xlane.xlu0 %3977
      %v3979 = vsel %vm2907, %v3623, 0.0
      %3980 = vadd.xlane.f32.xlu0 %v3979
      %v3981 = vpop.xlane.xlu0 %3980
      %v3982 = vsel %vm2907, %v3625, 0.0
      %3983 = vadd.xlane.f32.xlu0 %v3982
      %v3984 = vpop.xlane.xlu0 %3983
      %v3985 = vsel %vm2907, %v3627, 0.0
      %3986 = vadd.xlane.f32.xlu0 %v3985
      %v3987 = vpop.xlane.xlu0 %3986
      %v3988 = vsel %vm2907, %v3629, 0.0
      %3989 = vadd.xlane.f32.xlu0 %v3988
      %v3990 = vpop.xlane.xlu0 %3989
      %v3991 = vsel %vm2907, %v3631, 0.0
      %3992 = vadd.xlane.f32.xlu0 %v3991
      %v3993 = vpop.xlane.xlu0 %3992
      %v3994 = vsel %vm2907, %v3633, 0.0
      %3995 = vadd.xlane.f32.xlu0 %v3994
      %v3996 = vpop.xlane.xlu0 %3995
      %v3997 = vsel %vm2907, %v3635, 0.0
      %3998 = vadd.xlane.f32.xlu0 %v3997
      %v3999 = vpop.xlane.xlu0 %3998
      %v4000 = vsel %vm2907, %v3637, 0.0
      %4001 = vadd.xlane.f32.xlu0 %v4000
      %v4002 = vpop.xlane.xlu0 %4001
      %v4003 = vsel %vm2907, %v3639, 0.0
      %4004 = vadd.xlane.f32.xlu0 %v4003
      %v4005 = vpop.xlane.xlu0 %4004
      %v4006 = vsel %vm2907, %v3641, 0.0
      %4007 = vadd.xlane.f32.xlu0 %v4006
      %v4008 = vpop.xlane.xlu0 %4007
      %v4009 = vsel %vm2907, %v3643, 0.0
      %4010 = vadd.xlane.f32.xlu0 %v4009
      %v4011 = vpop.xlane.xlu0 %4010
      %v4012 = vsel %vm2907, %v3645, 0.0
      %4013 = vadd.xlane.f32.xlu0 %v4012
      %v4014 = vpop.xlane.xlu0 %4013
      %v4015 = vsel %vm2907, %v3647, 0.0
      %4016 = vadd.xlane.f32.xlu0 %v4015
      %v4017 = vpop.xlane.xlu0 %4016
      %v4018 = vsel %vm2907, %v3649, 0.0
      %4019 = vadd.xlane.f32.xlu0 %v4018
      %v4020 = vpop.xlane.xlu0 %4019
      %v4021 = vsel %vm2907, %v3651, 0.0
      %4022 = vadd.xlane.f32.xlu0 %v4021
      %v4023 = vpop.xlane.xlu0 %4022
      %v4024 = vsel %vm2907, %v3653, 0.0
      %4025 = vadd.xlane.f32.xlu0 %v4024
      %v4026 = vpop.xlane.xlu0 %4025
      %v4027 = vsel %vm2907, %v3655, 0.0
      %4028 = vadd.xlane.f32.xlu0 %v4027
      %v4029 = vpop.xlane.xlu0 %4028
      %v4030 = vsel %vm2907, %v3657, 0.0
      %4031 = vadd.xlane.f32.xlu0 %v4030
      %v4032 = vpop.xlane.xlu0 %4031
      %v4033 = vsel %vm2907, %v3659, 0.0
      %4034 = vadd.xlane.f32.xlu0 %v4033
      %v4035 = vpop.xlane.xlu0 %4034
      %v4036 = vsel %vm2907, %v3661, 0.0
      %4037 = vadd.xlane.f32.xlu0 %v4036
      %v4038 = vpop.xlane.xlu0 %4037
      %v4039 = vsel %vm2907, %v3663, 0.0
      %4040 = vadd.xlane.f32.xlu0 %v4039
      %v4041 = vpop.xlane.xlu0 %4040
      %v4042 = vsel %vm2907, %v3665, 0.0
      %4043 = vadd.xlane.f32.xlu0 %v4042
      %v4044 = vpop.xlane.xlu0 %4043
      %v4045 = vsel %vm2907, %v3667, 0.0
      %4046 = vadd.xlane.f32.xlu0 %v4045
      %v4047 = vpop.xlane.xlu0 %4046
      %v4048 = vsel %vm2907, %v3669, 0.0
      %4049 = vadd.xlane.f32.xlu0 %v4048
      %v4050 = vpop.xlane.xlu0 %4049
      %v4051 = vsel %vm2907, %v3671, 0.0
      %4052 = vadd.xlane.f32.xlu0 %v4051
      %v4053 = vpop.xlane.xlu0 %4052
      %v4054 = vsel %vm2907, %v3673, 0.0
      %4055 = vadd.xlane.f32.xlu0 %v4054
      %v4056 = vpop.xlane.xlu0 %4055
      %v4057 = vsel %vm2907, %v3675, 0.0
      %4058 = vadd.xlane.f32.xlu0 %v4057
      %v4059 = vpop.xlane.xlu0 %4058
      %v4060 = vrcp.pop %v3678
      %v4061 = vrcp.pop %v3681
      %v4062 = vrcp.pop %v3684
      %v4063 = vrcp.pop %v3687
      %v4064 = vrcp.pop %v3690
      %v4065 = vrcp.pop %v3693
      %v4066 = vrcp.pop %v3696
      %v4067 = vrcp.pop %v3699
      %v4068 = vrcp.pop %v3702
      %v4069 = vrcp.pop %v3705
      %v4070 = vrcp.pop %v3708
      %v4071 = vrcp.pop %v3711
      %v4072 = vrcp.pop %v3714
      %v4073 = vrcp.pop %v3717
      %v4074 = vrcp.pop %v3720
      %v4075 = vrcp.pop %v3723
      %v4076 = vrcp.pop %v3726
      %v4077 = vrcp.pop %v3729
      %v4078 = vrcp.pop %v3732
      %v4079 = vrcp.pop %v3735
      %v4080 = vrcp.pop %v3738
      %v4081 = vrcp.pop %v3741
      %v4082 = vrcp.pop %v3744
      %v4083 = vrcp.pop %v3747
      %v4084 = vrcp.pop %v3750
      %v4085 = vrcp.pop %v3753
      %v4086 = vrcp.pop %v3756
      %v4087 = vrcp.pop %v3759
      %v4088 = vrcp.pop %v3762
      %v4089 = vrcp.pop %v3765
      %v4090 = vrcp.pop %v3768
      %v4091 = vrcp.pop %v3771
      %v4092 = vrcp.pop %v3774
      %v4093 = vrcp.pop %v3777
      %v4094 = vrcp.pop %v3780
      %v4095 = vrcp.pop %v3783
      %v4096 = vrcp.pop %v3786
      %v4097 = vrcp.pop %v3789
      %v4098 = vrcp.pop %v3792
      %v4099 = vrcp.pop %v3795
      %v4100 = vrcp.pop %v3798
      %v4101 = vrcp.pop %v3801
      %v4102 = vrcp.pop %v3804
      %v4103 = vrcp.pop %v3807
      %v4104 = vrcp.pop %v3810
      %v4105 = vrcp.pop %v3813
      %v4106 = vrcp.pop %v3816
      %v4107 = vrcp.pop %v3819
      %v4108 = vrcp.pop %v3822
      %v4109 = vrcp.pop %v3825
      %v4110 = vrcp.pop %v3828
      %v4111 = vrcp.pop %v3831
      %v4112 = vrcp.pop %v3834
      %v4113 = vrcp.pop %v3837
      %v4114 = vrcp.pop %v3840
      %v4115 = vrcp.pop %v3843
      %v4116 = vrcp.pop %v3846
      %v4117 = vrcp.pop %v3849
      %v4118 = vrcp.pop %v3852
      %v4119 = vrcp.pop %v3855
      %v4120 = vrcp.pop %v3858
      %v4121 = vrcp.pop %v3861
      %v4122 = vrcp.pop %v3864
      %v4123 = vrcp.pop %v3867
      %v4124 = vrcp.pop %v3870
      %v4125 = vrcp.pop %v3873
      %v4126 = vrcp.pop %v3876
      %v4127 = vrcp.pop %v3879
      %v4128 = vrcp.pop %v3882
      %v4129 = vrcp.pop %v3885
      %v4130 = vrcp.pop %v3888
      %v4131 = vrcp.pop %v3891
      %v4132 = vrcp.pop %v3894
      %v4133 = vrcp.pop %v3897
      %v4134 = vrcp.pop %v3900
      %v4135 = vrcp.pop %v3903
      %v4136 = vrcp.pop %v3906
      %v4137 = vrcp.pop %v3909
      %v4138 = vrcp.pop %v3912
      %v4139 = vrcp.pop %v3915
      %v4140 = vrcp.pop %v3918
      %v4141 = vrcp.pop %v3921
      %v4142 = vrcp.pop %v3924
      %v4143 = vrcp.pop %v3927
      %v4144 = vrcp.pop %v3930
      %v4145 = vrcp.pop %v3933
      %v4146 = vrcp.pop %v3936
      %v4147 = vrcp.pop %v3939
      %v4148 = vrcp.pop %v3942
      %v4149 = vrcp.pop %v3945
      %v4150 = vrcp.pop %v3948
      %v4151 = vrcp.pop %v3951
      %v4152 = vrcp.pop %v3954
      %v4153 = vrcp.pop %v3957
      %v4154 = vrcp.pop %v3960
      %v4155 = vrcp.pop %v3963
      %v4156 = vrcp.pop %v3966
      %v4157 = vrcp.pop %v3969
      %v4158 = vrcp.pop %v3972
      %v4159 = vrcp.pop %v3975
      %v4160 = vrcp.pop %v3978
      %v4161 = vrcp.pop %v3981
      %v4162 = vrcp.pop %v3984
      %v4163 = vrcp.pop %v3987
      %v4164 = vrcp.pop %v3990
      %v4165 = vrcp.pop %v3993
      %v4166 = vrcp.pop %v3996
      %v4167 = vrcp.pop %v3999
      %v4168 = vrcp.pop %v4002
      %v4169 = vrcp.pop %v4005
      %v4170 = vrcp.pop %v4008
      %v4171 = vrcp.pop %v4011
      %v4172 = vrcp.pop %v4014
      %v4173 = vrcp.pop %v4017
      %v4174 = vrcp.pop %v4020
      %v4175 = vrcp.pop %v4023
      %v4176 = vrcp.pop %v4026
      %v4177 = vrcp.pop %v4029
      %v4178 = vrcp.pop %v4032
      %v4179 = vrcp.pop %v4035
      %v4180 = vrcp.pop %v4038
      %v4181 = vrcp.pop %v4041
      %v4182 = vrcp.pop %v4044
      %v4183 = vrcp.pop %v4047
      %v4184 = vrcp.pop %v4050
      %v4185 = vrcp.pop %v4053
      %v4186 = vrcp.pop %v4056
      %v4187 = vrcp.pop %v4059
      %v4188 = vmul.f32 %v3421, %v4060
      %v4189 = vmul.f32 %v3423, %v4061
      %v4190 = vmul.f32 %v3425, %v4062
      %v4191 = vmul.f32 %v3427, %v4063
      %v4192 = vmul.f32 %v3429, %v4064
      %v4193 = vmul.f32 %v3431, %v4065
      %v4194 = vmul.f32 %v3433, %v4066
      %v4195 = vmul.f32 %v3435, %v4067
      %v4196 = vmul.f32 %v3437, %v4068
      %v4197 = vmul.f32 %v3439, %v4069
      %v4198 = vmul.f32 %v3441, %v4070
      %v4199 = vmul.f32 %v3443, %v4071
      %v4200 = vmul.f32 %v3445, %v4072
      %v4201 = vmul.f32 %v3447, %v4073
      %v4202 = vmul.f32 %v3449, %v4074
      %v4203 = vmul.f32 %v3451, %v4075
      %v4204 = vmul.f32 %v3453, %v4076
      %v4205 = vmul.f32 %v3455, %v4077
      %v4206 = vmul.f32 %v3457, %v4078
      %v4207 = vmul.f32 %v3459, %v4079
      %v4208 = vmul.f32 %v3461, %v4080
      %v4209 = vmul.f32 %v3463, %v4081
      %v4210 = vmul.f32 %v3465, %v4082
      %v4211 = vmul.f32 %v3467, %v4083
      %v4212 = vmul.f32 %v3469, %v4084
      %v4213 = vmul.f32 %v3471, %v4085
      %v4214 = vmul.f32 %v3473, %v4086
      %v4215 = vmul.f32 %v3475, %v4087
      %v4216 = vmul.f32 %v3477, %v4088
      %v4217 = vmul.f32 %v3479, %v4089
      %v4218 = vmul.f32 %v3481, %v4090
      %v4219 = vmul.f32 %v3483, %v4091
      %v4220 = vmul.f32 %v3485, %v4092
      %v4221 = vmul.f32 %v3487, %v4093
      %v4222 = vmul.f32 %v3489, %v4094
      %v4223 = vmul.f32 %v3491, %v4095
      %v4224 = vmul.f32 %v3493, %v4096
      %v4225 = vmul.f32 %v3495, %v4097
      %v4226 = vmul.f32 %v3497, %v4098
      %v4227 = vmul.f32 %v3499, %v4099
      %v4228 = vmul.f32 %v3501, %v4100
      %v4229 = vmul.f32 %v3503, %v4101
      %v4230 = vmul.f32 %v3505, %v4102
      %v4231 = vmul.f32 %v3507, %v4103
      %v4232 = vmul.f32 %v3509, %v4104
      %v4233 = vmul.f32 %v3511, %v4105
      %v4234 = vmul.f32 %v3513, %v4106
      %v4235 = vmul.f32 %v3515, %v4107
      %v4236 = vmul.f32 %v3517, %v4108
      %v4237 = vmul.f32 %v3519, %v4109
      %v4238 = vmul.f32 %v3521, %v4110
      %v4239 = vmul.f32 %v3523, %v4111
      %v4240 = vmul.f32 %v3525, %v4112
      %v4241 = vmul.f32 %v3527, %v4113
      %v4242 = vmul.f32 %v3529, %v4114
      %v4243 = vmul.f32 %v3531, %v4115
      %v4244 = vmul.f32 %v3533, %v4116
      %v4245 = vmul.f32 %v3535, %v4117
      %v4246 = vmul.f32 %v3537, %v4118
      %v4247 = vmul.f32 %v3539, %v4119
      %v4248 = vmul.f32 %v3541, %v4120
      %v4249 = vmul.f32 %v3543, %v4121
      %v4250 = vmul.f32 %v3545, %v4122
      %v4251 = vmul.f32 %v3547, %v4123
      %v4252 = vmul.f32 %v3549, %v4124
      %v4253 = vmul.f32 %v3551, %v4125
      %v4254 = vmul.f32 %v3553, %v4126
      %v4255 = vmul.f32 %v3555, %v4127
      %v4256 = vmul.f32 %v3557, %v4128
      %v4257 = vmul.f32 %v3559, %v4129
      %v4258 = vmul.f32 %v3561, %v4130
      %v4259 = vmul.f32 %v3563, %v4131
      %v4260 = vmul.f32 %v3565, %v4132
      %v4261 = vmul.f32 %v3567, %v4133
      %v4262 = vmul.f32 %v3569, %v4134
      %v4263 = vmul.f32 %v3571, %v4135
      %v4264 = vmul.f32 %v3573, %v4136
      %v4265 = vmul.f32 %v3575, %v4137
      %v4266 = vmul.f32 %v3577, %v4138
      %v4267 = vmul.f32 %v3579, %v4139
      %v4268 = vmul.f32 %v3581, %v4140
      %v4269 = vmul.f32 %v3583, %v4141
      %v4270 = vmul.f32 %v3585, %v4142
      %v4271 = vmul.f32 %v3587, %v4143
      %v4272 = vmul.f32 %v3589, %v4144
      %v4273 = vmul.f32 %v3591, %v4145
      %v4274 = vmul.f32 %v3593, %v4146
      %v4275 = vmul.f32 %v3595, %v4147
      %v4276 = vmul.f32 %v3597, %v4148
      %v4277 = vmul.f32 %v3599, %v4149
      %v4278 = vmul.f32 %v3601, %v4150
      %v4279 = vmul.f32 %v3603, %v4151
      %v4280 = vmul.f32 %v3605, %v4152
      %v4281 = vmul.f32 %v3607, %v4153
      %v4282 = vmul.f32 %v3609, %v4154
      %v4283 = vmul.f32 %v3611, %v4155
      %v4284 = vmul.f32 %v3613, %v4156
      %v4285 = vmul.f32 %v3615, %v4157
      %v4286 = vmul.f32 %v3617, %v4158
      %v4287 = vmul.f32 %v3619, %v4159
      %v4288 = vmul.f32 %v3621, %v4160
      %v4289 = vmul.f32 %v3623, %v4161
      %v4290 = vmul.f32 %v3625, %v4162
      %v4291 = vmul.f32 %v3627, %v4163
      %v4292 = vmul.f32 %v3629, %v4164
      %v4293 = vmul.f32 %v3631, %v4165
      %v4294 = vmul.f32 %v3633, %v4166
      %v4295 = vmul.f32 %v3635, %v4167
      %v4296 = vmul.f32 %v3637, %v4168
      %v4297 = vmul.f32 %v3639, %v4169
      %v4298 = vmul.f32 %v3641, %v4170
      %v4299 = vmul.f32 %v3643, %v4171
      %v4300 = vmul.f32 %v3645, %v4172
      %v4301 = vmul.f32 %v3647, %v4173
      %v4302 = vmul.f32 %v3649, %v4174
      %v4303 = vmul.f32 %v3651, %v4175
      %v4304 = vmul.f32 %v3653, %v4176
      %v4305 = vmul.f32 %v3655, %v4177
      %v4306 = vmul.f32 %v3657, %v4178
      %v4307 = vmul.f32 %v3659, %v4179
      %v4308 = vmul.f32 %v3661, %v4180
      %v4309 = vmul.f32 %v3663, %v4181
      %v4310 = vmul.f32 %v3665, %v4182
      %v4311 = vmul.f32 %v3667, %v4183
      %v4312 = vmul.f32 %v3669, %v4184
      %v4313 = vmul.f32 %v3671, %v4185
      %v4314 = vmul.f32 %v3673, %v4186
      %v4315 = vmul.f32 %v3675, %v4187
      %v4316 = vpack.c.bf16 %v4189, %v4188
      %v4317 = vpack.c.bf16 %v4191, %v4190
      %v4318 = vpack.c.bf16 %v4193, %v4192
      %v4319 = vpack.c.bf16 %v4195, %v4194
      %v4320 = vpack.c.bf16 %v4197, %v4196
      %v4321 = vpack.c.bf16 %v4199, %v4198
      %v4322 = vpack.c.bf16 %v4201, %v4200
      %v4323 = vpack.c.bf16 %v4203, %v4202
      %v4324 = vpack.c.bf16 %v4205, %v4204
      %v4325 = vpack.c.bf16 %v4207, %v4206
      %v4326 = vpack.c.bf16 %v4209, %v4208
      %v4327 = vpack.c.bf16 %v4211, %v4210
      %v4328 = vpack.c.bf16 %v4213, %v4212
      %v4329 = vpack.c.bf16 %v4215, %v4214
      %v4330 = vpack.c.bf16 %v4217, %v4216
      %v4331 = vpack.c.bf16 %v4219, %v4218
      %v4332 = vpack.c.bf16 %v4221, %v4220
      %v4333 = vpack.c.bf16 %v4223, %v4222
      %v4334 = vpack.c.bf16 %v4225, %v4224
      %v4335 = vpack.c.bf16 %v4227, %v4226
      %v4336 = vpack.c.bf16 %v4229, %v4228
      %v4337 = vpack.c.bf16 %v4231, %v4230
      %v4338 = vpack.c.bf16 %v4233, %v4232
      %v4339 = vpack.c.bf16 %v4235, %v4234
      %v4340 = vpack.c.bf16 %v4237, %v4236
      %v4341 = vpack.c.bf16 %v4239, %v4238
      %v4342 = vpack.c.bf16 %v4241, %v4240
      %v4343 = vpack.c.bf16 %v4243, %v4242
      %v4344 = vpack.c.bf16 %v4245, %v4244
      %v4345 = vpack.c.bf16 %v4247, %v4246
      %v4346 = vpack.c.bf16 %v4249, %v4248
      %v4347 = vpack.c.bf16 %v4251, %v4250
      %v4348 = vpack.c.bf16 %v4253, %v4252
      %v4349 = vpack.c.bf16 %v4255, %v4254
      %v4350 = vpack.c.bf16 %v4257, %v4256
      %v4351 = vpack.c.bf16 %v4259, %v4258
      %v4352 = vpack.c.bf16 %v4261, %v4260
      %v4353 = vpack.c.bf16 %v4263, %v4262
      %v4354 = vpack.c.bf16 %v4265, %v4264
      %v4355 = vpack.c.bf16 %v4267, %v4266
      %v4356 = vpack.c.bf16 %v4269, %v4268
      %v4357 = vpack.c.bf16 %v4271, %v4270
      %v4358 = vpack.c.bf16 %v4273, %v4272
      %v4359 = vpack.c.bf16 %v4275, %v4274
      %v4360 = vpack.c.bf16 %v4277, %v4276
      %v4361 = vpack.c.bf16 %v4279, %v4278
      %v4362 = vpack.c.bf16 %v4281, %v4280
      %v4363 = vpack.c.bf16 %v4283, %v4282
      %v4364 = vpack.c.bf16 %v4285, %v4284
      %v4365 = vpack.c.bf16 %v4287, %v4286
      %v4366 = vpack.c.bf16 %v4289, %v4288
      %v4367 = vpack.c.bf16 %v4291, %v4290
      %v4368 = vpack.c.bf16 %v4293, %v4292
      %v4369 = vpack.c.bf16 %v4295, %v4294
      %v4370 = vpack.c.bf16 %v4297, %v4296
      %v4371 = vpack.c.bf16 %v4299, %v4298
      %v4372 = vpack.c.bf16 %v4301, %v4300
      %v4373 = vpack.c.bf16 %v4303, %v4302
      %v4374 = vpack.c.bf16 %v4305, %v4304
      %v4375 = vpack.c.bf16 %v4307, %v4306
      %v4376 = vpack.c.bf16 %v4309, %v4308
      %v4377 = vpack.c.bf16 %v4311, %v4310
      %v4378 = vpack.c.bf16 %v4313, %v4312
      %v4379 = vpack.c.bf16 %v4315, %v4314
      %v4381 = vsel %vm2907, %v4316, 0
      %v4384 = vsel %vm2907, %v4317, 0
      %v4387 = vsel %vm2907, %v4318, 0
      %v4390 = vsel %vm2907, %v4319, 0
      %v4393 = vsel %vm2907, %v1106, 0
      %v4396 = vsel %vm2907, %v1107, 0
      %4398 = vmatprep.subr.bf16.mxu0 0
      %4399 = vmatpush1.bf16.xpose.msra.mxu0 %v4393
      %4400 = vmatprep.subr.bf16.mxu0 0
      %4401 = vmatpush1.bf16.xpose.msra.mxu0 %v4396
      %4402 = vmatprep.subr.bf16.mxu0 0
      %4403 = vmatpush1.bf16.xpose.msra.mxu0 0
      %4404 = vmatprep.subr.bf16.mxu0 0
      %4405 = vmatpush1.bf16.xpose.msra.mxu0 0
      %4406 = vmatprep.subr.bf16.mxu0 0
      %4407 = vmatpush1.bf16.xpose.msra.mxu0 0
      %4408 = vmatprep.subr.bf16.mxu0 0
      %4409 = vmatpush1.bf16.xpose.msra.mxu0 0
      %4410 = vmatprep.subr.bf16.mxu0 0
      %4411 = vmatpush1.bf16.xpose.msra.mxu0 0
      %4412 = vmatprep.subr.bf16.mxu0 0
      %4413 = vmatpush1.bf16.xpose.msra.mxu0 0
      %4414 = vmatprep.subr.bf16.mxu0 0
      %4415 = vmatpush1.bf16.xpose.msra.mxu0 0
      %4416 = vmatprep.subr.bf16.mxu0 0
      %4417 = vmatpush1.bf16.xpose.msra.mxu0 0
      %4418 = vmatprep.subr.bf16.mxu0 0
      %4419 = vmatpush1.bf16.xpose.msra.mxu0 0
      %4420 = vmatprep.subr.bf16.mxu0 0
      %4421 = vmatpush1.bf16.xpose.msra.mxu0 0
      %4422 = vmatprep.subr.bf16.mxu0 0
      %4423 = vmatpush1.bf16.xpose.msra.mxu0 0
      %4424 = vmatprep.subr.bf16.mxu0 0
      %4425 = vmatpush1.bf16.xpose.msra.mxu0 0
      %4426 = vmatprep.subr.bf16.mxu0 0
      %4427 = vmatpush1.bf16.xpose.msra.mxu0 0
      %4428 = vmatprep.subr.bf16.mxu0 0
      %4429 = vmatpush1.bf16.xpose.msra.mxu0 0
      %4430 = vmatprep.mubr.bf16.mxu0 0
      %4431 = vmatmul.mubr.bf16.gmra.mrb[0].mxu0 %v4381
      %v4432 = vpop.f32.mrb[0].mxu0
      %v4433 = vadd.f32 0.0, %v4432
      %v4434 = vpop.f32.mrb[0].mxu0
      %v4435 = vpop.f32.mrb[0].mxu0
      %v4436 = vadd.f32 0.0, %v4435
      %v4437 = vpop.f32.mrb[0].mxu0
      %4438 = vmatprep.mubr.bf16.mxu0 0
      %4439 = vmatmul.mubr.bf16.gmra.mrb[0].mxu0 %v4384
      %v4440 = vpop.f32.mrb[0].mxu0
      %v4441 = vadd.f32 0.0, %v4440
      %v4442 = vpop.f32.mrb[0].mxu0
      %v4443 = vpop.f32.mrb[0].mxu0
      %v4444 = vadd.f32 0.0, %v4443
      %v4445 = vpop.f32.mrb[0].mxu0
      %4446 = vmatprep.mubr.bf16.mxu0 0
      %4447 = vmatmul.mubr.bf16.gmra.mrb[0].mxu0 %v4387
      %v4448 = vpop.f32.mrb[0].mxu0
      %v4449 = vadd.f32 0.0, %v4448
      %v4450 = vpop.f32.mrb[0].mxu0
      %v4451 = vpop.f32.mrb[0].mxu0
      %v4452 = vadd.f32 0.0, %v4451
      %v4453 = vpop.f32.mrb[0].mxu0
      %4454 = vmatprep.mubr.bf16.mxu0 0
      %4455 = vmatmul.mubr.bf16.gmra.mrb[0].mxu0 %v4390
      %v4456 = vpop.f32.mrb[0].mxu0
      %v4457 = vadd.f32 0.0, %v4456
      %v4458 = vpop.f32.mrb[0].mxu0
      %v4459 = vpop.f32.mrb[0].mxu0
      %v4460 = vadd.f32 0.0, %v4459
      %v4461 = vpop.f32.mrb[0].mxu0
      %4462 = vdwg.mxu0
      %v4464 = vsel %vm2907, %v4320, 0
      %v4467 = vsel %vm2907, %v4321, 0
      %v4470 = vsel %vm2907, %v4322, 0
      %v4473 = vsel %vm2907, %v4323, 0
      %v4476 = vsel %vm2907, %v1212, 0
      %v4479 = vsel %vm2907, %v1213, 0
      %4481 = vmatprep.subr.bf16.mxu0 0
      %4482 = vmatpush1.bf16.xpose.msra.mxu0 %v4476
      %4483 = vmatprep.subr.bf16.mxu0 0
      %4484 = vmatpush1.bf16.xpose.msra.mxu0 %v4479
      %4485 = vmatprep.subr.bf16.mxu0 0
      %4486 = vmatpush1.bf16.xpose.msra.mxu0 0
      %4487 = vmatprep.subr.bf16.mxu0 0
      %4488 = vmatpush1.bf16.xpose.msra.mxu0 0
      %4489 = vmatprep.subr.bf16.mxu0 0
      %4490 = vmatpush1.bf16.xpose.msra.mxu0 0
      %4491 = vmatprep.subr.bf16.mxu0 0
      %4492 = vmatpush1.bf16.xpose.msra.mxu0 0
      %4493 = vmatprep.subr.bf16.mxu0 0
      %4494 = vmatpush1.bf16.xpose.msra.mxu0 0
      %4495 = vmatprep.subr.bf16.mxu0 0
      %4496 = vmatpush1.bf16.xpose.msra.mxu0 0
      %4497 = vmatprep.subr.bf16.mxu0 0
      %4498 = vmatpush1.bf16.xpose.msra.mxu0 0
      %4499 = vmatprep.subr.bf16.mxu0 0
      %4500 = vmatpush1.bf16.xpose.msra.mxu0 0
      %4501 = vmatprep.subr.bf16.mxu0 0
      %4502 = vmatpush1.bf16.xpose.msra.mxu0 0
      %4503 = vmatprep.subr.bf16.mxu0 0
      %4504 = vmatpush1.bf16.xpose.msra.mxu0 0
      %4505 = vmatprep.subr.bf16.mxu0 0
      %4506 = vmatpush1.bf16.xpose.msra.mxu0 0
      %4507 = vmatprep.subr.bf16.mxu0 0
      %4508 = vmatpush1.bf16.xpose.msra.mxu0 0
      %4509 = vmatprep.subr.bf16.mxu0 0
      %4510 = vmatpush1.bf16.xpose.msra.mxu0 0
      %4511 = vmatprep.subr.bf16.mxu0 0
      %4512 = vmatpush1.bf16.xpose.msra.mxu0 0
      %4513 = vmatprep.mubr.bf16.mxu0 0
      %4514 = vmatmul.mubr.bf16.gmra.mrb[0].mxu0 %v4464
      %v4515 = vpop.f32.mrb[0].mxu0
      %v4516 = vadd.f32 0.0, %v4515
      %v4517 = vpop.f32.mrb[0].mxu0
      %v4518 = vpop.f32.mrb[0].mxu0
      %v4519 = vadd.f32 0.0, %v4518
      %v4520 = vpop.f32.mrb[0].mxu0
      %4521 = vmatprep.mubr.bf16.mxu0 0
      %4522 = vmatmul.mubr.bf16.gmra.mrb[0].mxu0 %v4467
      %v4523 = vpop.f32.mrb[0].mxu0
      %v4524 = vadd.f32 0.0, %v4523
      %v4525 = vpop.f32.mrb[0].mxu0
      %v4526 = vpop.f32.mrb[0].mxu0
      %v4527 = vadd.f32 0.0, %v4526
      %v4528 = vpop.f32.mrb[0].mxu0
      %4529 = vmatprep.mubr.bf16.mxu0 0
      %4530 = vmatmul.mubr.bf16.gmra.mrb[0].mxu0 %v4470
      %v4531 = vpop.f32.mrb[0].mxu0
      %v4532 = vadd.f32 0.0, %v4531
      %v4533 = vpop.f32.mrb[0].mxu0
      %v4534 = vpop.f32.mrb[0].mxu0
      %v4535 = vadd.f32 0.0, %v4534
      %v4536 = vpop.f32.mrb[0].mxu0
      %4537 = vmatprep.mubr.bf16.mxu0 0
      %4538 = vmatmul.mubr.bf16.gmra.mrb[0].mxu0 %v4473
      %v4539 = vpop.f32.mrb[0].mxu0
      %v4540 = vadd.f32 0.0, %v4539
      %v4541 = vpop.f32.mrb[0].mxu0
      %v4542 = vpop.f32.mrb[0].mxu0
      %v4543 = vadd.f32 0.0, %v4542
      %v4544 = vpop.f32.mrb[0].mxu0
      %4545 = vdwg.mxu0
      %v4547 = vsel %vm2907, %v4324, 0
      %v4550 = vsel %vm2907, %v4325, 0
      %v4553 = vsel %vm2907, %v4326, 0
      %v4556 = vsel %vm2907, %v4327, 0
      %v4559 = vsel %vm2907, %v1317, 0
      %v4562 = vsel %vm2907, %v1318, 0
      %4564 = vmatprep.subr.bf16.mxu0 0
      %4565 = vmatpush1.bf16.xpose.msra.mxu0 %v4559
      %4566 = vmatprep.subr.bf16.mxu0 0
      %4567 = vmatpush1.bf16.xpose.msra.mxu0 %v4562
      %4568 = vmatprep.subr.bf16.mxu0 0
      %4569 = vmatpush1.bf16.xpose.msra.mxu0 0
      %4570 = vmatprep.subr.bf16.mxu0 0
      %4571 = vmatpush1.bf16.xpose.msra.mxu0 0
      %4572 = vmatprep.subr.bf16.mxu0 0
      %4573 = vmatpush1.bf16.xpose.msra.mxu0 0
      %4574 = vmatprep.subr.bf16.mxu0 0
      %4575 = vmatpush1.bf16.xpose.msra.mxu0 0
      %4576 = vmatprep.subr.bf16.mxu0 0
      %4577 = vmatpush1.bf16.xpose.msra.mxu0 0
      %4578 = vmatprep.subr.bf16.mxu0 0
      %4579 = vmatpush1.bf16.xpose.msra.mxu0 0
      %4580 = vmatprep.subr.bf16.mxu0 0
      %4581 = vmatpush1.bf16.xpose.msra.mxu0 0
      %4582 = vmatprep.subr.bf16.mxu0 0
      %4583 = vmatpush1.bf16.xpose.msra.mxu0 0
      %4584 = vmatprep.subr.bf16.mxu0 0
      %4585 = vmatpush1.bf16.xpose.msra.mxu0 0
      %4586 = vmatprep.subr.bf16.mxu0 0
      %4587 = vmatpush1.bf16.xpose.msra.mxu0 0
      %4588 = vmatprep.subr.bf16.mxu0 0
      %4589 = vmatpush1.bf16.xpose.msra.mxu0 0
      %4590 = vmatprep.subr.bf16.mxu0 0
      %4591 = vmatpush1.bf16.xpose.msra.mxu0 0
      %4592 = vmatprep.subr.bf16.mxu0 0
      %4593 = vmatpush1.bf16.xpose.msra.mxu0 0
      %4594 = vmatprep.subr.bf16.mxu0 0
      %4595 = vmatpush1.bf16.xpose.msra.mxu0 0
      %4596 = vmatprep.mubr.bf16.mxu0 0
      %4597 = vmatmul.mubr.bf16.gmra.mrb[0].mxu0 %v4547
      %v4598 = vpop.f32.mrb[0].mxu0
      %v4599 = vadd.f32 0.0, %v4598
      %v4600 = vpop.f32.mrb[0].mxu0
      %v4601 = vpop.f32.mrb[0].mxu0
      %v4602 = vadd.f32 0.0, %v4601
      %v4603 = vpop.f32.mrb[0].mxu0
      %4604 = vmatprep.mubr.bf16.mxu0 0
      %4605 = vmatmul.mubr.bf16.gmra.mrb[0].mxu0 %v4550
      %v4606 = vpop.f32.mrb[0].mxu0
      %v4607 = vadd.f32 0.0, %v4606
      %v4608 = vpop.f32.mrb[0].mxu0
      %v4609 = vpop.f32.mrb[0].mxu0
      %v4610 = vadd.f32 0.0, %v4609
      %v4611 = vpop.f32.mrb[0].mxu0
      %4612 = vmatprep.mubr.bf16.mxu0 0
      %4613 = vmatmul.mubr.bf16.gmra.mrb[0].mxu0 %v4553
      %v4614 = vpop.f32.mrb[0].mxu0
      %v4615 = vadd.f32 0.0, %v4614
      %v4616 = vpop.f32.mrb[0].mxu0
      %v4617 = vpop.f32.mrb[0].mxu0
      %v4618 = vadd.f32 0.0, %v4617
      %v4619 = vpop.f32.mrb[0].mxu0
      %4620 = vmatprep.mubr.bf16.mxu0 0
      %4621 = vmatmul.mubr.bf16.gmra.mrb[0].mxu0 %v4556
      %v4622 = vpop.f32.mrb[0].mxu0
      %v4623 = vadd.f32 0.0, %v4622
      %v4624 = vpop.f32.mrb[0].mxu0
      %v4625 = vpop.f32.mrb[0].mxu0
      %v4626 = vadd.f32 0.0, %v4625
      %v4627 = vpop.f32.mrb[0].mxu0
      %4628 = vdwg.mxu0
      %v4630 = vsel %vm2907, %v4328, 0
      %v4633 = vsel %vm2907, %v4329, 0
      %v4636 = vsel %vm2907, %v4330, 0
      %v4639 = vsel %vm2907, %v4331, 0
      %v4642 = vsel %vm2907, %v1422, 0
      %v4645 = vsel %vm2907, %v1423, 0
      %4647 = vmatprep.subr.bf16.mxu0 0
      %4648 = vmatpush1.bf16.xpose.msra.mxu0 %v4642
      %4649 = vmatprep.subr.bf16.mxu0 0
      %4650 = vmatpush1.bf16.xpose.msra.mxu0 %v4645
      %4651 = vmatprep.subr.bf16.mxu0 0
      %4652 = vmatpush1.bf16.xpose.msra.mxu0 0
      %4653 = vmatprep.subr.bf16.mxu0 0
      %4654 = vmatpush1.bf16.xpose.msra.mxu0 0
      %4655 = vmatprep.subr.bf16.mxu0 0
      %4656 = vmatpush1.bf16.xpose.msra.mxu0 0
      %4657 = vmatprep.subr.bf16.mxu0 0
      %4658 = vmatpush1.bf16.xpose.msra.mxu0 0
      %4659 = vmatprep.subr.bf16.mxu0 0
      %4660 = vmatpush1.bf16.xpose.msra.mxu0 0
      %4661 = vmatprep.subr.bf16.mxu0 0
      %4662 = vmatpush1.bf16.xpose.msra.mxu0 0
      %4663 = vmatprep.subr.bf16.mxu0 0
      %4664 = vmatpush1.bf16.xpose.msra.mxu0 0
      %4665 = vmatprep.subr.bf16.mxu0 0
      %4666 = vmatpush1.bf16.xpose.msra.mxu0 0
      %4667 = vmatprep.subr.bf16.mxu0 0
      %4668 = vmatpush1.bf16.xpose.msra.mxu0 0
      %4669 = vmatprep.subr.bf16.mxu0 0
      %4670 = vmatpush1.bf16.xpose.msra.mxu0 0
      %4671 = vmatprep.subr.bf16.mxu0 0
      %4672 = vmatpush1.bf16.xpose.msra.mxu0 0
      %4673 = vmatprep.subr.bf16.mxu0 0
      %4674 = vmatpush1.bf16.xpose.msra.mxu0 0
      %4675 = vmatprep.subr.bf16.mxu0 0
      %4676 = vmatpush1.bf16.xpose.msra.mxu0 0
      %4677 = vmatprep.subr.bf16.mxu0 0
      %4678 = vmatpush1.bf16.xpose.msra.mxu0 0
      %4679 = vmatprep.mubr.bf16.mxu0 0
      %4680 = vmatmul.mubr.bf16.gmra.mrb[0].mxu0 %v4630
      %v4681 = vpop.f32.mrb[0].mxu0
      %v4682 = vadd.f32 0.0, %v4681
      %v4683 = vpop.f32.mrb[0].mxu0
      %v4684 = vpop.f32.mrb[0].mxu0
      %v4685 = vadd.f32 0.0, %v4684
      %v4686 = vpop.f32.mrb[0].mxu0
      %4687 = vmatprep.mubr.bf16.mxu0 0
      %4688 = vmatmul.mubr.bf16.gmra.mrb[0].mxu0 %v4633
      %v4689 = vpop.f32.mrb[0].mxu0
      %v4690 = vadd.f32 0.0, %v4689
      %v4691 = vpop.f32.mrb[0].mxu0
      %v4692 = vpop.f32.mrb[0].mxu0
      %v4693 = vadd.f32 0.0, %v4692
      %v4694 = vpop.f32.mrb[0].mxu0
      %4695 = vmatprep.mubr.bf16.mxu0 0
      %4696 = vmatmul.mubr.bf16.gmra.mrb[0].mxu0 %v4636
      %v4697 = vpop.f32.mrb[0].mxu0
      %v4698 = vadd.f32 0.0, %v4697
      %v4699 = vpop.f32.mrb[0].mxu0
      %v4700 = vpop.f32.mrb[0].mxu0
      %v4701 = vadd.f32 0.0, %v4700
      %v4702 = vpop.f32.mrb[0].mxu0
      %4703 = vmatprep.mubr.bf16.mxu0 0
      %4704 = vmatmul.mubr.bf16.gmra.mrb[0].mxu0 %v4639
      %v4705 = vpop.f32.mrb[0].mxu0
      %v4706 = vadd.f32 0.0, %v4705
      %v4707 = vpop.f32.mrb[0].mxu0
      %v4708 = vpop.f32.mrb[0].mxu0
      %v4709 = vadd.f32 0.0, %v4708
      %v4710 = vpop.f32.mrb[0].mxu0
      %4711 = vdwg.mxu0
      %v4713 = vsel %vm2907, %v4332, 0
      %v4716 = vsel %vm2907, %v4333, 0
      %v4719 = vsel %vm2907, %v4334, 0
      %v4722 = vsel %vm2907, %v4335, 0
      %v4725 = vsel %vm2907, %v1527, 0
      %v4728 = vsel %vm2907, %v1528, 0
      %4730 = vmatprep.subr.bf16.mxu0 0
      %4731 = vmatpush1.bf16.xpose.msra.mxu0 %v4725
      %4732 = vmatprep.subr.bf16.mxu0 0
      %4733 = vmatpush1.bf16.xpose.msra.mxu0 %v4728
      %4734 = vmatprep.subr.bf16.mxu0 0
      %4735 = vmatpush1.bf16.xpose.msra.mxu0 0
      %4736 = vmatprep.subr.bf16.mxu0 0
      %4737 = vmatpush1.bf16.xpose.msra.mxu0 0
      %4738 = vmatprep.subr.bf16.mxu0 0
      %4739 = vmatpush1.bf16.xpose.msra.mxu0 0
      %4740 = vmatprep.subr.bf16.mxu0 0
      %4741 = vmatpush1.bf16.xpose.msra.mxu0 0
      %4742 = vmatprep.subr.bf16.mxu0 0
      %4743 = vmatpush1.bf16.xpose.msra.mxu0 0
      %4744 = vmatprep.subr.bf16.mxu0 0
      %4745 = vmatpush1.bf16.xpose.msra.mxu0 0
      %4746 = vmatprep.subr.bf16.mxu0 0
      %4747 = vmatpush1.bf16.xpose.msra.mxu0 0
      %4748 = vmatprep.subr.bf16.mxu0 0
      %4749 = vmatpush1.bf16.xpose.msra.mxu0 0
      %4750 = vmatprep.subr.bf16.mxu0 0
      %4751 = vmatpush1.bf16.xpose.msra.mxu0 0
      %4752 = vmatprep.subr.bf16.mxu0 0
      %4753 = vmatpush1.bf16.xpose.msra.mxu0 0
      %4754 = vmatprep.subr.bf16.mxu0 0
      %4755 = vmatpush1.bf16.xpose.msra.mxu0 0
      %4756 = vmatprep.subr.bf16.mxu0 0
      %4757 = vmatpush1.bf16.xpose.msra.mxu0 0
      %4758 = vmatprep.subr.bf16.mxu0 0
      %4759 = vmatpush1.bf16.xpose.msra.mxu0 0
      %4760 = vmatprep.subr.bf16.mxu0 0
      %4761 = vmatpush1.bf16.xpose.msra.mxu0 0
      %4762 = vmatprep.mubr.bf16.mxu0 0
      %4763 = vmatmul.mubr.bf16.gmra.mrb[0].mxu0 %v4713
      %v4764 = vpop.f32.mrb[0].mxu0
      %v4765 = vadd.f32 0.0, %v4764
      %v4766 = vpop.f32.mrb[0].mxu0
      %v4767 = vpop.f32.mrb[0].mxu0
      %v4768 = vadd.f32 0.0, %v4767
      %v4769 = vpop.f32.mrb[0].mxu0
      %4770 = vmatprep.mubr.bf16.mxu0 0
      %4771 = vmatmul.mubr.bf16.gmra.mrb[0].mxu0 %v4716
      %v4772 = vpop.f32.mrb[0].mxu0
      %v4773 = vadd.f32 0.0, %v4772
      %v4774 = vpop.f32.mrb[0].mxu0
      %v4775 = vpop.f32.mrb[0].mxu0
      %v4776 = vadd.f32 0.0, %v4775
      %v4777 = vpop.f32.mrb[0].mxu0
      %4778 = vmatprep.mubr.bf16.mxu0 0
      %4779 = vmatmul.mubr.bf16.gmra.mrb[0].mxu0 %v4719
      %v4780 = vpop.f32.mrb[0].mxu0
      %v4781 = vadd.f32 0.0, %v4780
      %v4782 = vpop.f32.mrb[0].mxu0
      %v4783 = vpop.f32.mrb[0].mxu0
      %v4784 = vadd.f32 0.0, %v4783
      %v4785 = vpop.f32.mrb[0].mxu0
      %4786 = vmatprep.mubr.bf16.mxu0 0
      %4787 = vmatmul.mubr.bf16.gmra.mrb[0].mxu0 %v4722
      %v4788 = vpop.f32.mrb[0].mxu0
      %v4789 = vadd.f32 0.0, %v4788
      %v4790 = vpop.f32.mrb[0].mxu0
      %v4791 = vpop.f32.mrb[0].mxu0
      %v4792 = vadd.f32 0.0, %v4791
      %v4793 = vpop.f32.mrb[0].mxu0
      %4794 = vdwg.mxu0
      %v4796 = vsel %vm2907, %v4336, 0
      %v4799 = vsel %vm2907, %v4337, 0
      %v4802 = vsel %vm2907, %v4338, 0
      %v4805 = vsel %vm2907, %v4339, 0
      %v4808 = vsel %vm2907, %v1632, 0
      %v4811 = vsel %vm2907, %v1633, 0
      %4813 = vmatprep.subr.bf16.mxu0 0
      %4814 = vmatpush1.bf16.xpose.msra.mxu0 %v4808
      %4815 = vmatprep.subr.bf16.mxu0 0
      %4816 = vmatpush1.bf16.xpose.msra.mxu0 %v4811
      %4817 = vmatprep.subr.bf16.mxu0 0
      %4818 = vmatpush1.bf16.xpose.msra.mxu0 0
      %4819 = vmatprep.subr.bf16.mxu0 0
      %4820 = vmatpush1.bf16.xpose.msra.mxu0 0
      %4821 = vmatprep.subr.bf16.mxu0 0
      %4822 = vmatpush1.bf16.xpose.msra.mxu0 0
      %4823 = vmatprep.subr.bf16.mxu0 0
      %4824 = vmatpush1.bf16.xpose.msra.mxu0 0
      %4825 = vmatprep.subr.bf16.mxu0 0
      %4826 = vmatpush1.bf16.xpose.msra.mxu0 0
      %4827 = vmatprep.subr.bf16.mxu0 0
      %4828 = vmatpush1.bf16.xpose.msra.mxu0 0
      %4829 = vmatprep.subr.bf16.mxu0 0
      %4830 = vmatpush1.bf16.xpose.msra.mxu0 0
      %4831 = vmatprep.subr.bf16.mxu0 0
      %4832 = vmatpush1.bf16.xpose.msra.mxu0 0
      %4833 = vmatprep.subr.bf16.mxu0 0
      %4834 = vmatpush1.bf16.xpose.msra.mxu0 0
      %4835 = vmatprep.subr.bf16.mxu0 0
      %4836 = vmatpush1.bf16.xpose.msra.mxu0 0
      %4837 = vmatprep.subr.bf16.mxu0 0
      %4838 = vmatpush1.bf16.xpose.msra.mxu0 0
      %4839 = vmatprep.subr.bf16.mxu0 0
      %4840 = vmatpush1.bf16.xpose.msra.mxu0 0
      %4841 = vmatprep.subr.bf16.mxu0 0
      %4842 = vmatpush1.bf16.xpose.msra.mxu0 0
      %4843 = vmatprep.subr.bf16.mxu0 0
      %4844 = vmatpush1.bf16.xpose.msra.mxu0 0
      %4845 = vmatprep.mubr.bf16.mxu0 0
      %4846 = vmatmul.mubr.bf16.gmra.mrb[0].mxu0 %v4796
      %v4847 = vpop.f32.mrb[0].mxu0
      %v4848 = vadd.f32 0.0, %v4847
      %v4849 = vpop.f32.mrb[0].mxu0
      %v4850 = vpop.f32.mrb[0].mxu0
      %v4851 = vadd.f32 0.0, %v4850
      %v4852 = vpop.f32.mrb[0].mxu0
      %4853 = vmatprep.mubr.bf16.mxu0 0
      %4854 = vmatmul.mubr.bf16.gmra.mrb[0].mxu0 %v4799
      %v4855 = vpop.f32.mrb[0].mxu0
      %v4856 = vadd.f32 0.0, %v4855
      %v4857 = vpop.f32.mrb[0].mxu0
      %v4858 = vpop.f32.mrb[0].mxu0
      %v4859 = vadd.f32 0.0, %v4858
      %v4860 = vpop.f32.mrb[0].mxu0
      %4861 = vmatprep.mubr.bf16.mxu0 0
      %4862 = vmatmul.mubr.bf16.gmra.mrb[0].mxu0 %v4802
      %v4863 = vpop.f32.mrb[0].mxu0
      %v4864 = vadd.f32 0.0, %v4863
      %v4865 = vpop.f32.mrb[0].mxu0
      %v4866 = vpop.f32.mrb[0].mxu0
      %v4867 = vadd.f32 0.0, %v4866
      %v4868 = vpop.f32.mrb[0].mxu0
      %4869 = vmatprep.mubr.bf16.mxu0 0
      %4870 = vmatmul.mubr.bf16.gmra.mrb[0].mxu0 %v4805
      %v4871 = vpop.f32.mrb[0].mxu0
      %v4872 = vadd.f32 0.0, %v4871
      %v4873 = vpop.f32.mrb[0].mxu0
      %v4874 = vpop.f32.mrb[0].mxu0
      %v4875 = vadd.f32 0.0, %v4874
      %v4876 = vpop.f32.mrb[0].mxu0
      %4877 = vdwg.mxu0
      %v4879 = vsel %vm2907, %v4340, 0
      %v4882 = vsel %vm2907, %v4341, 0
      %v4885 = vsel %vm2907, %v4342, 0
      %v4888 = vsel %vm2907, %v4343, 0
      %v4891 = vsel %vm2907, %v1737, 0
      %v4894 = vsel %vm2907, %v1738, 0
      %4896 = vmatprep.subr.bf16.mxu0 0
      %4897 = vmatpush1.bf16.xpose.msra.mxu0 %v4891
      %4898 = vmatprep.subr.bf16.mxu0 0
      %4899 = vmatpush1.bf16.xpose.msra.mxu0 %v4894
      %4900 = vmatprep.subr.bf16.mxu0 0
      %4901 = vmatpush1.bf16.xpose.msra.mxu0 0
      %4902 = vmatprep.subr.bf16.mxu0 0
      %4903 = vmatpush1.bf16.xpose.msra.mxu0 0
      %4904 = vmatprep.subr.bf16.mxu0 0
      %4905 = vmatpush1.bf16.xpose.msra.mxu0 0
      %4906 = vmatprep.subr.bf16.mxu0 0
      %4907 = vmatpush1.bf16.xpose.msra.mxu0 0
      %4908 = vmatprep.subr.bf16.mxu0 0
      %4909 = vmatpush1.bf16.xpose.msra.mxu0 0
      %4910 = vmatprep.subr.bf16.mxu0 0
      %4911 = vmatpush1.bf16.xpose.msra.mxu0 0
      %4912 = vmatprep.subr.bf16.mxu0 0
      %4913 = vmatpush1.bf16.xpose.msra.mxu0 0
      %4914 = vmatprep.subr.bf16.mxu0 0
      %4915 = vmatpush1.bf16.xpose.msra.mxu0 0
      %4916 = vmatprep.subr.bf16.mxu0 0
      %4917 = vmatpush1.bf16.xpose.msra.mxu0 0
      %4918 = vmatprep.subr.bf16.mxu0 0
      %4919 = vmatpush1.bf16.xpose.msra.mxu0 0
      %4920 = vmatprep.subr.bf16.mxu0 0
      %4921 = vmatpush1.bf16.xpose.msra.mxu0 0
      %4922 = vmatprep.subr.bf16.mxu0 0
      %4923 = vmatpush1.bf16.xpose.msra.mxu0 0
      %4924 = vmatprep.subr.bf16.mxu0 0
      %4925 = vmatpush1.bf16.xpose.msra.mxu0 0
      %4926 = vmatprep.subr.bf16.mxu0 0
      %4927 = vmatpush1.bf16.xpose.msra.mxu0 0
      %4928 = vmatprep.mubr.bf16.mxu0 0
      %4929 = vmatmul.mubr.bf16.gmra.mrb[0].mxu0 %v4879
      %v4930 = vpop.f32.mrb[0].mxu0
      %v4931 = vadd.f32 0.0, %v4930
      %v4932 = vpop.f32.mrb[0].mxu0
      %v4933 = vpop.f32.mrb[0].mxu0
      %v4934 = vadd.f32 0.0, %v4933
      %v4935 = vpop.f32.mrb[0].mxu0
      %4936 = vmatprep.mubr.bf16.mxu0 0
      %4937 = vmatmul.mubr.bf16.gmra.mrb[0].mxu0 %v4882
      %v4938 = vpop.f32.mrb[0].mxu0
      %v4939 = vadd.f32 0.0, %v4938
      %v4940 = vpop.f32.mrb[0].mxu0
      %v4941 = vpop.f32.mrb[0].mxu0
      %v4942 = vadd.f32 0.0, %v4941
      %v4943 = vpop.f32.mrb[0].mxu0
      %4944 = vmatprep.mubr.bf16.mxu0 0
      %4945 = vmatmul.mubr.bf16.gmra.mrb[0].mxu0 %v4885
      %v4946 = vpop.f32.mrb[0].mxu0
      %v4947 = vadd.f32 0.0, %v4946
      %v4948 = vpop.f32.mrb[0].mxu0
      %v4949 = vpop.f32.mrb[0].mxu0
      %v4950 = vadd.f32 0.0, %v4949
      %v4951 = vpop.f32.mrb[0].mxu0
      %4952 = vmatprep.mubr.bf16.mxu0 0
      %4953 = vmatmul.mubr.bf16.gmra.mrb[0].mxu0 %v4888
      %v4954 = vpop.f32.mrb[0].mxu0
      %v4955 = vadd.f32 0.0, %v4954
      %v4956 = vpop.f32.mrb[0].mxu0
      %v4957 = vpop.f32.mrb[0].mxu0
      %v4958 = vadd.f32 0.0, %v4957
      %v4959 = vpop.f32.mrb[0].mxu0
      %4960 = vdwg.mxu0
      %v4962 = vsel %vm2907, %v4344, 0
      %v4965 = vsel %vm2907, %v4345, 0
      %v4968 = vsel %vm2907, %v4346, 0
      %v4971 = vsel %vm2907, %v4347, 0
      %v4974 = vsel %vm2907, %v1842, 0
      %v4977 = vsel %vm2907, %v1843, 0
      %4979 = vmatprep.subr.bf16.mxu0 0
      %4980 = vmatpush1.bf16.xpose.msra.mxu0 %v4974
      %4981 = vmatprep.subr.bf16.mxu0 0
      %4982 = vmatpush1.bf16.xpose.msra.mxu0 %v4977
      %4983 = vmatprep.subr.bf16.mxu0 0
      %4984 = vmatpush1.bf16.xpose.msra.mxu0 0
      %4985 = vmatprep.subr.bf16.mxu0 0
      %4986 = vmatpush1.bf16.xpose.msra.mxu0 0
      %4987 = vmatprep.subr.bf16.mxu0 0
      %4988 = vmatpush1.bf16.xpose.msra.mxu0 0
      %4989 = vmatprep.subr.bf16.mxu0 0
      %4990 = vmatpush1.bf16.xpose.msra.mxu0 0
      %4991 = vmatprep.subr.bf16.mxu0 0
      %4992 = vmatpush1.bf16.xpose.msra.mxu0 0
      %4993 = vmatprep.subr.bf16.mxu0 0
      %4994 = vmatpush1.bf16.xpose.msra.mxu0 0
      %4995 = vmatprep.subr.bf16.mxu0 0
      %4996 = vmatpush1.bf16.xpose.msra.mxu0 0
      %4997 = vmatprep.subr.bf16.mxu0 0
      %4998 = vmatpush1.bf16.xpose.msra.mxu0 0
      %4999 = vmatprep.subr.bf16.mxu0 0
      %5000 = vmatpush1.bf16.xpose.msra.mxu0 0
      %5001 = vmatprep.subr.bf16.mxu0 0
      %5002 = vmatpush1.bf16.xpose.msra.mxu0 0
      %5003 = vmatprep.subr.bf16.mxu0 0
      %5004 = vmatpush1.bf16.xpose.msra.mxu0 0
      %5005 = vmatprep.subr.bf16.mxu0 0
      %5006 = vmatpush1.bf16.xpose.msra.mxu0 0
      %5007 = vmatprep.subr.bf16.mxu0 0
      %5008 = vmatpush1.bf16.xpose.msra.mxu0 0
      %5009 = vmatprep.subr.bf16.mxu0 0
      %5010 = vmatpush1.bf16.xpose.msra.mxu0 0
      %5011 = vmatprep.mubr.bf16.mxu0 0
      %5012 = vmatmul.mubr.bf16.gmra.mrb[0].mxu0 %v4962
      %v5013 = vpop.f32.mrb[0].mxu0
      %v5014 = vadd.f32 0.0, %v5013
      %v5015 = vpop.f32.mrb[0].mxu0
      %v5016 = vpop.f32.mrb[0].mxu0
      %v5017 = vadd.f32 0.0, %v5016
      %v5018 = vpop.f32.mrb[0].mxu0
      %5019 = vmatprep.mubr.bf16.mxu0 0
      %5020 = vmatmul.mubr.bf16.gmra.mrb[0].mxu0 %v4965
      %v5021 = vpop.f32.mrb[0].mxu0
      %v5022 = vadd.f32 0.0, %v5021
      %v5023 = vpop.f32.mrb[0].mxu0
      %v5024 = vpop.f32.mrb[0].mxu0
      %v5025 = vadd.f32 0.0, %v5024
      %v5026 = vpop.f32.mrb[0].mxu0
      %5027 = vmatprep.mubr.bf16.mxu0 0
      %5028 = vmatmul.mubr.bf16.gmra.mrb[0].mxu0 %v4968
      %v5029 = vpop.f32.mrb[0].mxu0
      %v5030 = vadd.f32 0.0, %v5029
      %v5031 = vpop.f32.mrb[0].mxu0
      %v5032 = vpop.f32.mrb[0].mxu0
      %v5033 = vadd.f32 0.0, %v5032
      %v5034 = vpop.f32.mrb[0].mxu0
      %5035 = vmatprep.mubr.bf16.mxu0 0
      %5036 = vmatmul.mubr.bf16.gmra.mrb[0].mxu0 %v4971
      %v5037 = vpop.f32.mrb[0].mxu0
      %v5038 = vadd.f32 0.0, %v5037
      %v5039 = vpop.f32.mrb[0].mxu0
      %v5040 = vpop.f32.mrb[0].mxu0
      %v5041 = vadd.f32 0.0, %v5040
      %v5042 = vpop.f32.mrb[0].mxu0
      %5043 = vdwg.mxu0
      %v5045 = vsel %vm2907, %v4348, 0
      %v5048 = vsel %vm2907, %v4349, 0
      %v5051 = vsel %vm2907, %v4350, 0
      %v5054 = vsel %vm2907, %v4351, 0
      %v5057 = vsel %vm2907, %v1947, 0
      %v5060 = vsel %vm2907, %v1948, 0
      %5062 = vmatprep.subr.bf16.mxu0 0
      %5063 = vmatpush1.bf16.xpose.msra.mxu0 %v5057
      %5064 = vmatprep.subr.bf16.mxu0 0
      %5065 = vmatpush1.bf16.xpose.msra.mxu0 %v5060
      %5066 = vmatprep.subr.bf16.mxu0 0
      %5067 = vmatpush1.bf16.xpose.msra.mxu0 0
      %5068 = vmatprep.subr.bf16.mxu0 0
      %5069 = vmatpush1.bf16.xpose.msra.mxu0 0
      %5070 = vmatprep.subr.bf16.mxu0 0
      %5071 = vmatpush1.bf16.xpose.msra.mxu0 0
      %5072 = vmatprep.subr.bf16.mxu0 0
      %5073 = vmatpush1.bf16.xpose.msra.mxu0 0
      %5074 = vmatprep.subr.bf16.mxu0 0
      %5075 = vmatpush1.bf16.xpose.msra.mxu0 0
      %5076 = vmatprep.subr.bf16.mxu0 0
      %5077 = vmatpush1.bf16.xpose.msra.mxu0 0
      %5078 = vmatprep.subr.bf16.mxu0 0
      %5079 = vmatpush1.bf16.xpose.msra.mxu0 0
      %5080 = vmatprep.subr.bf16.mxu0 0
      %5081 = vmatpush1.bf16.xpose.msra.mxu0 0
      %5082 = vmatprep.subr.bf16.mxu0 0
      %5083 = vmatpush1.bf16.xpose.msra.mxu0 0
      %5084 = vmatprep.subr.bf16.mxu0 0
      %5085 = vmatpush1.bf16.xpose.msra.mxu0 0
      %5086 = vmatprep.subr.bf16.mxu0 0
      %5087 = vmatpush1.bf16.xpose.msra.mxu0 0
      %5088 = vmatprep.subr.bf16.mxu0 0
      %5089 = vmatpush1.bf16.xpose.msra.mxu0 0
      %5090 = vmatprep.subr.bf16.mxu0 0
      %5091 = vmatpush1.bf16.xpose.msra.mxu0 0
      %5092 = vmatprep.subr.bf16.mxu0 0
      %5093 = vmatpush1.bf16.xpose.msra.mxu0 0
      %5094 = vmatprep.mubr.bf16.mxu0 0
      %5095 = vmatmul.mubr.bf16.gmra.mrb[0].mxu0 %v5045
      %v5096 = vpop.f32.mrb[0].mxu0
      %v5097 = vadd.f32 0.0, %v5096
      %v5098 = vpop.f32.mrb[0].mxu0
      %v5099 = vpop.f32.mrb[0].mxu0
      %v5100 = vadd.f32 0.0, %v5099
      %v5101 = vpop.f32.mrb[0].mxu0
      %5102 = vmatprep.mubr.bf16.mxu0 0
      %5103 = vmatmul.mubr.bf16.gmra.mrb[0].mxu0 %v5048
      %v5104 = vpop.f32.mrb[0].mxu0
      %v5105 = vadd.f32 0.0, %v5104
      %v5106 = vpop.f32.mrb[0].mxu0
      %v5107 = vpop.f32.mrb[0].mxu0
      %v5108 = vadd.f32 0.0, %v5107
      %v5109 = vpop.f32.mrb[0].mxu0
      %5110 = vmatprep.mubr.bf16.mxu0 0
      %5111 = vmatmul.mubr.bf16.gmra.mrb[0].mxu0 %v5051
      %v5112 = vpop.f32.mrb[0].mxu0
      %v5113 = vadd.f32 0.0, %v5112
      %v5114 = vpop.f32.mrb[0].mxu0
      %v5115 = vpop.f32.mrb[0].mxu0
      %v5116 = vadd.f32 0.0, %v5115
      %v5117 = vpop.f32.mrb[0].mxu0
      %5118 = vmatprep.mubr.bf16.mxu0 0
      %5119 = vmatmul.mubr.bf16.gmra.mrb[0].mxu0 %v5054
      %v5120 = vpop.f32.mrb[0].mxu0
      %v5121 = vadd.f32 0.0, %v5120
      %v5122 = vpop.f32.mrb[0].mxu0
      %v5123 = vpop.f32.mrb[0].mxu0
      %v5124 = vadd.f32 0.0, %v5123
      %v5125 = vpop.f32.mrb[0].mxu0
      %5126 = vdwg.mxu0
      %v5128 = vsel %vm2907, %v4352, 0
      %v5131 = vsel %vm2907, %v4353, 0
      %v5134 = vsel %vm2907, %v4354, 0
      %v5137 = vsel %vm2907, %v4355, 0
      %v5140 = vsel %vm2907, %v2052, 0
      %v5143 = vsel %vm2907, %v2053, 0
      %5145 = vmatprep.subr.bf16.mxu0 0
      %5146 = vmatpush1.bf16.xpose.msra.mxu0 %v5140
      %5147 = vmatprep.subr.bf16.mxu0 0
      %5148 = vmatpush1.bf16.xpose.msra.mxu0 %v5143
      %5149 = vmatprep.subr.bf16.mxu0 0
      %5150 = vmatpush1.bf16.xpose.msra.mxu0 0
      %5151 = vmatprep.subr.bf16.mxu0 0
      %5152 = vmatpush1.bf16.xpose.msra.mxu0 0
      %5153 = vmatprep.subr.bf16.mxu0 0
      %5154 = vmatpush1.bf16.xpose.msra.mxu0 0
      %5155 = vmatprep.subr.bf16.mxu0 0
      %5156 = vmatpush1.bf16.xpose.msra.mxu0 0
      %5157 = vmatprep.subr.bf16.mxu0 0
      %5158 = vmatpush1.bf16.xpose.msra.mxu0 0
      %5159 = vmatprep.subr.bf16.mxu0 0
      %5160 = vmatpush1.bf16.xpose.msra.mxu0 0
      %5161 = vmatprep.subr.bf16.mxu0 0
      %5162 = vmatpush1.bf16.xpose.msra.mxu0 0
      %5163 = vmatprep.subr.bf16.mxu0 0
      %5164 = vmatpush1.bf16.xpose.msra.mxu0 0
      %5165 = vmatprep.subr.bf16.mxu0 0
      %5166 = vmatpush1.bf16.xpose.msra.mxu0 0
      %5167 = vmatprep.subr.bf16.mxu0 0
      %5168 = vmatpush1.bf16.xpose.msra.mxu0 0
      %5169 = vmatprep.subr.bf16.mxu0 0
      %5170 = vmatpush1.bf16.xpose.msra.mxu0 0
      %5171 = vmatprep.subr.bf16.mxu0 0
      %5172 = vmatpush1.bf16.xpose.msra.mxu0 0
      %5173 = vmatprep.subr.bf16.mxu0 0
      %5174 = vmatpush1.bf16.xpose.msra.mxu0 0
      %5175 = vmatprep.subr.bf16.mxu0 0
      %5176 = vmatpush1.bf16.xpose.msra.mxu0 0
      %5177 = vmatprep.mubr.bf16.mxu0 0
      %5178 = vmatmul.mubr.bf16.gmra.mrb[0].mxu0 %v5128
      %v5179 = vpop.f32.mrb[0].mxu0
      %v5180 = vadd.f32 0.0, %v5179
      %v5181 = vpop.f32.mrb[0].mxu0
      %v5182 = vpop.f32.mrb[0].mxu0
      %v5183 = vadd.f32 0.0, %v5182
      %v5184 = vpop.f32.mrb[0].mxu0
      %5185 = vmatprep.mubr.bf16.mxu0 0
      %5186 = vmatmul.mubr.bf16.gmra.mrb[0].mxu0 %v5131
      %v5187 = vpop.f32.mrb[0].mxu0
      %v5188 = vadd.f32 0.0, %v5187
      %v5189 = vpop.f32.mrb[0].mxu0
      %v5190 = vpop.f32.mrb[0].mxu0
      %v5191 = vadd.f32 0.0, %v5190
      %v5192 = vpop.f32.mrb[0].mxu0
      %5193 = vmatprep.mubr.bf16.mxu0 0
      %5194 = vmatmul.mubr.bf16.gmra.mrb[0].mxu0 %v5134
      %v5195 = vpop.f32.mrb[0].mxu0
      %v5196 = vadd.f32 0.0, %v5195
      %v5197 = vpop.f32.mrb[0].mxu0
      %v5198 = vpop.f32.mrb[0].mxu0
      %v5199 = vadd.f32 0.0, %v5198
      %v5200 = vpop.f32.mrb[0].mxu0
      %5201 = vmatprep.mubr.bf16.mxu0 0
      %5202 = vmatmul.mubr.bf16.gmra.mrb[0].mxu0 %v5137
      %v5203 = vpop.f32.mrb[0].mxu0
      %v5204 = vadd.f32 0.0, %v5203
      %v5205 = vpop.f32.mrb[0].mxu0
      %v5206 = vpop.f32.mrb[0].mxu0
      %v5207 = vadd.f32 0.0, %v5206
      %v5208 = vpop.f32.mrb[0].mxu0
      %5209 = vdwg.mxu0
      %v5211 = vsel %vm2907, %v4356, 0
      %v5214 = vsel %vm2907, %v4357, 0
      %v5217 = vsel %vm2907, %v4358, 0
      %v5220 = vsel %vm2907, %v4359, 0
      %v5223 = vsel %vm2907, %v2157, 0
      %v5226 = vsel %vm2907, %v2158, 0
      %5228 = vmatprep.subr.bf16.mxu0 0
      %5229 = vmatpush1.bf16.xpose.msra.mxu0 %v5223
      %5230 = vmatprep.subr.bf16.mxu0 0
      %5231 = vmatpush1.bf16.xpose.msra.mxu0 %v5226
      %5232 = vmatprep.subr.bf16.mxu0 0
      %5233 = vmatpush1.bf16.xpose.msra.mxu0 0
      %5234 = vmatprep.subr.bf16.mxu0 0
      %5235 = vmatpush1.bf16.xpose.msra.mxu0 0
      %5236 = vmatprep.subr.bf16.mxu0 0
      %5237 = vmatpush1.bf16.xpose.msra.mxu0 0
      %5238 = vmatprep.subr.bf16.mxu0 0
      %5239 = vmatpush1.bf16.xpose.msra.mxu0 0
      %5240 = vmatprep.subr.bf16.mxu0 0
      %5241 = vmatpush1.bf16.xpose.msra.mxu0 0
      %5242 = vmatprep.subr.bf16.mxu0 0
      %5243 = vmatpush1.bf16.xpose.msra.mxu0 0
      %5244 = vmatprep.subr.bf16.mxu0 0
      %5245 = vmatpush1.bf16.xpose.msra.mxu0 0
      %5246 = vmatprep.subr.bf16.mxu0 0
      %5247 = vmatpush1.bf16.xpose.msra.mxu0 0
      %5248 = vmatprep.subr.bf16.mxu0 0
      %5249 = vmatpush1.bf16.xpose.msra.mxu0 0
      %5250 = vmatprep.subr.bf16.mxu0 0
      %5251 = vmatpush1.bf16.xpose.msra.mxu0 0
      %5252 = vmatprep.subr.bf16.mxu0 0
      %5253 = vmatpush1.bf16.xpose.msra.mxu0 0
      %5254 = vmatprep.subr.bf16.mxu0 0
      %5255 = vmatpush1.bf16.xpose.msra.mxu0 0
      %5256 = vmatprep.subr.bf16.mxu0 0
      %5257 = vmatpush1.bf16.xpose.msra.mxu0 0
      %5258 = vmatprep.subr.bf16.mxu0 0
      %5259 = vmatpush1.bf16.xpose.msra.mxu0 0
      %5260 = vmatprep.mubr.bf16.mxu0 0
      %5261 = vmatmul.mubr.bf16.gmra.mrb[0].mxu0 %v5211
      %v5262 = vpop.f32.mrb[0].mxu0
      %v5263 = vadd.f32 0.0, %v5262
      %v5264 = vpop.f32.mrb[0].mxu0
      %v5265 = vpop.f32.mrb[0].mxu0
      %v5266 = vadd.f32 0.0, %v5265
      %v5267 = vpop.f32.mrb[0].mxu0
      %5268 = vmatprep.mubr.bf16.mxu0 0
      %5269 = vmatmul.mubr.bf16.gmra.mrb[0].mxu0 %v5214
      %v5270 = vpop.f32.mrb[0].mxu0
      %v5271 = vadd.f32 0.0, %v5270
      %v5272 = vpop.f32.mrb[0].mxu0
      %v5273 = vpop.f32.mrb[0].mxu0
      %v5274 = vadd.f32 0.0, %v5273
      %v5275 = vpop.f32.mrb[0].mxu0
      %5276 = vmatprep.mubr.bf16.mxu0 0
      %5277 = vmatmul.mubr.bf16.gmra.mrb[0].mxu0 %v5217
      %v5278 = vpop.f32.mrb[0].mxu0
      %v5279 = vadd.f32 0.0, %v5278
      %v5280 = vpop.f32.mrb[0].mxu0
      %v5281 = vpop.f32.mrb[0].mxu0
      %v5282 = vadd.f32 0.0, %v5281
      %v5283 = vpop.f32.mrb[0].mxu0
      %5284 = vmatprep.mubr.bf16.mxu0 0
      %5285 = vmatmul.mubr.bf16.gmra.mrb[0].mxu0 %v5220
      %v5286 = vpop.f32.mrb[0].mxu0
      %v5287 = vadd.f32 0.0, %v5286
      %v5288 = vpop.f32.mrb[0].mxu0
      %v5289 = vpop.f32.mrb[0].mxu0
      %v5290 = vadd.f32 0.0, %v5289
      %v5291 = vpop.f32.mrb[0].mxu0
      %5292 = vdwg.mxu0
      %v5294 = vsel %vm2907, %v4360, 0
      %v5297 = vsel %vm2907, %v4361, 0
      %v5300 = vsel %vm2907, %v4362, 0
      %v5303 = vsel %vm2907, %v4363, 0
      %v5306 = vsel %vm2907, %v2262, 0
      %v5309 = vsel %vm2907, %v2263, 0
      %5311 = vmatprep.subr.bf16.mxu0 0
      %5312 = vmatpush1.bf16.xpose.msra.mxu0 %v5306
      %5313 = vmatprep.subr.bf16.mxu0 0
      %5314 = vmatpush1.bf16.xpose.msra.mxu0 %v5309
      %5315 = vmatprep.subr.bf16.mxu0 0
      %5316 = vmatpush1.bf16.xpose.msra.mxu0 0
      %5317 = vmatprep.subr.bf16.mxu0 0
      %5318 = vmatpush1.bf16.xpose.msra.mxu0 0
      %5319 = vmatprep.subr.bf16.mxu0 0
      %5320 = vmatpush1.bf16.xpose.msra.mxu0 0
      %5321 = vmatprep.subr.bf16.mxu0 0
      %5322 = vmatpush1.bf16.xpose.msra.mxu0 0
      %5323 = vmatprep.subr.bf16.mxu0 0
      %5324 = vmatpush1.bf16.xpose.msra.mxu0 0
      %5325 = vmatprep.subr.bf16.mxu0 0
      %5326 = vmatpush1.bf16.xpose.msra.mxu0 0
      %5327 = vmatprep.subr.bf16.mxu0 0
      %5328 = vmatpush1.bf16.xpose.msra.mxu0 0
      %5329 = vmatprep.subr.bf16.mxu0 0
      %5330 = vmatpush1.bf16.xpose.msra.mxu0 0
      %5331 = vmatprep.subr.bf16.mxu0 0
      %5332 = vmatpush1.bf16.xpose.msra.mxu0 0
      %5333 = vmatprep.subr.bf16.mxu0 0
      %5334 = vmatpush1.bf16.xpose.msra.mxu0 0
      %5335 = vmatprep.subr.bf16.mxu0 0
      %5336 = vmatpush1.bf16.xpose.msra.mxu0 0
      %5337 = vmatprep.subr.bf16.mxu0 0
      %5338 = vmatpush1.bf16.xpose.msra.mxu0 0
      %5339 = vmatprep.subr.bf16.mxu0 0
      %5340 = vmatpush1.bf16.xpose.msra.mxu0 0
      %5341 = vmatprep.subr.bf16.mxu0 0
      %5342 = vmatpush1.bf16.xpose.msra.mxu0 0
      %5343 = vmatprep.mubr.bf16.mxu0 0
      %5344 = vmatmul.mubr.bf16.gmra.mrb[0].mxu0 %v5294
      %v5345 = vpop.f32.mrb[0].mxu0
      %v5346 = vadd.f32 0.0, %v5345
      %v5347 = vpop.f32.mrb[0].mxu0
      %v5348 = vpop.f32.mrb[0].mxu0
      %v5349 = vadd.f32 0.0, %v5348
      %v5350 = vpop.f32.mrb[0].mxu0
      %5351 = vmatprep.mubr.bf16.mxu0 0
      %5352 = vmatmul.mubr.bf16.gmra.mrb[0].mxu0 %v5297
      %v5353 = vpop.f32.mrb[0].mxu0
      %v5354 = vadd.f32 0.0, %v5353
      %v5355 = vpop.f32.mrb[0].mxu0
      %v5356 = vpop.f32.mrb[0].mxu0
      %v5357 = vadd.f32 0.0, %v5356
      %v5358 = vpop.f32.mrb[0].mxu0
      %5359 = vmatprep.mubr.bf16.mxu0 0
      %5360 = vmatmul.mubr.bf16.gmra.mrb[0].mxu0 %v5300
      %v5361 = vpop.f32.mrb[0].mxu0
      %v5362 = vadd.f32 0.0, %v5361
      %v5363 = vpop.f32.mrb[0].mxu0
      %v5364 = vpop.f32.mrb[0].mxu0
      %v5365 = vadd.f32 0.0, %v5364
      %v5366 = vpop.f32.mrb[0].mxu0
      %5367 = vmatprep.mubr.bf16.mxu0 0
      %5368 = vmatmul.mubr.bf16.gmra.mrb[0].mxu0 %v5303
      %v5369 = vpop.f32.mrb[0].mxu0
      %v5370 = vadd.f32 0.0, %v5369
      %v5371 = vpop.f32.mrb[0].mxu0
      %v5372 = vpop.f32.mrb[0].mxu0
      %v5373 = vadd.f32 0.0, %v5372
      %v5374 = vpop.f32.mrb[0].mxu0
      %5375 = vdwg.mxu0
      %v5377 = vsel %vm2907, %v4364, 0
      %v5380 = vsel %vm2907, %v4365, 0
      %v5383 = vsel %vm2907, %v4366, 0
      %v5386 = vsel %vm2907, %v4367, 0
      %v5389 = vsel %vm2907, %v2367, 0
      %v5392 = vsel %vm2907, %v2368, 0
      %5394 = vmatprep.subr.bf16.mxu0 0
      %5395 = vmatpush1.bf16.xpose.msra.mxu0 %v5389
      %5396 = vmatprep.subr.bf16.mxu0 0
      %5397 = vmatpush1.bf16.xpose.msra.mxu0 %v5392
      %5398 = vmatprep.subr.bf16.mxu0 0
      %5399 = vmatpush1.bf16.xpose.msra.mxu0 0
      %5400 = vmatprep.subr.bf16.mxu0 0
      %5401 = vmatpush1.bf16.xpose.msra.mxu0 0
      %5402 = vmatprep.subr.bf16.mxu0 0
      %5403 = vmatpush1.bf16.xpose.msra.mxu0 0
      %5404 = vmatprep.subr.bf16.mxu0 0
      %5405 = vmatpush1.bf16.xpose.msra.mxu0 0
      %5406 = vmatprep.subr.bf16.mxu0 0
      %5407 = vmatpush1.bf16.xpose.msra.mxu0 0
      %5408 = vmatprep.subr.bf16.mxu0 0
      %5409 = vmatpush1.bf16.xpose.msra.mxu0 0
      %5410 = vmatprep.subr.bf16.mxu0 0
      %5411 = vmatpush1.bf16.xpose.msra.mxu0 0
      %5412 = vmatprep.subr.bf16.mxu0 0
      %5413 = vmatpush1.bf16.xpose.msra.mxu0 0
      %5414 = vmatprep.subr.bf16.mxu0 0
      %5415 = vmatpush1.bf16.xpose.msra.mxu0 0
      %5416 = vmatprep.subr.bf16.mxu0 0
      %5417 = vmatpush1.bf16.xpose.msra.mxu0 0
      %5418 = vmatprep.subr.bf16.mxu0 0
      %5419 = vmatpush1.bf16.xpose.msra.mxu0 0
      %5420 = vmatprep.subr.bf16.mxu0 0
      %5421 = vmatpush1.bf16.xpose.msra.mxu0 0
      %5422 = vmatprep.subr.bf16.mxu0 0
      %5423 = vmatpush1.bf16.xpose.msra.mxu0 0
      %5424 = vmatprep.subr.bf16.mxu0 0
      %5425 = vmatpush1.bf16.xpose.msra.mxu0 0
      %5426 = vmatprep.mubr.bf16.mxu0 0
      %5427 = vmatmul.mubr.bf16.gmra.mrb[0].mxu0 %v5377
      %v5428 = vpop.f32.mrb[0].mxu0
      %v5429 = vadd.f32 0.0, %v5428
      %v5430 = vpop.f32.mrb[0].mxu0
      %v5431 = vpop.f32.mrb[0].mxu0
      %v5432 = vadd.f32 0.0, %v5431
      %v5433 = vpop.f32.mrb[0].mxu0
      %5434 = vmatprep.mubr.bf16.mxu0 0
      %5435 = vmatmul.mubr.bf16.gmra.mrb[0].mxu0 %v5380
      %v5436 = vpop.f32.mrb[0].mxu0
      %v5437 = vadd.f32 0.0, %v5436
      %v5438 = vpop.f32.mrb[0].mxu0
      %v5439 = vpop.f32.mrb[0].mxu0
      %v5440 = vadd.f32 0.0, %v5439
      %v5441 = vpop.f32.mrb[0].mxu0
      %5442 = vmatprep.mubr.bf16.mxu0 0
      %5443 = vmatmul.mubr.bf16.gmra.mrb[0].mxu0 %v5383
      %v5444 = vpop.f32.mrb[0].mxu0
      %v5445 = vadd.f32 0.0, %v5444
      %v5446 = vpop.f32.mrb[0].mxu0
      %v5447 = vpop.f32.mrb[0].mxu0
      %v5448 = vadd.f32 0.0, %v5447
      %v5449 = vpop.f32.mrb[0].mxu0
      %5450 = vmatprep.mubr.bf16.mxu0 0
      %5451 = vmatmul.mubr.bf16.gmra.mrb[0].mxu0 %v5386
      %v5452 = vpop.f32.mrb[0].mxu0
      %v5453 = vadd.f32 0.0, %v5452
      %v5454 = vpop.f32.mrb[0].mxu0
      %v5455 = vpop.f32.mrb[0].mxu0
      %v5456 = vadd.f32 0.0, %v5455
      %v5457 = vpop.f32.mrb[0].mxu0
      %5458 = vdwg.mxu0
      %v5460 = vsel %vm2907, %v4368, 0
      %v5463 = vsel %vm2907, %v4369, 0
      %v5466 = vsel %vm2907, %v4370, 0
      %v5469 = vsel %vm2907, %v4371, 0
      %v5472 = vsel %vm2907, %v2472, 0
      %v5475 = vsel %vm2907, %v2473, 0
      %5477 = vmatprep.subr.bf16.mxu0 0
      %5478 = vmatpush1.bf16.xpose.msra.mxu0 %v5472
      %5479 = vmatprep.subr.bf16.mxu0 0
      %5480 = vmatpush1.bf16.xpose.msra.mxu0 %v5475
      %5481 = vmatprep.subr.bf16.mxu0 0
      %5482 = vmatpush1.bf16.xpose.msra.mxu0 0
      %5483 = vmatprep.subr.bf16.mxu0 0
      %5484 = vmatpush1.bf16.xpose.msra.mxu0 0
      %5485 = vmatprep.subr.bf16.mxu0 0
      %5486 = vmatpush1.bf16.xpose.msra.mxu0 0
      %5487 = vmatprep.subr.bf16.mxu0 0
      %5488 = vmatpush1.bf16.xpose.msra.mxu0 0
      %5489 = vmatprep.subr.bf16.mxu0 0
      %5490 = vmatpush1.bf16.xpose.msra.mxu0 0
      %5491 = vmatprep.subr.bf16.mxu0 0
      %5492 = vmatpush1.bf16.xpose.msra.mxu0 0
      %5493 = vmatprep.subr.bf16.mxu0 0
      %5494 = vmatpush1.bf16.xpose.msra.mxu0 0
      %5495 = vmatprep.subr.bf16.mxu0 0
      %5496 = vmatpush1.bf16.xpose.msra.mxu0 0
      %5497 = vmatprep.subr.bf16.mxu0 0
      %5498 = vmatpush1.bf16.xpose.msra.mxu0 0
      %5499 = vmatprep.subr.bf16.mxu0 0
      %5500 = vmatpush1.bf16.xpose.msra.mxu0 0
      %5501 = vmatprep.subr.bf16.mxu0 0
      %5502 = vmatpush1.bf16.xpose.msra.mxu0 0
      %5503 = vmatprep.subr.bf16.mxu0 0
      %5504 = vmatpush1.bf16.xpose.msra.mxu0 0
      %5505 = vmatprep.subr.bf16.mxu0 0
      %5506 = vmatpush1.bf16.xpose.msra.mxu0 0
      %5507 = vmatprep.subr.bf16.mxu0 0
      %5508 = vmatpush1.bf16.xpose.msra.mxu0 0
      %5509 = vmatprep.mubr.bf16.mxu0 0
      %5510 = vmatmul.mubr.bf16.gmra.mrb[0].mxu0 %v5460
      %v5511 = vpop.f32.mrb[0].mxu0
      %v5512 = vadd.f32 0.0, %v5511
      %v5513 = vpop.f32.mrb[0].mxu0
      %v5514 = vpop.f32.mrb[0].mxu0
      %v5515 = vadd.f32 0.0, %v5514
      %v5516 = vpop.f32.mrb[0].mxu0
      %5517 = vmatprep.mubr.bf16.mxu0 0
      %5518 = vmatmul.mubr.bf16.gmra.mrb[0].mxu0 %v5463
      %v5519 = vpop.f32.mrb[0].mxu0
      %v5520 = vadd.f32 0.0, %v5519
      %v5521 = vpop.f32.mrb[0].mxu0
      %v5522 = vpop.f32.mrb[0].mxu0
      %v5523 = vadd.f32 0.0, %v5522
      %v5524 = vpop.f32.mrb[0].mxu0
      %5525 = vmatprep.mubr.bf16.mxu0 0
      %5526 = vmatmul.mubr.bf16.gmra.mrb[0].mxu0 %v5466
      %v5527 = vpop.f32.mrb[0].mxu0
      %v5528 = vadd.f32 0.0, %v5527
      %v5529 = vpop.f32.mrb[0].mxu0
      %v5530 = vpop.f32.mrb[0].mxu0
      %v5531 = vadd.f32 0.0, %v5530
      %v5532 = vpop.f32.mrb[0].mxu0
      %5533 = vmatprep.mubr.bf16.mxu0 0
      %5534 = vmatmul.mubr.bf16.gmra.mrb[0].mxu0 %v5469
      %v5535 = vpop.f32.mrb[0].mxu0
      %v5536 = vadd.f32 0.0, %v5535
      %v5537 = vpop.f32.mrb[0].mxu0
      %v5538 = vpop.f32.mrb[0].mxu0
      %v5539 = vadd.f32 0.0, %v5538
      %v5540 = vpop.f32.mrb[0].mxu0
      %5541 = vdwg.mxu0
      %v5543 = vsel %vm2907, %v4372, 0
      %v5546 = vsel %vm2907, %v4373, 0
      %v5549 = vsel %vm2907, %v4374, 0
      %v5552 = vsel %vm2907, %v4375, 0
      %v5555 = vsel %vm2907, %v2577, 0
      %v5558 = vsel %vm2907, %v2578, 0
      %5560 = vmatprep.subr.bf16.mxu0 0
      %5561 = vmatpush1.bf16.xpose.msra.mxu0 %v5555
      %5562 = vmatprep.subr.bf16.mxu0 0
      %5563 = vmatpush1.bf16.xpose.msra.mxu0 %v5558
      %5564 = vmatprep.subr.bf16.mxu0 0
      %5565 = vmatpush1.bf16.xpose.msra.mxu0 0
      %5566 = vmatprep.subr.bf16.mxu0 0
      %5567 = vmatpush1.bf16.xpose.msra.mxu0 0
      %5568 = vmatprep.subr.bf16.mxu0 0
      %5569 = vmatpush1.bf16.xpose.msra.mxu0 0
      %5570 = vmatprep.subr.bf16.mxu0 0
      %5571 = vmatpush1.bf16.xpose.msra.mxu0 0
      %5572 = vmatprep.subr.bf16.mxu0 0
      %5573 = vmatpush1.bf16.xpose.msra.mxu0 0
      %5574 = vmatprep.subr.bf16.mxu0 0
      %5575 = vmatpush1.bf16.xpose.msra.mxu0 0
      %5576 = vmatprep.subr.bf16.mxu0 0
      %5577 = vmatpush1.bf16.xpose.msra.mxu0 0
      %5578 = vmatprep.subr.bf16.mxu0 0
      %5579 = vmatpush1.bf16.xpose.msra.mxu0 0
      %5580 = vmatprep.subr.bf16.mxu0 0
      %5581 = vmatpush1.bf16.xpose.msra.mxu0 0
      %5582 = vmatprep.subr.bf16.mxu0 0
      %5583 = vmatpush1.bf16.xpose.msra.mxu0 0
      %5584 = vmatprep.subr.bf16.mxu0 0
      %5585 = vmatpush1.bf16.xpose.msra.mxu0 0
      %5586 = vmatprep.subr.bf16.mxu0 0
      %5587 = vmatpush1.bf16.xpose.msra.mxu0 0
      %5588 = vmatprep.subr.bf16.mxu0 0
      %5589 = vmatpush1.bf16.xpose.msra.mxu0 0
      %5590 = vmatprep.subr.bf16.mxu0 0
      %5591 = vmatpush1.bf16.xpose.msra.mxu0 0
      %5592 = vmatprep.mubr.bf16.mxu0 0
      %5593 = vmatmul.mubr.bf16.gmra.mrb[0].mxu0 %v5543
      %v5594 = vpop.f32.mrb[0].mxu0
      %v5595 = vadd.f32 0.0, %v5594
      %v5596 = vpop.f32.mrb[0].mxu0
      %v5597 = vpop.f32.mrb[0].mxu0
      %v5598 = vadd.f32 0.0, %v5597
      %v5599 = vpop.f32.mrb[0].mxu0
      %5600 = vmatprep.mubr.bf16.mxu0 0
      %5601 = vmatmul.mubr.bf16.gmra.mrb[0].mxu0 %v5546
      %v5602 = vpop.f32.mrb[0].mxu0
      %v5603 = vadd.f32 0.0, %v5602
      %v5604 = vpop.f32.mrb[0].mxu0
      %v5605 = vpop.f32.mrb[0].mxu0
      %v5606 = vadd.f32 0.0, %v5605
      %v5607 = vpop.f32.mrb[0].mxu0
      %5608 = vmatprep.mubr.bf16.mxu0 0
      %5609 = vmatmul.mubr.bf16.gmra.mrb[0].mxu0 %v5549
      %v5610 = vpop.f32.mrb[0].mxu0
      %v5611 = vadd.f32 0.0, %v5610
      %v5612 = vpop.f32.mrb[0].mxu0
      %v5613 = vpop.f32.mrb[0].mxu0
      %v5614 = vadd.f32 0.0, %v5613
      %v5615 = vpop.f32.mrb[0].mxu0
      %5616 = vmatprep.mubr.bf16.mxu0 0
      %5617 = vmatmul.mubr.bf16.gmra.mrb[0].mxu0 %v5552
      %v5618 = vpop.f32.mrb[0].mxu0
      %v5619 = vadd.f32 0.0, %v5618
      %v5620 = vpop.f32.mrb[0].mxu0
      %v5621 = vpop.f32.mrb[0].mxu0
      %v5622 = vadd.f32 0.0, %v5621
      %v5623 = vpop.f32.mrb[0].mxu0
      %5624 = vdwg.mxu0
      %v5626 = vsel %vm2907, %v4376, 0
      %v5629 = vsel %vm2907, %v4377, 0
      %v5632 = vsel %vm2907, %v4378, 0
      %v5635 = vsel %vm2907, %v4379, 0
      %v5638 = vsel %vm2907, %v2682, 0
      %v5641 = vsel %vm2907, %v2683, 0
      %5643 = vmatprep.subr.bf16.mxu0 0
      %5644 = vmatpush1.bf16.xpose.msra.mxu0 %v5638
      %5645 = vmatprep.subr.bf16.mxu0 0
      %5646 = vmatpush1.bf16.xpose.msra.mxu0 %v5641
      %5647 = vmatprep.subr.bf16.mxu0 0
      %5648 = vmatpush1.bf16.xpose.msra.mxu0 0
      %5649 = vmatprep.subr.bf16.mxu0 0
      %5650 = vmatpush1.bf16.xpose.msra.mxu0 0
      %5651 = vmatprep.subr.bf16.mxu0 0
      %5652 = vmatpush1.bf16.xpose.msra.mxu0 0
      %5653 = vmatprep.subr.bf16.mxu0 0
      %5654 = vmatpush1.bf16.xpose.msra.mxu0 0
      %5655 = vmatprep.subr.bf16.mxu0 0
      %5656 = vmatpush1.bf16.xpose.msra.mxu0 0
      %5657 = vmatprep.subr.bf16.mxu0 0
      %5658 = vmatpush1.bf16.xpose.msra.mxu0 0
      %5659 = vmatprep.subr.bf16.mxu0 0
      %5660 = vmatpush1.bf16.xpose.msra.mxu0 0
      %5661 = vmatprep.subr.bf16.mxu0 0
      %5662 = vmatpush1.bf16.xpose.msra.mxu0 0
      %5663 = vmatprep.subr.bf16.mxu0 0
      %5664 = vmatpush1.bf16.xpose.msra.mxu0 0
      %5665 = vmatprep.subr.bf16.mxu0 0
      %5666 = vmatpush1.bf16.xpose.msra.mxu0 0
      %5667 = vmatprep.subr.bf16.mxu0 0
      %5668 = vmatpush1.bf16.xpose.msra.mxu0 0
      %5669 = vmatprep.subr.bf16.mxu0 0
      %5670 = vmatpush1.bf16.xpose.msra.mxu0 0
      %5671 = vmatprep.subr.bf16.mxu0 0
      %5672 = vmatpush1.bf16.xpose.msra.mxu0 0
      %5673 = vmatprep.subr.bf16.mxu0 0
      %5674 = vmatpush1.bf16.xpose.msra.mxu0 0
      %5675 = vmatprep.mubr.bf16.mxu0 0
      %5676 = vmatmul.mubr.bf16.gmra.mrb[0].mxu0 %v5626
      %v5677 = vpop.f32.mrb[0].mxu0
      %v5678 = vadd.f32 0.0, %v5677
      %v5679 = vpop.f32.mrb[0].mxu0
      %v5680 = vpop.f32.mrb[0].mxu0
      %v5681 = vadd.f32 0.0, %v5680
      %v5682 = vpop.f32.mrb[0].mxu0
      %5683 = vmatprep.mubr.bf16.mxu0 0
      %5684 = vmatmul.mubr.bf16.gmra.mrb[0].mxu0 %v5629
      %v5685 = vpop.f32.mrb[0].mxu0
      %v5686 = vadd.f32 0.0, %v5685
      %v5687 = vpop.f32.mrb[0].mxu0
      %v5688 = vpop.f32.mrb[0].mxu0
      %v5689 = vadd.f32 0.0, %v5688
      %v5690 = vpop.f32.mrb[0].mxu0
      %5691 = vmatprep.mubr.bf16.mxu0 0
      %5692 = vmatmul.mubr.bf16.gmra.mrb[0].mxu0 %v5632
      %v5693 = vpop.f32.mrb[0].mxu0
      %v5694 = vadd.f32 0.0, %v5693
      %v5695 = vpop.f32.mrb[0].mxu0
      %v5696 = vpop.f32.mrb[0].mxu0
      %v5697 = vadd.f32 0.0, %v5696
      %v5698 = vpop.f32.mrb[0].mxu0
      %5699 = vmatprep.mubr.bf16.mxu0 0
      %5700 = vmatmul.mubr.bf16.gmra.mrb[0].mxu0 %v5635
      %v5701 = vpop.f32.mrb[0].mxu0
      %v5702 = vadd.f32 0.0, %v5701
      %v5703 = vpop.f32.mrb[0].mxu0
      %v5704 = vpop.f32.mrb[0].mxu0
      %v5705 = vadd.f32 0.0, %v5704
      %v5706 = vpop.f32.mrb[0].mxu0
      %5707 = vdwg.mxu0
      %5708 = vst.msk [vmem:[%s203] sm:$0xff] %vm1126, %v4433
      %5709 = vst.msk [vmem:[%s203 + $0x8] sm:$0xff] %vm1126, %v4436
      %5710 = vst.msk [vmem:[%s203 + $0x10] sm:$0xff] %vm1126, %v4441
      %5711 = vst.msk [vmem:[%s203 + $0x18] sm:$0xff] %vm1126, %v4444
      %5712 = vst.msk [vmem:[%s203 + $0x20] sm:$0xff] %vm1126, %v4449
      %5713 = vst.msk [vmem:[%s203 + $0x28] sm:$0xff] %vm1126, %v4452
      %5714 = vst.msk [vmem:[%s203 + $0x30] sm:$0xff] %vm1126, %v4457
      %5715 = vst.msk [vmem:[%s203 + $0x38] sm:$0xff] %vm1126, %v4460
      %5716 = vst.msk [vmem:[%s203 + $0x40] sm:$0xff] %vm1126, %v4516
      %5717 = vst.msk [vmem:[%s203 + $0x48] sm:$0xff] %vm1126, %v4519
      %5718 = vst.msk [vmem:[%s203 + $0x50] sm:$0xff] %vm1126, %v4524
      %5719 = vst.msk [vmem:[%s203 + $0x58] sm:$0xff] %vm1126, %v4527
      %5720 = vst.msk [vmem:[%s203 + $0x60] sm:$0xff] %vm1126, %v4532
      %5721 = vst.msk [vmem:[%s203 + $0x68] sm:$0xff] %vm1126, %v4535
      %5722 = vst.msk [vmem:[%s203 + $0x70] sm:$0xff] %vm1126, %v4540
      %5723 = vst.msk [vmem:[%s203 + $0x78] sm:$0xff] %vm1126, %v4543
      %5724 = vst.msk [vmem:[%s203 + $0x80] sm:$0xff] %vm1126, %v4599
      %5725 = vst.msk [vmem:[%s203 + $0x88] sm:$0xff] %vm1126, %v4602
      %5726 = vst.msk [vmem:[%s203 + $0x90] sm:$0xff] %vm1126, %v4607
      %5727 = vst.msk [vmem:[%s203 + $0x98] sm:$0xff] %vm1126, %v4610
      %5728 = vst.msk [vmem:[%s203 + $0xa0] sm:$0xff] %vm1126, %v4615
      %5729 = vst.msk [vmem:[%s203 + $0xa8] sm:$0xff] %vm1126, %v4618
      %5730 = vst.msk [vmem:[%s203 + $0xb0] sm:$0xff] %vm1126, %v4623
      %5731 = vst.msk [vmem:[%s203 + $0xb8] sm:$0xff] %vm1126, %v4626
      %5732 = vst.msk [vmem:[%s203 + $0xc0] sm:$0xff] %vm1126, %v4682
      %5733 = vst.msk [vmem:[%s203 + $0xc8] sm:$0xff] %vm1126, %v4685
      %5734 = vst.msk [vmem:[%s203 + $0xd0] sm:$0xff] %vm1126, %v4690
      %5735 = vst.msk [vmem:[%s203 + $0xd8] sm:$0xff] %vm1126, %v4693
      %5736 = vst.msk [vmem:[%s203 + $0xe0] sm:$0xff] %vm1126, %v4698
      %5737 = vst.msk [vmem:[%s203 + $0xe8] sm:$0xff] %vm1126, %v4701
      %5738 = vst.msk [vmem:[%s203 + $0xf0] sm:$0xff] %vm1126, %v4706
      %5739 = vst.msk [vmem:[%s203 + $0xf8] sm:$0xff] %vm1126, %v4709
      %5740 = vst.msk [vmem:[%s203 + $0x100] sm:$0xff] %vm1126, %v4765
      %5741 = vst.msk [vmem:[%s203 + $0x108] sm:$0xff] %vm1126, %v4768
      %5742 = vst.msk [vmem:[%s203 + $0x110] sm:$0xff] %vm1126, %v4773
      %5743 = vst.msk [vmem:[%s203 + $0x118] sm:$0xff] %vm1126, %v4776
      %5744 = vst.msk [vmem:[%s203 + $0x120] sm:$0xff] %vm1126, %v4781
      %5745 = vst.msk [vmem:[%s203 + $0x128] sm:$0xff] %vm1126, %v4784
      %5746 = vst.msk [vmem:[%s203 + $0x130] sm:$0xff] %vm1126, %v4789
      %5747 = vst.msk [vmem:[%s203 + $0x138] sm:$0xff] %vm1126, %v4792
      %5748 = vst.msk [vmem:[%s203 + $0x140] sm:$0xff] %vm1126, %v4848
      %5749 = vst.msk [vmem:[%s203 + $0x148] sm:$0xff] %vm1126, %v4851
      %5750 = vst.msk [vmem:[%s203 + $0x150] sm:$0xff] %vm1126, %v4856
      %5751 = vst.msk [vmem:[%s203 + $0x158] sm:$0xff] %vm1126, %v4859
      %5752 = vst.msk [vmem:[%s203 + $0x160] sm:$0xff] %vm1126, %v4864
      %5753 = vst.msk [vmem:[%s203 + $0x168] sm:$0xff] %vm1126, %v4867
      %5754 = vst.msk [vmem:[%s203 + $0x170] sm:$0xff] %vm1126, %v4872
      %5755 = vst.msk [vmem:[%s203 + $0x178] sm:$0xff] %vm1126, %v4875
      %5756 = vst.msk [vmem:[%s203 + $0x180] sm:$0xff] %vm1126, %v4931
      %5757 = vst.msk [vmem:[%s203 + $0x188] sm:$0xff] %vm1126, %v4934
      %5758 = vst.msk [vmem:[%s203 + $0x190] sm:$0xff] %vm1126, %v4939
      %5759 = vst.msk [vmem:[%s203 + $0x198] sm:$0xff] %vm1126, %v4942
      %5760 = vst.msk [vmem:[%s203 + $0x1a0] sm:$0xff] %vm1126, %v4947
      %5761 = vst.msk [vmem:[%s203 + $0x1a8] sm:$0xff] %vm1126, %v4950
      %5762 = vst.msk [vmem:[%s203 + $0x1b0] sm:$0xff] %vm1126, %v4955
      %5763 = vst.msk [vmem:[%s203 + $0x1b8] sm:$0xff] %vm1126, %v4958
      %5764 = vst.msk [vmem:[%s203 + $0x1c0] sm:$0xff] %vm1126, %v5014
      %5765 = vst.msk [vmem:[%s203 + $0x1c8] sm:$0xff] %vm1126, %v5017
      %5766 = vst.msk [vmem:[%s203 + $0x1d0] sm:$0xff] %vm1126, %v5022
      %5767 = vst.msk [vmem:[%s203 + $0x1d8] sm:$0xff] %vm1126, %v5025
      %5768 = vst.msk [vmem:[%s203 + $0x1e0] sm:$0xff] %vm1126, %v5030
      %5769 = vst.msk [vmem:[%s203 + $0x1e8] sm:$0xff] %vm1126, %v5033
      %5770 = vst.msk [vmem:[%s203 + $0x1f0] sm:$0xff] %vm1126, %v5038
      %5771 = vst.msk [vmem:[%s203 + $0x1f8] sm:$0xff] %vm1126, %v5041
      %5772 = vst.msk [vmem:[%s203 + $0x200] sm:$0xff] %vm1126, %v5097
      %5773 = vst.msk [vmem:[%s203 + $0x208] sm:$0xff] %vm1126, %v5100
      %5774 = vst.msk [vmem:[%s203 + $0x210] sm:$0xff] %vm1126, %v5105
      %5775 = vst.msk [vmem:[%s203 + $0x218] sm:$0xff] %vm1126, %v5108
      %5776 = vst.msk [vmem:[%s203 + $0x220] sm:$0xff] %vm1126, %v5113
      %5777 = vst.msk [vmem:[%s203 + $0x228] sm:$0xff] %vm1126, %v5116
      %5778 = vst.msk [vmem:[%s203 + $0x230] sm:$0xff] %vm1126, %v5121
      %5779 = vst.msk [vmem:[%s203 + $0x238] sm:$0xff] %vm1126, %v5124
      %5780 = vst.msk [vmem:[%s203 + $0x240] sm:$0xff] %vm1126, %v5180
      %5781 = vst.msk [vmem:[%s203 + $0x248] sm:$0xff] %vm1126, %v5183
      %5782 = vst.msk [vmem:[%s203 + $0x250] sm:$0xff] %vm1126, %v5188
      %5783 = vst.msk [vmem:[%s203 + $0x258] sm:$0xff] %vm1126, %v5191
      %5784 = vst.msk [vmem:[%s203 + $0x260] sm:$0xff] %vm1126, %v5196
      %5785 = vst.msk [vmem:[%s203 + $0x268] sm:$0xff] %vm1126, %v5199
      %5786 = vst.msk [vmem:[%s203 + $0x270] sm:$0xff] %vm1126, %v5204
      %5787 = vst.msk [vmem:[%s203 + $0x278] sm:$0xff] %vm1126, %v5207
      %5788 = vst.msk [vmem:[%s203 + $0x280] sm:$0xff] %vm1126, %v5263
      %5789 = vst.msk [vmem:[%s203 + $0x288] sm:$0xff] %vm1126, %v5266
      %5790 = vst.msk [vmem:[%s203 + $0x290] sm:$0xff] %vm1126, %v5271
      %5791 = vst.msk [vmem:[%s203 + $0x298] sm:$0xff] %vm1126, %v5274
      %5792 = vst.msk [vmem:[%s203 + $0x2a0] sm:$0xff] %vm1126, %v5279
      %5793 = vst.msk [vmem:[%s203 + $0x2a8] sm:$0xff] %vm1126, %v5282
      %5794 = vst.msk [vmem:[%s203 + $0x2b0] sm:$0xff] %vm1126, %v5287
      %5795 = vst.msk [vmem:[%s203 + $0x2b8] sm:$0xff] %vm1126, %v5290
      %5796 = vst.msk [vmem:[%s203 + $0x2c0] sm:$0xff] %vm1126, %v5346
      %5797 = vst.msk [vmem:[%s203 + $0x2c8] sm:$0xff] %vm1126, %v5349
      %5798 = vst.msk [vmem:[%s203 + $0x2d0] sm:$0xff] %vm1126, %v5354
      %5799 = vst.msk [vmem:[%s203 + $0x2d8] sm:$0xff] %vm1126, %v5357
      %5800 = vst.msk [vmem:[%s203 + $0x2e0] sm:$0xff] %vm1126, %v5362
      %5801 = vst.msk [vmem:[%s203 + $0x2e8] sm:$0xff] %vm1126, %v5365
      %5802 = vst.msk [vmem:[%s203 + $0x2f0] sm:$0xff] %vm1126, %v5370
      %5803 = vst.msk [vmem:[%s203 + $0x2f8] sm:$0xff] %vm1126, %v5373
      %5804 = vst.msk [vmem:[%s203 + $0x300] sm:$0xff] %vm1126, %v5429
      %5805 = vst.msk [vmem:[%s203 + $0x308] sm:$0xff] %vm1126, %v5432
      %5806 = vst.msk [vmem:[%s203 + $0x310] sm:$0xff] %vm1126, %v5437
      %5807 = vst.msk [vmem:[%s203 + $0x318] sm:$0xff] %vm1126, %v5440
      %5808 = vst.msk [vmem:[%s203 + $0x320] sm:$0xff] %vm1126, %v5445
      %5809 = vst.msk [vmem:[%s203 + $0x328] sm:$0xff] %vm1126, %v5448
      %5810 = vst.msk [vmem:[%s203 + $0x330] sm:$0xff] %vm1126, %v5453
      %5811 = vst.msk [vmem:[%s203 + $0x338] sm:$0xff] %vm1126, %v5456
      %5812 = vst.msk [vmem:[%s203 + $0x340] sm:$0xff] %vm1126, %v5512
      %5813 = vst.msk [vmem:[%s203 + $0x348] sm:$0xff] %vm1126, %v5515
      %5814 = vst.msk [vmem:[%s203 + $0x350] sm:$0xff] %vm1126, %v5520
      %5815 = vst.msk [vmem:[%s203 + $0x358] sm:$0xff] %vm1126, %v5523
      %5816 = vst.msk [vmem:[%s203 + $0x360] sm:$0xff] %vm1126, %v5528
      %5817 = vst.msk [vmem:[%s203 + $0x368] sm:$0xff] %vm1126, %v5531
      %5818 = vst.msk [vmem:[%s203 + $0x370] sm:$0xff] %vm1126, %v5536
      %5819 = vst.msk [vmem:[%s203 + $0x378] sm:$0xff] %vm1126, %v5539
      %5820 = vst.msk [vmem:[%s203 + $0x380] sm:$0xff] %vm1126, %v5595
      %5821 = vst.msk [vmem:[%s203 + $0x388] sm:$0xff] %vm1126, %v5598
      %5822 = vst.msk [vmem:[%s203 + $0x390] sm:$0xff] %vm1126, %v5603
      %5823 = vst.msk [vmem:[%s203 + $0x398] sm:$0xff] %vm1126, %v5606
      %5824 = vst.msk [vmem:[%s203 + $0x3a0] sm:$0xff] %vm1126, %v5611
      %5825 = vst.msk [vmem:[%s203 + $0x3a8] sm:$0xff] %vm1126, %v5614
      %5826 = vst.msk [vmem:[%s203 + $0x3b0] sm:$0xff] %vm1126, %v5619
      %5827 = vst.msk [vmem:[%s203 + $0x3b8] sm:$0xff] %vm1126, %v5622
      %5828 = vst.msk [vmem:[%s203 + $0x3c0] sm:$0xff] %vm1126, %v5678
      %5829 = vst.msk [vmem:[%s203 + $0x3c8] sm:$0xff] %vm1126, %v5681
      %5830 = vst.msk [vmem:[%s203 + $0x3d0] sm:$0xff] %vm1126, %v5686
      %5831 = vst.msk [vmem:[%s203 + $0x3d8] sm:$0xff] %vm1126, %v5689
      %5832 = vst.msk [vmem:[%s203 + $0x3e0] sm:$0xff] %vm1126, %v5694
      %5833 = vst.msk [vmem:[%s203 + $0x3e8] sm:$0xff] %vm1126, %v5697
      %5834 = vst.msk [vmem:[%s203 + $0x3f0] sm:$0xff] %vm1126, %v5702
      %5835 = vst.msk [vmem:[%s203 + $0x3f8] sm:$0xff] %vm1126, %v5705
      %p5836 = scmp.lt.s32.totalorder %s15, 1
      %s5837 = scalar_select %p5836, %s15, 1
      %s5838 = smul.addr %s5837, 32
      %s5839 = smul.addr %s5838, 8
      %s5840 = scalar_lea.vmem %s2, %s5839
      %p5841 = scmp.lt.s32.totalorder %s15, 1
      %s5842 = scalar_select %p5841, %s15, 1
      %s5843 = smul.addr %s5842, 128
      %s5844 = smul.addr %s5843, 8
      %s5845 = scalar_lea.vmem %s3, %s5844
      // Predicated region
      $region29: #{branch_spa.6} parent=27 // pred_check
        %p5846 = pneg %p85
      $region30: #{branch_spa.6} parent=27 // pred_check_branch
        %5848 = sbr.rel (%p5846) target = $region32
      $region31: #{branch_spa.6} parent=27 // pred_region
        _
      $region32: #{branch_spa.6} parent=27 // pred_fallthru
        _
      // Predicated region
      $region33: #{branch_spa.6} parent=27 // pred_check
        %p5849 = pneg %p111
      $region34: #{branch_spa.6} parent=27 // pred_check_branch
        %5851 = sbr.rel (%p5849) target = $region36
      $region35: #{branch_spa.6} parent=27 // pred_region
        _
      $region36: #{branch_spa.6} parent=27 // pred_fallthru
        _
    $region28: #{branch_spa.6} parent=5 // pred_fallthru
      _
    %p5852 = scmp.le.s32.totalorder 2, %s10
    // Predicated region
    $region37: #{branch_spa.6} parent=5 // pred_check
      %p5853 = pneg %p5852
    $region38: #{branch_spa.6} parent=5 // pred_check_branch
      %5855 = sbr.rel (%p5853) target = $region40
    $region39: #{branch_spa.6} parent=5 // pred_region
      %s5856 = ssub.s32 %s10, 2
      // Predicated region
      $region41: #{branch_spa.6} parent=39 // pred_check
        %p5857 = pneg %p91
      $region42: #{branch_spa.6} parent=39 // pred_check_branch
        %5859 = sbr.rel (%p5857) target = $region44
      $region43: #{branch_spa.6} parent=39 // pred_region
        %p5860 = scmp.lt.s32.totalorder %s16, 1
        %s5861 = scalar_select %p5860, %s16, 1
        %s5862 = smul.addr %s5861, 32
        %s5863 = smul.addr %s5862, 8
        %s5864 = scalar_lea.vmem %s2, %s5863
      $region44: #{branch_spa.6} parent=39 // pred_fallthru
        _
      // Predicated region
      $region45: #{branch_spa.6} parent=39 // pred_check
        %p5865 = pneg %p117
      $region46: #{branch_spa.6} parent=39 // pred_check_branch
        %5867 = sbr.rel (%p5865) target = $region48
      $region47: #{branch_spa.6} parent=39 // pred_region
        %p5868 = scmp.lt.s32.totalorder %s16, 1
        %s5869 = scalar_select %p5868, %s16, 1
        %s5870 = smul.addr %s5869, 128
        %s5871 = smul.addr %s5870, 8
        %s5872 = scalar_lea.vmem %s3, %s5871
      $region48: #{branch_spa.6} parent=39 // pred_fallthru
        _
    $region40: #{branch_spa.6} parent=5 // pred_fallthru
      _
  $region6: #{branch_spa.6} parent=0 // loop_footer
    %s14 = sadd.s32 1, %s10
  $region7: #{branch_spa.6} parent=0 // loop_footer_branch
    %9 = sbr.rel target = $region3
  $region8: #{branch_spa.6} parent=0 // loop_exit
    _

</llo_original>
